<compile_context>
chip_gen: v6e
topology: v6e:2x2x1
jax: 0.10.0
libtpu: 0.0.40
codegen_flags: <defaults>
</compile_context>

<pallas_src>
import functools

import jax
import jax.numpy as jnp
from jax.experimental import pallas as pl
from jax.experimental.pallas import tpu as pltpu

BN_EPS = 1e-5
MXU_DTYPE = jnp.bfloat16     # matmul operand dtype (accumulation stays f32)


# ----------------------------------------------------------------------------
# In-kernel helpers (operate on values / refs already in VMEM)
# ----------------------------------------------------------------------------

def _conv2d_rows(x, wb_ref, widx, N, H, W, Cin, Cout, KH):
    """'same' 2D conv via KH banded matmuls.

    x                    : (N, H, W*Cin) f32 value (un-padded).
    wb_ref[widx + (kh,)] : (W*Cin, W*Cout) banded weight for row tap kh; the
                           banding already encodes zero padding along W.
    Returns (N*H, W*Cout) f32.
    """
    ph = (KH - 1) // 2
    wcin = W * Cin
    if ph > 0:
        zer = jnp.zeros((N, ph, wcin), jnp.float32)
        xp = jnp.concatenate([zer, x, zer], axis=1)       # (N, H + 2*ph, W*Cin)
    else:
        xp = x
    acc = jnp.zeros((N * H, W * Cout), jnp.float32)
    for kh in range(KH):
        rows = xp[:, kh:kh + H, :].reshape(N * H, wcin).astype(MXU_DTYPE)
        acc = acc + jnp.dot(rows, wb_ref[widx + (kh,)],
                            preferred_element_type=jnp.float32)
    return acc


def _batchnorm(acc, fold, gamma, beta, count, W):
    """Training-mode BatchNorm2d on the lane-dense (rows, W*C) layout.

    acc: (rows, W*C) f32   fold: (W*C, C)   gamma/beta: (1, C)
    """
    ssum = jnp.sum(acc, axis=0, keepdims=True)                       # (1, W*C)
    sqsum = jnp.sum(acc * acc, axis=0, keepdims=True)                # (1, W*C)
    mean = jnp.dot(ssum, fold, preferred_element_type=jnp.float32) / count
    ex2 = jnp.dot(sqsum, fold, preferred_element_type=jnp.float32) / count
    var = ex2 - mean * mean                                          # biased
    scale = gamma * jax.lax.rsqrt(var + BN_EPS)                      # (1, C)
    shift = beta - mean * scale                                      # (1, C)
    scale_t = jnp.concatenate([scale] * W, axis=1)                   # (1, W*C)
    shift_t = jnp.concatenate([shift] * W, axis=1)                   # (1, W*C)
    return acc * scale_t + shift_t


def _prelu(x, alpha):
    return jnp.where(x >= 0, x, alpha * x)


# ----------------------------------------------------------------------------
# Kernel 1: fused trunk  (in_conv -> residual blocks -> post_res_conv -> skip)
# ----------------------------------------------------------------------------

def _trunk_kernel(x_ref, fold_ref, in_wb_ref, in_b_ref,
                  rb_wb1_ref, rb_g1_ref, rb_b1_ref,
                  rb_wb2_ref, rb_g2_ref, rb_b2_ref,
                  post_wb_ref, post_g_ref, post_b_ref,
                  alphas_ref, out_ref, *, N, H, W, Cin, C, K_in, num_res):
    fold = fold_ref[...]                                             # (W*C, C)
    count = N * H * W

    # in_conv: 9x9 (Cin -> C) + bias + PReLU
    x = _conv2d_rows(x_ref[...], in_wb_ref, (), N, H, W, Cin, C, K_in)
    x = _prelu(x + in_b_ref[...], alphas_ref[0])
    residual = x

    # residual blocks: x + BN(conv3(PReLU(BN(conv3(x)))))
    for r in range(num_res):
        h = _conv2d_rows(x.reshape(N, H, W * C), rb_wb1_ref, (r,),
                         N, H, W, C, C, 3)
        h = _batchnorm(h, fold, rb_g1_ref[r], rb_b1_ref[r], count, W)
        h = _prelu(h, alphas_ref[1 + r])
        h = _conv2d_rows(h.reshape(N, H, W * C), rb_wb2_ref, (r,),
                         N, H, W, C, C, 3)
        h = _batchnorm(h, fold, rb_g2_ref[r], rb_b2_ref[r], count, W)
        x = x + h

    # post_res_conv: 3x3 + BN, then global skip connection
    h = _conv2d_rows(x.reshape(N, H, W * C), post_wb_ref, (),
                     N, H, W, C, C, 3)
    h = _batchnorm(h, fold, post_g_ref[...], post_b_ref[...], count, W)
    out_ref[...] = h + residual


def _trunk_apply(x_nhwc, kp):
    N, H, W, Cin = x_nhwc.shape
    C = kp["fold"].shape[1]
    num_res = kp["rb_wb1"].shape[0]
    K_in = kp["in_wb"].shape[0]

    kernel = functools.partial(_trunk_kernel, N=N, H=H, W=W, Cin=Cin, C=C,
                               K_in=K_in, num_res=num_res)
    vmem = pl.BlockSpec(memory_space=pltpu.MemorySpace.VMEM)
    smem = pl.BlockSpec(memory_space=pltpu.MemorySpace.SMEM)
    out = pl.pallas_call(
        kernel,
        out_shape=jax.ShapeDtypeStruct((N * H, W * C), jnp.float32),
        in_specs=[vmem] * 13 + [smem],
        out_specs=vmem,
    )(x_nhwc.reshape(N, H, W * Cin), kp["fold"], kp["in_wb"], kp["in_b"],
      kp["rb_wb1"], kp["rb_g1"], kp["rb_b1"],
      kp["rb_wb2"], kp["rb_g2"], kp["rb_b2"],
      kp["post_wb"], kp["post_g"], kp["post_b"], kp["alphas"])
    return out.reshape(N, H, W, C)


# ----------------------------------------------------------------------------
# Kernel 2: conv + bias + (PReLU | tanh), gridded over the batch dimension
# ----------------------------------------------------------------------------

def _conv_act_kernel(alpha_ref, x_ref, wb_ref, b_ref, out_ref, *,
                     H, W, Cin, Cout, KH, act):
    acc = _conv2d_rows(x_ref[...], wb_ref, (), 1, H, W, Cin, Cout, KH)
    acc = acc + b_ref[...]
    if act == "prelu":
        acc = _prelu(acc, alpha_ref[0])
    elif act == "tanh":
        acc = jnp.tanh(acc)
    out_ref[...] = acc


def _conv_act_apply(x_nhwc, wb, b_t, alpha, act):
    N, H, W, Cin = x_nhwc.shape
    KH = wb.shape[0]
    Cout = wb.shape[2] // W

    kernel = functools.partial(_conv_act_kernel, H=H, W=W, Cin=Cin, Cout=Cout,
                               KH=KH, act=act)
    grid_spec = pltpu.PrefetchScalarGridSpec(
        num_scalar_prefetch=1,                 # alpha scalar lands in SMEM
        grid=(N,),
        in_specs=[
            pl.BlockSpec((1, H, W * Cin), lambda n, a: (n, 0, 0)),
            pl.BlockSpec((KH, W * Cin, W * Cout), lambda n, a: (0, 0, 0)),
            pl.BlockSpec((1, W * Cout), lambda n, a: (0, 0)),
        ],
        out_specs=pl.BlockSpec((H, W * Cout), lambda n, a: (n, 0)),
    )
    out = pl.pallas_call(
        kernel,
        out_shape=jax.ShapeDtypeStruct((N * H, W * Cout), jnp.float32),
        grid_spec=grid_spec,
        compiler_params=pltpu.CompilerParams(
            dimension_semantics=("parallel",)),
    )(alpha, x_nhwc.reshape(N, H, W * Cin), wb, b_t)
    return out.reshape(N, H, W, Cout)


# ----------------------------------------------------------------------------
# Host-side layout prep (one-time): banded weights, tiled biases, fold matrix
# ----------------------------------------------------------------------------

def _band_weights(w, W_out):
    """(KH, KW, Cin, Cout) HWIO -> (KH, W_out*Cin, W_out*Cout) banded matrices.

    The banding folds the KW taps and the 'same' zero padding along the width
    dimension into the matmul contraction dimension.
    """
    KH, KW, Cin, Cout = w.shape
    pw = (KW - 1) // 2
    wi = jnp.arange(W_out)[:, None]          # input column
    wo = jnp.arange(W_out)[None, :]          # output column
    kw = wi - wo + pw
    valid = ((kw >= 0) & (kw < KW)).astype(w.dtype)
    g = w[:, jnp.clip(kw, 0, KW - 1)]                      # (KH, Wi, Wo, Cin, Cout)
    g = g * valid[None, :, :, None, None]
    g = g.transpose(0, 1, 3, 2, 4)                         # (KH, Wi, Cin, Wo, Cout)
    return g.reshape(KH, W_out * Cin, W_out * Cout)


def prepare_params(p, width):
    """Convert raw HWIO params into kernel-ready (banded / tiled) params."""
    C = p["in_w"].shape[-1]
    kp = {
        "fold": jnp.tile(jnp.eye(C, dtype=jnp.float32), (width, 1)),   # (W*C, C)
        "in_wb": _band_weights(p["in_w"], width).astype(MXU_DTYPE),
        "in_b": jnp.tile(p["in_b"], (1, width)),
        "rb_wb1": jnp.stack([_band_weights(rb["w1"], width)
                             for rb in p["res"]]).astype(MXU_DTYPE),
        "rb_wb2": jnp.stack([_band_weights(rb["w2"], width)
                             for rb in p["res"]]).astype(MXU_DTYPE),
        "rb_g1": jnp.stack([rb["g1"] for rb in p["res"]]),
        "rb_b1": jnp.stack([rb["b1"] for rb in p["res"]]),
        "rb_g2": jnp.stack([rb["g2"] for rb in p["res"]]),
        "rb_b2": jnp.stack([rb["b2"] for rb in p["res"]]),
        "post_wb": _band_weights(p["post_w"], width).astype(MXU_DTYPE),
        "post_g": p["post_g"],
        "post_b": p["post_b"],
        "alphas": jnp.concatenate([p["in_alpha"].reshape(1)]
                                  + [rb["a1"].reshape(1) for rb in p["res"]]),
        "up": [],
    }
    w = width
    for ub in p["up"]:
        kp["up"].append({
            "wb": _band_weights(ub["w"], w).astype(MXU_DTYPE),
            "b": jnp.tile(ub["b"], (1, w)),
            "a": ub["a"].reshape(1),
        })
        w = w * 2
    kp["final_wb"] = _band_weights(p["final_w"], w).astype(MXU_DTYPE)
    kp["final_b"] = jnp.tile(p["final_b"], (1, w))
    return kp


# ----------------------------------------------------------------------------
# Forward pass
# ----------------------------------------------------------------------------

def _pixel_shuffle_nhwc(x, r):
    # out[n, h*r+i, w*r+j, c] = x[n, h, w, c*r*r + i*r + j]  (matches nn.PixelShuffle)
    # TODO(synk): fuse PixelShuffle into the upsample kernel's output index_map;
    # kept as an XLA reshape/transpose (pure layout plumbing) for robustness.
    N, H, W, C4 = x.shape
    c = C4 // (r * r)
    x = x.reshape(N, H, W, c, r, r)
    x = x.transpose(0, 1, 4, 2, 5, 3)
    return x.reshape(N, H * r, W * r, c)


def srnet_forward(x_nchw, kp):
    x = jnp.transpose(x_nchw, (0, 2, 3, 1))                 # NCHW -> NHWC

    # Fused trunk: in_conv + residual blocks + post_res_conv + global skip.
    x = _trunk_apply(x, kp)

    # Upsample blocks: conv3 (C -> 4C) + PReLU + PixelShuffle(2).
    # (PReLU has a single shared scalar parameter, so applying it before the
    # pixel shuffle is mathematically identical to the PyTorch ordering.)
    for ub in kp["up"]:
        y = _conv_act_apply(x, ub["wb"], ub["b"], ub["a"], act="prelu")
        x = _pixel_shuffle_nhwc(y, 2)

    # final_conv: 9x9 conv + tanh.
    x = _conv_act_apply(x, kp["final_wb"], kp["final_b"],
                        jnp.zeros((1,), jnp.float32), act="tanh")
    return jnp.transpose(x, (0, 3, 1, 2))                   # NHWC -> NCHW


# ----------------------------------------------------------------------------
# Parameter init (raw HWIO weights, like the PyTorch module)
# ----------------------------------------------------------------------------

def init_params(key, in_channels=3, channels=16, num_residual_blocks=2,
                num_upsamples=2):
    def nrm(k, shape, scale=0.05):
        return scale * jax.random.normal(k, shape, jnp.float32)

    keys = iter(jax.random.split(key, 64))
    p = {"in_w": nrm(next(keys), (9, 9, in_channels, channels)),
         "in_b": nrm(next(keys), (1, channels)),
         "in_alpha": jnp.full((1, 1), 0.25, jnp.float32),   # nn.PReLU() default
         "res": [], "up": []}
    for _ in range(num_residual_blocks):
        p["res"].append({
            "w1": nrm(next(keys), (3, 3, channels, channels)),
            "g1": jnp.ones((1, channels), jnp.float32),
            "b1": jnp.zeros((1, channels), jnp.float32),
            "a1": jnp.full((1, 1), 0.25, jnp.float32),
            "w2": nrm(next(keys), (3, 3, channels, channels)),
            "g2": jnp.ones((1, channels), jnp.float32),
            "b2": jnp.zeros((1, channels), jnp.float32)})
    p["post_w"] = nrm(next(keys), (3, 3, channels, channels))
    p["post_g"] = jnp.ones((1, channels), jnp.float32)
    p["post_b"] = jnp.zeros((1, channels), jnp.float32)
    for _ in range(num_upsamples):
        p["up"].append({"w": nrm(next(keys), (3, 3, channels, channels * 4)),
                        "b": nrm(next(keys), (1, channels * 4)),
                        "a": jnp.full((1, 1), 0.25, jnp.float32)})
    p["final_w"] = nrm(next(keys), (9, 9, channels, in_channels))
    p["final_b"] = nrm(next(keys), (1, in_channels))
    return p


if __name__ == "__main__":
    key = jax.random.PRNGKey(0)
    kx, kparam = jax.random.split(key)

    # Small SRNet: in_channels=3, channels=16, 2 residual blocks, 4x upscale.
    x = jax.random.normal(kx, (2, 3, 8, 8), jnp.float32)     # NCHW, like PyTorch
    params = init_params(kparam, in_channels=3, channels=16,
                         num_residual_blocks=2, num_upsamples=2)
    kparams = prepare_params(params, width=8)                # one-time layout prep

    fwd = jax.jit(srnet_forward)
    out = jax.block_until_ready(fwd(x, kparams))

    assert out.shape == (2, 3, 32, 32), out.shape            # 4x upscale
    assert bool(jnp.all(jnp.isfinite(out)))
    assert bool(jnp.all(jnp.abs(out) <= 1.0))                # tanh output range
    print("KERNEL_OK")
</pallas_src>

<mosaic_0001>
module attributes {stable_mosaic.version = 11 : i64} {
  func.func @_trunk_kernel(%arg0: memref<2x8x24xf32, #tpu.memory_space<vmem>>, %arg1: memref<128x16xf32, #tpu.memory_space<vmem>>, %arg2: memref<9x24x128xbf16, #tpu.memory_space<vmem>>, %arg3: memref<1x128xf32, #tpu.memory_space<vmem>>, %arg4: memref<2x3x128x128xbf16, #tpu.memory_space<vmem>>, %arg5: memref<2x1x16xf32, #tpu.memory_space<vmem>>, %arg6: memref<2x1x16xf32, #tpu.memory_space<vmem>>, %arg7: memref<2x3x128x128xbf16, #tpu.memory_space<vmem>>, %arg8: memref<2x1x16xf32, #tpu.memory_space<vmem>>, %arg9: memref<2x1x16xf32, #tpu.memory_space<vmem>>, %arg10: memref<3x128x128xbf16, #tpu.memory_space<vmem>>, %arg11: memref<1x16xf32, #tpu.memory_space<vmem>>, %arg12: memref<1x16xf32, #tpu.memory_space<vmem>>, %arg13: memref<3xf32, #tpu.memory_space<smem>>, %arg14: memref<16x128xf32, #tpu.memory_space<vmem>>) attributes {dimension_semantics = [], scalar_prefetch = 0 : i64, scratch_operands = 0 : i64, tpu.core_type = #tpu.core_type<tc>} {
    %c0 = arith.constant 0 : index
    %c0_0 = arith.constant 0 : index
    %0 = vector.load %arg1[%c0, %c0_0] : memref<128x16xf32, #tpu.memory_space<vmem>>, vector<128x16xf32>
    %c0_1 = arith.constant 0 : index
    %c0_2 = arith.constant 0 : index
    %c0_3 = arith.constant 0 : index
    %1 = vector.load %arg0[%c0_1, %c0_2, %c0_3] : memref<2x8x24xf32, #tpu.memory_space<vmem>>, vector<2x8x24xf32>
    %cst = arith.constant 0.000000e+00 : f32
    %2 = vector.broadcast %cst : f32 to vector<2x4x24xf32>
    %3 = tpu.concatenate %2, %1, %2 in 1 : vector<2x4x24xf32>, vector<2x8x24xf32>, vector<2x4x24xf32> -> vector<2x16x24xf32>
    %cst_4 = arith.constant 0.000000e+00 : f32
    %4 = vector.broadcast %cst_4 : f32 to vector<16x128xf32>
    %5 = vector.extract_strided_slice %3 {offsets = [0, 0, 0], sizes = [2, 8, 24], strides = [1, 1, 1]} : vector<2x16x24xf32> to vector<2x8x24xf32>
    %6 = vector.shape_cast %5 : vector<2x8x24xf32> to vector<16x24xf32>
    %7 = arith.truncf %6 : vector<16x24xf32> to vector<16x24xbf16>
    %c0_5 = arith.constant 0 : index
    %c0_6 = arith.constant 0 : index
    %c0_7 = arith.constant 0 : index
    %8 = vector.load %arg2[%c0_5, %c0_6, %c0_7] : memref<9x24x128xbf16, #tpu.memory_space<vmem>>, vector<1x24x128xbf16>
    %9 = vector.shape_cast %8 : vector<1x24x128xbf16> to vector<24x128xbf16>
    %cst_8 = arith.constant dense<0.000000e+00> : vector<16x128xf32>
    %10 = tpu.matmul %7, %9, %cst_8 {dimension_numbers = #tpu.dot_dimension_numbers<[1], [0], [0], [1], [0, 0, 1, 1], [], []>} : vector<16x24xbf16>, vector<24x128xbf16>, vector<16x128xf32> -> vector<16x128xf32>
    %11 = arith.addf %4, %10 : vector<16x128xf32>
    %12 = vector.extract_strided_slice %3 {offsets = [0, 1, 0], sizes = [2, 8, 24], strides = [1, 1, 1]} : vector<2x16x24xf32> to vector<2x8x24xf32>
    %13 = vector.shape_cast %12 : vector<2x8x24xf32> to vector<16x24xf32>
    %14 = arith.truncf %13 : vector<16x24xf32> to vector<16x24xbf16>
    %c1 = arith.constant 1 : index
    %c0_9 = arith.constant 0 : index
    %c0_10 = arith.constant 0 : index
    %15 = vector.load %arg2[%c1, %c0_9, %c0_10] : memref<9x24x128xbf16, #tpu.memory_space<vmem>>, vector<1x24x128xbf16>
    %16 = vector.shape_cast %15 : vector<1x24x128xbf16> to vector<24x128xbf16>
    %cst_11 = arith.constant dense<0.000000e+00> : vector<16x128xf32>
    %17 = tpu.matmul %14, %16, %cst_11 {dimension_numbers = #tpu.dot_dimension_numbers<[1], [0], [0], [1], [0, 0, 1, 1], [], []>} : vector<16x24xbf16>, vector<24x128xbf16>, vector<16x128xf32> -> vector<16x128xf32>
    %18 = arith.addf %11, %17 : vector<16x128xf32>
    %19 = vector.extract_strided_slice %3 {offsets = [0, 2, 0], sizes = [2, 8, 24], strides = [1, 1, 1]} : vector<2x16x24xf32> to vector<2x8x24xf32>
    %20 = vector.shape_cast %19 : vector<2x8x24xf32> to vector<16x24xf32>
    %21 = arith.truncf %20 : vector<16x24xf32> to vector<16x24xbf16>
    %c2 = arith.constant 2 : index
    %c0_12 = arith.constant 0 : index
    %c0_13 = arith.constant 0 : index
    %22 = vector.load %arg2[%c2, %c0_12, %c0_13] : memref<9x24x128xbf16, #tpu.memory_space<vmem>>, vector<1x24x128xbf16>
    %23 = vector.shape_cast %22 : vector<1x24x128xbf16> to vector<24x128xbf16>
    %cst_14 = arith.constant dense<0.000000e+00> : vector<16x128xf32>
    %24 = tpu.matmul %21, %23, %cst_14 {dimension_numbers = #tpu.dot_dimension_numbers<[1], [0], [0], [1], [0, 0, 1, 1], [], []>} : vector<16x24xbf16>, vector<24x128xbf16>, vector<16x128xf32> -> vector<16x128xf32>
    %25 = arith.addf %18, %24 : vector<16x128xf32>
    %26 = vector.extract_strided_slice %3 {offsets = [0, 3, 0], sizes = [2, 8, 24], strides = [1, 1, 1]} : vector<2x16x24xf32> to vector<2x8x24xf32>
    %27 = vector.shape_cast %26 : vector<2x8x24xf32> to vector<16x24xf32>
    %28 = arith.truncf %27 : vector<16x24xf32> to vector<16x24xbf16>
    %c3 = arith.constant 3 : index
    %c0_15 = arith.constant 0 : index
    %c0_16 = arith.constant 0 : index
    %29 = vector.load %arg2[%c3, %c0_15, %c0_16] : memref<9x24x128xbf16, #tpu.memory_space<vmem>>, vector<1x24x128xbf16>
    %30 = vector.shape_cast %29 : vector<1x24x128xbf16> to vector<24x128xbf16>
    %cst_17 = arith.constant dense<0.000000e+00> : vector<16x128xf32>
    %31 = tpu.matmul %28, %30, %cst_17 {dimension_numbers = #tpu.dot_dimension_numbers<[1], [0], [0], [1], [0, 0, 1, 1], [], []>} : vector<16x24xbf16>, vector<24x128xbf16>, vector<16x128xf32> -> vector<16x128xf32>
    %32 = arith.addf %25, %31 : vector<16x128xf32>
    %33 = vector.extract_strided_slice %3 {offsets = [0, 4, 0], sizes = [2, 8, 24], strides = [1, 1, 1]} : vector<2x16x24xf32> to vector<2x8x24xf32>
    %34 = vector.shape_cast %33 : vector<2x8x24xf32> to vector<16x24xf32>
    %35 = arith.truncf %34 : vector<16x24xf32> to vector<16x24xbf16>
    %c4 = arith.constant 4 : index
    %c0_18 = arith.constant 0 : index
    %c0_19 = arith.constant 0 : index
    %36 = vector.load %arg2[%c4, %c0_18, %c0_19] : memref<9x24x128xbf16, #tpu.memory_space<vmem>>, vector<1x24x128xbf16>
    %37 = vector.shape_cast %36 : vector<1x24x128xbf16> to vector<24x128xbf16>
    %cst_20 = arith.constant dense<0.000000e+00> : vector<16x128xf32>
    %38 = tpu.matmul %35, %37, %cst_20 {dimension_numbers = #tpu.dot_dimension_numbers<[1], [0], [0], [1], [0, 0, 1, 1], [], []>} : vector<16x24xbf16>, vector<24x128xbf16>, vector<16x128xf32> -> vector<16x128xf32>
    %39 = arith.addf %32, %38 : vector<16x128xf32>
    %40 = vector.extract_strided_slice %3 {offsets = [0, 5, 0], sizes = [2, 8, 24], strides = [1, 1, 1]} : vector<2x16x24xf32> to vector<2x8x24xf32>
    %41 = vector.shape_cast %40 : vector<2x8x24xf32> to vector<16x24xf32>
    %42 = arith.truncf %41 : vector<16x24xf32> to vector<16x24xbf16>
    %c5 = arith.constant 5 : index
    %c0_21 = arith.constant 0 : index
    %c0_22 = arith.constant 0 : index
    %43 = vector.load %arg2[%c5, %c0_21, %c0_22] : memref<9x24x128xbf16, #tpu.memory_space<vmem>>, vector<1x24x128xbf16>
    %44 = vector.shape_cast %43 : vector<1x24x128xbf16> to vector<24x128xbf16>
    %cst_23 = arith.constant dense<0.000000e+00> : vector<16x128xf32>
    %45 = tpu.matmul %42, %44, %cst_23 {dimension_numbers = #tpu.dot_dimension_numbers<[1], [0], [0], [1], [0, 0, 1, 1], [], []>} : vector<16x24xbf16>, vector<24x128xbf16>, vector<16x128xf32> -> vector<16x128xf32>
    %46 = arith.addf %39, %45 : vector<16x128xf32>
    %47 = vector.extract_strided_slice %3 {offsets = [0, 6, 0], sizes = [2, 8, 24], strides = [1, 1, 1]} : vector<2x16x24xf32> to vector<2x8x24xf32>
    %48 = vector.shape_cast %47 : vector<2x8x24xf32> to vector<16x24xf32>
    %49 = arith.truncf %48 : vector<16x24xf32> to vector<16x24xbf16>
    %c6 = arith.constant 6 : index
    %c0_24 = arith.constant 0 : index
    %c0_25 = arith.constant 0 : index
    %50 = vector.load %arg2[%c6, %c0_24, %c0_25] : memref<9x24x128xbf16, #tpu.memory_space<vmem>>, vector<1x24x128xbf16>
    %51 = vector.shape_cast %50 : vector<1x24x128xbf16> to vector<24x128xbf16>
    %cst_26 = arith.constant dense<0.000000e+00> : vector<16x128xf32>
    %52 = tpu.matmul %49, %51, %cst_26 {dimension_numbers = #tpu.dot_dimension_numbers<[1], [0], [0], [1], [0, 0, 1, 1], [], []>} : vector<16x24xbf16>, vector<24x128xbf16>, vector<16x128xf32> -> vector<16x128xf32>
    %53 = arith.addf %46, %52 : vector<16x128xf32>
    %54 = vector.extract_strided_slice %3 {offsets = [0, 7, 0], sizes = [2, 8, 24], strides = [1, 1, 1]} : vector<2x16x24xf32> to vector<2x8x24xf32>
    %55 = vector.shape_cast %54 : vector<2x8x24xf32> to vector<16x24xf32>
    %56 = arith.truncf %55 : vector<16x24xf32> to vector<16x24xbf16>
    %c7 = arith.constant 7 : index
    %c0_27 = arith.constant 0 : index
    %c0_28 = arith.constant 0 : index
    %57 = vector.load %arg2[%c7, %c0_27, %c0_28] : memref<9x24x128xbf16, #tpu.memory_space<vmem>>, vector<1x24x128xbf16>
    %58 = vector.shape_cast %57 : vector<1x24x128xbf16> to vector<24x128xbf16>
    %cst_29 = arith.constant dense<0.000000e+00> : vector<16x128xf32>
    %59 = tpu.matmul %56, %58, %cst_29 {dimension_numbers = #tpu.dot_dimension_numbers<[1], [0], [0], [1], [0, 0, 1, 1], [], []>} : vector<16x24xbf16>, vector<24x128xbf16>, vector<16x128xf32> -> vector<16x128xf32>
    %60 = arith.addf %53, %59 : vector<16x128xf32>
    %61 = vector.extract_strided_slice %3 {offsets = [0, 8, 0], sizes = [2, 8, 24], strides = [1, 1, 1]} : vector<2x16x24xf32> to vector<2x8x24xf32>
    %62 = vector.shape_cast %61 : vector<2x8x24xf32> to vector<16x24xf32>
    %63 = arith.truncf %62 : vector<16x24xf32> to vector<16x24xbf16>
    %c8 = arith.constant 8 : index
    %c0_30 = arith.constant 0 : index
    %c0_31 = arith.constant 0 : index
    %64 = vector.load %arg2[%c8, %c0_30, %c0_31] : memref<9x24x128xbf16, #tpu.memory_space<vmem>>, vector<1x24x128xbf16>
    %65 = vector.shape_cast %64 : vector<1x24x128xbf16> to vector<24x128xbf16>
    %cst_32 = arith.constant dense<0.000000e+00> : vector<16x128xf32>
    %66 = tpu.matmul %63, %65, %cst_32 {dimension_numbers = #tpu.dot_dimension_numbers<[1], [0], [0], [1], [0, 0, 1, 1], [], []>} : vector<16x24xbf16>, vector<24x128xbf16>, vector<16x128xf32> -> vector<16x128xf32>
    %67 = arith.addf %60, %66 : vector<16x128xf32>
    %c0_33 = arith.constant 0 : index
    %c0_34 = arith.constant 0 : index
    %68 = vector.load %arg3[%c0_33, %c0_34] : memref<1x128xf32, #tpu.memory_space<vmem>>, vector<1x128xf32>
    %69 = vector.broadcast %68 : vector<1x128xf32> to vector<16x128xf32>
    %70 = arith.addf %67, %69 : vector<16x128xf32>
    %c0_35 = arith.constant 0 : index
    %71 = memref.load %arg13[%c0_35] : memref<3xf32, #tpu.memory_space<smem>>
    %cst_36 = arith.constant 0.000000e+00 : f32
    %72 = vector.broadcast %cst_36 : f32 to vector<16x128xf32>
    %73 = arith.cmpf oge, %70, %72 : vector<16x128xf32>
    %74 = vector.broadcast %71 : f32 to vector<16x128xf32>
    %75 = arith.mulf %74, %70 : vector<16x128xf32>
    %76 = arith.select %73, %70, %75 : vector<16x128xi1>, vector<16x128xf32>
    %77 = vector.shape_cast %76 : vector<16x128xf32> to vector<2x8x128xf32>
    %cst_37 = arith.constant 0.000000e+00 : f32
    %78 = vector.broadcast %cst_37 : f32 to vector<2x1x128xf32>
    %79 = tpu.concatenate %78, %77, %78 in 1 : vector<2x1x128xf32>, vector<2x8x128xf32>, vector<2x1x128xf32> -> vector<2x10x128xf32>
    %cst_38 = arith.constant 0.000000e+00 : f32
    %80 = vector.broadcast %cst_38 : f32 to vector<16x128xf32>
    %81 = vector.extract_strided_slice %79 {offsets = [0, 0, 0], sizes = [2, 8, 128], strides = [1, 1, 1]} : vector<2x10x128xf32> to vector<2x8x128xf32>
    %82 = vector.shape_cast %81 : vector<2x8x128xf32> to vector<16x128xf32>
    %83 = arith.truncf %82 : vector<16x128xf32> to vector<16x128xbf16>
    %c0_39 = arith.constant 0 : index
    %c0_40 = arith.constant 0 : index
    %c0_41 = arith.constant 0 : index
    %c0_42 = arith.constant 0 : index
    %84 = vector.load %arg4[%c0_39, %c0_40, %c0_41, %c0_42] : memref<2x3x128x128xbf16, #tpu.memory_space<vmem>>, vector<1x1x128x128xbf16>
    %85 = vector.shape_cast %84 : vector<1x1x128x128xbf16> to vector<128x128xbf16>
    %cst_43 = arith.constant dense<0.000000e+00> : vector<16x128xf32>
    %86 = tpu.matmul %83, %85, %cst_43 {dimension_numbers = #tpu.dot_dimension_numbers<[1], [0], [0], [1], [0, 0, 1, 1], [], []>} : vector<16x128xbf16>, vector<128x128xbf16>, vector<16x128xf32> -> vector<16x128xf32>
    %87 = arith.addf %80, %86 : vector<16x128xf32>
    %88 = vector.extract_strided_slice %79 {offsets = [0, 1, 0], sizes = [2, 8, 128], strides = [1, 1, 1]} : vector<2x10x128xf32> to vector<2x8x128xf32>
    %89 = vector.shape_cast %88 : vector<2x8x128xf32> to vector<16x128xf32>
    %90 = arith.truncf %89 : vector<16x128xf32> to vector<16x128xbf16>
    %c0_44 = arith.constant 0 : index
    %c1_45 = arith.constant 1 : index
    %c0_46 = arith.constant 0 : index
    %c0_47 = arith.constant 0 : index
    %91 = vector.load %arg4[%c0_44, %c1_45, %c0_46, %c0_47] : memref<2x3x128x128xbf16, #tpu.memory_space<vmem>>, vector<1x1x128x128xbf16>
    %92 = vector.shape_cast %91 : vector<1x1x128x128xbf16> to vector<128x128xbf16>
    %cst_48 = arith.constant dense<0.000000e+00> : vector<16x128xf32>
    %93 = tpu.matmul %90, %92, %cst_48 {dimension_numbers = #tpu.dot_dimension_numbers<[1], [0], [0], [1], [0, 0, 1, 1], [], []>} : vector<16x128xbf16>, vector<128x128xbf16>, vector<16x128xf32> -> vector<16x128xf32>
    %94 = arith.addf %87, %93 : vector<16x128xf32>
    %95 = vector.extract_strided_slice %79 {offsets = [0, 2, 0], sizes = [2, 8, 128], strides = [1, 1, 1]} : vector<2x10x128xf32> to vector<2x8x128xf32>
    %96 = vector.shape_cast %95 : vector<2x8x128xf32> to vector<16x128xf32>
    %97 = arith.truncf %96 : vector<16x128xf32> to vector<16x128xbf16>
    %c0_49 = arith.constant 0 : index
    %c2_50 = arith.constant 2 : index
    %c0_51 = arith.constant 0 : index
    %c0_52 = arith.constant 0 : index
    %98 = vector.load %arg4[%c0_49, %c2_50, %c0_51, %c0_52] : memref<2x3x128x128xbf16, #tpu.memory_space<vmem>>, vector<1x1x128x128xbf16>
    %99 = vector.shape_cast %98 : vector<1x1x128x128xbf16> to vector<128x128xbf16>
    %cst_53 = arith.constant dense<0.000000e+00> : vector<16x128xf32>
    %100 = tpu.matmul %97, %99, %cst_53 {dimension_numbers = #tpu.dot_dimension_numbers<[1], [0], [0], [1], [0, 0, 1, 1], [], []>} : vector<16x128xbf16>, vector<128x128xbf16>, vector<16x128xf32> -> vector<16x128xf32>
    %101 = arith.addf %94, %100 : vector<16x128xf32>
    %c0_54 = arith.constant 0 : index
    %c0_55 = arith.constant 0 : index
    %c0_56 = arith.constant 0 : index
    %102 = vector.load %arg5[%c0_54, %c0_55, %c0_56] : memref<2x1x16xf32, #tpu.memory_space<vmem>>, vector<1x1x16xf32>
    %103 = vector.shape_cast %102 : vector<1x1x16xf32> to vector<1x16xf32>
    %c0_57 = arith.constant 0 : index
    %c0_58 = arith.constant 0 : index
    %c0_59 = arith.constant 0 : index
    %104 = vector.load %arg6[%c0_57, %c0_58, %c0_59] : memref<2x1x16xf32, #tpu.memory_space<vmem>>, vector<1x1x16xf32>
    %105 = vector.shape_cast %104 : vector<1x1x16xf32> to vector<1x16xf32>
    %cst_60 = arith.constant dense<0.000000e+00> : vector<128xf32>
    %106 = vector.multi_reduction <add>, %101, %cst_60 [0] : vector<16x128xf32> to vector<128xf32>
    %107 = vector.shape_cast %106 : vector<128xf32> to vector<1x128xf32>
    %108 = arith.mulf %101, %101 : vector<16x128xf32>
    %cst_61 = arith.constant dense<0.000000e+00> : vector<128xf32>
    %109 = vector.multi_reduction <add>, %108, %cst_61 [0] : vector<16x128xf32> to vector<128xf32>
    %110 = vector.shape_cast %109 : vector<128xf32> to vector<1x128xf32>
    %cst_62 = arith.constant dense<0.000000e+00> : vector<1x16xf32>
    %111 = tpu.matmul %107, %0, %cst_62 {dimension_numbers = #tpu.dot_dimension_numbers<[1], [0], [0], [1], [0, 0, 1, 1], [], []>} : vector<1x128xf32>, vector<128x16xf32>, vector<1x16xf32> -> vector<1x16xf32>
    %cst_63 = arith.constant 1.280000e+02 : f32
    %112 = vector.broadcast %cst_63 : f32 to vector<1x16xf32>
    %113 = arith.divf %111, %112 : vector<1x16xf32>
    %cst_64 = arith.constant dense<0.000000e+00> : vector<1x16xf32>
    %114 = tpu.matmul %110, %0, %cst_64 {dimension_numbers = #tpu.dot_dimension_numbers<[1], [0], [0], [1], [0, 0, 1, 1], [], []>} : vector<1x128xf32>, vector<128x16xf32>, vector<1x16xf32> -> vector<1x16xf32>
    %cst_65 = arith.constant 1.280000e+02 : f32
    %115 = vector.broadcast %cst_65 : f32 to vector<1x16xf32>
    %116 = arith.divf %114, %115 : vector<1x16xf32>
    %117 = arith.mulf %113, %113 : vector<1x16xf32>
    %118 = arith.subf %116, %117 : vector<1x16xf32>
    %cst_66 = arith.constant 9.99999974E-6 : f32
    %119 = vector.broadcast %cst_66 : f32 to vector<1x16xf32>
    %120 = arith.addf %118, %119 : vector<1x16xf32>
    %121 = math.rsqrt %120 : vector<1x16xf32>
    %122 = arith.mulf %103, %121 : vector<1x16xf32>
    %123 = arith.mulf %113, %122 : vector<1x16xf32>
    %124 = arith.subf %105, %123 : vector<1x16xf32>
    %125 = tpu.concatenate %122, %122, %122, %122, %122, %122, %122, %122 in 1 : vector<1x16xf32>, vector<1x16xf32>, vector<1x16xf32>, vector<1x16xf32>, vector<1x16xf32>, vector<1x16xf32>, vector<1x16xf32>, vector<1x16xf32> -> vector<1x128xf32>
    %126 = tpu.concatenate %124, %124, %124, %124, %124, %124, %124, %124 in 1 : vector<1x16xf32>, vector<1x16xf32>, vector<1x16xf32>, vector<1x16xf32>, vector<1x16xf32>, vector<1x16xf32>, vector<1x16xf32>, vector<1x16xf32> -> vector<1x128xf32>
    %127 = vector.broadcast %125 : vector<1x128xf32> to vector<16x128xf32>
    %128 = arith.mulf %101, %127 : vector<16x128xf32>
    %129 = vector.broadcast %126 : vector<1x128xf32> to vector<16x128xf32>
    %130 = arith.addf %128, %129 : vector<16x128xf32>
    %c1_67 = arith.constant 1 : index
    %131 = memref.load %arg13[%c1_67] : memref<3xf32, #tpu.memory_space<smem>>
    %cst_68 = arith.constant 0.000000e+00 : f32
    %132 = vector.broadcast %cst_68 : f32 to vector<16x128xf32>
    %133 = arith.cmpf oge, %130, %132 : vector<16x128xf32>
    %134 = vector.broadcast %131 : f32 to vector<16x128xf32>
    %135 = arith.mulf %134, %130 : vector<16x128xf32>
    %136 = arith.select %133, %130, %135 : vector<16x128xi1>, vector<16x128xf32>
    %137 = vector.shape_cast %136 : vector<16x128xf32> to vector<2x8x128xf32>
    %cst_69 = arith.constant 0.000000e+00 : f32
    %138 = vector.broadcast %cst_69 : f32 to vector<2x1x128xf32>
    %139 = tpu.concatenate %138, %137, %138 in 1 : vector<2x1x128xf32>, vector<2x8x128xf32>, vector<2x1x128xf32> -> vector<2x10x128xf32>
    %cst_70 = arith.constant 0.000000e+00 : f32
    %140 = vector.broadcast %cst_70 : f32 to vector<16x128xf32>
    %141 = vector.extract_strided_slice %139 {offsets = [0, 0, 0], sizes = [2, 8, 128], strides = [1, 1, 1]} : vector<2x10x128xf32> to vector<2x8x128xf32>
    %142 = vector.shape_cast %141 : vector<2x8x128xf32> to vector<16x128xf32>
    %143 = arith.truncf %142 : vector<16x128xf32> to vector<16x128xbf16>
    %c0_71 = arith.constant 0 : index
    %c0_72 = arith.constant 0 : index
    %c0_73 = arith.constant 0 : index
    %c0_74 = arith.constant 0 : index
    %144 = vector.load %arg7[%c0_71, %c0_72, %c0_73, %c0_74] : memref<2x3x128x128xbf16, #tpu.memory_space<vmem>>, vector<1x1x128x128xbf16>
    %145 = vector.shape_cast %144 : vector<1x1x128x128xbf16> to vector<128x128xbf16>
    %cst_75 = arith.constant dense<0.000000e+00> : vector<16x128xf32>
    %146 = tpu.matmul %143, %145, %cst_75 {dimension_numbers = #tpu.dot_dimension_numbers<[1], [0], [0], [1], [0, 0, 1, 1], [], []>} : vector<16x128xbf16>, vector<128x128xbf16>, vector<16x128xf32> -> vector<16x128xf32>
    %147 = arith.addf %140, %146 : vector<16x128xf32>
    %148 = vector.extract_strided_slice %139 {offsets = [0, 1, 0], sizes = [2, 8, 128], strides = [1, 1, 1]} : vector<2x10x128xf32> to vector<2x8x128xf32>
    %149 = vector.shape_cast %148 : vector<2x8x128xf32> to vector<16x128xf32>
    %150 = arith.truncf %149 : vector<16x128xf32> to vector<16x128xbf16>
    %c0_76 = arith.constant 0 : index
    %c1_77 = arith.constant 1 : index
    %c0_78 = arith.constant 0 : index
    %c0_79 = arith.constant 0 : index
    %151 = vector.load %arg7[%c0_76, %c1_77, %c0_78, %c0_79] : memref<2x3x128x128xbf16, #tpu.memory_space<vmem>>, vector<1x1x128x128xbf16>
    %152 = vector.shape_cast %151 : vector<1x1x128x128xbf16> to vector<128x128xbf16>
    %cst_80 = arith.constant dense<0.000000e+00> : vector<16x128xf32>
    %153 = tpu.matmul %150, %152, %cst_80 {dimension_numbers = #tpu.dot_dimension_numbers<[1], [0], [0], [1], [0, 0, 1, 1], [], []>} : vector<16x128xbf16>, vector<128x128xbf16>, vector<16x128xf32> -> vector<16x128xf32>
    %154 = arith.addf %147, %153 : vector<16x128xf32>
    %155 = vector.extract_strided_slice %139 {offsets = [0, 2, 0], sizes = [2, 8, 128], strides = [1, 1, 1]} : vector<2x10x128xf32> to vector<2x8x128xf32>
    %156 = vector.shape_cast %155 : vector<2x8x128xf32> to vector<16x128xf32>
    %157 = arith.truncf %156 : vector<16x128xf32> to vector<16x128xbf16>
    %c0_81 = arith.constant 0 : index
    %c2_82 = arith.constant 2 : index
    %c0_83 = arith.constant 0 : index
    %c0_84 = arith.constant 0 : index
    %158 = vector.load %arg7[%c0_81, %c2_82, %c0_83, %c0_84] : memref<2x3x128x128xbf16, #tpu.memory_space<vmem>>, vector<1x1x128x128xbf16>
    %159 = vector.shape_cast %158 : vector<1x1x128x128xbf16> to vector<128x128xbf16>
    %cst_85 = arith.constant dense<0.000000e+00> : vector<16x128xf32>
    %160 = tpu.matmul %157, %159, %cst_85 {dimension_numbers = #tpu.dot_dimension_numbers<[1], [0], [0], [1], [0, 0, 1, 1], [], []>} : vector<16x128xbf16>, vector<128x128xbf16>, vector<16x128xf32> -> vector<16x128xf32>
    %161 = arith.addf %154, %160 : vector<16x128xf32>
    %c0_86 = arith.constant 0 : index
    %c0_87 = arith.constant 0 : index
    %c0_88 = arith.constant 0 : index
    %162 = vector.load %arg8[%c0_86, %c0_87, %c0_88] : memref<2x1x16xf32, #tpu.memory_space<vmem>>, vector<1x1x16xf32>
    %163 = vector.shape_cast %162 : vector<1x1x16xf32> to vector<1x16xf32>
    %c0_89 = arith.constant 0 : index
    %c0_90 = arith.constant 0 : index
    %c0_91 = arith.constant 0 : index
    %164 = vector.load %arg9[%c0_89, %c0_90, %c0_91] : memref<2x1x16xf32, #tpu.memory_space<vmem>>, vector<1x1x16xf32>
    %165 = vector.shape_cast %164 : vector<1x1x16xf32> to vector<1x16xf32>
    %cst_92 = arith.constant dense<0.000000e+00> : vector<128xf32>
    %166 = vector.multi_reduction <add>, %161, %cst_92 [0] : vector<16x128xf32> to vector<128xf32>
    %167 = vector.shape_cast %166 : vector<128xf32> to vector<1x128xf32>
    %168 = arith.mulf %161, %161 : vector<16x128xf32>
    %cst_93 = arith.constant dense<0.000000e+00> : vector<128xf32>
    %169 = vector.multi_reduction <add>, %168, %cst_93 [0] : vector<16x128xf32> to vector<128xf32>
    %170 = vector.shape_cast %169 : vector<128xf32> to vector<1x128xf32>
    %cst_94 = arith.constant dense<0.000000e+00> : vector<1x16xf32>
    %171 = tpu.matmul %167, %0, %cst_94 {dimension_numbers = #tpu.dot_dimension_numbers<[1], [0], [0], [1], [0, 0, 1, 1], [], []>} : vector<1x128xf32>, vector<128x16xf32>, vector<1x16xf32> -> vector<1x16xf32>
    %cst_95 = arith.constant 1.280000e+02 : f32
    %172 = vector.broadcast %cst_95 : f32 to vector<1x16xf32>
    %173 = arith.divf %171, %172 : vector<1x16xf32>
    %cst_96 = arith.constant dense<0.000000e+00> : vector<1x16xf32>
    %174 = tpu.matmul %170, %0, %cst_96 {dimension_numbers = #tpu.dot_dimension_numbers<[1], [0], [0], [1], [0, 0, 1, 1], [], []>} : vector<1x128xf32>, vector<128x16xf32>, vector<1x16xf32> -> vector<1x16xf32>
    %cst_97 = arith.constant 1.280000e+02 : f32
    %175 = vector.broadcast %cst_97 : f32 to vector<1x16xf32>
    %176 = arith.divf %174, %175 : vector<1x16xf32>
    %177 = arith.mulf %173, %173 : vector<1x16xf32>
    %178 = arith.subf %176, %177 : vector<1x16xf32>
    %cst_98 = arith.constant 9.99999974E-6 : f32
    %179 = vector.broadcast %cst_98 : f32 to vector<1x16xf32>
    %180 = arith.addf %178, %179 : vector<1x16xf32>
    %181 = math.rsqrt %180 : vector<1x16xf32>
    %182 = arith.mulf %163, %181 : vector<1x16xf32>
    %183 = arith.mulf %173, %182 : vector<1x16xf32>
    %184 = arith.subf %165, %183 : vector<1x16xf32>
    %185 = tpu.concatenate %182, %182, %182, %182, %182, %182, %182, %182 in 1 : vector<1x16xf32>, vector<1x16xf32>, vector<1x16xf32>, vector<1x16xf32>, vector<1x16xf32>, vector<1x16xf32>, vector<1x16xf32>, vector<1x16xf32> -> vector<1x128xf32>
    %186 = tpu.concatenate %184, %184, %184, %184, %184, %184, %184, %184 in 1 : vector<1x16xf32>, vector<1x16xf32>, vector<1x16xf32>, vector<1x16xf32>, vector<1x16xf32>, vector<1x16xf32>, vector<1x16xf32>, vector<1x16xf32> -> vector<1x128xf32>
    %187 = vector.broadcast %185 : vector<1x128xf32> to vector<16x128xf32>
    %188 = arith.mulf %161, %187 : vector<16x128xf32>
    %189 = vector.broadcast %186 : vector<1x128xf32> to vector<16x128xf32>
    %190 = arith.addf %188, %189 : vector<16x128xf32>
    %191 = arith.addf %76, %190 : vector<16x128xf32>
    %192 = vector.shape_cast %191 : vector<16x128xf32> to vector<2x8x128xf32>
    %cst_99 = arith.constant 0.000000e+00 : f32
    %193 = vector.broadcast %cst_99 : f32 to vector<2x1x128xf32>
    %194 = tpu.concatenate %193, %192, %193 in 1 : vector<2x1x128xf32>, vector<2x8x128xf32>, vector<2x1x128xf32> -> vector<2x10x128xf32>
    %cst_100 = arith.constant 0.000000e+00 : f32
    %195 = vector.broadcast %cst_100 : f32 to vector<16x128xf32>
    %196 = vector.extract_strided_slice %194 {offsets = [0, 0, 0], sizes = [2, 8, 128], strides = [1, 1, 1]} : vector<2x10x128xf32> to vector<2x8x128xf32>
    %197 = vector.shape_cast %196 : vector<2x8x128xf32> to vector<16x128xf32>
    %198 = arith.truncf %197 : vector<16x128xf32> to vector<16x128xbf16>
    %c1_101 = arith.constant 1 : index
    %c0_102 = arith.constant 0 : index
    %c0_103 = arith.constant 0 : index
    %c0_104 = arith.constant 0 : index
    %199 = vector.load %arg4[%c1_101, %c0_102, %c0_103, %c0_104] : memref<2x3x128x128xbf16, #tpu.memory_space<vmem>>, vector<1x1x128x128xbf16>
    %200 = vector.shape_cast %199 : vector<1x1x128x128xbf16> to vector<128x128xbf16>
    %cst_105 = arith.constant dense<0.000000e+00> : vector<16x128xf32>
    %201 = tpu.matmul %198, %200, %cst_105 {dimension_numbers = #tpu.dot_dimension_numbers<[1], [0], [0], [1], [0, 0, 1, 1], [], []>} : vector<16x128xbf16>, vector<128x128xbf16>, vector<16x128xf32> -> vector<16x128xf32>
    %202 = arith.addf %195, %201 : vector<16x128xf32>
    %203 = vector.extract_strided_slice %194 {offsets = [0, 1, 0], sizes = [2, 8, 128], strides = [1, 1, 1]} : vector<2x10x128xf32> to vector<2x8x128xf32>
    %204 = vector.shape_cast %203 : vector<2x8x128xf32> to vector<16x128xf32>
    %205 = arith.truncf %204 : vector<16x128xf32> to vector<16x128xbf16>
    %c1_106 = arith.constant 1 : index
    %c1_107 = arith.constant 1 : index
    %c0_108 = arith.constant 0 : index
    %c0_109 = arith.constant 0 : index
    %206 = vector.load %arg4[%c1_106, %c1_107, %c0_108, %c0_109] : memref<2x3x128x128xbf16, #tpu.memory_space<vmem>>, vector<1x1x128x128xbf16>
    %207 = vector.shape_cast %206 : vector<1x1x128x128xbf16> to vector<128x128xbf16>
    %cst_110 = arith.constant dense<0.000000e+00> : vector<16x128xf32>
    %208 = tpu.matmul %205, %207, %cst_110 {dimension_numbers = #tpu.dot_dimension_numbers<[1], [0], [0], [1], [0, 0, 1, 1], [], []>} : vector<16x128xbf16>, vector<128x128xbf16>, vector<16x128xf32> -> vector<16x128xf32>
    %209 = arith.addf %202, %208 : vector<16x128xf32>
    %210 = vector.extract_strided_slice %194 {offsets = [0, 2, 0], sizes = [2, 8, 128], strides = [1, 1, 1]} : vector<2x10x128xf32> to vector<2x8x128xf32>
    %211 = vector.shape_cast %210 : vector<2x8x128xf32> to vector<16x128xf32>
    %212 = arith.truncf %211 : vector<16x128xf32> to vector<16x128xbf16>
    %c1_111 = arith.constant 1 : index
    %c2_112 = arith.constant 2 : index
    %c0_113 = arith.constant 0 : index
    %c0_114 = arith.constant 0 : index
    %213 = vector.load %arg4[%c1_111, %c2_112, %c0_113, %c0_114] : memref<2x3x128x128xbf16, #tpu.memory_space<vmem>>, vector<1x1x128x128xbf16>
    %214 = vector.shape_cast %213 : vector<1x1x128x128xbf16> to vector<128x128xbf16>
    %cst_115 = arith.constant dense<0.000000e+00> : vector<16x128xf32>
    %215 = tpu.matmul %212, %214, %cst_115 {dimension_numbers = #tpu.dot_dimension_numbers<[1], [0], [0], [1], [0, 0, 1, 1], [], []>} : vector<16x128xbf16>, vector<128x128xbf16>, vector<16x128xf32> -> vector<16x128xf32>
    %216 = arith.addf %209, %215 : vector<16x128xf32>
    %c1_116 = arith.constant 1 : index
    %c0_117 = arith.constant 0 : index
    %c0_118 = arith.constant 0 : index
    %217 = vector.load %arg5[%c1_116, %c0_117, %c0_118] : memref<2x1x16xf32, #tpu.memory_space<vmem>>, vector<1x1x16xf32>
    %218 = vector.shape_cast %217 : vector<1x1x16xf32> to vector<1x16xf32>
    %c1_119 = arith.constant 1 : index
    %c0_120 = arith.constant 0 : index
    %c0_121 = arith.constant 0 : index
    %219 = vector.load %arg6[%c1_119, %c0_120, %c0_121] : memref<2x1x16xf32, #tpu.memory_space<vmem>>, vector<1x1x16xf32>
    %220 = vector.shape_cast %219 : vector<1x1x16xf32> to vector<1x16xf32>
    %cst_122 = arith.constant dense<0.000000e+00> : vector<128xf32>
    %221 = vector.multi_reduction <add>, %216, %cst_122 [0] : vector<16x128xf32> to vector<128xf32>
    %222 = vector.shape_cast %221 : vector<128xf32> to vector<1x128xf32>
    %223 = arith.mulf %216, %216 : vector<16x128xf32>
    %cst_123 = arith.constant dense<0.000000e+00> : vector<128xf32>
    %224 = vector.multi_reduction <add>, %223, %cst_123 [0] : vector<16x128xf32> to vector<128xf32>
    %225 = vector.shape_cast %224 : vector<128xf32> to vector<1x128xf32>
    %cst_124 = arith.constant dense<0.000000e+00> : vector<1x16xf32>
    %226 = tpu.matmul %222, %0, %cst_124 {dimension_numbers = #tpu.dot_dimension_numbers<[1], [0], [0], [1], [0, 0, 1, 1], [], []>} : vector<1x128xf32>, vector<128x16xf32>, vector<1x16xf32> -> vector<1x16xf32>
    %cst_125 = arith.constant 1.280000e+02 : f32
    %227 = vector.broadcast %cst_125 : f32 to vector<1x16xf32>
    %228 = arith.divf %226, %227 : vector<1x16xf32>
    %cst_126 = arith.constant dense<0.000000e+00> : vector<1x16xf32>
    %229 = tpu.matmul %225, %0, %cst_126 {dimension_numbers = #tpu.dot_dimension_numbers<[1], [0], [0], [1], [0, 0, 1, 1], [], []>} : vector<1x128xf32>, vector<128x16xf32>, vector<1x16xf32> -> vector<1x16xf32>
    %cst_127 = arith.constant 1.280000e+02 : f32
    %230 = vector.broadcast %cst_127 : f32 to vector<1x16xf32>
    %231 = arith.divf %229, %230 : vector<1x16xf32>
    %232 = arith.mulf %228, %228 : vector<1x16xf32>
    %233 = arith.subf %231, %232 : vector<1x16xf32>
    %cst_128 = arith.constant 9.99999974E-6 : f32
    %234 = vector.broadcast %cst_128 : f32 to vector<1x16xf32>
    %235 = arith.addf %233, %234 : vector<1x16xf32>
    %236 = math.rsqrt %235 : vector<1x16xf32>
    %237 = arith.mulf %218, %236 : vector<1x16xf32>
    %238 = arith.mulf %228, %237 : vector<1x16xf32>
    %239 = arith.subf %220, %238 : vector<1x16xf32>
    %240 = tpu.concatenate %237, %237, %237, %237, %237, %237, %237, %237 in 1 : vector<1x16xf32>, vector<1x16xf32>, vector<1x16xf32>, vector<1x16xf32>, vector<1x16xf32>, vector<1x16xf32>, vector<1x16xf32>, vector<1x16xf32> -> vector<1x128xf32>
    %241 = tpu.concatenate %239, %239, %239, %239, %239, %239, %239, %239 in 1 : vector<1x16xf32>, vector<1x16xf32>, vector<1x16xf32>, vector<1x16xf32>, vector<1x16xf32>, vector<1x16xf32>, vector<1x16xf32>, vector<1x16xf32> -> vector<1x128xf32>
    %242 = vector.broadcast %240 : vector<1x128xf32> to vector<16x128xf32>
    %243 = arith.mulf %216, %242 : vector<16x128xf32>
    %244 = vector.broadcast %241 : vector<1x128xf32> to vector<16x128xf32>
    %245 = arith.addf %243, %244 : vector<16x128xf32>
    %c2_129 = arith.constant 2 : index
    %246 = memref.load %arg13[%c2_129] : memref<3xf32, #tpu.memory_space<smem>>
    %cst_130 = arith.constant 0.000000e+00 : f32
    %247 = vector.broadcast %cst_130 : f32 to vector<16x128xf32>
    %248 = arith.cmpf oge, %245, %247 : vector<16x128xf32>
    %249 = vector.broadcast %246 : f32 to vector<16x128xf32>
    %250 = arith.mulf %249, %245 : vector<16x128xf32>
    %251 = arith.select %248, %245, %250 : vector<16x128xi1>, vector<16x128xf32>
    %252 = vector.shape_cast %251 : vector<16x128xf32> to vector<2x8x128xf32>
    %cst_131 = arith.constant 0.000000e+00 : f32
    %253 = vector.broadcast %cst_131 : f32 to vector<2x1x128xf32>
    %254 = tpu.concatenate %253, %252, %253 in 1 : vector<2x1x128xf32>, vector<2x8x128xf32>, vector<2x1x128xf32> -> vector<2x10x128xf32>
    %cst_132 = arith.constant 0.000000e+00 : f32
    %255 = vector.broadcast %cst_132 : f32 to vector<16x128xf32>
    %256 = vector.extract_strided_slice %254 {offsets = [0, 0, 0], sizes = [2, 8, 128], strides = [1, 1, 1]} : vector<2x10x128xf32> to vector<2x8x128xf32>
    %257 = vector.shape_cast %256 : vector<2x8x128xf32> to vector<16x128xf32>
    %258 = arith.truncf %257 : vector<16x128xf32> to vector<16x128xbf16>
    %c1_133 = arith.constant 1 : index
    %c0_134 = arith.constant 0 : index
    %c0_135 = arith.constant 0 : index
    %c0_136 = arith.constant 0 : index
    %259 = vector.load %arg7[%c1_133, %c0_134, %c0_135, %c0_136] : memref<2x3x128x128xbf16, #tpu.memory_space<vmem>>, vector<1x1x128x128xbf16>
    %260 = vector.shape_cast %259 : vector<1x1x128x128xbf16> to vector<128x128xbf16>
    %cst_137 = arith.constant dense<0.000000e+00> : vector<16x128xf32>
    %261 = tpu.matmul %258, %260, %cst_137 {dimension_numbers = #tpu.dot_dimension_numbers<[1], [0], [0], [1], [0, 0, 1, 1], [], []>} : vector<16x128xbf16>, vector<128x128xbf16>, vector<16x128xf32> -> vector<16x128xf32>
    %262 = arith.addf %255, %261 : vector<16x128xf32>
    %263 = vector.extract_strided_slice %254 {offsets = [0, 1, 0], sizes = [2, 8, 128], strides = [1, 1, 1]} : vector<2x10x128xf32> to vector<2x8x128xf32>
    %264 = vector.shape_cast %263 : vector<2x8x128xf32> to vector<16x128xf32>
    %265 = arith.truncf %264 : vector<16x128xf32> to vector<16x128xbf16>
    %c1_138 = arith.constant 1 : index
    %c1_139 = arith.constant 1 : index
    %c0_140 = arith.constant 0 : index
    %c0_141 = arith.constant 0 : index
    %266 = vector.load %arg7[%c1_138, %c1_139, %c0_140, %c0_141] : memref<2x3x128x128xbf16, #tpu.memory_space<vmem>>, vector<1x1x128x128xbf16>
    %267 = vector.shape_cast %266 : vector<1x1x128x128xbf16> to vector<128x128xbf16>
    %cst_142 = arith.constant dense<0.000000e+00> : vector<16x128xf32>
    %268 = tpu.matmul %265, %267, %cst_142 {dimension_numbers = #tpu.dot_dimension_numbers<[1], [0], [0], [1], [0, 0, 1, 1], [], []>} : vector<16x128xbf16>, vector<128x128xbf16>, vector<16x128xf32> -> vector<16x128xf32>
    %269 = arith.addf %262, %268 : vector<16x128xf32>
    %270 = vector.extract_strided_slice %254 {offsets = [0, 2, 0], sizes = [2, 8, 128], strides = [1, 1, 1]} : vector<2x10x128xf32> to vector<2x8x128xf32>
    %271 = vector.shape_cast %270 : vector<2x8x128xf32> to vector<16x128xf32>
    %272 = arith.truncf %271 : vector<16x128xf32> to vector<16x128xbf16>
    %c1_143 = arith.constant 1 : index
    %c2_144 = arith.constant 2 : index
    %c0_145 = arith.constant 0 : index
    %c0_146 = arith.constant 0 : index
    %273 = vector.load %arg7[%c1_143, %c2_144, %c0_145, %c0_146] : memref<2x3x128x128xbf16, #tpu.memory_space<vmem>>, vector<1x1x128x128xbf16>
    %274 = vector.shape_cast %273 : vector<1x1x128x128xbf16> to vector<128x128xbf16>
    %cst_147 = arith.constant dense<0.000000e+00> : vector<16x128xf32>
    %275 = tpu.matmul %272, %274, %cst_147 {dimension_numbers = #tpu.dot_dimension_numbers<[1], [0], [0], [1], [0, 0, 1, 1], [], []>} : vector<16x128xbf16>, vector<128x128xbf16>, vector<16x128xf32> -> vector<16x128xf32>
    %276 = arith.addf %269, %275 : vector<16x128xf32>
    %c1_148 = arith.constant 1 : index
    %c0_149 = arith.constant 0 : index
    %c0_150 = arith.constant 0 : index
    %277 = vector.load %arg8[%c1_148, %c0_149, %c0_150] : memref<2x1x16xf32, #tpu.memory_space<vmem>>, vector<1x1x16xf32>
    %278 = vector.shape_cast %277 : vector<1x1x16xf32> to vector<1x16xf32>
    %c1_151 = arith.constant 1 : index
    %c0_152 = arith.constant 0 : index
    %c0_153 = arith.constant 0 : index
    %279 = vector.load %arg9[%c1_151, %c0_152, %c0_153] : memref<2x1x16xf32, #tpu.memory_space<vmem>>, vector<1x1x16xf32>
    %280 = vector.shape_cast %279 : vector<1x1x16xf32> to vector<1x16xf32>
    %cst_154 = arith.constant dense<0.000000e+00> : vector<128xf32>
    %281 = vector.multi_reduction <add>, %276, %cst_154 [0] : vector<16x128xf32> to vector<128xf32>
    %282 = vector.shape_cast %281 : vector<128xf32> to vector<1x128xf32>
    %283 = arith.mulf %276, %276 : vector<16x128xf32>
    %cst_155 = arith.constant dense<0.000000e+00> : vector<128xf32>
    %284 = vector.multi_reduction <add>, %283, %cst_155 [0] : vector<16x128xf32> to vector<128xf32>
    %285 = vector.shape_cast %284 : vector<128xf32> to vector<1x128xf32>
    %cst_156 = arith.constant dense<0.000000e+00> : vector<1x16xf32>
    %286 = tpu.matmul %282, %0, %cst_156 {dimension_numbers = #tpu.dot_dimension_numbers<[1], [0], [0], [1], [0, 0, 1, 1], [], []>} : vector<1x128xf32>, vector<128x16xf32>, vector<1x16xf32> -> vector<1x16xf32>
    %cst_157 = arith.constant 1.280000e+02 : f32
    %287 = vector.broadcast %cst_157 : f32 to vector<1x16xf32>
    %288 = arith.divf %286, %287 : vector<1x16xf32>
    %cst_158 = arith.constant dense<0.000000e+00> : vector<1x16xf32>
    %289 = tpu.matmul %285, %0, %cst_158 {dimension_numbers = #tpu.dot_dimension_numbers<[1], [0], [0], [1], [0, 0, 1, 1], [], []>} : vector<1x128xf32>, vector<128x16xf32>, vector<1x16xf32> -> vector<1x16xf32>
    %cst_159 = arith.constant 1.280000e+02 : f32
    %290 = vector.broadcast %cst_159 : f32 to vector<1x16xf32>
    %291 = arith.divf %289, %290 : vector<1x16xf32>
    %292 = arith.mulf %288, %288 : vector<1x16xf32>
    %293 = arith.subf %291, %292 : vector<1x16xf32>
    %cst_160 = arith.constant 9.99999974E-6 : f32
    %294 = vector.broadcast %cst_160 : f32 to vector<1x16xf32>
    %295 = arith.addf %293, %294 : vector<1x16xf32>
    %296 = math.rsqrt %295 : vector<1x16xf32>
    %297 = arith.mulf %278, %296 : vector<1x16xf32>
    %298 = arith.mulf %288, %297 : vector<1x16xf32>
    %299 = arith.subf %280, %298 : vector<1x16xf32>
    %300 = tpu.concatenate %297, %297, %297, %297, %297, %297, %297, %297 in 1 : vector<1x16xf32>, vector<1x16xf32>, vector<1x16xf32>, vector<1x16xf32>, vector<1x16xf32>, vector<1x16xf32>, vector<1x16xf32>, vector<1x16xf32> -> vector<1x128xf32>
    %301 = tpu.concatenate %299, %299, %299, %299, %299, %299, %299, %299 in 1 : vector<1x16xf32>, vector<1x16xf32>, vector<1x16xf32>, vector<1x16xf32>, vector<1x16xf32>, vector<1x16xf32>, vector<1x16xf32>, vector<1x16xf32> -> vector<1x128xf32>
    %302 = vector.broadcast %300 : vector<1x128xf32> to vector<16x128xf32>
    %303 = arith.mulf %276, %302 : vector<16x128xf32>
    %304 = vector.broadcast %301 : vector<1x128xf32> to vector<16x128xf32>
    %305 = arith.addf %303, %304 : vector<16x128xf32>
    %306 = arith.addf %191, %305 : vector<16x128xf32>
    %307 = vector.shape_cast %306 : vector<16x128xf32> to vector<2x8x128xf32>
    %cst_161 = arith.constant 0.000000e+00 : f32
    %308 = vector.broadcast %cst_161 : f32 to vector<2x1x128xf32>
    %309 = tpu.concatenate %308, %307, %308 in 1 : vector<2x1x128xf32>, vector<2x8x128xf32>, vector<2x1x128xf32> -> vector<2x10x128xf32>
    %cst_162 = arith.constant 0.000000e+00 : f32
    %310 = vector.broadcast %cst_162 : f32 to vector<16x128xf32>
    %311 = vector.extract_strided_slice %309 {offsets = [0, 0, 0], sizes = [2, 8, 128], strides = [1, 1, 1]} : vector<2x10x128xf32> to vector<2x8x128xf32>
    %312 = vector.shape_cast %311 : vector<2x8x128xf32> to vector<16x128xf32>
    %313 = arith.truncf %312 : vector<16x128xf32> to vector<16x128xbf16>
    %c0_163 = arith.constant 0 : index
    %c0_164 = arith.constant 0 : index
    %c0_165 = arith.constant 0 : index
    %314 = vector.load %arg10[%c0_163, %c0_164, %c0_165] : memref<3x128x128xbf16, #tpu.memory_space<vmem>>, vector<1x128x128xbf16>
    %315 = vector.shape_cast %314 : vector<1x128x128xbf16> to vector<128x128xbf16>
    %cst_166 = arith.constant dense<0.000000e+00> : vector<16x128xf32>
    %316 = tpu.matmul %313, %315, %cst_166 {dimension_numbers = #tpu.dot_dimension_numbers<[1], [0], [0], [1], [0, 0, 1, 1], [], []>} : vector<16x128xbf16>, vector<128x128xbf16>, vector<16x128xf32> -> vector<16x128xf32>
    %317 = arith.addf %310, %316 : vector<16x128xf32>
    %318 = vector.extract_strided_slice %309 {offsets = [0, 1, 0], sizes = [2, 8, 128], strides = [1, 1, 1]} : vector<2x10x128xf32> to vector<2x8x128xf32>
    %319 = vector.shape_cast %318 : vector<2x8x128xf32> to vector<16x128xf32>
    %320 = arith.truncf %319 : vector<16x128xf32> to vector<16x128xbf16>
    %c1_167 = arith.constant 1 : index
    %c0_168 = arith.constant 0 : index
    %c0_169 = arith.constant 0 : index
    %321 = vector.load %arg10[%c1_167, %c0_168, %c0_169] : memref<3x128x128xbf16, #tpu.memory_space<vmem>>, vector<1x128x128xbf16>
    %322 = vector.shape_cast %321 : vector<1x128x128xbf16> to vector<128x128xbf16>
    %cst_170 = arith.constant dense<0.000000e+00> : vector<16x128xf32>
    %323 = tpu.matmul %320, %322, %cst_170 {dimension_numbers = #tpu.dot_dimension_numbers<[1], [0], [0], [1], [0, 0, 1, 1], [], []>} : vector<16x128xbf16>, vector<128x128xbf16>, vector<16x128xf32> -> vector<16x128xf32>
    %324 = arith.addf %317, %323 : vector<16x128xf32>
    %325 = vector.extract_strided_slice %309 {offsets = [0, 2, 0], sizes = [2, 8, 128], strides = [1, 1, 1]} : vector<2x10x128xf32> to vector<2x8x128xf32>
    %326 = vector.shape_cast %325 : vector<2x8x128xf32> to vector<16x128xf32>
    %327 = arith.truncf %326 : vector<16x128xf32> to vector<16x128xbf16>
    %c2_171 = arith.constant 2 : index
    %c0_172 = arith.constant 0 : index
    %c0_173 = arith.constant 0 : index
    %328 = vector.load %arg10[%c2_171, %c0_172, %c0_173] : memref<3x128x128xbf16, #tpu.memory_space<vmem>>, vector<1x128x128xbf16>
    %329 = vector.shape_cast %328 : vector<1x128x128xbf16> to vector<128x128xbf16>
    %cst_174 = arith.constant dense<0.000000e+00> : vector<16x128xf32>
    %330 = tpu.matmul %327, %329, %cst_174 {dimension_numbers = #tpu.dot_dimension_numbers<[1], [0], [0], [1], [0, 0, 1, 1], [], []>} : vector<16x128xbf16>, vector<128x128xbf16>, vector<16x128xf32> -> vector<16x128xf32>
    %331 = arith.addf %324, %330 : vector<16x128xf32>
    %c0_175 = arith.constant 0 : index
    %c0_176 = arith.constant 0 : index
    %332 = vector.load %arg11[%c0_175, %c0_176] : memref<1x16xf32, #tpu.memory_space<vmem>>, vector<1x16xf32>
    %c0_177 = arith.constant 0 : index
    %c0_178 = arith.constant 0 : index
    %333 = vector.load %arg12[%c0_177, %c0_178] : memref<1x16xf32, #tpu.memory_space<vmem>>, vector<1x16xf32>
    %cst_179 = arith.constant dense<0.000000e+00> : vector<128xf32>
    %334 = vector.multi_reduction <add>, %331, %cst_179 [0] : vector<16x128xf32> to vector<128xf32>
    %335 = vector.shape_cast %334 : vector<128xf32> to vector<1x128xf32>
    %336 = arith.mulf %331, %331 : vector<16x128xf32>
    %cst_180 = arith.constant dense<0.000000e+00> : vector<128xf32>
    %337 = vector.multi_reduction <add>, %336, %cst_180 [0] : vector<16x128xf32> to vector<128xf32>
    %338 = vector.shape_cast %337 : vector<128xf32> to vector<1x128xf32>
    %cst_181 = arith.constant dense<0.000000e+00> : vector<1x16xf32>
    %339 = tpu.matmul %335, %0, %cst_181 {dimension_numbers = #tpu.dot_dimension_numbers<[1], [0], [0], [1], [0, 0, 1, 1], [], []>} : vector<1x128xf32>, vector<128x16xf32>, vector<1x16xf32> -> vector<1x16xf32>
    %cst_182 = arith.constant 1.280000e+02 : f32
    %340 = vector.broadcast %cst_182 : f32 to vector<1x16xf32>
    %341 = arith.divf %339, %340 : vector<1x16xf32>
    %cst_183 = arith.constant dense<0.000000e+00> : vector<1x16xf32>
    %342 = tpu.matmul %338, %0, %cst_183 {dimension_numbers = #tpu.dot_dimension_numbers<[1], [0], [0], [1], [0, 0, 1, 1], [], []>} : vector<1x128xf32>, vector<128x16xf32>, vector<1x16xf32> -> vector<1x16xf32>
    %cst_184 = arith.constant 1.280000e+02 : f32
    %343 = vector.broadcast %cst_184 : f32 to vector<1x16xf32>
    %344 = arith.divf %342, %343 : vector<1x16xf32>
    %345 = arith.mulf %341, %341 : vector<1x16xf32>
    %346 = arith.subf %344, %345 : vector<1x16xf32>
    %cst_185 = arith.constant 9.99999974E-6 : f32
    %347 = vector.broadcast %cst_185 : f32 to vector<1x16xf32>
    %348 = arith.addf %346, %347 : vector<1x16xf32>
    %349 = math.rsqrt %348 : vector<1x16xf32>
    %350 = arith.mulf %332, %349 : vector<1x16xf32>
    %351 = arith.mulf %341, %350 : vector<1x16xf32>
    %352 = arith.subf %333, %351 : vector<1x16xf32>
    %353 = tpu.concatenate %350, %350, %350, %350, %350, %350, %350, %350 in 1 : vector<1x16xf32>, vector<1x16xf32>, vector<1x16xf32>, vector<1x16xf32>, vector<1x16xf32>, vector<1x16xf32>, vector<1x16xf32>, vector<1x16xf32> -> vector<1x128xf32>
    %354 = tpu.concatenate %352, %352, %352, %352, %352, %352, %352, %352 in 1 : vector<1x16xf32>, vector<1x16xf32>, vector<1x16xf32>, vector<1x16xf32>, vector<1x16xf32>, vector<1x16xf32>, vector<1x16xf32>, vector<1x16xf32> -> vector<1x128xf32>
    %355 = vector.broadcast %353 : vector<1x128xf32> to vector<16x128xf32>
    %356 = arith.mulf %331, %355 : vector<16x128xf32>
    %357 = vector.broadcast %354 : vector<1x128xf32> to vector<16x128xf32>
    %358 = arith.addf %356, %357 : vector<16x128xf32>
    %359 = arith.addf %358, %76 : vector<16x128xf32>
    %c0_186 = arith.constant 0 : index
    %c0_187 = arith.constant 0 : index
    %360 = vector.load %arg14[%c0_186, %c0_187] : memref<16x128xf32, #tpu.memory_space<vmem>>, vector<16x128xf32>
    tpu.vector_store %arg14[%c0_186, %c0_187], %359 {strides = array<i32>} : memref<16x128xf32, #tpu.memory_space<vmem>>, vector<16x128xf32>,
    return
  }
}

module attributes {stable_mosaic.version = 11 : i64} {
  func.func @_conv_act_kernel(%arg0: i32, %arg1: memref<1xf32, #tpu.memory_space<smem>>, %arg2: memref<1x8x128xf32, #tpu.memory_space<vmem>>, %arg3: memref<3x128x512xbf16, #tpu.memory_space<vmem>>, %arg4: memref<1x512xf32, #tpu.memory_space<vmem>>, %arg5: memref<8x512xf32, #tpu.memory_space<vmem>>) attributes {dimension_semantics = [#tpu.dimension_semantics<parallel>], iteration_bounds = array<i64: 2>, scalar_prefetch = 1 : i64, scratch_operands = 0 : i64, tpu.core_type = #tpu.core_type<tc>, window_params = [{transform_indices = @transform_0, window_bounds = array<i64: 1, 8, 128>}, {pipeline_mode = #tpu.pipeline_mode<synchronous>, transform_indices = @transform_1, window_bounds = array<i64: 3, 128, 512>}, {pipeline_mode = #tpu.pipeline_mode<synchronous>, transform_indices = @transform_2, window_bounds = array<i64: 1, 512>}, {transform_indices = @transform_3, window_bounds = array<i64: 8, 512>}]} {
    %c0 = arith.constant 0 : index
    %c0_0 = arith.constant 0 : index
    %c0_1 = arith.constant 0 : index
    %0 = vector.load %arg2[%c0, %c0_0, %c0_1] : memref<1x8x128xf32, #tpu.memory_space<vmem>>, vector<1x8x128xf32>
    %cst = arith.constant 0.000000e+00 : f32
    %1 = vector.broadcast %cst : f32 to vector<1x1x128xf32>
    %2 = tpu.concatenate %1, %0, %1 in 1 : vector<1x1x128xf32>, vector<1x8x128xf32>, vector<1x1x128xf32> -> vector<1x10x128xf32>
    %cst_2 = arith.constant 0.000000e+00 : f32
    %3 = vector.broadcast %cst_2 : f32 to vector<8x512xf32>
    %4 = vector.extract_strided_slice %2 {offsets = [0, 0, 0], sizes = [1, 8, 128], strides = [1, 1, 1]} : vector<1x10x128xf32> to vector<1x8x128xf32>
    %5 = vector.shape_cast %4 : vector<1x8x128xf32> to vector<8x128xf32>
    %6 = arith.truncf %5 : vector<8x128xf32> to vector<8x128xbf16>
    %c0_3 = arith.constant 0 : index
    %c0_4 = arith.constant 0 : index
    %c0_5 = arith.constant 0 : index
    %7 = vector.load %arg3[%c0_3, %c0_4, %c0_5] : memref<3x128x512xbf16, #tpu.memory_space<vmem>>, vector<1x128x512xbf16>
    %8 = vector.shape_cast %7 : vector<1x128x512xbf16> to vector<128x512xbf16>
    %cst_6 = arith.constant dense<0.000000e+00> : vector<8x512xf32>
    %9 = tpu.matmul %6, %8, %cst_6 {dimension_numbers = #tpu.dot_dimension_numbers<[1], [0], [0], [1], [0, 0, 1, 1], [], []>} : vector<8x128xbf16>, vector<128x512xbf16>, vector<8x512xf32> -> vector<8x512xf32>
    %10 = arith.addf %3, %9 : vector<8x512xf32>
    %11 = vector.extract_strided_slice %2 {offsets = [0, 1, 0], sizes = [1, 8, 128], strides = [1, 1, 1]} : vector<1x10x128xf32> to vector<1x8x128xf32>
    %12 = vector.shape_cast %11 : vector<1x8x128xf32> to vector<8x128xf32>
    %13 = arith.truncf %12 : vector<8x128xf32> to vector<8x128xbf16>
    %c1 = arith.constant 1 : index
    %c0_7 = arith.constant 0 : index
    %c0_8 = arith.constant 0 : index
    %14 = vector.load %arg3[%c1, %c0_7, %c0_8] : memref<3x128x512xbf16, #tpu.memory_space<vmem>>, vector<1x128x512xbf16>
    %15 = vector.shape_cast %14 : vector<1x128x512xbf16> to vector<128x512xbf16>
    %cst_9 = arith.constant dense<0.000000e+00> : vector<8x512xf32>
    %16 = tpu.matmul %13, %15, %cst_9 {dimension_numbers = #tpu.dot_dimension_numbers<[1], [0], [0], [1], [0, 0, 1, 1], [], []>} : vector<8x128xbf16>, vector<128x512xbf16>, vector<8x512xf32> -> vector<8x512xf32>
    %17 = arith.addf %10, %16 : vector<8x512xf32>
    %18 = vector.extract_strided_slice %2 {offsets = [0, 2, 0], sizes = [1, 8, 128], strides = [1, 1, 1]} : vector<1x10x128xf32> to vector<1x8x128xf32>
    %19 = vector.shape_cast %18 : vector<1x8x128xf32> to vector<8x128xf32>
    %20 = arith.truncf %19 : vector<8x128xf32> to vector<8x128xbf16>
    %c2 = arith.constant 2 : index
    %c0_10 = arith.constant 0 : index
    %c0_11 = arith.constant 0 : index
    %21 = vector.load %arg3[%c2, %c0_10, %c0_11] : memref<3x128x512xbf16, #tpu.memory_space<vmem>>, vector<1x128x512xbf16>
    %22 = vector.shape_cast %21 : vector<1x128x512xbf16> to vector<128x512xbf16>
    %cst_12 = arith.constant dense<0.000000e+00> : vector<8x512xf32>
    %23 = tpu.matmul %20, %22, %cst_12 {dimension_numbers = #tpu.dot_dimension_numbers<[1], [0], [0], [1], [0, 0, 1, 1], [], []>} : vector<8x128xbf16>, vector<128x512xbf16>, vector<8x512xf32> -> vector<8x512xf32>
    %24 = arith.addf %17, %23 : vector<8x512xf32>
    %c0_13 = arith.constant 0 : index
    %c0_14 = arith.constant 0 : index
    %25 = vector.load %arg4[%c0_13, %c0_14] : memref<1x512xf32, #tpu.memory_space<vmem>>, vector<1x512xf32>
    %26 = vector.broadcast %25 : vector<1x512xf32> to vector<8x512xf32>
    %27 = arith.addf %24, %26 : vector<8x512xf32>
    %c0_15 = arith.constant 0 : index
    %28 = memref.load %arg1[%c0_15] : memref<1xf32, #tpu.memory_space<smem>>
    %cst_16 = arith.constant 0.000000e+00 : f32
    %29 = vector.broadcast %cst_16 : f32 to vector<8x512xf32>
    %30 = arith.cmpf oge, %27, %29 : vector<8x512xf32>
    %31 = vector.broadcast %28 : f32 to vector<8x512xf32>
    %32 = arith.mulf %31, %27 : vector<8x512xf32>
    %33 = arith.select %30, %27, %32 : vector<8x512xi1>, vector<8x512xf32>
    %c0_17 = arith.constant 0 : index
    %c0_18 = arith.constant 0 : index
    %34 = vector.load %arg5[%c0_17, %c0_18] : memref<8x512xf32, #tpu.memory_space<vmem>>, vector<8x512xf32>
    tpu.vector_store %arg5[%c0_17, %c0_18], %33 {strides = array<i32>} : memref<8x512xf32, #tpu.memory_space<vmem>>, vector<8x512xf32>,
    return
  }
  func.func @transform_0(%arg0: i32, %arg1: memref<1xf32, #tpu.memory_space<smem>>) -> (i32, i32, i32) {
    %c0_i32 = arith.constant 0 : i32
    %c0_i32_0 = arith.constant 0 : i32
    %c0_i32_1 = arith.constant 0 : i32
    return %arg0, %c0_i32, %c0_i32_0 : i32, i32, i32
  }
  func.func @transform_1(%arg0: i32, %arg1: memref<1xf32, #tpu.memory_space<smem>>) -> (i32, i32, i32) {
    %c0_i32 = arith.constant 0 : i32
    %c0_i32_0 = arith.constant 0 : i32
    %c0_i32_1 = arith.constant 0 : i32
    %c0_i32_2 = arith.constant 0 : i32
    return %c0_i32, %c0_i32_0, %c0_i32_1 : i32, i32, i32
  }
  func.func @transform_2(%arg0: i32, %arg1: memref<1xf32, #tpu.memory_space<smem>>) -> (i32, i32) {
    %c0_i32 = arith.constant 0 : i32
    %c0_i32_0 = arith.constant 0 : i32
    %c0_i32_1 = arith.constant 0 : i32
    return %c0_i32, %c0_i32_0 : i32, i32
  }
  func.func @transform_3(%arg0: i32, %arg1: memref<1xf32, #tpu.memory_space<smem>>) -> (i32, i32) {
    %c0_i32 = arith.constant 0 : i32
    %c0_i32_0 = arith.constant 0 : i32
    return %arg0, %c0_i32 : i32, i32
  }
}

module attributes {stable_mosaic.version = 11 : i64} {
  func.func @_conv_act_kernel(%arg0: i32, %arg1: memref<1xf32, #tpu.memory_space<smem>>, %arg2: memref<1x16x256xf32, #tpu.memory_space<vmem>>, %arg3: memref<3x256x1024xbf16, #tpu.memory_space<vmem>>, %arg4: memref<1x1024xf32, #tpu.memory_space<vmem>>, %arg5: memref<16x1024xf32, #tpu.memory_space<vmem>>) attributes {dimension_semantics = [#tpu.dimension_semantics<parallel>], iteration_bounds = array<i64: 2>, scalar_prefetch = 1 : i64, scratch_operands = 0 : i64, tpu.core_type = #tpu.core_type<tc>, window_params = [{transform_indices = @transform_0, window_bounds = array<i64: 1, 16, 256>}, {pipeline_mode = #tpu.pipeline_mode<synchronous>, transform_indices = @transform_1, window_bounds = array<i64: 3, 256, 1024>}, {pipeline_mode = #tpu.pipeline_mode<synchronous>, transform_indices = @transform_2, window_bounds = array<i64: 1, 1024>}, {transform_indices = @transform_3, window_bounds = array<i64: 16, 1024>}]} {
    %c0 = arith.constant 0 : index
    %c0_0 = arith.constant 0 : index
    %c0_1 = arith.constant 0 : index
    %0 = vector.load %arg2[%c0, %c0_0, %c0_1] : memref<1x16x256xf32, #tpu.memory_space<vmem>>, vector<1x16x256xf32>
    %cst = arith.constant 0.000000e+00 : f32
    %1 = vector.broadcast %cst : f32 to vector<1x1x256xf32>
    %2 = tpu.concatenate %1, %0, %1 in 1 : vector<1x1x256xf32>, vector<1x16x256xf32>, vector<1x1x256xf32> -> vector<1x18x256xf32>
    %cst_2 = arith.constant 0.000000e+00 : f32
    %3 = vector.broadcast %cst_2 : f32 to vector<16x1024xf32>
    %4 = vector.extract_strided_slice %2 {offsets = [0, 0, 0], sizes = [1, 16, 256], strides = [1, 1, 1]} : vector<1x18x256xf32> to vector<1x16x256xf32>
    %5 = vector.shape_cast %4 : vector<1x16x256xf32> to vector<16x256xf32>
    %6 = arith.truncf %5 : vector<16x256xf32> to vector<16x256xbf16>
    %c0_3 = arith.constant 0 : index
    %c0_4 = arith.constant 0 : index
    %c0_5 = arith.constant 0 : index
    %7 = vector.load %arg3[%c0_3, %c0_4, %c0_5] : memref<3x256x1024xbf16, #tpu.memory_space<vmem>>, vector<1x256x1024xbf16>
    %8 = vector.shape_cast %7 : vector<1x256x1024xbf16> to vector<256x1024xbf16>
    %cst_6 = arith.constant dense<0.000000e+00> : vector<16x1024xf32>
    %9 = tpu.matmul %6, %8, %cst_6 {dimension_numbers = #tpu.dot_dimension_numbers<[1], [0], [0], [1], [0, 0, 1, 1], [], []>} : vector<16x256xbf16>, vector<256x1024xbf16>, vector<16x1024xf32> -> vector<16x1024xf32>
    %10 = arith.addf %3, %9 : vector<16x1024xf32>
    %11 = vector.extract_strided_slice %2 {offsets = [0, 1, 0], sizes = [1, 16, 256], strides = [1, 1, 1]} : vector<1x18x256xf32> to vector<1x16x256xf32>
    %12 = vector.shape_cast %11 : vector<1x16x256xf32> to vector<16x256xf32>
    %13 = arith.truncf %12 : vector<16x256xf32> to vector<16x256xbf16>
    %c1 = arith.constant 1 : index
    %c0_7 = arith.constant 0 : index
    %c0_8 = arith.constant 0 : index
    %14 = vector.load %arg3[%c1, %c0_7, %c0_8] : memref<3x256x1024xbf16, #tpu.memory_space<vmem>>, vector<1x256x1024xbf16>
    %15 = vector.shape_cast %14 : vector<1x256x1024xbf16> to vector<256x1024xbf16>
    %cst_9 = arith.constant dense<0.000000e+00> : vector<16x1024xf32>
    %16 = tpu.matmul %13, %15, %cst_9 {dimension_numbers = #tpu.dot_dimension_numbers<[1], [0], [0], [1], [0, 0, 1, 1], [], []>} : vector<16x256xbf16>, vector<256x1024xbf16>, vector<16x1024xf32> -> vector<16x1024xf32>
    %17 = arith.addf %10, %16 : vector<16x1024xf32>
    %18 = vector.extract_strided_slice %2 {offsets = [0, 2, 0], sizes = [1, 16, 256], strides = [1, 1, 1]} : vector<1x18x256xf32> to vector<1x16x256xf32>
    %19 = vector.shape_cast %18 : vector<1x16x256xf32> to vector<16x256xf32>
    %20 = arith.truncf %19 : vector<16x256xf32> to vector<16x256xbf16>
    %c2 = arith.constant 2 : index
    %c0_10 = arith.constant 0 : index
    %c0_11 = arith.constant 0 : index
    %21 = vector.load %arg3[%c2, %c0_10, %c0_11] : memref<3x256x1024xbf16, #tpu.memory_space<vmem>>, vector<1x256x1024xbf16>
    %22 = vector.shape_cast %21 : vector<1x256x1024xbf16> to vector<256x1024xbf16>
    %cst_12 = arith.constant dense<0.000000e+00> : vector<16x1024xf32>
    %23 = tpu.matmul %20, %22, %cst_12 {dimension_numbers = #tpu.dot_dimension_numbers<[1], [0], [0], [1], [0, 0, 1, 1], [], []>} : vector<16x256xbf16>, vector<256x1024xbf16>, vector<16x1024xf32> -> vector<16x1024xf32>
    %24 = arith.addf %17, %23 : vector<16x1024xf32>
    %c0_13 = arith.constant 0 : index
    %c0_14 = arith.constant 0 : index
    %25 = vector.load %arg4[%c0_13, %c0_14] : memref<1x1024xf32, #tpu.memory_space<vmem>>, vector<1x1024xf32>
    %26 = vector.broadcast %25 : vector<1x1024xf32> to vector<16x1024xf32>
    %27 = arith.addf %24, %26 : vector<16x1024xf32>
    %c0_15 = arith.constant 0 : index
    %28 = memref.load %arg1[%c0_15] : memref<1xf32, #tpu.memory_space<smem>>
    %cst_16 = arith.constant 0.000000e+00 : f32
    %29 = vector.broadcast %cst_16 : f32 to vector<16x1024xf32>
    %30 = arith.cmpf oge, %27, %29 : vector<16x1024xf32>
    %31 = vector.broadcast %28 : f32 to vector<16x1024xf32>
    %32 = arith.mulf %31, %27 : vector<16x1024xf32>
    %33 = arith.select %30, %27, %32 : vector<16x1024xi1>, vector<16x1024xf32>
    %c0_17 = arith.constant 0 : index
    %c0_18 = arith.constant 0 : index
    %34 = vector.load %arg5[%c0_17, %c0_18] : memref<16x1024xf32, #tpu.memory_space<vmem>>, vector<16x1024xf32>
    tpu.vector_store %arg5[%c0_17, %c0_18], %33 {strides = array<i32>} : memref<16x1024xf32, #tpu.memory_space<vmem>>, vector<16x1024xf32>,
    return
  }
  func.func @transform_0(%arg0: i32, %arg1: memref<1xf32, #tpu.memory_space<smem>>) -> (i32, i32, i32) {
    %c0_i32 = arith.constant 0 : i32
    %c0_i32_0 = arith.constant 0 : i32
    %c0_i32_1 = arith.constant 0 : i32
    return %arg0, %c0_i32, %c0_i32_0 : i32, i32, i32
  }
  func.func @transform_1(%arg0: i32, %arg1: memref<1xf32, #tpu.memory_space<smem>>) -> (i32, i32, i32) {
    %c0_i32 = arith.constant 0 : i32
    %c0_i32_0 = arith.constant 0 : i32
    %c0_i32_1 = arith.constant 0 : i32
    %c0_i32_2 = arith.constant 0 : i32
    return %c0_i32, %c0_i32_0, %c0_i32_1 : i32, i32, i32
  }
  func.func @transform_2(%arg0: i32, %arg1: memref<1xf32, #tpu.memory_space<smem>>) -> (i32, i32) {
    %c0_i32 = arith.constant 0 : i32
    %c0_i32_0 = arith.constant 0 : i32
    %c0_i32_1 = arith.constant 0 : i32
    return %c0_i32, %c0_i32_0 : i32, i32
  }
  func.func @transform_3(%arg0: i32, %arg1: memref<1xf32, #tpu.memory_space<smem>>) -> (i32, i32) {
    %c0_i32 = arith.constant 0 : i32
    %c0_i32_0 = arith.constant 0 : i32
    return %arg0, %c0_i32 : i32, i32
  }
}

module attributes {stable_mosaic.version = 11 : i64} {
  func.func @_conv_act_kernel(%arg0: i32, %arg1: memref<1xf32, #tpu.memory_space<smem>>, %arg2: memref<1x32x512xf32, #tpu.memory_space<vmem>>, %arg3: memref<9x512x96xbf16, #tpu.memory_space<vmem>>, %arg4: memref<1x96xf32, #tpu.memory_space<vmem>>, %arg5: memref<32x96xf32, #tpu.memory_space<vmem>>) attributes {dimension_semantics = [#tpu.dimension_semantics<parallel>], iteration_bounds = array<i64: 2>, scalar_prefetch = 1 : i64, scratch_operands = 0 : i64, tpu.core_type = #tpu.core_type<tc>, window_params = [{transform_indices = @transform_0, window_bounds = array<i64: 1, 32, 512>}, {pipeline_mode = #tpu.pipeline_mode<synchronous>, transform_indices = @transform_1, window_bounds = array<i64: 9, 512, 96>}, {pipeline_mode = #tpu.pipeline_mode<synchronous>, transform_indices = @transform_2, window_bounds = array<i64: 1, 96>}, {transform_indices = @transform_3, window_bounds = array<i64: 32, 96>}]} {
    %c0 = arith.constant 0 : index
    %c0_0 = arith.constant 0 : index
    %c0_1 = arith.constant 0 : index
    %0 = vector.load %arg2[%c0, %c0_0, %c0_1] : memref<1x32x512xf32, #tpu.memory_space<vmem>>, vector<1x32x512xf32>
    %cst = arith.constant 0.000000e+00 : f32
    %1 = vector.broadcast %cst : f32 to vector<1x4x512xf32>
    %2 = tpu.concatenate %1, %0, %1 in 1 : vector<1x4x512xf32>, vector<1x32x512xf32>, vector<1x4x512xf32> -> vector<1x40x512xf32>
    %cst_2 = arith.constant 0.000000e+00 : f32
    %3 = vector.broadcast %cst_2 : f32 to vector<32x96xf32>
    %4 = vector.extract_strided_slice %2 {offsets = [0, 0, 0], sizes = [1, 32, 512], strides = [1, 1, 1]} : vector<1x40x512xf32> to vector<1x32x512xf32>
    %5 = vector.shape_cast %4 : vector<1x32x512xf32> to vector<32x512xf32>
    %6 = arith.truncf %5 : vector<32x512xf32> to vector<32x512xbf16>
    %c0_3 = arith.constant 0 : index
    %c0_4 = arith.constant 0 : index
    %c0_5 = arith.constant 0 : index
    %7 = vector.load %arg3[%c0_3, %c0_4, %c0_5] : memref<9x512x96xbf16, #tpu.memory_space<vmem>>, vector<1x512x96xbf16>
    %8 = vector.shape_cast %7 : vector<1x512x96xbf16> to vector<512x96xbf16>
    %cst_6 = arith.constant dense<0.000000e+00> : vector<32x96xf32>
    %9 = tpu.matmul %6, %8, %cst_6 {dimension_numbers = #tpu.dot_dimension_numbers<[1], [0], [0], [1], [0, 0, 1, 1], [], []>} : vector<32x512xbf16>, vector<512x96xbf16>, vector<32x96xf32> -> vector<32x96xf32>
    %10 = arith.addf %3, %9 : vector<32x96xf32>
    %11 = vector.extract_strided_slice %2 {offsets = [0, 1, 0], sizes = [1, 32, 512], strides = [1, 1, 1]} : vector<1x40x512xf32> to vector<1x32x512xf32>
    %12 = vector.shape_cast %11 : vector<1x32x512xf32> to vector<32x512xf32>
    %13 = arith.truncf %12 : vector<32x512xf32> to vector<32x512xbf16>
    %c1 = arith.constant 1 : index
    %c0_7 = arith.constant 0 : index
    %c0_8 = arith.constant 0 : index
    %14 = vector.load %arg3[%c1, %c0_7, %c0_8] : memref<9x512x96xbf16, #tpu.memory_space<vmem>>, vector<1x512x96xbf16>
    %15 = vector.shape_cast %14 : vector<1x512x96xbf16> to vector<512x96xbf16>
    %cst_9 = arith.constant dense<0.000000e+00> : vector<32x96xf32>
    %16 = tpu.matmul %13, %15, %cst_9 {dimension_numbers = #tpu.dot_dimension_numbers<[1], [0], [0], [1], [0, 0, 1, 1], [], []>} : vector<32x512xbf16>, vector<512x96xbf16>, vector<32x96xf32> -> vector<32x96xf32>
    %17 = arith.addf %10, %16 : vector<32x96xf32>
    %18 = vector.extract_strided_slice %2 {offsets = [0, 2, 0], sizes = [1, 32, 512], strides = [1, 1, 1]} : vector<1x40x512xf32> to vector<1x32x512xf32>
    %19 = vector.shape_cast %18 : vector<1x32x512xf32> to vector<32x512xf32>
    %20 = arith.truncf %19 : vector<32x512xf32> to vector<32x512xbf16>
    %c2 = arith.constant 2 : index
    %c0_10 = arith.constant 0 : index
    %c0_11 = arith.constant 0 : index
    %21 = vector.load %arg3[%c2, %c0_10, %c0_11] : memref<9x512x96xbf16, #tpu.memory_space<vmem>>, vector<1x512x96xbf16>
    %22 = vector.shape_cast %21 : vector<1x512x96xbf16> to vector<512x96xbf16>
    %cst_12 = arith.constant dense<0.000000e+00> : vector<32x96xf32>
    %23 = tpu.matmul %20, %22, %cst_12 {dimension_numbers = #tpu.dot_dimension_numbers<[1], [0], [0], [1], [0, 0, 1, 1], [], []>} : vector<32x512xbf16>, vector<512x96xbf16>, vector<32x96xf32> -> vector<32x96xf32>
    %24 = arith.addf %17, %23 : vector<32x96xf32>
    %25 = vector.extract_strided_slice %2 {offsets = [0, 3, 0], sizes = [1, 32, 512], strides = [1, 1, 1]} : vector<1x40x512xf32> to vector<1x32x512xf32>
    %26 = vector.shape_cast %25 : vector<1x32x512xf32> to vector<32x512xf32>
    %27 = arith.truncf %26 : vector<32x512xf32> to vector<32x512xbf16>
    %c3 = arith.constant 3 : index
    %c0_13 = arith.constant 0 : index
    %c0_14 = arith.constant 0 : index
    %28 = vector.load %arg3[%c3, %c0_13, %c0_14] : memref<9x512x96xbf16, #tpu.memory_space<vmem>>, vector<1x512x96xbf16>
    %29 = vector.shape_cast %28 : vector<1x512x96xbf16> to vector<512x96xbf16>
    %cst_15 = arith.constant dense<0.000000e+00> : vector<32x96xf32>
    %30 = tpu.matmul %27, %29, %cst_15 {dimension_numbers = #tpu.dot_dimension_numbers<[1], [0], [0], [1], [0, 0, 1, 1], [], []>} : vector<32x512xbf16>, vector<512x96xbf16>, vector<32x96xf32> -> vector<32x96xf32>
    %31 = arith.addf %24, %30 : vector<32x96xf32>
    %32 = vector.extract_strided_slice %2 {offsets = [0, 4, 0], sizes = [1, 32, 512], strides = [1, 1, 1]} : vector<1x40x512xf32> to vector<1x32x512xf32>
    %33 = vector.shape_cast %32 : vector<1x32x512xf32> to vector<32x512xf32>
    %34 = arith.truncf %33 : vector<32x512xf32> to vector<32x512xbf16>
    %c4 = arith.constant 4 : index
    %c0_16 = arith.constant 0 : index
    %c0_17 = arith.constant 0 : index
    %35 = vector.load %arg3[%c4, %c0_16, %c0_17] : memref<9x512x96xbf16, #tpu.memory_space<vmem>>, vector<1x512x96xbf16>
    %36 = vector.shape_cast %35 : vector<1x512x96xbf16> to vector<512x96xbf16>
    %cst_18 = arith.constant dense<0.000000e+00> : vector<32x96xf32>
    %37 = tpu.matmul %34, %36, %cst_18 {dimension_numbers = #tpu.dot_dimension_numbers<[1], [0], [0], [1], [0, 0, 1, 1], [], []>} : vector<32x512xbf16>, vector<512x96xbf16>, vector<32x96xf32> -> vector<32x96xf32>
    %38 = arith.addf %31, %37 : vector<32x96xf32>
    %39 = vector.extract_strided_slice %2 {offsets = [0, 5, 0], sizes = [1, 32, 512], strides = [1, 1, 1]} : vector<1x40x512xf32> to vector<1x32x512xf32>
    %40 = vector.shape_cast %39 : vector<1x32x512xf32> to vector<32x512xf32>
    %41 = arith.truncf %40 : vector<32x512xf32> to vector<32x512xbf16>
    %c5 = arith.constant 5 : index
    %c0_19 = arith.constant 0 : index
    %c0_20 = arith.constant 0 : index
    %42 = vector.load %arg3[%c5, %c0_19, %c0_20] : memref<9x512x96xbf16, #tpu.memory_space<vmem>>, vector<1x512x96xbf16>
    %43 = vector.shape_cast %42 : vector<1x512x96xbf16> to vector<512x96xbf16>
    %cst_21 = arith.constant dense<0.000000e+00> : vector<32x96xf32>
    %44 = tpu.matmul %41, %43, %cst_21 {dimension_numbers = #tpu.dot_dimension_numbers<[1], [0], [0], [1], [0, 0, 1, 1], [], []>} : vector<32x512xbf16>, vector<512x96xbf16>, vector<32x96xf32> -> vector<32x96xf32>
    %45 = arith.addf %38, %44 : vector<32x96xf32>
    %46 = vector.extract_strided_slice %2 {offsets = [0, 6, 0], sizes = [1, 32, 512], strides = [1, 1, 1]} : vector<1x40x512xf32> to vector<1x32x512xf32>
    %47 = vector.shape_cast %46 : vector<1x32x512xf32> to vector<32x512xf32>
    %48 = arith.truncf %47 : vector<32x512xf32> to vector<32x512xbf16>
    %c6 = arith.constant 6 : index
    %c0_22 = arith.constant 0 : index
    %c0_23 = arith.constant 0 : index
    %49 = vector.load %arg3[%c6, %c0_22, %c0_23] : memref<9x512x96xbf16, #tpu.memory_space<vmem>>, vector<1x512x96xbf16>
    %50 = vector.shape_cast %49 : vector<1x512x96xbf16> to vector<512x96xbf16>
    %cst_24 = arith.constant dense<0.000000e+00> : vector<32x96xf32>
    %51 = tpu.matmul %48, %50, %cst_24 {dimension_numbers = #tpu.dot_dimension_numbers<[1], [0], [0], [1], [0, 0, 1, 1], [], []>} : vector<32x512xbf16>, vector<512x96xbf16>, vector<32x96xf32> -> vector<32x96xf32>
    %52 = arith.addf %45, %51 : vector<32x96xf32>
    %53 = vector.extract_strided_slice %2 {offsets = [0, 7, 0], sizes = [1, 32, 512], strides = [1, 1, 1]} : vector<1x40x512xf32> to vector<1x32x512xf32>
    %54 = vector.shape_cast %53 : vector<1x32x512xf32> to vector<32x512xf32>
    %55 = arith.truncf %54 : vector<32x512xf32> to vector<32x512xbf16>
    %c7 = arith.constant 7 : index
    %c0_25 = arith.constant 0 : index
    %c0_26 = arith.constant 0 : index
    %56 = vector.load %arg3[%c7, %c0_25, %c0_26] : memref<9x512x96xbf16, #tpu.memory_space<vmem>>, vector<1x512x96xbf16>
    %57 = vector.shape_cast %56 : vector<1x512x96xbf16> to vector<512x96xbf16>
    %cst_27 = arith.constant dense<0.000000e+00> : vector<32x96xf32>
    %58 = tpu.matmul %55, %57, %cst_27 {dimension_numbers = #tpu.dot_dimension_numbers<[1], [0], [0], [1], [0, 0, 1, 1], [], []>} : vector<32x512xbf16>, vector<512x96xbf16>, vector<32x96xf32> -> vector<32x96xf32>
    %59 = arith.addf %52, %58 : vector<32x96xf32>
    %60 = vector.extract_strided_slice %2 {offsets = [0, 8, 0], sizes = [1, 32, 512], strides = [1, 1, 1]} : vector<1x40x512xf32> to vector<1x32x512xf32>
    %61 = vector.shape_cast %60 : vector<1x32x512xf32> to vector<32x512xf32>
    %62 = arith.truncf %61 : vector<32x512xf32> to vector<32x512xbf16>
    %c8 = arith.constant 8 : index
    %c0_28 = arith.constant 0 : index
    %c0_29 = arith.constant 0 : index
    %63 = vector.load %arg3[%c8, %c0_28, %c0_29] : memref<9x512x96xbf16, #tpu.memory_space<vmem>>, vector<1x512x96xbf16>
    %64 = vector.shape_cast %63 : vector<1x512x96xbf16> to vector<512x96xbf16>
    %cst_30 = arith.constant dense<0.000000e+00> : vector<32x96xf32>
    %65 = tpu.matmul %62, %64, %cst_30 {dimension_numbers = #tpu.dot_dimension_numbers<[1], [0], [0], [1], [0, 0, 1, 1], [], []>} : vector<32x512xbf16>, vector<512x96xbf16>, vector<32x96xf32> -> vector<32x96xf32>
    %66 = arith.addf %59, %65 : vector<32x96xf32>
    %c0_31 = arith.constant 0 : index
    %c0_32 = arith.constant 0 : index
    %67 = vector.load %arg4[%c0_31, %c0_32] : memref<1x96xf32, #tpu.memory_space<vmem>>, vector<1x96xf32>
    %68 = vector.broadcast %67 : vector<1x96xf32> to vector<32x96xf32>
    %69 = arith.addf %66, %68 : vector<32x96xf32>
    %70 = math.tanh %69 : vector<32x96xf32>
    %c0_33 = arith.constant 0 : index
    %c0_34 = arith.constant 0 : index
    %71 = vector.load %arg5[%c0_33, %c0_34] : memref<32x96xf32, #tpu.memory_space<vmem>>, vector<32x96xf32>
    tpu.vector_store %arg5[%c0_33, %c0_34], %70 {strides = array<i32>} : memref<32x96xf32, #tpu.memory_space<vmem>>, vector<32x96xf32>,
    return
  }
  func.func @transform_0(%arg0: i32, %arg1: memref<1xf32, #tpu.memory_space<smem>>) -> (i32, i32, i32) {
    %c0_i32 = arith.constant 0 : i32
    %c0_i32_0 = arith.constant 0 : i32
    %c0_i32_1 = arith.constant 0 : i32
    return %arg0, %c0_i32, %c0_i32_0 : i32, i32, i32
  }
  func.func @transform_1(%arg0: i32, %arg1: memref<1xf32, #tpu.memory_space<smem>>) -> (i32, i32, i32) {
    %c0_i32 = arith.constant 0 : i32
    %c0_i32_0 = arith.constant 0 : i32
    %c0_i32_1 = arith.constant 0 : i32
    %c0_i32_2 = arith.constant 0 : i32
    return %c0_i32, %c0_i32_0, %c0_i32_1 : i32, i32, i32
  }
  func.func @transform_2(%arg0: i32, %arg1: memref<1xf32, #tpu.memory_space<smem>>) -> (i32, i32) {
    %c0_i32 = arith.constant 0 : i32
    %c0_i32_0 = arith.constant 0 : i32
    %c0_i32_1 = arith.constant 0 : i32
    return %c0_i32, %c0_i32_0 : i32, i32
  }
  func.func @transform_3(%arg0: i32, %arg1: memref<1xf32, #tpu.memory_space<smem>>) -> (i32, i32) {
    %c0_i32 = arith.constant 0 : i32
    %c0_i32_0 = arith.constant 0 : i32
    return %arg0, %c0_i32 : i32, i32
  }
}

</mosaic_0001>

<llo_original>
// kernel: srnet_forward.5
$region0: #{srnet_forward.5}
  #allocation0 [shape = 'u32[]', space=smem, size = 0x4, offset = 0x4, fixed_abs, tag = 'smem constant byte address 0x4 - core index']
  #allocation1 [shape = 'u32[144,128]{1,0:T(1,128)}', space=vmem, size = 0x12000, scoped, tag = 'internal scratch']
  #allocation2 [shape = 's32[1]{0}', space=sflag, size = 0x4, scoped, tag = 'scoped memory for srnet_forward.5']
  #allocation3 [shape = 'f32[1]{0:T(128)S(6)}', space=smem, size = 0x200, scoped, tag = 'prefetched SMEM operand 0']
  %s0 = inlined_call_operand.<no memory space> [shape: f32[1], index: 0, kind: input, shape index: {}]
  %s1 = inlined_call_operand.vmem [shape: f32[2,8,128], index: 1, kind: input, shape index: {}]
  %s2 = inlined_call_operand.hbm [shape: bf16[3,128,512], index: 2, kind: input, shape index: {}]
  %s3 = inlined_call_operand.hbm [shape: f32[1,512], index: 3, kind: input, shape index: {}]
  %s4 = inlined_call_operand.vmem [shape: f32[16,512], index: 4, kind: output, shape index: {}]
  %s5 = sld [smem:[#allocation0]]
  $region53: #{srnet_forward.5} parent=0
    _
  %s7 = ssub.s32 1, %s5
  %s8 = scalar_select 0, %s7, %s5
  %9 = sst [smem:[#allocation3]] %s0
  $region1: #{srnet_forward.5} parent=0
    #allocation4 [shape = 'u8[393216]{0}', space=vmem, size = 0x60000, scoped, tag = 'input window, operand 2, single buffered']
    #allocation5 [shape = 's32[2]{0}', space=sflag, size = 0x8, scoped, tag = 'scoped memory for srnet_forward.5']
    #allocation6 [shape = 'u8[2048]{0}', space=vmem, size = 0x800, scoped, tag = 'input window, operand 3, single buffered']
    #allocation7 [shape = 's32[1]{0}', space=sflag, size = 0x4, scoped, tag = 'scoped memory for srnet_forward.5']
    %10 = vsyncpa [#allocation5], 0
    %11 = vsyncpa [#allocation7], 0
    loop: start=0, step=1, limit=4
    $region2: #{srnet_forward.5} parent=1 // loop_pre_header
      _
    $region3: #{srnet_forward.5} parent=1 // loop_header
      %s13 = sphi 0, %s17
      %p14 = scmp.ge.s32.totalorder %s13, 4
      %s23 = sphi 0, %s25
      %s26 = sphi 0, %s23
      %s27 = sphi 0, %s26
      %s43 = sphi 0, %s27
      %s47 = sphi 0, %s47
      %s49 = sphi 0, %s47
      %s50 = sphi 0, %s49
      %s64 = sphi 0, %s50
      %s68 = sphi 0, %s68
      %s70 = sphi 0, %s68
      %s71 = sphi 0, %s70
      %s85 = sphi 0, %s71
      %s91 = sphi 0, %s93
      %s94 = sphi 0, %s91
      %s95 = sphi 0, %s94
      %s111 = sphi 0, %s95
    $region4: #{srnet_forward.5} parent=1 // loop_header_branch
      %16 = sbr.rel (%p14) target = $region8
    $region5: #{srnet_forward.5} parent=1 // loop_body
      %s18 = ssub.s32 %s13, 1
      %s19 = ssub.s32 %s13, 2
      %s20 = sadd.s32 %s13, 1
      %s21 = ssub.s32 %s13, %s20
      %p22 = scmp.eq.s32.totalorder %s21, 0
      %s24 = sadd.s32 %s23, 1
      %s25 = scalar_select %p22, %s23, %s24
      %p28 = pneg %p22
      %p29 = scmp.eq.s32.totalorder %s13, 1
      %p30 = por %p28, %p29
      %p31 = scmp.ne.s32.totalorder %s23, %s26
      %p32 = scmp.eq.s32.totalorder %s13, 0
      %p33 = por %p31, %p32
      %p34 = scmp.ne.s32.totalorder %s23, %s26
      %p35 = scmp.eq.s32.totalorder %s18, 1
      %p36 = por %p34, %p35
      %p37 = scmp.ne.s32.totalorder %s26, %s27
      %p38 = scmp.eq.s32.totalorder %s18, 0
      %p39 = por %p37, %p38
      %p40 = scmp.ne.s32.totalorder %s26, %s27
      %p41 = scmp.eq.s32.totalorder %s19, 1
      %p42 = por %p40, %p41
      %p44 = scmp.ne.s32.totalorder %s27, %s43
      %p45 = scmp.eq.s32.totalorder %s19, 0
      %p46 = por %p44, %p45
      %s48 = sadd.s32 %s47, 1
      %p51 = scmp.eq.s32.totalorder %s13, 1
      %p52 = scmp.ne.s32.totalorder %s47, %s49
      %p53 = scmp.eq.s32.totalorder %s13, 0
      %p54 = por %p52, %p53
      %p55 = scmp.ne.s32.totalorder %s47, %s49
      %p56 = scmp.eq.s32.totalorder %s18, 1
      %p57 = por %p55, %p56
      %p58 = scmp.ne.s32.totalorder %s49, %s50
      %p59 = scmp.eq.s32.totalorder %s18, 0
      %p60 = por %p58, %p59
      %p61 = scmp.ne.s32.totalorder %s49, %s50
      %p62 = scmp.eq.s32.totalorder %s19, 1
      %p63 = por %p61, %p62
      %p65 = scmp.ne.s32.totalorder %s50, %s64
      %p66 = scmp.eq.s32.totalorder %s19, 0
      %p67 = por %p65, %p66
      %s69 = sadd.s32 %s68, 1
      %p72 = scmp.eq.s32.totalorder %s13, 1
      %p73 = scmp.ne.s32.totalorder %s68, %s70
      %p74 = scmp.eq.s32.totalorder %s13, 0
      %p75 = por %p73, %p74
      %p76 = scmp.ne.s32.totalorder %s68, %s70
      %p77 = scmp.eq.s32.totalorder %s18, 1
      %p78 = por %p76, %p77
      %p79 = scmp.ne.s32.totalorder %s70, %s71
      %p80 = scmp.eq.s32.totalorder %s18, 0
      %p81 = por %p79, %p80
      %p82 = scmp.ne.s32.totalorder %s70, %s71
      %p83 = scmp.eq.s32.totalorder %s19, 1
      %p84 = por %p82, %p83
      %p86 = scmp.ne.s32.totalorder %s71, %s85
      %p87 = scmp.eq.s32.totalorder %s19, 0
      %p88 = por %p86, %p87
      %s89 = ssub.s32 %s13, %s20
      %p90 = scmp.eq.s32.totalorder %s89, 0
      %s92 = sadd.s32 %s91, 1
      %s93 = scalar_select %p90, %s91, %s92
      %p96 = pneg %p90
      %p97 = scmp.eq.s32.totalorder %s13, 1
      %p98 = por %p96, %p97
      %p99 = scmp.ne.s32.totalorder %s91, %s94
      %p100 = scmp.eq.s32.totalorder %s13, 0
      %p101 = por %p99, %p100
      %p102 = scmp.ne.s32.totalorder %s91, %s94
      %p103 = scmp.eq.s32.totalorder %s18, 1
      %p104 = por %p102, %p103
      %p105 = scmp.ne.s32.totalorder %s94, %s95
      %p106 = scmp.eq.s32.totalorder %s18, 0
      %p107 = por %p105, %p106
      %p108 = scmp.ne.s32.totalorder %s94, %s95
      %p109 = scmp.eq.s32.totalorder %s19, 1
      %p110 = por %p108, %p109
      %p112 = scmp.ne.s32.totalorder %s95, %s111
      %p113 = scmp.eq.s32.totalorder %s19, 0
      %p114 = por %p112, %p113
      %p115 = scmp.le.s32.totalorder 1, %s13
      %p116 = scmp.lt.s32.totalorder %s13, 3
      %p117 = pnand %p115, %p116
      %p118 = pneg %p117
      // Predicated region
      $region9: #{srnet_forward.5} parent=5 // pred_check
        _
      $region10: #{srnet_forward.5} parent=5 // pred_check_branch
        %120 = sbr.rel (%p117) target = $region12
      $region11: #{srnet_forward.5} parent=5 // pred_region
        %s121 = ssub.s32 %s13, 1
        // Predicated region
        $region13: #{srnet_forward.5} parent=11 // pred_check
          %p122 = pneg %p60
        $region14: #{srnet_forward.5} parent=11 // pred_check_branch
          %124 = sbr.rel (%p122) target = $region16
        $region15: #{srnet_forward.5} parent=11 // pred_region
          %s126 = ssub.s32 12288, 12288
          %127 = vsyncadd [#allocation5], %s126
          %s128 = sshll.u32 [#allocation4], 4
          %s129 = int_to_ptr.vmem [resolvable:$true] %s128
          %134 = dma.hbm_to_vmem [thread:$0]  %s2, 12288, %s129, [#allocation5], 256, 256, 16
        $region16: #{srnet_forward.5} parent=11 // pred_fallthru
          _
        // Predicated region
        $region17: #{srnet_forward.5} parent=11 // pred_check
          %p135 = pneg %p81
        $region18: #{srnet_forward.5} parent=11 // pred_check_branch
          %137 = sbr.rel (%p135) target = $region20
        $region19: #{srnet_forward.5} parent=11 // pred_region
          %s139 = ssub.s32 64, 64
          %140 = vsyncadd [#allocation7], %s139
          %s142 = sshll.u32 [#allocation6], 4
          %s143 = int_to_ptr.vmem [resolvable:$true] %s142
          %145 = dma.hbm_to_vmem [thread:$0]  %s3, 64, %s143, [#allocation7]
        $region20: #{srnet_forward.5} parent=11 // pred_fallthru
          _
      $region12: #{srnet_forward.5} parent=5 // pred_fallthru
        _
      %p146 = scmp.lt.s32.totalorder %s13, 2
      // Predicated region
      $region21: #{srnet_forward.5} parent=5 // pred_check
        %p147 = pneg %p146
      $region22: #{srnet_forward.5} parent=5 // pred_check_branch
        %149 = sbr.rel (%p147) target = $region24
      $region23: #{srnet_forward.5} parent=5 // pred_region
        // Predicated region
        $region25: #{srnet_forward.5} parent=23 // pred_check
          %p150 = pneg %p33
        $region26: #{srnet_forward.5} parent=23 // pred_check_branch
          %152 = sbr.rel (%p150) target = $region28
        $region27: #{srnet_forward.5} parent=23 // pred_region
          %p153 = scmp.lt.s32.totalorder %s13, 1
          %s154 = scalar_select %p153, %s13, 1
          %s155 = smul.addr %s154, 8
          %s156 = scalar_lea.vmem %s1, %s155
        $region28: #{srnet_forward.5} parent=23 // pred_fallthru
          _
      $region24: #{srnet_forward.5} parent=5 // pred_fallthru
        _
      %p157 = scmp.le.s32.totalorder 1, %s13
      %p158 = scmp.lt.s32.totalorder %s13, 3
      %p159 = pnand %p157, %p158
      %p160 = pneg %p159
      // Predicated region
      $region29: #{srnet_forward.5} parent=5 // pred_check
        _
      $region30: #{srnet_forward.5} parent=5 // pred_check_branch
        %162 = sbr.rel (%p159) target = $region32
      $region31: #{srnet_forward.5} parent=5 // pred_region
        %s163 = ssub.s32 %s13, 1
        // Predicated region
        $region33: #{srnet_forward.5} parent=31 // pred_check
          %p164 = pneg %p60
        $region34: #{srnet_forward.5} parent=31 // pred_check_branch
          %166 = sbr.rel (%p164) target = $region36
        $region35: #{srnet_forward.5} parent=31 // pred_region
          %167 = dma.done [#allocation5], 12288
        $region36: #{srnet_forward.5} parent=31 // pred_fallthru
          _
        // Predicated region
        $region37: #{srnet_forward.5} parent=31 // pred_check
          %p168 = pneg %p81
        $region38: #{srnet_forward.5} parent=31 // pred_check_branch
          %170 = sbr.rel (%p168) target = $region40
        $region39: #{srnet_forward.5} parent=31 // pred_region
          %171 = dma.done [#allocation7], 64
        $region40: #{srnet_forward.5} parent=31 // pred_fallthru
          _
        %p172 = scmp.lt.s32.totalorder %s18, 1
        %s173 = scalar_select %p172, %s18, 1
        %s174 = smul.addr %s173, 8
        %s175 = scalar_lea.vmem %s1, %s174
        %p176 = pneg %p39
        %p177 = pneg %p36
        %p178 = pneg %p60
        %p179 = pneg %p57
        %p180 = pneg %p81
        %p181 = pneg %p78
        %p182 = pneg %p107
        %p183 = pneg %p104
        %p184 = scmp.lt.s32.totalorder %s18, 1
        %s185 = scalar_select %p184, %s18, 1
        %s186 = smul.addr %s185, 4
        %s187 = smul.addr %s186, 8
        %s188 = scalar_lea.vmem %s4, %s187
        %p189 = scmp.lt.s32.totalorder %s18, 1
        %s190 = scalar_select %p189, %s18, 1
        %s191 = smul.addr %s190, 8
        %s192 = scalar_lea.vmem %s1, %s191
        %p193 = scmp.lt.s32.totalorder %s18, 1
        %s194 = scalar_select %p193, %s18, 1
        %s195 = smul.addr %s194, 4
        %s196 = smul.addr %s195, 8
        %s197 = scalar_lea.vmem %s4, %s196
        %v199 = vld [vmem:[%s192] sm:$0xff]
        %v201 = vrot.slane %v199, 7
        %vm203 = vcmask 1040384
        %v204 = vsel %vm203, 0.0, %v201
        %v205 = vsel %vm203, %v201, 0.0
        %v206 = vpack.c.bf16 %v204, %v204
        %v207 = vld [vmem:[#allocation4] sm:$0xff]
        %v208 = vld [vmem:[#allocation4 + $0x8] sm:$0xff]
        %v209 = vld [vmem:[#allocation4 + $0x10] sm:$0xff]
        %v210 = vld [vmem:[#allocation4 + $0x18] sm:$0xff]
        %v211 = vld [vmem:[#allocation4 + $0x20] sm:$0xff]
        %v212 = vld [vmem:[#allocation4 + $0x28] sm:$0xff]
        %v213 = vld [vmem:[#allocation4 + $0x30] sm:$0xff]
        %v214 = vld [vmem:[#allocation4 + $0x38] sm:$0xff]
        %v215 = vld [vmem:[#allocation4 + $0x40] sm:$0xff]
        %v216 = vld [vmem:[#allocation4 + $0x48] sm:$0xff]
        %v217 = vld [vmem:[#allocation4 + $0x50] sm:$0xff]
        %v218 = vld [vmem:[#allocation4 + $0x58] sm:$0xff]
        %v219 = vld [vmem:[#allocation4 + $0x60] sm:$0xff]
        %v220 = vld [vmem:[#allocation4 + $0x68] sm:$0xff]
        %v221 = vld [vmem:[#allocation4 + $0x70] sm:$0xff]
        %v222 = vld [vmem:[#allocation4 + $0x78] sm:$0xff]
        %v223 = vld [vmem:[#allocation4 + $0x80] sm:$0xff]
        %v224 = vld [vmem:[#allocation4 + $0x88] sm:$0xff]
        %v225 = vld [vmem:[#allocation4 + $0x90] sm:$0xff]
        %v226 = vld [vmem:[#allocation4 + $0x98] sm:$0xff]
        %v227 = vld [vmem:[#allocation4 + $0xa0] sm:$0xff]
        %v228 = vld [vmem:[#allocation4 + $0xa8] sm:$0xff]
        %v229 = vld [vmem:[#allocation4 + $0xb0] sm:$0xff]
        %v230 = vld [vmem:[#allocation4 + $0xb8] sm:$0xff]
        %v231 = vld [vmem:[#allocation4 + $0xc0] sm:$0xff]
        %v232 = vld [vmem:[#allocation4 + $0xc8] sm:$0xff]
        %v233 = vld [vmem:[#allocation4 + $0xd0] sm:$0xff]
        %v234 = vld [vmem:[#allocation4 + $0xd8] sm:$0xff]
        %v235 = vld [vmem:[#allocation4 + $0xe0] sm:$0xff]
        %v236 = vld [vmem:[#allocation4 + $0xe8] sm:$0xff]
        %v237 = vld [vmem:[#allocation4 + $0xf0] sm:$0xff]
        %v238 = vld [vmem:[#allocation4 + $0xf8] sm:$0xff]
        %v239 = vpack.c.bf16 %v205, %v204
        %s240 = scalar_lea.vmem [#allocation4], 256
        %v241 = vld [vmem:[%s240] sm:$0xff]
        %v242 = vld [vmem:[%s240 + $0x8] sm:$0xff]
        %v243 = vld [vmem:[%s240 + $0x10] sm:$0xff]
        %v244 = vld [vmem:[%s240 + $0x18] sm:$0xff]
        %v245 = vld [vmem:[%s240 + $0x20] sm:$0xff]
        %v246 = vld [vmem:[%s240 + $0x28] sm:$0xff]
        %v247 = vld [vmem:[%s240 + $0x30] sm:$0xff]
        %v248 = vld [vmem:[%s240 + $0x38] sm:$0xff]
        %v249 = vld [vmem:[%s240 + $0x40] sm:$0xff]
        %v250 = vld [vmem:[%s240 + $0x48] sm:$0xff]
        %v251 = vld [vmem:[%s240 + $0x50] sm:$0xff]
        %v252 = vld [vmem:[%s240 + $0x58] sm:$0xff]
        %v253 = vld [vmem:[%s240 + $0x60] sm:$0xff]
        %v254 = vld [vmem:[%s240 + $0x68] sm:$0xff]
        %v255 = vld [vmem:[%s240 + $0x70] sm:$0xff]
        %v256 = vld [vmem:[%s240 + $0x78] sm:$0xff]
        %v257 = vld [vmem:[%s240 + $0x80] sm:$0xff]
        %v258 = vld [vmem:[%s240 + $0x88] sm:$0xff]
        %v259 = vld [vmem:[%s240 + $0x90] sm:$0xff]
        %v260 = vld [vmem:[%s240 + $0x98] sm:$0xff]
        %v261 = vld [vmem:[%s240 + $0xa0] sm:$0xff]
        %v262 = vld [vmem:[%s240 + $0xa8] sm:$0xff]
        %v263 = vld [vmem:[%s240 + $0xb0] sm:$0xff]
        %v264 = vld [vmem:[%s240 + $0xb8] sm:$0xff]
        %v265 = vld [vmem:[%s240 + $0xc0] sm:$0xff]
        %v266 = vld [vmem:[%s240 + $0xc8] sm:$0xff]
        %v267 = vld [vmem:[%s240 + $0xd0] sm:$0xff]
        %v268 = vld [vmem:[%s240 + $0xd8] sm:$0xff]
        %v269 = vld [vmem:[%s240 + $0xe0] sm:$0xff]
        %v270 = vld [vmem:[%s240 + $0xe8] sm:$0xff]
        %v271 = vld [vmem:[%s240 + $0xf0] sm:$0xff]
        %v272 = vld [vmem:[%s240 + $0xf8] sm:$0xff]
        %v274 = vshrl.u32 %v239, 16
        %v276 = vshll.u32 %v239, 16
        %v278 = vrot.slane %v276, 1
        %v279 = vor.u32 %v274, %v278
        %v313 = vunpack.c.l.b16 %v241
        %v314 = vunpack.c.h.b16 %v241
        %v315 = vunpack.c.l.b16 %v242
        %v316 = vunpack.c.h.b16 %v242
        %v317 = vunpack.c.l.b16 %v243
        %v318 = vunpack.c.h.b16 %v243
        %v319 = vunpack.c.l.b16 %v244
        %v320 = vunpack.c.h.b16 %v244
        %v321 = vunpack.c.l.b16 %v245
        %v322 = vunpack.c.h.b16 %v245
        %v323 = vunpack.c.l.b16 %v246
        %v324 = vunpack.c.h.b16 %v246
        %v325 = vunpack.c.l.b16 %v247
        %v326 = vunpack.c.h.b16 %v247
        %v327 = vunpack.c.l.b16 %v248
        %v328 = vunpack.c.h.b16 %v248
        %v329 = vunpack.c.l.b16 %v249
        %v330 = vunpack.c.h.b16 %v249
        %v331 = vunpack.c.l.b16 %v250
        %v332 = vunpack.c.h.b16 %v250
        %v333 = vunpack.c.l.b16 %v251
        %v334 = vunpack.c.h.b16 %v251
        %v335 = vunpack.c.l.b16 %v252
        %v336 = vunpack.c.h.b16 %v252
        %v337 = vunpack.c.l.b16 %v253
        %v338 = vunpack.c.h.b16 %v253
        %v339 = vunpack.c.l.b16 %v254
        %v340 = vunpack.c.h.b16 %v254
        %v341 = vunpack.c.l.b16 %v255
        %v342 = vunpack.c.h.b16 %v255
        %v343 = vunpack.c.l.b16 %v256
        %v344 = vunpack.c.h.b16 %v256
        %v345 = vunpack.c.l.b16 %v257
        %v346 = vunpack.c.h.b16 %v257
        %v347 = vunpack.c.l.b16 %v258
        %v348 = vunpack.c.h.b16 %v258
        %v349 = vunpack.c.l.b16 %v259
        %v350 = vunpack.c.h.b16 %v259
        %v351 = vunpack.c.l.b16 %v260
        %v352 = vunpack.c.h.b16 %v260
        %v353 = vunpack.c.l.b16 %v261
        %v354 = vunpack.c.h.b16 %v261
        %v355 = vunpack.c.l.b16 %v262
        %v356 = vunpack.c.h.b16 %v262
        %v357 = vunpack.c.l.b16 %v263
        %v358 = vunpack.c.h.b16 %v263
        %v359 = vunpack.c.l.b16 %v264
        %v360 = vunpack.c.h.b16 %v264
        %v361 = vunpack.c.l.b16 %v265
        %v362 = vunpack.c.h.b16 %v265
        %v363 = vunpack.c.l.b16 %v266
        %v364 = vunpack.c.h.b16 %v266
        %v365 = vunpack.c.l.b16 %v267
        %v366 = vunpack.c.h.b16 %v267
        %v367 = vunpack.c.l.b16 %v268
        %v368 = vunpack.c.h.b16 %v268
        %v369 = vunpack.c.l.b16 %v269
        %v370 = vunpack.c.h.b16 %v269
        %v371 = vunpack.c.l.b16 %v270
        %v372 = vunpack.c.h.b16 %v270
        %v373 = vunpack.c.l.b16 %v271
        %v374 = vunpack.c.h.b16 %v271
        %v375 = vunpack.c.l.b16 %v272
        %v376 = vunpack.c.h.b16 %v272
        %v377 = vpack.c.b16 %v317, %v313
        %v378 = vpack.c.b16 %v318, %v314
        %v379 = vpack.c.b16 %v319, %v315
        %v380 = vpack.c.b16 %v320, %v316
        %v381 = vpack.c.b16 %v325, %v321
        %v382 = vpack.c.b16 %v326, %v322
        %v383 = vpack.c.b16 %v327, %v323
        %v384 = vpack.c.b16 %v328, %v324
        %v385 = vpack.c.b16 %v333, %v329
        %v386 = vpack.c.b16 %v334, %v330
        %v387 = vpack.c.b16 %v335, %v331
        %v388 = vpack.c.b16 %v336, %v332
        %v389 = vpack.c.b16 %v341, %v337
        %v390 = vpack.c.b16 %v342, %v338
        %v391 = vpack.c.b16 %v343, %v339
        %v392 = vpack.c.b16 %v344, %v340
        %v393 = vpack.c.b16 %v349, %v345
        %v394 = vpack.c.b16 %v350, %v346
        %v395 = vpack.c.b16 %v351, %v347
        %v396 = vpack.c.b16 %v352, %v348
        %v397 = vpack.c.b16 %v357, %v353
        %v398 = vpack.c.b16 %v358, %v354
        %v399 = vpack.c.b16 %v359, %v355
        %v400 = vpack.c.b16 %v360, %v356
        %v401 = vpack.c.b16 %v365, %v361
        %v402 = vpack.c.b16 %v366, %v362
        %v403 = vpack.c.b16 %v367, %v363
        %v404 = vpack.c.b16 %v368, %v364
        %v405 = vpack.c.b16 %v373, %v369
        %v406 = vpack.c.b16 %v374, %v370
        %v407 = vpack.c.b16 %v375, %v371
        %v408 = vpack.c.b16 %v376, %v372
        %441 = vmatprep.subr.bf16.mxu0 %v406
        %442 = vmatpush1.bf16.msra.mxu0 %v405
        %443 = vmatprep.subr.bf16.mxu0 %v402
        %444 = vmatpush1.bf16.msra.mxu0 %v401
        %445 = vmatprep.subr.bf16.mxu0 %v398
        %446 = vmatpush1.bf16.msra.mxu0 %v397
        %447 = vmatprep.subr.bf16.mxu0 %v394
        %448 = vmatpush1.bf16.msra.mxu0 %v393
        %449 = vmatprep.subr.bf16.mxu0 %v390
        %450 = vmatpush1.bf16.msra.mxu0 %v389
        %451 = vmatprep.subr.bf16.mxu0 %v386
        %452 = vmatpush1.bf16.msra.mxu0 %v385
        %453 = vmatprep.subr.bf16.mxu0 %v382
        %454 = vmatpush1.bf16.msra.mxu0 %v381
        %455 = vmatprep.subr.bf16.mxu0 %v378
        %456 = vmatpush1.bf16.msra.mxu0 %v377
        %457 = vmatprep.subr.bf16.mxu0 0
        %458 = vmatpush2.bf16.msra.mxu0 0
        %459 = vmatprep.subr.bf16.mxu0 0
        %460 = vmatpush2.bf16.msra.mxu0 0
        %461 = vmatprep.subr.bf16.mxu0 0
        %462 = vmatpush2.bf16.msra.mxu0 0
        %463 = vmatprep.subr.bf16.mxu0 0
        %464 = vmatpush2.bf16.msra.mxu0 0
        %465 = vmatprep.subr.bf16.mxu0 0
        %466 = vmatpush2.bf16.msra.mxu0 0
        %467 = vmatprep.subr.bf16.mxu0 0
        %468 = vmatpush2.bf16.msra.mxu0 0
        %469 = vmatprep.subr.bf16.mxu0 0
        %470 = vmatpush2.bf16.msra.mxu0 0
        %471 = vmatprep.subr.bf16.mxu0 0
        %472 = vmatpush2.bf16.msra.mxu0 0
        %473 = vmatprep.mubr.bf16.mxu0 0
        %474 = vmatmul.mubr.bf16.gmra.mxu0 %v279
        %v475 = vpop.f32.mrf.mxu0
        %v476 = vadd.f32 0.0, %v475
        %v477 = vpop.f32.mrf.mxu0
        %v478 = vadd.f32 0.0, %v477
        %v479 = vpop.f32.mrf.mxu0
        %v480 = vpop.f32.mrf.mxu0
        %481 = vdwg.mxu0
        %482 = vmatprep.subr.bf16.mxu0 %v408
        %483 = vmatpush1.bf16.msra.mxu0 %v407
        %484 = vmatprep.subr.bf16.mxu0 %v404
        %485 = vmatpush1.bf16.msra.mxu0 %v403
        %486 = vmatprep.subr.bf16.mxu0 %v400
        %487 = vmatpush1.bf16.msra.mxu0 %v399
        %488 = vmatprep.subr.bf16.mxu0 %v396
        %489 = vmatpush1.bf16.msra.mxu0 %v395
        %490 = vmatprep.subr.bf16.mxu0 %v392
        %491 = vmatpush1.bf16.msra.mxu0 %v391
        %492 = vmatprep.subr.bf16.mxu0 %v388
        %493 = vmatpush1.bf16.msra.mxu0 %v387
        %494 = vmatprep.subr.bf16.mxu0 %v384
        %495 = vmatpush1.bf16.msra.mxu0 %v383
        %496 = vmatprep.subr.bf16.mxu0 %v380
        %497 = vmatpush1.bf16.msra.mxu0 %v379
        %498 = vmatprep.subr.bf16.mxu0 0
        %499 = vmatpush2.bf16.msra.mxu0 0
        %500 = vmatprep.subr.bf16.mxu0 0
        %501 = vmatpush2.bf16.msra.mxu0 0
        %502 = vmatprep.subr.bf16.mxu0 0
        %503 = vmatpush2.bf16.msra.mxu0 0
        %504 = vmatprep.subr.bf16.mxu0 0
        %505 = vmatpush2.bf16.msra.mxu0 0
        %506 = vmatprep.subr.bf16.mxu0 0
        %507 = vmatpush2.bf16.msra.mxu0 0
        %508 = vmatprep.subr.bf16.mxu0 0
        %509 = vmatpush2.bf16.msra.mxu0 0
        %510 = vmatprep.subr.bf16.mxu0 0
        %511 = vmatpush2.bf16.msra.mxu0 0
        %512 = vmatprep.subr.bf16.mxu0 0
        %513 = vmatpush2.bf16.msra.mxu0 0
        %514 = vmatprep.mubr.bf16.mxu0 0
        %515 = vmatmul.mubr.bf16.gmra.mxu0 %v279
        %v516 = vpop.f32.mrf.mxu0
        %v517 = vadd.f32 0.0, %v516
        %v518 = vpop.f32.mrf.mxu0
        %v519 = vadd.f32 0.0, %v518
        %v520 = vpop.f32.mrf.mxu0
        %v521 = vpop.f32.mrf.mxu0
        %522 = vdwg.mxu0
        %v555 = vunpack.c.l.b16 %v207
        %v556 = vunpack.c.h.b16 %v207
        %v557 = vunpack.c.l.b16 %v208
        %v558 = vunpack.c.h.b16 %v208
        %v559 = vunpack.c.l.b16 %v209
        %v560 = vunpack.c.h.b16 %v209
        %v561 = vunpack.c.l.b16 %v210
        %v562 = vunpack.c.h.b16 %v210
        %v563 = vunpack.c.l.b16 %v211
        %v564 = vunpack.c.h.b16 %v211
        %v565 = vunpack.c.l.b16 %v212
        %v566 = vunpack.c.h.b16 %v212
        %v567 = vunpack.c.l.b16 %v213
        %v568 = vunpack.c.h.b16 %v213
        %v569 = vunpack.c.l.b16 %v214
        %v570 = vunpack.c.h.b16 %v214
        %v571 = vunpack.c.l.b16 %v215
        %v572 = vunpack.c.h.b16 %v215
        %v573 = vunpack.c.l.b16 %v216
        %v574 = vunpack.c.h.b16 %v216
        %v575 = vunpack.c.l.b16 %v217
        %v576 = vunpack.c.h.b16 %v217
        %v577 = vunpack.c.l.b16 %v218
        %v578 = vunpack.c.h.b16 %v218
        %v579 = vunpack.c.l.b16 %v219
        %v580 = vunpack.c.h.b16 %v219
        %v581 = vunpack.c.l.b16 %v220
        %v582 = vunpack.c.h.b16 %v220
        %v583 = vunpack.c.l.b16 %v221
        %v584 = vunpack.c.h.b16 %v221
        %v585 = vunpack.c.l.b16 %v222
        %v586 = vunpack.c.h.b16 %v222
        %v587 = vunpack.c.l.b16 %v223
        %v588 = vunpack.c.h.b16 %v223
        %v589 = vunpack.c.l.b16 %v224
        %v590 = vunpack.c.h.b16 %v224
        %v591 = vunpack.c.l.b16 %v225
        %v592 = vunpack.c.h.b16 %v225
        %v593 = vunpack.c.l.b16 %v226
        %v594 = vunpack.c.h.b16 %v226
        %v595 = vunpack.c.l.b16 %v227
        %v596 = vunpack.c.h.b16 %v227
        %v597 = vunpack.c.l.b16 %v228
        %v598 = vunpack.c.h.b16 %v228
        %v599 = vunpack.c.l.b16 %v229
        %v600 = vunpack.c.h.b16 %v229
        %v601 = vunpack.c.l.b16 %v230
        %v602 = vunpack.c.h.b16 %v230
        %v603 = vunpack.c.l.b16 %v231
        %v604 = vunpack.c.h.b16 %v231
        %v605 = vunpack.c.l.b16 %v232
        %v606 = vunpack.c.h.b16 %v232
        %v607 = vunpack.c.l.b16 %v233
        %v608 = vunpack.c.h.b16 %v233
        %v609 = vunpack.c.l.b16 %v234
        %v610 = vunpack.c.h.b16 %v234
        %v611 = vunpack.c.l.b16 %v235
        %v612 = vunpack.c.h.b16 %v235
        %v613 = vunpack.c.l.b16 %v236
        %v614 = vunpack.c.h.b16 %v236
        %v615 = vunpack.c.l.b16 %v237
        %v616 = vunpack.c.h.b16 %v237
        %v617 = vunpack.c.l.b16 %v238
        %v618 = vunpack.c.h.b16 %v238
        %v619 = vpack.c.b16 %v559, %v555
        %v620 = vpack.c.b16 %v560, %v556
        %v621 = vpack.c.b16 %v561, %v557
        %v622 = vpack.c.b16 %v562, %v558
        %v623 = vpack.c.b16 %v567, %v563
        %v624 = vpack.c.b16 %v568, %v564
        %v625 = vpack.c.b16 %v569, %v565
        %v626 = vpack.c.b16 %v570, %v566
        %v627 = vpack.c.b16 %v575, %v571
        %v628 = vpack.c.b16 %v576, %v572
        %v629 = vpack.c.b16 %v577, %v573
        %v630 = vpack.c.b16 %v578, %v574
        %v631 = vpack.c.b16 %v583, %v579
        %v632 = vpack.c.b16 %v584, %v580
        %v633 = vpack.c.b16 %v585, %v581
        %v634 = vpack.c.b16 %v586, %v582
        %v635 = vpack.c.b16 %v591, %v587
        %v636 = vpack.c.b16 %v592, %v588
        %v637 = vpack.c.b16 %v593, %v589
        %v638 = vpack.c.b16 %v594, %v590
        %v639 = vpack.c.b16 %v599, %v595
        %v640 = vpack.c.b16 %v600, %v596
        %v641 = vpack.c.b16 %v601, %v597
        %v642 = vpack.c.b16 %v602, %v598
        %v643 = vpack.c.b16 %v607, %v603
        %v644 = vpack.c.b16 %v608, %v604
        %v645 = vpack.c.b16 %v609, %v605
        %v646 = vpack.c.b16 %v610, %v606
        %v647 = vpack.c.b16 %v615, %v611
        %v648 = vpack.c.b16 %v616, %v612
        %v649 = vpack.c.b16 %v617, %v613
        %v650 = vpack.c.b16 %v618, %v614
        %683 = vmatprep.subr.bf16.mxu0 %v648
        %684 = vmatpush1.bf16.msra.mxu0 %v647
        %685 = vmatprep.subr.bf16.mxu0 %v644
        %686 = vmatpush1.bf16.msra.mxu0 %v643
        %687 = vmatprep.subr.bf16.mxu0 %v640
        %688 = vmatpush1.bf16.msra.mxu0 %v639
        %689 = vmatprep.subr.bf16.mxu0 %v636
        %690 = vmatpush1.bf16.msra.mxu0 %v635
        %691 = vmatprep.subr.bf16.mxu0 %v632
        %692 = vmatpush1.bf16.msra.mxu0 %v631
        %693 = vmatprep.subr.bf16.mxu0 %v628
        %694 = vmatpush1.bf16.msra.mxu0 %v627
        %695 = vmatprep.subr.bf16.mxu0 %v624
        %696 = vmatpush1.bf16.msra.mxu0 %v623
        %697 = vmatprep.subr.bf16.mxu0 %v620
        %698 = vmatpush1.bf16.msra.mxu0 %v619
        %699 = vmatprep.subr.bf16.mxu0 0
        %700 = vmatpush2.bf16.msra.mxu0 0
        %701 = vmatprep.subr.bf16.mxu0 0
        %702 = vmatpush2.bf16.msra.mxu0 0
        %703 = vmatprep.subr.bf16.mxu0 0
        %704 = vmatpush2.bf16.msra.mxu0 0
        %705 = vmatprep.subr.bf16.mxu0 0
        %706 = vmatpush2.bf16.msra.mxu0 0
        %707 = vmatprep.subr.bf16.mxu0 0
        %708 = vmatpush2.bf16.msra.mxu0 0
        %709 = vmatprep.subr.bf16.mxu0 0
        %710 = vmatpush2.bf16.msra.mxu0 0
        %711 = vmatprep.subr.bf16.mxu0 0
        %712 = vmatpush2.bf16.msra.mxu0 0
        %713 = vmatprep.subr.bf16.mxu0 0
        %714 = vmatpush2.bf16.msra.mxu0 0
        %715 = vmatprep.mubr.bf16.mxu0 0
        %716 = vmatmul.mubr.bf16.gmra.mxu0 %v206
        %v717 = vpop.f32.mrf.mxu0
        %v718 = vadd.f32 %v476, %v717
        %v719 = vpop.f32.mrf.mxu0
        %v720 = vadd.f32 %v478, %v719
        %v721 = vpop.f32.mrf.mxu0
        %v722 = vpop.f32.mrf.mxu0
        %723 = vdwg.mxu0
        %724 = vmatprep.subr.bf16.mxu0 %v650
        %725 = vmatpush1.bf16.msra.mxu0 %v649
        %726 = vmatprep.subr.bf16.mxu0 %v646
        %727 = vmatpush1.bf16.msra.mxu0 %v645
        %728 = vmatprep.subr.bf16.mxu0 %v642
        %729 = vmatpush1.bf16.msra.mxu0 %v641
        %730 = vmatprep.subr.bf16.mxu0 %v638
        %731 = vmatpush1.bf16.msra.mxu0 %v637
        %732 = vmatprep.subr.bf16.mxu0 %v634
        %733 = vmatpush1.bf16.msra.mxu0 %v633
        %734 = vmatprep.subr.bf16.mxu0 %v630
        %735 = vmatpush1.bf16.msra.mxu0 %v629
        %736 = vmatprep.subr.bf16.mxu0 %v626
        %737 = vmatpush1.bf16.msra.mxu0 %v625
        %738 = vmatprep.subr.bf16.mxu0 %v622
        %739 = vmatpush1.bf16.msra.mxu0 %v621
        %740 = vmatprep.subr.bf16.mxu0 0
        %741 = vmatpush2.bf16.msra.mxu0 0
        %742 = vmatprep.subr.bf16.mxu0 0
        %743 = vmatpush2.bf16.msra.mxu0 0
        %744 = vmatprep.subr.bf16.mxu0 0
        %745 = vmatpush2.bf16.msra.mxu0 0
        %746 = vmatprep.subr.bf16.mxu0 0
        %747 = vmatpush2.bf16.msra.mxu0 0
        %748 = vmatprep.subr.bf16.mxu0 0
        %749 = vmatpush2.bf16.msra.mxu0 0
        %750 = vmatprep.subr.bf16.mxu0 0
        %751 = vmatpush2.bf16.msra.mxu0 0
        %752 = vmatprep.subr.bf16.mxu0 0
        %753 = vmatpush2.bf16.msra.mxu0 0
        %754 = vmatprep.subr.bf16.mxu0 0
        %755 = vmatpush2.bf16.msra.mxu0 0
        %756 = vmatprep.mubr.bf16.mxu0 0
        %757 = vmatmul.mubr.bf16.gmra.mxu0 %v206
        %v758 = vpop.f32.mrf.mxu0
        %v759 = vadd.f32 %v517, %v758
        %v760 = vpop.f32.mrf.mxu0
        %v761 = vadd.f32 %v519, %v760
        %v762 = vpop.f32.mrf.mxu0
        %v763 = vpop.f32.mrf.mxu0
        %764 = vdwg.mxu0
        %s765 = scalar_lea.vmem [#allocation4], 512
        %v766 = vld [vmem:[%s765] sm:$0xff]
        %v767 = vld [vmem:[%s765 + $0x8] sm:$0xff]
        %v768 = vld [vmem:[%s765 + $0x10] sm:$0xff]
        %v769 = vld [vmem:[%s765 + $0x18] sm:$0xff]
        %v770 = vld [vmem:[%s765 + $0x20] sm:$0xff]
        %v771 = vld [vmem:[%s765 + $0x28] sm:$0xff]
        %v772 = vld [vmem:[%s765 + $0x30] sm:$0xff]
        %v773 = vld [vmem:[%s765 + $0x38] sm:$0xff]
        %v774 = vld [vmem:[%s765 + $0x40] sm:$0xff]
        %v775 = vld [vmem:[%s765 + $0x48] sm:$0xff]
        %v776 = vld [vmem:[%s765 + $0x50] sm:$0xff]
        %v777 = vld [vmem:[%s765 + $0x58] sm:$0xff]
        %v778 = vld [vmem:[%s765 + $0x60] sm:$0xff]
        %v779 = vld [vmem:[%s765 + $0x68] sm:$0xff]
        %v780 = vld [vmem:[%s765 + $0x70] sm:$0xff]
        %v781 = vld [vmem:[%s765 + $0x78] sm:$0xff]
        %v782 = vld [vmem:[%s765 + $0x80] sm:$0xff]
        %v783 = vld [vmem:[%s765 + $0x88] sm:$0xff]
        %v784 = vld [vmem:[%s765 + $0x90] sm:$0xff]
        %v785 = vld [vmem:[%s765 + $0x98] sm:$0xff]
        %v786 = vld [vmem:[%s765 + $0xa0] sm:$0xff]
        %v787 = vld [vmem:[%s765 + $0xa8] sm:$0xff]
        %v788 = vld [vmem:[%s765 + $0xb0] sm:$0xff]
        %v789 = vld [vmem:[%s765 + $0xb8] sm:$0xff]
        %v790 = vld [vmem:[%s765 + $0xc0] sm:$0xff]
        %v791 = vld [vmem:[%s765 + $0xc8] sm:$0xff]
        %v792 = vld [vmem:[%s765 + $0xd0] sm:$0xff]
        %v793 = vld [vmem:[%s765 + $0xd8] sm:$0xff]
        %v794 = vld [vmem:[%s765 + $0xe0] sm:$0xff]
        %v795 = vld [vmem:[%s765 + $0xe8] sm:$0xff]
        %v796 = vld [vmem:[%s765 + $0xf0] sm:$0xff]
        %v797 = vld [vmem:[%s765 + $0xf8] sm:$0xff]
        %v799 = vrot.slane %v239, 1
        %v833 = vunpack.c.l.b16 %v766
        %v834 = vunpack.c.h.b16 %v766
        %v835 = vunpack.c.l.b16 %v767
        %v836 = vunpack.c.h.b16 %v767
        %v837 = vunpack.c.l.b16 %v768
        %v838 = vunpack.c.h.b16 %v768
        %v839 = vunpack.c.l.b16 %v769
        %v840 = vunpack.c.h.b16 %v769
        %v841 = vunpack.c.l.b16 %v770
        %v842 = vunpack.c.h.b16 %v770
        %v843 = vunpack.c.l.b16 %v771
        %v844 = vunpack.c.h.b16 %v771
        %v845 = vunpack.c.l.b16 %v772
        %v846 = vunpack.c.h.b16 %v772
        %v847 = vunpack.c.l.b16 %v773
        %v848 = vunpack.c.h.b16 %v773
        %v849 = vunpack.c.l.b16 %v774
        %v850 = vunpack.c.h.b16 %v774
        %v851 = vunpack.c.l.b16 %v775
        %v852 = vunpack.c.h.b16 %v775
        %v853 = vunpack.c.l.b16 %v776
        %v854 = vunpack.c.h.b16 %v776
        %v855 = vunpack.c.l.b16 %v777
        %v856 = vunpack.c.h.b16 %v777
        %v857 = vunpack.c.l.b16 %v778
        %v858 = vunpack.c.h.b16 %v778
        %v859 = vunpack.c.l.b16 %v779
        %v860 = vunpack.c.h.b16 %v779
        %v861 = vunpack.c.l.b16 %v780
        %v862 = vunpack.c.h.b16 %v780
        %v863 = vunpack.c.l.b16 %v781
        %v864 = vunpack.c.h.b16 %v781
        %v865 = vunpack.c.l.b16 %v782
        %v866 = vunpack.c.h.b16 %v782
        %v867 = vunpack.c.l.b16 %v783
        %v868 = vunpack.c.h.b16 %v783
        %v869 = vunpack.c.l.b16 %v784
        %v870 = vunpack.c.h.b16 %v784
        %v871 = vunpack.c.l.b16 %v785
        %v872 = vunpack.c.h.b16 %v785
        %v873 = vunpack.c.l.b16 %v786
        %v874 = vunpack.c.h.b16 %v786
        %v875 = vunpack.c.l.b16 %v787
        %v876 = vunpack.c.h.b16 %v787
        %v877 = vunpack.c.l.b16 %v788
        %v878 = vunpack.c.h.b16 %v788
        %v879 = vunpack.c.l.b16 %v789
        %v880 = vunpack.c.h.b16 %v789
        %v881 = vunpack.c.l.b16 %v790
        %v882 = vunpack.c.h.b16 %v790
        %v883 = vunpack.c.l.b16 %v791
        %v884 = vunpack.c.h.b16 %v791
        %v885 = vunpack.c.l.b16 %v792
        %v886 = vunpack.c.h.b16 %v792
        %v887 = vunpack.c.l.b16 %v793
        %v888 = vunpack.c.h.b16 %v793
        %v889 = vunpack.c.l.b16 %v794
        %v890 = vunpack.c.h.b16 %v794
        %v891 = vunpack.c.l.b16 %v795
        %v892 = vunpack.c.h.b16 %v795
        %v893 = vunpack.c.l.b16 %v796
        %v894 = vunpack.c.h.b16 %v796
        %v895 = vunpack.c.l.b16 %v797
        %v896 = vunpack.c.h.b16 %v797
        %v897 = vpack.c.b16 %v837, %v833
        %v898 = vpack.c.b16 %v838, %v834
        %v899 = vpack.c.b16 %v839, %v835
        %v900 = vpack.c.b16 %v840, %v836
        %v901 = vpack.c.b16 %v845, %v841
        %v902 = vpack.c.b16 %v846, %v842
        %v903 = vpack.c.b16 %v847, %v843
        %v904 = vpack.c.b16 %v848, %v844
        %v905 = vpack.c.b16 %v853, %v849
        %v906 = vpack.c.b16 %v854, %v850
        %v907 = vpack.c.b16 %v855, %v851
        %v908 = vpack.c.b16 %v856, %v852
        %v909 = vpack.c.b16 %v861, %v857
        %v910 = vpack.c.b16 %v862, %v858
        %v911 = vpack.c.b16 %v863, %v859
        %v912 = vpack.c.b16 %v864, %v860
        %v913 = vpack.c.b16 %v869, %v865
        %v914 = vpack.c.b16 %v870, %v866
        %v915 = vpack.c.b16 %v871, %v867
        %v916 = vpack.c.b16 %v872, %v868
        %v917 = vpack.c.b16 %v877, %v873
        %v918 = vpack.c.b16 %v878, %v874
        %v919 = vpack.c.b16 %v879, %v875
        %v920 = vpack.c.b16 %v880, %v876
        %v921 = vpack.c.b16 %v885, %v881
        %v922 = vpack.c.b16 %v886, %v882
        %v923 = vpack.c.b16 %v887, %v883
        %v924 = vpack.c.b16 %v888, %v884
        %v925 = vpack.c.b16 %v893, %v889
        %v926 = vpack.c.b16 %v894, %v890
        %v927 = vpack.c.b16 %v895, %v891
        %v928 = vpack.c.b16 %v896, %v892
        %961 = vmatprep.subr.bf16.mxu0 %v926
        %962 = vmatpush1.bf16.msra.mxu0 %v925
        %963 = vmatprep.subr.bf16.mxu0 %v922
        %964 = vmatpush1.bf16.msra.mxu0 %v921
        %965 = vmatprep.subr.bf16.mxu0 %v918
        %966 = vmatpush1.bf16.msra.mxu0 %v917
        %967 = vmatprep.subr.bf16.mxu0 %v914
        %968 = vmatpush1.bf16.msra.mxu0 %v913
        %969 = vmatprep.subr.bf16.mxu0 %v910
        %970 = vmatpush1.bf16.msra.mxu0 %v909
        %971 = vmatprep.subr.bf16.mxu0 %v906
        %972 = vmatpush1.bf16.msra.mxu0 %v905
        %973 = vmatprep.subr.bf16.mxu0 %v902
        %974 = vmatpush1.bf16.msra.mxu0 %v901
        %975 = vmatprep.subr.bf16.mxu0 %v898
        %976 = vmatpush1.bf16.msra.mxu0 %v897
        %977 = vmatprep.subr.bf16.mxu0 0
        %978 = vmatpush2.bf16.msra.mxu0 0
        %979 = vmatprep.subr.bf16.mxu0 0
        %980 = vmatpush2.bf16.msra.mxu0 0
        %981 = vmatprep.subr.bf16.mxu0 0
        %982 = vmatpush2.bf16.msra.mxu0 0
        %983 = vmatprep.subr.bf16.mxu0 0
        %984 = vmatpush2.bf16.msra.mxu0 0
        %985 = vmatprep.subr.bf16.mxu0 0
        %986 = vmatpush2.bf16.msra.mxu0 0
        %987 = vmatprep.subr.bf16.mxu0 0
        %988 = vmatpush2.bf16.msra.mxu0 0
        %989 = vmatprep.subr.bf16.mxu0 0
        %990 = vmatpush2.bf16.msra.mxu0 0
        %991 = vmatprep.subr.bf16.mxu0 0
        %992 = vmatpush2.bf16.msra.mxu0 0
        %993 = vmatprep.mubr.bf16.mxu0 0
        %994 = vmatmul.mubr.bf16.gmra.mxu0 %v799
        %v995 = vpop.f32.mrf.mxu0
        %v996 = vadd.f32 0.0, %v995
        %v997 = vpop.f32.mrf.mxu0
        %v998 = vadd.f32 0.0, %v997
        %v999 = vpop.f32.mrf.mxu0
        %v1000 = vpop.f32.mrf.mxu0
        %1001 = vdwg.mxu0
        %1002 = vmatprep.subr.bf16.mxu0 %v928
        %1003 = vmatpush1.bf16.msra.mxu0 %v927
        %1004 = vmatprep.subr.bf16.mxu0 %v924
        %1005 = vmatpush1.bf16.msra.mxu0 %v923
        %1006 = vmatprep.subr.bf16.mxu0 %v920
        %1007 = vmatpush1.bf16.msra.mxu0 %v919
        %1008 = vmatprep.subr.bf16.mxu0 %v916
        %1009 = vmatpush1.bf16.msra.mxu0 %v915
        %1010 = vmatprep.subr.bf16.mxu0 %v912
        %1011 = vmatpush1.bf16.msra.mxu0 %v911
        %1012 = vmatprep.subr.bf16.mxu0 %v908
        %1013 = vmatpush1.bf16.msra.mxu0 %v907
        %1014 = vmatprep.subr.bf16.mxu0 %v904
        %1015 = vmatpush1.bf16.msra.mxu0 %v903
        %1016 = vmatprep.subr.bf16.mxu0 %v900
        %1017 = vmatpush1.bf16.msra.mxu0 %v899
        %1018 = vmatprep.subr.bf16.mxu0 0
        %1019 = vmatpush2.bf16.msra.mxu0 0
        %1020 = vmatprep.subr.bf16.mxu0 0
        %1021 = vmatpush2.bf16.msra.mxu0 0
        %1022 = vmatprep.subr.bf16.mxu0 0
        %1023 = vmatpush2.bf16.msra.mxu0 0
        %1024 = vmatprep.subr.bf16.mxu0 0
        %1025 = vmatpush2.bf16.msra.mxu0 0
        %1026 = vmatprep.subr.bf16.mxu0 0
        %1027 = vmatpush2.bf16.msra.mxu0 0
        %1028 = vmatprep.subr.bf16.mxu0 0
        %1029 = vmatpush2.bf16.msra.mxu0 0
        %1030 = vmatprep.subr.bf16.mxu0 0
        %1031 = vmatpush2.bf16.msra.mxu0 0
        %1032 = vmatprep.subr.bf16.mxu0 0
        %1033 = vmatpush2.bf16.msra.mxu0 0
        %1034 = vmatprep.mubr.bf16.mxu0 0
        %1035 = vmatmul.mubr.bf16.gmra.mxu0 %v799
        %v1036 = vpop.f32.mrf.mxu0
        %v1037 = vadd.f32 0.0, %v1036
        %v1038 = vpop.f32.mrf.mxu0
        %v1039 = vadd.f32 0.0, %v1038
        %v1040 = vpop.f32.mrf.mxu0
        %v1041 = vpop.f32.mrf.mxu0
        %1042 = vdwg.mxu0
        %v1043 = vadd.f32 %v718, %v996
        %v1044 = vadd.f32 %v720, %v998
        %v1045 = vadd.f32 %v759, %v1037
        %v1046 = vadd.f32 %v761, %v1039
        %v1047 = vld [vmem:[#allocation6] sm:$0xf]
        %v1049 = vlaneseq
        %v1050 = vshrl.u32 %v1049, 7
        %v1051 = vsub.s32 0, %v1050
        %v1052 = vrot.slane %v1047, %v1051
        %v1053 = vlaneseq
        %v1054 = vshrl.u32 %v1053, 7
        %v1055 = vsub.s32 1, %v1054
        %v1056 = vrot.slane %v1047, %v1055
        %v1057 = vlaneseq
        %v1058 = vshrl.u32 %v1057, 7
        %v1059 = vsub.s32 2, %v1058
        %v1060 = vrot.slane %v1047, %v1059
        %v1061 = vlaneseq
        %v1062 = vshrl.u32 %v1061, 7
        %v1063 = vsub.s32 3, %v1062
        %v1064 = vrot.slane %v1047, %v1063
        %v1069 = vadd.f32 %v1043, %v1052
        %v1070 = vadd.f32 %v1044, %v1056
        %v1071 = vadd.f32 %v1045, %v1060
        %v1072 = vadd.f32 %v1046, %v1064
        %s1073 = sld [smem:[#allocation3]]
        %vm1074 = vcmp.ge.f32.partialorder %v1069, 0.0
        %vm1075 = vcmp.ge.f32.partialorder %v1070, 0.0
        %vm1076 = vcmp.ge.f32.partialorder %v1071, 0.0
        %vm1077 = vcmp.ge.f32.partialorder %v1072, 0.0
        %v1078 = vstv %s1073
        %v1079 = vmul.f32 %v1078, %v1069
        %v1080 = vmul.f32 %v1078, %v1070
        %v1081 = vmul.f32 %v1078, %v1071
        %v1082 = vmul.f32 %v1078, %v1072
        %v1083 = vsel %vm1074, %v1069, %v1079
        %v1084 = vsel %vm1075, %v1070, %v1080
        %v1085 = vsel %vm1076, %v1071, %v1081
        %v1086 = vsel %vm1077, %v1072, %v1082
        %1087 = vst [vmem:[%s197] sm:$0xff] %v1083
        %1088 = vst [vmem:[%s197 + $0x8] sm:$0xff] %v1084
        %1089 = vst [vmem:[%s197 + $0x10] sm:$0xff] %v1085
        %1090 = vst [vmem:[%s197 + $0x18] sm:$0xff] %v1086
        %p1091 = scmp.lt.s32.totalorder %s18, 1
        %s1092 = scalar_select %p1091, %s18, 1
        %s1093 = smul.addr %s1092, 4
        %s1094 = smul.addr %s1093, 8
        %s1095 = scalar_lea.vmem %s4, %s1094
        // Predicated region
        $region41: #{srnet_forward.5} parent=31 // pred_check
          %p1096 = pneg %p104
        $region42: #{srnet_forward.5} parent=31 // pred_check_branch
          %1098 = sbr.rel (%p1096) target = $region44
        $region43: #{srnet_forward.5} parent=31 // pred_region
          _
        $region44: #{srnet_forward.5} parent=31 // pred_fallthru
          _
      $region32: #{srnet_forward.5} parent=5 // pred_fallthru
        _
      %p1099 = scmp.le.s32.totalorder 2, %s13
      // Predicated region
      $region45: #{srnet_forward.5} parent=5 // pred_check
        %p1100 = pneg %p1099
      $region46: #{srnet_forward.5} parent=5 // pred_check_branch
        %1102 = sbr.rel (%p1100) target = $region48
      $region47: #{srnet_forward.5} parent=5 // pred_region
        %s1103 = ssub.s32 %s13, 2
        // Predicated region
        $region49: #{srnet_forward.5} parent=47 // pred_check
          %p1104 = pneg %p110
        $region50: #{srnet_forward.5} parent=47 // pred_check_branch
          %1106 = sbr.rel (%p1104) target = $region52
        $region51: #{srnet_forward.5} parent=47 // pred_region
          %p1107 = scmp.lt.s32.totalorder %s19, 1
          %s1108 = scalar_select %p1107, %s19, 1
          %s1109 = smul.addr %s1108, 4
          %s1110 = smul.addr %s1109, 8
          %s1111 = scalar_lea.vmem %s4, %s1110
        $region52: #{srnet_forward.5} parent=47 // pred_fallthru
          _
      $region48: #{srnet_forward.5} parent=5 // pred_fallthru
        _
    $region6: #{srnet_forward.5} parent=1 // loop_footer
      %s17 = sadd.s32 1, %s13
    $region7: #{srnet_forward.5} parent=1 // loop_footer_branch
      %12 = sbr.rel target = $region3
    $region8: #{srnet_forward.5} parent=1 // loop_exit
      _
    %1112 = vsyncpa [#allocation5], 1
    %s1113 = scalar_lea.sflag [#allocation5], 1
    %1114 = vsyncpa %s1113, 1
    %1115 = vsyncpa [#allocation7], 1

// kernel: srnet_forward.4
$region0: #{srnet_forward.4}
  #allocation0 [shape = 'u32[]', space=smem, size = 0x4, offset = 0x4, fixed_abs, tag = 'smem constant byte address 0x4 - core index']
  #allocation1 [shape = 'u32[144,128]{1,0:T(1,128)}', space=vmem, size = 0x12000, scoped, tag = 'internal scratch']
  %s0 = inlined_call_operand.vmem [shape: f32[2,8,24], index: 0, kind: input, shape index: {}]
  %s1 = inlined_call_operand.vmem [shape: f32[128,16], index: 1, kind: input, shape index: {}]
  %s2 = inlined_call_operand.hbm [shape: bf16[9,24,128], index: 2, kind: input, shape index: {}]
  %s3 = inlined_call_operand.hbm [shape: f32[1,128], index: 3, kind: input, shape index: {}]
  %s4 = inlined_call_operand.hbm [shape: bf16[2,3,128,128], index: 4, kind: input, shape index: {}]
  %s5 = inlined_call_operand.hbm [shape: f32[2,1,16], index: 5, kind: input, shape index: {}]
  %s6 = inlined_call_operand.hbm [shape: f32[2,1,16], index: 6, kind: input, shape index: {}]
  %s7 = inlined_call_operand.hbm [shape: bf16[2,3,128,128], index: 7, kind: input, shape index: {}]
  %s8 = inlined_call_operand.hbm [shape: f32[2,1,16], index: 8, kind: input, shape index: {}]
  %s9 = inlined_call_operand.hbm [shape: f32[2,1,16], index: 9, kind: input, shape index: {}]
  %s10 = inlined_call_operand.hbm [shape: bf16[3,128,128], index: 10, kind: input, shape index: {}]
  %s11 = inlined_call_operand.hbm [shape: f32[1,16], index: 11, kind: input, shape index: {}]
  %s12 = inlined_call_operand.hbm [shape: f32[1,16], index: 12, kind: input, shape index: {}]
  %s13 = inlined_call_operand.hbm [shape: f32[3], index: 13, kind: input, shape index: {}]
  %s14 = inlined_call_operand.vmem [shape: f32[16,128], index: 14, kind: output, shape index: {}]
  %s15 = sld [smem:[#allocation0]]
  $region114: #{srnet_forward.4} parent=0
    _
  %s17 = ssub.s32 1, %s15
  %s18 = scalar_select 0, %s17, %s15
  $region1: #{srnet_forward.4} parent=0
    #allocation2 [shape = 'u8[55296]{0}', space=vmem, size = 0xd800, scoped, tag = 'input window, operand 2, single buffered']
    #allocation3 [shape = 's32[1]{0}', space=sflag, size = 0x4, scoped, tag = 'scoped memory for srnet_forward.4']
    #allocation4 [shape = 's32[1]{0}', space=sflag, size = 0x4, scoped, tag = 'scoped memory for srnet_forward.4']
    #allocation5 [shape = 'u8[512]{0}', space=vmem, size = 0x400, scoped, tag = 'input window, operand 3, single buffered']
    #allocation6 [shape = 's32[1]{0}', space=sflag, size = 0x4, scoped, tag = 'scoped memory for srnet_forward.4']
    #allocation7 [shape = 'u8[196608]{0}', space=vmem, size = 0x30000, scoped, tag = 'input window, operand 4, single buffered']
    #allocation8 [shape = 'u8[1024]{0}', space=vmem, size = 0x400, scoped, tag = 'input window, operand 5, single buffered']
    #allocation9 [shape = 's32[1]{0}', space=sflag, size = 0x4, scoped, tag = 'scoped memory for srnet_forward.4']
    #allocation10 [shape = 'u8[1024]{0}', space=vmem, size = 0x400, scoped, tag = 'input window, operand 6, single buffered']
    #allocation11 [shape = 'u8[196608]{0}', space=vmem, size = 0x30000, scoped, tag = 'input window, operand 7, single buffered']
    #allocation12 [shape = 's32[1]{0}', space=sflag, size = 0x4, scoped, tag = 'scoped memory for srnet_forward.4']
    #allocation13 [shape = 'u8[1024]{0}', space=vmem, size = 0x400, scoped, tag = 'input window, operand 8, single buffered']
    #allocation14 [shape = 'u8[1024]{0}', space=vmem, size = 0x400, scoped, tag = 'input window, operand 9, single buffered']
    #allocation15 [shape = 's32[1]{0}', space=sflag, size = 0x4, scoped, tag = 'scoped memory for srnet_forward.4']
    #allocation16 [shape = 'u8[98304]{0}', space=vmem, size = 0x18000, scoped, tag = 'input window, operand 10, single buffered']
    #allocation17 [shape = 'u8[512]{0}', space=vmem, size = 0x400, scoped, tag = 'input window, operand 11, single buffered']
    #allocation18 [shape = 's32[1]{0}', space=sflag, size = 0x4, scoped, tag = 'scoped memory for srnet_forward.4']
    #allocation19 [shape = 'u8[512]{0}', space=vmem, size = 0x400, scoped, tag = 'input window, operand 12, single buffered']
    #allocation20 [shape = 'u8[512]{0}', space=smem, size = 0x200, scoped, tag = 'input window, operand 13, single buffered']
    %19 = vsyncpa [#allocation3], 0
    %20 = vsyncpa [#allocation6], 0
    %21 = vsyncpa [#allocation9], 0
    %22 = vsyncpa [#allocation12], 0
    %23 = vsyncpa [#allocation15], 0
    %24 = vsyncpa [#allocation18], 0
    %25 = vsyncpa [#allocation4], 0
    // Predicated region
    $region2: #{srnet_forward.4} parent=1 // pred_check
      _
    $region3: #{srnet_forward.4} parent=1 // pred_check_branch
      %27 = sbr.rel (0) target = $region5
    $region4: #{srnet_forward.4} parent=1 // pred_region
      _
    $region5: #{srnet_forward.4} parent=1 // pred_fallthru
      _
    // Predicated region
    $region6: #{srnet_forward.4} parent=1 // pred_check
      _
    $region7: #{srnet_forward.4} parent=1 // pred_check_branch
      %29 = sbr.rel (0) target = $region9
    $region8: #{srnet_forward.4} parent=1 // pred_region
      _
    $region9: #{srnet_forward.4} parent=1 // pred_fallthru
      _
    // Predicated region
    $region10: #{srnet_forward.4} parent=1 // pred_check
      _
    $region11: #{srnet_forward.4} parent=1 // pred_check_branch
      %31 = sbr.rel (0) target = $region13
    $region12: #{srnet_forward.4} parent=1 // pred_region
      %s33 = ssub.s32 1728, 1728
      %34 = vsyncadd [#allocation3], %s33
      %s35 = sshll.u32 [#allocation2], 4
      %s36 = int_to_ptr.vmem [resolvable:$true] %s35
      %41 = dma.hbm_to_vmem [thread:$0]  %s2, 1728, %s36, [#allocation3], 64, 64, 4
    $region13: #{srnet_forward.4} parent=1 // pred_fallthru
      _
    // Predicated region
    $region14: #{srnet_forward.4} parent=1 // pred_check
      _
    $region15: #{srnet_forward.4} parent=1 // pred_check_branch
      %43 = sbr.rel (0) target = $region17
    $region16: #{srnet_forward.4} parent=1 // pred_region
      %s45 = ssub.s32 16, 16
      %46 = vsyncadd [#allocation6], %s45
      %s48 = sshll.u32 [#allocation5], 4
      %s49 = int_to_ptr.vmem [resolvable:$true] %s48
      %51 = dma.hbm_to_vmem [thread:$0]  %s3, 16, %s49, [#allocation6]
    $region17: #{srnet_forward.4} parent=1 // pred_fallthru
      _
    // Predicated region
    $region18: #{srnet_forward.4} parent=1 // pred_check
      _
    $region19: #{srnet_forward.4} parent=1 // pred_check_branch
      %53 = sbr.rel (0) target = $region21
    $region20: #{srnet_forward.4} parent=1 // pred_region
      %s55 = ssub.s32 6144, 6144
      %56 = vsyncadd [#allocation6], %s55
      %s57 = sshll.u32 [#allocation7], 4
      %s58 = int_to_ptr.vmem [resolvable:$true] %s57
      %63 = dma.hbm_to_vmem [thread:$0]  %s4, 6144, %s58, [#allocation6], 64, 64, 4
    $region21: #{srnet_forward.4} parent=1 // pred_fallthru
      _
    // Predicated region
    $region22: #{srnet_forward.4} parent=1 // pred_check
      _
    $region23: #{srnet_forward.4} parent=1 // pred_check_branch
      %65 = sbr.rel (0) target = $region25
    $region24: #{srnet_forward.4} parent=1 // pred_region
      %s67 = ssub.s32 32, 32
      %68 = vsyncadd [#allocation9], %s67
      %s69 = sshll.u32 [#allocation8], 4
      %s70 = int_to_ptr.vmem [resolvable:$true] %s69
      %75 = dma.hbm_to_vmem [thread:$0]  %s5, 32, %s70, [#allocation9], 16, 16, 1
    $region25: #{srnet_forward.4} parent=1 // pred_fallthru
      _
    // Predicated region
    $region26: #{srnet_forward.4} parent=1 // pred_check
      _
    $region27: #{srnet_forward.4} parent=1 // pred_check_branch
      %77 = sbr.rel (0) target = $region29
    $region28: #{srnet_forward.4} parent=1 // pred_region
      %s79 = ssub.s32 32, 32
      %80 = vsyncadd [#allocation9], %s79
      %s81 = sshll.u32 [#allocation10], 4
      %s82 = int_to_ptr.vmem [resolvable:$true] %s81
      %87 = dma.hbm_to_vmem [thread:$0]  %s6, 32, %s82, [#allocation9], 16, 16, 1
    $region29: #{srnet_forward.4} parent=1 // pred_fallthru
      _
    // Predicated region
    $region30: #{srnet_forward.4} parent=1 // pred_check
      _
    $region31: #{srnet_forward.4} parent=1 // pred_check_branch
      %89 = sbr.rel (0) target = $region33
    $region32: #{srnet_forward.4} parent=1 // pred_region
      %s91 = ssub.s32 6144, 6144
      %92 = vsyncadd [#allocation12], %s91
      %s93 = sshll.u32 [#allocation11], 4
      %s94 = int_to_ptr.vmem [resolvable:$true] %s93
      %99 = dma.hbm_to_vmem [thread:$0]  %s7, 6144, %s94, [#allocation12], 64, 64, 4
    $region33: #{srnet_forward.4} parent=1 // pred_fallthru
      _
    // Predicated region
    $region34: #{srnet_forward.4} parent=1 // pred_check
      _
    $region35: #{srnet_forward.4} parent=1 // pred_check_branch
      %101 = sbr.rel (0) target = $region37
    $region36: #{srnet_forward.4} parent=1 // pred_region
      %s103 = ssub.s32 32, 32
      %104 = vsyncadd [#allocation12], %s103
      %s105 = sshll.u32 [#allocation13], 4
      %s106 = int_to_ptr.vmem [resolvable:$true] %s105
      %111 = dma.hbm_to_vmem [thread:$0]  %s8, 32, %s106, [#allocation12], 16, 16, 1
    $region37: #{srnet_forward.4} parent=1 // pred_fallthru
      _
    // Predicated region
    $region38: #{srnet_forward.4} parent=1 // pred_check
      _
    $region39: #{srnet_forward.4} parent=1 // pred_check_branch
      %113 = sbr.rel (0) target = $region41
    $region40: #{srnet_forward.4} parent=1 // pred_region
      %s115 = ssub.s32 32, 32
      %116 = vsyncadd [#allocation15], %s115
      %s117 = sshll.u32 [#allocation14], 4
      %s118 = int_to_ptr.vmem [resolvable:$true] %s117
      %123 = dma.hbm_to_vmem [thread:$0]  %s9, 32, %s118, [#allocation15], 16, 16, 1
    $region41: #{srnet_forward.4} parent=1 // pred_fallthru
      _
    // Predicated region
    $region42: #{srnet_forward.4} parent=1 // pred_check
      _
    $region43: #{srnet_forward.4} parent=1 // pred_check_branch
      %125 = sbr.rel (0) target = $region45
    $region44: #{srnet_forward.4} parent=1 // pred_region
      %s127 = ssub.s32 3072, 3072
      %128 = vsyncadd [#allocation15], %s127
      %s129 = sshll.u32 [#allocation16], 4
      %s130 = int_to_ptr.vmem [resolvable:$true] %s129
      %135 = dma.hbm_to_vmem [thread:$0]  %s10, 3072, %s130, [#allocation15], 64, 64, 4
    $region45: #{srnet_forward.4} parent=1 // pred_fallthru
      _
    // Predicated region
    $region46: #{srnet_forward.4} parent=1 // pred_check
      _
    $region47: #{srnet_forward.4} parent=1 // pred_check_branch
      %137 = sbr.rel (0) target = $region49
    $region48: #{srnet_forward.4} parent=1 // pred_region
      %s139 = ssub.s32 16, 16
      %140 = vsyncadd [#allocation18], %s139
      %s142 = sshll.u32 [#allocation17], 4
      %s143 = int_to_ptr.vmem [resolvable:$true] %s142
      %145 = dma.hbm_to_vmem [thread:$0]  %s11, 16, %s143, [#allocation18]
    $region49: #{srnet_forward.4} parent=1 // pred_fallthru
      _
    // Predicated region
    $region50: #{srnet_forward.4} parent=1 // pred_check
      _
    $region51: #{srnet_forward.4} parent=1 // pred_check_branch
      %147 = sbr.rel (0) target = $region53
    $region52: #{srnet_forward.4} parent=1 // pred_region
      %s149 = ssub.s32 16, 16
      %150 = vsyncadd [#allocation18], %s149
      %s152 = sshll.u32 [#allocation19], 4
      %s153 = int_to_ptr.vmem [resolvable:$true] %s152
      %155 = dma.hbm_to_vmem [thread:$0]  %s12, 16, %s153, [#allocation18]
    $region53: #{srnet_forward.4} parent=1 // pred_fallthru
      _
    // Predicated region
    $region54: #{srnet_forward.4} parent=1 // pred_check
      _
    $region55: #{srnet_forward.4} parent=1 // pred_check_branch
      %157 = sbr.rel (0) target = $region57
    $region56: #{srnet_forward.4} parent=1 // pred_region
      %s159 = ssub.s32 16, 16
      %160 = vsyncadd [#allocation4], %s159
      %163 = dma.hbm_to_smem %s13, 16, [#allocation20], [#allocation4]
    $region57: #{srnet_forward.4} parent=1 // pred_fallthru
      _
    // Predicated region
    $region58: #{srnet_forward.4} parent=1 // pred_check
      _
    $region59: #{srnet_forward.4} parent=1 // pred_check_branch
      %165 = sbr.rel (0) target = $region61
    $region60: #{srnet_forward.4} parent=1 // pred_region
      %166 = dma.done [#allocation3], 1728
    $region61: #{srnet_forward.4} parent=1 // pred_fallthru
      _
    // Predicated region
    $region62: #{srnet_forward.4} parent=1 // pred_check
      _
    $region63: #{srnet_forward.4} parent=1 // pred_check_branch
      %168 = sbr.rel (0) target = $region65
    $region64: #{srnet_forward.4} parent=1 // pred_region
      %169 = dma.done [#allocation6], 16
    $region65: #{srnet_forward.4} parent=1 // pred_fallthru
      _
    // Predicated region
    $region66: #{srnet_forward.4} parent=1 // pred_check
      _
    $region67: #{srnet_forward.4} parent=1 // pred_check_branch
      %171 = sbr.rel (0) target = $region69
    $region68: #{srnet_forward.4} parent=1 // pred_region
      %172 = dma.done [#allocation6], 6144
    $region69: #{srnet_forward.4} parent=1 // pred_fallthru
      _
    // Predicated region
    $region70: #{srnet_forward.4} parent=1 // pred_check
      _
    $region71: #{srnet_forward.4} parent=1 // pred_check_branch
      %174 = sbr.rel (0) target = $region73
    $region72: #{srnet_forward.4} parent=1 // pred_region
      %175 = dma.done [#allocation9], 32
    $region73: #{srnet_forward.4} parent=1 // pred_fallthru
      _
    // Predicated region
    $region74: #{srnet_forward.4} parent=1 // pred_check
      _
    $region75: #{srnet_forward.4} parent=1 // pred_check_branch
      %177 = sbr.rel (0) target = $region77
    $region76: #{srnet_forward.4} parent=1 // pred_region
      %178 = dma.done [#allocation9], 32
    $region77: #{srnet_forward.4} parent=1 // pred_fallthru
      _
    // Predicated region
    $region78: #{srnet_forward.4} parent=1 // pred_check
      _
    $region79: #{srnet_forward.4} parent=1 // pred_check_branch
      %180 = sbr.rel (0) target = $region81
    $region80: #{srnet_forward.4} parent=1 // pred_region
      %181 = dma.done [#allocation12], 6144
    $region81: #{srnet_forward.4} parent=1 // pred_fallthru
      _
    // Predicated region
    $region82: #{srnet_forward.4} parent=1 // pred_check
      _
    $region83: #{srnet_forward.4} parent=1 // pred_check_branch
      %183 = sbr.rel (0) target = $region85
    $region84: #{srnet_forward.4} parent=1 // pred_region
      %184 = dma.done [#allocation12], 32
    $region85: #{srnet_forward.4} parent=1 // pred_fallthru
      _
    // Predicated region
    $region86: #{srnet_forward.4} parent=1 // pred_check
      _
    $region87: #{srnet_forward.4} parent=1 // pred_check_branch
      %186 = sbr.rel (0) target = $region89
    $region88: #{srnet_forward.4} parent=1 // pred_region
      %187 = dma.done [#allocation15], 32
    $region89: #{srnet_forward.4} parent=1 // pred_fallthru
      _
    // Predicated region
    $region90: #{srnet_forward.4} parent=1 // pred_check
      _
    $region91: #{srnet_forward.4} parent=1 // pred_check_branch
      %189 = sbr.rel (0) target = $region93
    $region92: #{srnet_forward.4} parent=1 // pred_region
      %190 = dma.done [#allocation15], 3072
    $region93: #{srnet_forward.4} parent=1 // pred_fallthru
      _
    // Predicated region
    $region94: #{srnet_forward.4} parent=1 // pred_check
      _
    $region95: #{srnet_forward.4} parent=1 // pred_check_branch
      %192 = sbr.rel (0) target = $region97
    $region96: #{srnet_forward.4} parent=1 // pred_region
      %193 = dma.done [#allocation18], 16
    $region97: #{srnet_forward.4} parent=1 // pred_fallthru
      _
    // Predicated region
    $region98: #{srnet_forward.4} parent=1 // pred_check
      _
    $region99: #{srnet_forward.4} parent=1 // pred_check_branch
      %195 = sbr.rel (0) target = $region101
    $region100: #{srnet_forward.4} parent=1 // pred_region
      %196 = dma.done [#allocation18], 16
    $region101: #{srnet_forward.4} parent=1 // pred_fallthru
      _
    // Predicated region
    $region102: #{srnet_forward.4} parent=1 // pred_check
      _
    $region103: #{srnet_forward.4} parent=1 // pred_check_branch
      %198 = sbr.rel (0) target = $region105
    $region104: #{srnet_forward.4} parent=1 // pred_region
      %199 = dma.done [#allocation4], 16
    $region105: #{srnet_forward.4} parent=1 // pred_fallthru
      _
    %200 = sfence
    %v202 = vld [vmem:[%s1] sm:$0xff]
    %v203 = vld [vmem:[%s1 + $0x8] sm:$0xff]
    %v204 = vld [vmem:[%s1 + $0x10] sm:$0xff]
    %v205 = vld [vmem:[%s1 + $0x18] sm:$0xff]
    %v206 = vld [vmem:[%s1 + $0x20] sm:$0xff]
    %v207 = vld [vmem:[%s1 + $0x28] sm:$0xff]
    %v208 = vld [vmem:[%s1 + $0x30] sm:$0xff]
    %v209 = vld [vmem:[%s1 + $0x38] sm:$0xff]
    %v210 = vld [vmem:[%s1 + $0x40] sm:$0xff]
    %v211 = vld [vmem:[%s1 + $0x48] sm:$0xff]
    %v212 = vld [vmem:[%s1 + $0x50] sm:$0xff]
    %v213 = vld [vmem:[%s1 + $0x58] sm:$0xff]
    %v214 = vld [vmem:[%s1 + $0x60] sm:$0xff]
    %v215 = vld [vmem:[%s1 + $0x68] sm:$0xff]
    %v216 = vld [vmem:[%s1 + $0x70] sm:$0xff]
    %v217 = vld [vmem:[%s1 + $0x78] sm:$0xff]
    %v218 = vld [vmem:[%s0] sm:$0xff]
    %v219 = vld [vmem:[%s0 + $0x8] sm:$0xff]
    %v222 = vrot.slane %v218, 4
    %v223 = vrot.slane %v219, 4
    %vm226 = vcmask 1043456
    %v227 = vsel %vm226, 0.0, %v222
    %v228 = vsel %vm226, 0.0, %v223
    %v229 = vsel %vm226, %v222, 0.0
    %v230 = vsel %vm226, %v223, 0.0
    %v231 = vpack.c.bf16 %v228, %v227
    %v232 = vld [vmem:[#allocation2] sm:$0xf]
    %v233 = vld [vmem:[#allocation2 + $0x4] sm:$0xf]
    %v234 = vld [vmem:[#allocation2 + $0x8] sm:$0xf]
    %vm239 = vcmask 1046528
    %v240 = vrot.slane %v227, 1
    %v241 = vrot.slane %v229, 1
    %v242 = vsel %vm239, %v240, %v241
    %v243 = vrot.slane %v228, 1
    %v244 = vrot.slane %v230, 1
    %v245 = vsel %vm239, %v243, %v244
    %v248 = vpack.c.bf16 %v245, %v242
    %s249 = scalar_lea.vmem [#allocation2], 12
    %v250 = vld [vmem:[%s249] sm:$0xf]
    %v251 = vld [vmem:[%s249 + $0x4] sm:$0xf]
    %v252 = vld [vmem:[%s249 + $0x8] sm:$0xf]
    %v256 = vunpack.c.l.b16 %v250
    %v257 = vunpack.c.l.b16 %v251
    %v258 = vunpack.c.l.b16 %v252
    %v259 = vpack.c.b16 %v257, %v256
    %v260 = vpack.c.b16 %v258, %v258
    %vm262 = vcmask 195584
    %v264 = vsel %vm262, %v248, 0
    %v267 = vsel %vm226, %v260, 0
    %269 = vmatprep.subr.bf16.mxu0 0
    %270 = vmatpush1.bf16.msra.mxu0 0
    %271 = vmatprep.subr.bf16.mxu0 0
    %272 = vmatpush1.bf16.msra.mxu0 0
    %273 = vmatprep.subr.bf16.mxu0 0
    %274 = vmatpush1.bf16.msra.mxu0 0
    %275 = vmatprep.subr.bf16.mxu0 0
    %276 = vmatpush1.bf16.msra.mxu0 0
    %277 = vmatprep.subr.bf16.mxu0 0
    %278 = vmatpush1.bf16.msra.mxu0 0
    %279 = vmatprep.subr.bf16.mxu0 0
    %280 = vmatpush1.bf16.msra.mxu0 0
    %281 = vmatprep.subr.bf16.mxu0 0
    %282 = vmatpush1.bf16.msra.mxu0 %v267
    %283 = vmatprep.subr.bf16.mxu0 0
    %284 = vmatpush1.bf16.msra.mxu0 %v259
    %285 = vmatprep.subr.bf16.mxu0 0
    %286 = vmatpush2.bf16.msra.mxu0 0
    %287 = vmatprep.subr.bf16.mxu0 0
    %288 = vmatpush2.bf16.msra.mxu0 0
    %289 = vmatprep.subr.bf16.mxu0 0
    %290 = vmatpush2.bf16.msra.mxu0 0
    %291 = vmatprep.subr.bf16.mxu0 0
    %292 = vmatpush2.bf16.msra.mxu0 0
    %293 = vmatprep.subr.bf16.mxu0 0
    %294 = vmatpush2.bf16.msra.mxu0 0
    %295 = vmatprep.subr.bf16.mxu0 0
    %296 = vmatpush2.bf16.msra.mxu0 0
    %297 = vmatprep.subr.bf16.mxu0 0
    %298 = vmatpush2.bf16.msra.mxu0 0
    %299 = vmatprep.subr.bf16.mxu0 0
    %300 = vmatpush2.bf16.msra.mxu0 0
    %301 = vmatprep.mubr.bf16.mxu0 0
    %302 = vmatmul.mubr.bf16.gmra.mxu0 %v264
    %v303 = vpop.f32.mrf.mxu0
    %v304 = vadd.f32 0.0, %v303
    %v305 = vpop.f32.mrf.mxu0
    %v306 = vpop.f32.mrf.mxu0
    %v307 = vadd.f32 0.0, %v306
    %v308 = vpop.f32.mrf.mxu0
    %309 = vdwg.mxu0
    %v313 = vunpack.c.l.b16 %v232
    %v314 = vunpack.c.l.b16 %v233
    %v315 = vunpack.c.l.b16 %v234
    %v316 = vpack.c.b16 %v314, %v313
    %v317 = vpack.c.b16 %v315, %v315
    %v320 = vsel %vm262, %v231, 0
    %v323 = vsel %vm226, %v317, 0
    %325 = vmatprep.subr.bf16.mxu0 0
    %326 = vmatpush1.bf16.msra.mxu0 0
    %327 = vmatprep.subr.bf16.mxu0 0
    %328 = vmatpush1.bf16.msra.mxu0 0
    %329 = vmatprep.subr.bf16.mxu0 0
    %330 = vmatpush1.bf16.msra.mxu0 0
    %331 = vmatprep.subr.bf16.mxu0 0
    %332 = vmatpush1.bf16.msra.mxu0 0
    %333 = vmatprep.subr.bf16.mxu0 0
    %334 = vmatpush1.bf16.msra.mxu0 0
    %335 = vmatprep.subr.bf16.mxu0 0
    %336 = vmatpush1.bf16.msra.mxu0 0
    %337 = vmatprep.subr.bf16.mxu0 0
    %338 = vmatpush1.bf16.msra.mxu0 %v323
    %339 = vmatprep.subr.bf16.mxu0 0
    %340 = vmatpush1.bf16.msra.mxu0 %v316
    %341 = vmatprep.subr.bf16.mxu0 0
    %342 = vmatpush2.bf16.msra.mxu0 0
    %343 = vmatprep.subr.bf16.mxu0 0
    %344 = vmatpush2.bf16.msra.mxu0 0
    %345 = vmatprep.subr.bf16.mxu0 0
    %346 = vmatpush2.bf16.msra.mxu0 0
    %347 = vmatprep.subr.bf16.mxu0 0
    %348 = vmatpush2.bf16.msra.mxu0 0
    %349 = vmatprep.subr.bf16.mxu0 0
    %350 = vmatpush2.bf16.msra.mxu0 0
    %351 = vmatprep.subr.bf16.mxu0 0
    %352 = vmatpush2.bf16.msra.mxu0 0
    %353 = vmatprep.subr.bf16.mxu0 0
    %354 = vmatpush2.bf16.msra.mxu0 0
    %355 = vmatprep.subr.bf16.mxu0 0
    %356 = vmatpush2.bf16.msra.mxu0 0
    %357 = vmatprep.mubr.bf16.mxu0 0
    %358 = vmatmul.mubr.bf16.gmra.mxu0 %v320
    %v359 = vpop.f32.mrf.mxu0
    %v360 = vadd.f32 %v304, %v359
    %v361 = vpop.f32.mrf.mxu0
    %v362 = vpop.f32.mrf.mxu0
    %v363 = vadd.f32 %v307, %v362
    %v364 = vpop.f32.mrf.mxu0
    %365 = vdwg.mxu0
    %vm366 = vcmask 1045504
    %v367 = vrot.slane %v227, 2
    %v368 = vrot.slane %v229, 2
    %v369 = vsel %vm366, %v367, %v368
    %v370 = vrot.slane %v228, 2
    %v371 = vrot.slane %v230, 2
    %v372 = vsel %vm366, %v370, %v371
    %v375 = vpack.c.bf16 %v372, %v369
    %s376 = scalar_lea.vmem [#allocation2], 24
    %v377 = vld [vmem:[%s376] sm:$0xf]
    %v378 = vld [vmem:[%s376 + $0x4] sm:$0xf]
    %v379 = vld [vmem:[%s376 + $0x8] sm:$0xf]
    %v383 = vunpack.c.l.b16 %v377
    %v384 = vunpack.c.l.b16 %v378
    %v385 = vunpack.c.l.b16 %v379
    %v386 = vpack.c.b16 %v384, %v383
    %v387 = vpack.c.b16 %v385, %v385
    %v390 = vsel %vm262, %v375, 0
    %v393 = vsel %vm226, %v387, 0
    %395 = vmatprep.subr.bf16.mxu0 0
    %396 = vmatpush1.bf16.msra.mxu0 0
    %397 = vmatprep.subr.bf16.mxu0 0
    %398 = vmatpush1.bf16.msra.mxu0 0
    %399 = vmatprep.subr.bf16.mxu0 0
    %400 = vmatpush1.bf16.msra.mxu0 0
    %401 = vmatprep.subr.bf16.mxu0 0
    %402 = vmatpush1.bf16.msra.mxu0 0
    %403 = vmatprep.subr.bf16.mxu0 0
    %404 = vmatpush1.bf16.msra.mxu0 0
    %405 = vmatprep.subr.bf16.mxu0 0
    %406 = vmatpush1.bf16.msra.mxu0 0
    %407 = vmatprep.subr.bf16.mxu0 0
    %408 = vmatpush1.bf16.msra.mxu0 %v393
    %409 = vmatprep.subr.bf16.mxu0 0
    %410 = vmatpush1.bf16.msra.mxu0 %v386
    %411 = vmatprep.subr.bf16.mxu0 0
    %412 = vmatpush2.bf16.msra.mxu0 0
    %413 = vmatprep.subr.bf16.mxu0 0
    %414 = vmatpush2.bf16.msra.mxu0 0
    %415 = vmatprep.subr.bf16.mxu0 0
    %416 = vmatpush2.bf16.msra.mxu0 0
    %417 = vmatprep.subr.bf16.mxu0 0
    %418 = vmatpush2.bf16.msra.mxu0 0
    %419 = vmatprep.subr.bf16.mxu0 0
    %420 = vmatpush2.bf16.msra.mxu0 0
    %421 = vmatprep.subr.bf16.mxu0 0
    %422 = vmatpush2.bf16.msra.mxu0 0
    %423 = vmatprep.subr.bf16.mxu0 0
    %424 = vmatpush2.bf16.msra.mxu0 0
    %425 = vmatprep.subr.bf16.mxu0 0
    %426 = vmatpush2.bf16.msra.mxu0 0
    %427 = vmatprep.mubr.bf16.mxu0 0
    %428 = vmatmul.mubr.bf16.gmra.mxu0 %v390
    %v429 = vpop.f32.mrf.mxu0
    %v430 = vadd.f32 0.0, %v429
    %v431 = vpop.f32.mrf.mxu0
    %v432 = vpop.f32.mrf.mxu0
    %v433 = vadd.f32 0.0, %v432
    %v434 = vpop.f32.mrf.mxu0
    %435 = vdwg.mxu0
    %v436 = vadd.f32 %v360, %v430
    %v437 = vadd.f32 %v363, %v433
    %vm438 = vcmask 1044480
    %v439 = vrot.slane %v227, 3
    %v440 = vrot.slane %v229, 3
    %v441 = vsel %vm438, %v439, %v440
    %v442 = vrot.slane %v228, 3
    %v443 = vrot.slane %v230, 3
    %v444 = vsel %vm438, %v442, %v443
    %v447 = vpack.c.bf16 %v444, %v441
    %s448 = scalar_lea.vmem [#allocation2], 36
    %v449 = vld [vmem:[%s448] sm:$0xf]
    %v450 = vld [vmem:[%s448 + $0x4] sm:$0xf]
    %v451 = vld [vmem:[%s448 + $0x8] sm:$0xf]
    %v455 = vunpack.c.l.b16 %v449
    %v456 = vunpack.c.l.b16 %v450
    %v457 = vunpack.c.l.b16 %v451
    %v458 = vpack.c.b16 %v456, %v455
    %v459 = vpack.c.b16 %v457, %v457
    %v462 = vsel %vm262, %v447, 0
    %v465 = vsel %vm226, %v459, 0
    %467 = vmatprep.subr.bf16.mxu0 0
    %468 = vmatpush1.bf16.msra.mxu0 0
    %469 = vmatprep.subr.bf16.mxu0 0
    %470 = vmatpush1.bf16.msra.mxu0 0
    %471 = vmatprep.subr.bf16.mxu0 0
    %472 = vmatpush1.bf16.msra.mxu0 0
    %473 = vmatprep.subr.bf16.mxu0 0
    %474 = vmatpush1.bf16.msra.mxu0 0
    %475 = vmatprep.subr.bf16.mxu0 0
    %476 = vmatpush1.bf16.msra.mxu0 0
    %477 = vmatprep.subr.bf16.mxu0 0
    %478 = vmatpush1.bf16.msra.mxu0 0
    %479 = vmatprep.subr.bf16.mxu0 0
    %480 = vmatpush1.bf16.msra.mxu0 %v465
    %481 = vmatprep.subr.bf16.mxu0 0
    %482 = vmatpush1.bf16.msra.mxu0 %v458
    %483 = vmatprep.subr.bf16.mxu0 0
    %484 = vmatpush2.bf16.msra.mxu0 0
    %485 = vmatprep.subr.bf16.mxu0 0
    %486 = vmatpush2.bf16.msra.mxu0 0
    %487 = vmatprep.subr.bf16.mxu0 0
    %488 = vmatpush2.bf16.msra.mxu0 0
    %489 = vmatprep.subr.bf16.mxu0 0
    %490 = vmatpush2.bf16.msra.mxu0 0
    %491 = vmatprep.subr.bf16.mxu0 0
    %492 = vmatpush2.bf16.msra.mxu0 0
    %493 = vmatprep.subr.bf16.mxu0 0
    %494 = vmatpush2.bf16.msra.mxu0 0
    %495 = vmatprep.subr.bf16.mxu0 0
    %496 = vmatpush2.bf16.msra.mxu0 0
    %497 = vmatprep.subr.bf16.mxu0 0
    %498 = vmatpush2.bf16.msra.mxu0 0
    %499 = vmatprep.mubr.bf16.mxu0 0
    %500 = vmatmul.mubr.bf16.gmra.mxu0 %v462
    %v501 = vpop.f32.mrf.mxu0
    %v502 = vadd.f32 0.0, %v501
    %v503 = vpop.f32.mrf.mxu0
    %v504 = vpop.f32.mrf.mxu0
    %v505 = vadd.f32 0.0, %v504
    %v506 = vpop.f32.mrf.mxu0
    %507 = vdwg.mxu0
    %v508 = vadd.f32 %v436, %v502
    %v509 = vadd.f32 %v437, %v505
    %v510 = vrot.slane %v227, 4
    %v511 = vrot.slane %v229, 4
    %v512 = vsel %vm226, %v510, %v511
    %v513 = vrot.slane %v228, 4
    %v514 = vrot.slane %v230, 4
    %v515 = vsel %vm226, %v513, %v514
    %v518 = vpack.c.bf16 %v515, %v512
    %s519 = scalar_lea.vmem [#allocation2], 48
    %v520 = vld [vmem:[%s519] sm:$0xf]
    %v521 = vld [vmem:[%s519 + $0x4] sm:$0xf]
    %v522 = vld [vmem:[%s519 + $0x8] sm:$0xf]
    %v526 = vunpack.c.l.b16 %v520
    %v527 = vunpack.c.l.b16 %v521
    %v528 = vunpack.c.l.b16 %v522
    %v529 = vpack.c.b16 %v527, %v526
    %v530 = vpack.c.b16 %v528, %v528
    %v533 = vsel %vm262, %v518, 0
    %v536 = vsel %vm226, %v530, 0
    %538 = vmatprep.subr.bf16.mxu0 0
    %539 = vmatpush1.bf16.msra.mxu0 0
    %540 = vmatprep.subr.bf16.mxu0 0
    %541 = vmatpush1.bf16.msra.mxu0 0
    %542 = vmatprep.subr.bf16.mxu0 0
    %543 = vmatpush1.bf16.msra.mxu0 0
    %544 = vmatprep.subr.bf16.mxu0 0
    %545 = vmatpush1.bf16.msra.mxu0 0
    %546 = vmatprep.subr.bf16.mxu0 0
    %547 = vmatpush1.bf16.msra.mxu0 0
    %548 = vmatprep.subr.bf16.mxu0 0
    %549 = vmatpush1.bf16.msra.mxu0 0
    %550 = vmatprep.subr.bf16.mxu0 0
    %551 = vmatpush1.bf16.msra.mxu0 %v536
    %552 = vmatprep.subr.bf16.mxu0 0
    %553 = vmatpush1.bf16.msra.mxu0 %v529
    %554 = vmatprep.subr.bf16.mxu0 0
    %555 = vmatpush2.bf16.msra.mxu0 0
    %556 = vmatprep.subr.bf16.mxu0 0
    %557 = vmatpush2.bf16.msra.mxu0 0
    %558 = vmatprep.subr.bf16.mxu0 0
    %559 = vmatpush2.bf16.msra.mxu0 0
    %560 = vmatprep.subr.bf16.mxu0 0
    %561 = vmatpush2.bf16.msra.mxu0 0
    %562 = vmatprep.subr.bf16.mxu0 0
    %563 = vmatpush2.bf16.msra.mxu0 0
    %564 = vmatprep.subr.bf16.mxu0 0
    %565 = vmatpush2.bf16.msra.mxu0 0
    %566 = vmatprep.subr.bf16.mxu0 0
    %567 = vmatpush2.bf16.msra.mxu0 0
    %568 = vmatprep.subr.bf16.mxu0 0
    %569 = vmatpush2.bf16.msra.mxu0 0
    %570 = vmatprep.mubr.bf16.mxu0 0
    %571 = vmatmul.mubr.bf16.gmra.mxu0 %v533
    %v572 = vpop.f32.mrf.mxu0
    %v573 = vadd.f32 0.0, %v572
    %v574 = vpop.f32.mrf.mxu0
    %v575 = vpop.f32.mrf.mxu0
    %v576 = vadd.f32 0.0, %v575
    %v577 = vpop.f32.mrf.mxu0
    %578 = vdwg.mxu0
    %v579 = vadd.f32 %v508, %v573
    %v580 = vadd.f32 %v509, %v576
    %vm581 = vcmask 1042432
    %v582 = vrot.slane %v227, 5
    %v583 = vrot.slane %v229, 5
    %v584 = vsel %vm581, %v582, %v583
    %v585 = vrot.slane %v228, 5
    %v586 = vrot.slane %v230, 5
    %v587 = vsel %vm581, %v585, %v586
    %v590 = vpack.c.bf16 %v587, %v584
    %s591 = scalar_lea.vmem [#allocation2], 60
    %v592 = vld [vmem:[%s591] sm:$0xf]
    %v593 = vld [vmem:[%s591 + $0x4] sm:$0xf]
    %v594 = vld [vmem:[%s591 + $0x8] sm:$0xf]
    %v598 = vunpack.c.l.b16 %v592
    %v599 = vunpack.c.l.b16 %v593
    %v600 = vunpack.c.l.b16 %v594
    %v601 = vpack.c.b16 %v599, %v598
    %v602 = vpack.c.b16 %v600, %v600
    %v605 = vsel %vm262, %v590, 0
    %v608 = vsel %vm226, %v602, 0
    %610 = vmatprep.subr.bf16.mxu0 0
    %611 = vmatpush1.bf16.msra.mxu0 0
    %612 = vmatprep.subr.bf16.mxu0 0
    %613 = vmatpush1.bf16.msra.mxu0 0
    %614 = vmatprep.subr.bf16.mxu0 0
    %615 = vmatpush1.bf16.msra.mxu0 0
    %616 = vmatprep.subr.bf16.mxu0 0
    %617 = vmatpush1.bf16.msra.mxu0 0
    %618 = vmatprep.subr.bf16.mxu0 0
    %619 = vmatpush1.bf16.msra.mxu0 0
    %620 = vmatprep.subr.bf16.mxu0 0
    %621 = vmatpush1.bf16.msra.mxu0 0
    %622 = vmatprep.subr.bf16.mxu0 0
    %623 = vmatpush1.bf16.msra.mxu0 %v608
    %624 = vmatprep.subr.bf16.mxu0 0
    %625 = vmatpush1.bf16.msra.mxu0 %v601
    %626 = vmatprep.subr.bf16.mxu0 0
    %627 = vmatpush2.bf16.msra.mxu0 0
    %628 = vmatprep.subr.bf16.mxu0 0
    %629 = vmatpush2.bf16.msra.mxu0 0
    %630 = vmatprep.subr.bf16.mxu0 0
    %631 = vmatpush2.bf16.msra.mxu0 0
    %632 = vmatprep.subr.bf16.mxu0 0
    %633 = vmatpush2.bf16.msra.mxu0 0
    %634 = vmatprep.subr.bf16.mxu0 0
    %635 = vmatpush2.bf16.msra.mxu0 0
    %636 = vmatprep.subr.bf16.mxu0 0
    %637 = vmatpush2.bf16.msra.mxu0 0
    %638 = vmatprep.subr.bf16.mxu0 0
    %639 = vmatpush2.bf16.msra.mxu0 0
    %640 = vmatprep.subr.bf16.mxu0 0
    %641 = vmatpush2.bf16.msra.mxu0 0
    %642 = vmatprep.mubr.bf16.mxu0 0
    %643 = vmatmul.mubr.bf16.gmra.mxu0 %v605
    %v644 = vpop.f32.mrf.mxu0
    %v645 = vadd.f32 0.0, %v644
    %v646 = vpop.f32.mrf.mxu0
    %v647 = vpop.f32.mrf.mxu0
    %v648 = vadd.f32 0.0, %v647
    %v649 = vpop.f32.mrf.mxu0
    %650 = vdwg.mxu0
    %v651 = vadd.f32 %v579, %v645
    %v652 = vadd.f32 %v580, %v648
    %vm653 = vcmask 1041408
    %v654 = vrot.slane %v227, 6
    %v655 = vrot.slane %v229, 6
    %v656 = vsel %vm653, %v654, %v655
    %v657 = vrot.slane %v228, 6
    %v658 = vrot.slane %v230, 6
    %v659 = vsel %vm653, %v657, %v658
    %v662 = vpack.c.bf16 %v659, %v656
    %s663 = scalar_lea.vmem [#allocation2], 72
    %v664 = vld [vmem:[%s663] sm:$0xf]
    %v665 = vld [vmem:[%s663 + $0x4] sm:$0xf]
    %v666 = vld [vmem:[%s663 + $0x8] sm:$0xf]
    %v670 = vunpack.c.l.b16 %v664
    %v671 = vunpack.c.l.b16 %v665
    %v672 = vunpack.c.l.b16 %v666
    %v673 = vpack.c.b16 %v671, %v670
    %v674 = vpack.c.b16 %v672, %v672
    %v677 = vsel %vm262, %v662, 0
    %v680 = vsel %vm226, %v674, 0
    %682 = vmatprep.subr.bf16.mxu0 0
    %683 = vmatpush1.bf16.msra.mxu0 0
    %684 = vmatprep.subr.bf16.mxu0 0
    %685 = vmatpush1.bf16.msra.mxu0 0
    %686 = vmatprep.subr.bf16.mxu0 0
    %687 = vmatpush1.bf16.msra.mxu0 0
    %688 = vmatprep.subr.bf16.mxu0 0
    %689 = vmatpush1.bf16.msra.mxu0 0
    %690 = vmatprep.subr.bf16.mxu0 0
    %691 = vmatpush1.bf16.msra.mxu0 0
    %692 = vmatprep.subr.bf16.mxu0 0
    %693 = vmatpush1.bf16.msra.mxu0 0
    %694 = vmatprep.subr.bf16.mxu0 0
    %695 = vmatpush1.bf16.msra.mxu0 %v680
    %696 = vmatprep.subr.bf16.mxu0 0
    %697 = vmatpush1.bf16.msra.mxu0 %v673
    %698 = vmatprep.subr.bf16.mxu0 0
    %699 = vmatpush2.bf16.msra.mxu0 0
    %700 = vmatprep.subr.bf16.mxu0 0
    %701 = vmatpush2.bf16.msra.mxu0 0
    %702 = vmatprep.subr.bf16.mxu0 0
    %703 = vmatpush2.bf16.msra.mxu0 0
    %704 = vmatprep.subr.bf16.mxu0 0
    %705 = vmatpush2.bf16.msra.mxu0 0
    %706 = vmatprep.subr.bf16.mxu0 0
    %707 = vmatpush2.bf16.msra.mxu0 0
    %708 = vmatprep.subr.bf16.mxu0 0
    %709 = vmatpush2.bf16.msra.mxu0 0
    %710 = vmatprep.subr.bf16.mxu0 0
    %711 = vmatpush2.bf16.msra.mxu0 0
    %712 = vmatprep.subr.bf16.mxu0 0
    %713 = vmatpush2.bf16.msra.mxu0 0
    %714 = vmatprep.mubr.bf16.mxu0 0
    %715 = vmatmul.mubr.bf16.gmra.mxu0 %v677
    %v716 = vpop.f32.mrf.mxu0
    %v717 = vadd.f32 0.0, %v716
    %v718 = vpop.f32.mrf.mxu0
    %v719 = vpop.f32.mrf.mxu0
    %v720 = vadd.f32 0.0, %v719
    %v721 = vpop.f32.mrf.mxu0
    %722 = vdwg.mxu0
    %v723 = vadd.f32 %v651, %v717
    %v724 = vadd.f32 %v652, %v720
    %vm725 = vcmask 1040384
    %v726 = vrot.slane %v227, 7
    %v727 = vrot.slane %v229, 7
    %v728 = vsel %vm725, %v726, %v727
    %v729 = vrot.slane %v228, 7
    %v730 = vrot.slane %v230, 7
    %v731 = vsel %vm725, %v729, %v730
    %v734 = vpack.c.bf16 %v731, %v728
    %s735 = scalar_lea.vmem [#allocation2], 84
    %v736 = vld [vmem:[%s735] sm:$0xf]
    %v737 = vld [vmem:[%s735 + $0x4] sm:$0xf]
    %v738 = vld [vmem:[%s735 + $0x8] sm:$0xf]
    %v742 = vunpack.c.l.b16 %v736
    %v743 = vunpack.c.l.b16 %v737
    %v744 = vunpack.c.l.b16 %v738
    %v745 = vpack.c.b16 %v743, %v742
    %v746 = vpack.c.b16 %v744, %v744
    %v749 = vsel %vm262, %v734, 0
    %v752 = vsel %vm226, %v746, 0
    %754 = vmatprep.subr.bf16.mxu0 0
    %755 = vmatpush1.bf16.msra.mxu0 0
    %756 = vmatprep.subr.bf16.mxu0 0
    %757 = vmatpush1.bf16.msra.mxu0 0
    %758 = vmatprep.subr.bf16.mxu0 0
    %759 = vmatpush1.bf16.msra.mxu0 0
    %760 = vmatprep.subr.bf16.mxu0 0
    %761 = vmatpush1.bf16.msra.mxu0 0
    %762 = vmatprep.subr.bf16.mxu0 0
    %763 = vmatpush1.bf16.msra.mxu0 0
    %764 = vmatprep.subr.bf16.mxu0 0
    %765 = vmatpush1.bf16.msra.mxu0 0
    %766 = vmatprep.subr.bf16.mxu0 0
    %767 = vmatpush1.bf16.msra.mxu0 %v752
    %768 = vmatprep.subr.bf16.mxu0 0
    %769 = vmatpush1.bf16.msra.mxu0 %v745
    %770 = vmatprep.subr.bf16.mxu0 0
    %771 = vmatpush2.bf16.msra.mxu0 0
    %772 = vmatprep.subr.bf16.mxu0 0
    %773 = vmatpush2.bf16.msra.mxu0 0
    %774 = vmatprep.subr.bf16.mxu0 0
    %775 = vmatpush2.bf16.msra.mxu0 0
    %776 = vmatprep.subr.bf16.mxu0 0
    %777 = vmatpush2.bf16.msra.mxu0 0
    %778 = vmatprep.subr.bf16.mxu0 0
    %779 = vmatpush2.bf16.msra.mxu0 0
    %780 = vmatprep.subr.bf16.mxu0 0
    %781 = vmatpush2.bf16.msra.mxu0 0
    %782 = vmatprep.subr.bf16.mxu0 0
    %783 = vmatpush2.bf16.msra.mxu0 0
    %784 = vmatprep.subr.bf16.mxu0 0
    %785 = vmatpush2.bf16.msra.mxu0 0
    %786 = vmatprep.mubr.bf16.mxu0 0
    %787 = vmatmul.mubr.bf16.gmra.mxu0 %v749
    %v788 = vpop.f32.mrf.mxu0
    %v789 = vadd.f32 0.0, %v788
    %v790 = vpop.f32.mrf.mxu0
    %v791 = vpop.f32.mrf.mxu0
    %v792 = vadd.f32 0.0, %v791
    %v793 = vpop.f32.mrf.mxu0
    %794 = vdwg.mxu0
    %v795 = vadd.f32 %v723, %v789
    %v796 = vadd.f32 %v724, %v792
    %v797 = vpack.c.bf16 %v230, %v229
    %s798 = scalar_lea.vmem [#allocation2], 96
    %v799 = vld [vmem:[%s798] sm:$0xf]
    %v800 = vld [vmem:[%s798 + $0x4] sm:$0xf]
    %v801 = vld [vmem:[%s798 + $0x8] sm:$0xf]
    %v805 = vunpack.c.l.b16 %v799
    %v806 = vunpack.c.l.b16 %v800
    %v807 = vunpack.c.l.b16 %v801
    %v808 = vpack.c.b16 %v806, %v805
    %v809 = vpack.c.b16 %v807, %v807
    %v812 = vsel %vm262, %v797, 0
    %v815 = vsel %vm226, %v809, 0
    %817 = vmatprep.subr.bf16.mxu0 0
    %818 = vmatpush1.bf16.msra.mxu0 0
    %819 = vmatprep.subr.bf16.mxu0 0
    %820 = vmatpush1.bf16.msra.mxu0 0
    %821 = vmatprep.subr.bf16.mxu0 0
    %822 = vmatpush1.bf16.msra.mxu0 0
    %823 = vmatprep.subr.bf16.mxu0 0
    %824 = vmatpush1.bf16.msra.mxu0 0
    %825 = vmatprep.subr.bf16.mxu0 0
    %826 = vmatpush1.bf16.msra.mxu0 0
    %827 = vmatprep.subr.bf16.mxu0 0
    %828 = vmatpush1.bf16.msra.mxu0 0
    %829 = vmatprep.subr.bf16.mxu0 0
    %830 = vmatpush1.bf16.msra.mxu0 %v815
    %831 = vmatprep.subr.bf16.mxu0 0
    %832 = vmatpush1.bf16.msra.mxu0 %v808
    %833 = vmatprep.subr.bf16.mxu0 0
    %834 = vmatpush2.bf16.msra.mxu0 0
    %835 = vmatprep.subr.bf16.mxu0 0
    %836 = vmatpush2.bf16.msra.mxu0 0
    %837 = vmatprep.subr.bf16.mxu0 0
    %838 = vmatpush2.bf16.msra.mxu0 0
    %839 = vmatprep.subr.bf16.mxu0 0
    %840 = vmatpush2.bf16.msra.mxu0 0
    %841 = vmatprep.subr.bf16.mxu0 0
    %842 = vmatpush2.bf16.msra.mxu0 0
    %843 = vmatprep.subr.bf16.mxu0 0
    %844 = vmatpush2.bf16.msra.mxu0 0
    %845 = vmatprep.subr.bf16.mxu0 0
    %846 = vmatpush2.bf16.msra.mxu0 0
    %847 = vmatprep.subr.bf16.mxu0 0
    %848 = vmatpush2.bf16.msra.mxu0 0
    %849 = vmatprep.mubr.bf16.mxu0 0
    %850 = vmatmul.mubr.bf16.gmra.mxu0 %v812
    %v851 = vpop.f32.mrf.mxu0
    %v852 = vadd.f32 0.0, %v851
    %v853 = vpop.f32.mrf.mxu0
    %v854 = vpop.f32.mrf.mxu0
    %v855 = vadd.f32 0.0, %v854
    %v856 = vpop.f32.mrf.mxu0
    %857 = vdwg.mxu0
    %v858 = vadd.f32 %v795, %v852
    %v859 = vadd.f32 %v796, %v855
    %v860 = vld [vmem:[#allocation5] sm:$0x1]
    %v862 = vlaneseq
    %v863 = vshrl.u32 %v862, 7
    %v864 = vsub.s32 0, %v863
    %v865 = vrot.slane %v860, %v864
    %v867 = vadd.f32 %v858, %v865
    %v868 = vadd.f32 %v859, %v865
    %s869 = sld [smem:[#allocation20]]
    %vm870 = vcmp.ge.f32.partialorder %v867, 0.0
    %vm871 = vcmp.ge.f32.partialorder %v868, 0.0
    %v872 = vstv %s869
    %v873 = vmul.f32 %v872, %v867
    %v874 = vmul.f32 %v872, %v868
    %v875 = vsel %vm870, %v867, %v873
    %v876 = vsel %vm871, %v868, %v874
    %v879 = vrot.slane %v875, 7
    %v880 = vrot.slane %v876, 7
    %v883 = vsel %vm725, 0.0, %v879
    %v884 = vsel %vm725, 0.0, %v880
    %v885 = vsel %vm725, %v879, 0.0
    %v886 = vsel %vm725, %v880, 0.0
    %v887 = vpack.c.bf16 %v884, %v883
    %v888 = vld [vmem:[#allocation7] sm:$0xf]
    %v889 = vld [vmem:[#allocation7 + $0x4] sm:$0xf]
    %v890 = vld [vmem:[#allocation7 + $0x8] sm:$0xf]
    %v891 = vld [vmem:[#allocation7 + $0xc] sm:$0xf]
    %v892 = vld [vmem:[#allocation7 + $0x10] sm:$0xf]
    %v893 = vld [vmem:[#allocation7 + $0x14] sm:$0xf]
    %v894 = vld [vmem:[#allocation7 + $0x18] sm:$0xf]
    %v895 = vld [vmem:[#allocation7 + $0x1c] sm:$0xf]
    %v896 = vld [vmem:[#allocation7 + $0x20] sm:$0xf]
    %v897 = vld [vmem:[#allocation7 + $0x24] sm:$0xf]
    %v898 = vld [vmem:[#allocation7 + $0x28] sm:$0xf]
    %v899 = vld [vmem:[#allocation7 + $0x2c] sm:$0xf]
    %v900 = vld [vmem:[#allocation7 + $0x30] sm:$0xf]
    %v901 = vld [vmem:[#allocation7 + $0x34] sm:$0xf]
    %v902 = vld [vmem:[#allocation7 + $0x38] sm:$0xf]
    %v903 = vld [vmem:[#allocation7 + $0x3c] sm:$0xf]
    %v908 = vrot.slane %v883, 1
    %v909 = vrot.slane %v885, 1
    %v910 = vsel %vm239, %v908, %v909
    %v911 = vrot.slane %v884, 1
    %v912 = vrot.slane %v886, 1
    %v913 = vsel %vm239, %v911, %v912
    %v916 = vpack.c.bf16 %v913, %v910
    %s917 = scalar_lea.vmem [#allocation7], 64
    %v918 = vld [vmem:[%s917] sm:$0xf]
    %v919 = vld [vmem:[%s917 + $0x4] sm:$0xf]
    %v920 = vld [vmem:[%s917 + $0x8] sm:$0xf]
    %v921 = vld [vmem:[%s917 + $0xc] sm:$0xf]
    %v922 = vld [vmem:[%s917 + $0x10] sm:$0xf]
    %v923 = vld [vmem:[%s917 + $0x14] sm:$0xf]
    %v924 = vld [vmem:[%s917 + $0x18] sm:$0xf]
    %v925 = vld [vmem:[%s917 + $0x1c] sm:$0xf]
    %v926 = vld [vmem:[%s917 + $0x20] sm:$0xf]
    %v927 = vld [vmem:[%s917 + $0x24] sm:$0xf]
    %v928 = vld [vmem:[%s917 + $0x28] sm:$0xf]
    %v929 = vld [vmem:[%s917 + $0x2c] sm:$0xf]
    %v930 = vld [vmem:[%s917 + $0x30] sm:$0xf]
    %v931 = vld [vmem:[%s917 + $0x34] sm:$0xf]
    %v932 = vld [vmem:[%s917 + $0x38] sm:$0xf]
    %v933 = vld [vmem:[%s917 + $0x3c] sm:$0xf]
    %v950 = vunpack.c.l.b16 %v918
    %v951 = vunpack.c.l.b16 %v919
    %v952 = vunpack.c.l.b16 %v920
    %v953 = vunpack.c.l.b16 %v921
    %v954 = vunpack.c.l.b16 %v922
    %v955 = vunpack.c.l.b16 %v923
    %v956 = vunpack.c.l.b16 %v924
    %v957 = vunpack.c.l.b16 %v925
    %v958 = vunpack.c.l.b16 %v926
    %v959 = vunpack.c.l.b16 %v927
    %v960 = vunpack.c.l.b16 %v928
    %v961 = vunpack.c.l.b16 %v929
    %v962 = vunpack.c.l.b16 %v930
    %v963 = vunpack.c.l.b16 %v931
    %v964 = vunpack.c.l.b16 %v932
    %v965 = vunpack.c.l.b16 %v933
    %v966 = vpack.c.b16 %v951, %v950
    %v967 = vpack.c.b16 %v953, %v952
    %v968 = vpack.c.b16 %v955, %v954
    %v969 = vpack.c.b16 %v957, %v956
    %v970 = vpack.c.b16 %v959, %v958
    %v971 = vpack.c.b16 %v961, %v960
    %v972 = vpack.c.b16 %v963, %v962
    %v973 = vpack.c.b16 %v965, %v964
    %982 = vmatprep.subr.bf16.mxu0 0
    %983 = vmatpush1.bf16.msra.mxu0 %v973
    %984 = vmatprep.subr.bf16.mxu0 0
    %985 = vmatpush1.bf16.msra.mxu0 %v972
    %986 = vmatprep.subr.bf16.mxu0 0
    %987 = vmatpush1.bf16.msra.mxu0 %v971
    %988 = vmatprep.subr.bf16.mxu0 0
    %989 = vmatpush1.bf16.msra.mxu0 %v970
    %990 = vmatprep.subr.bf16.mxu0 0
    %991 = vmatpush1.bf16.msra.mxu0 %v969
    %992 = vmatprep.subr.bf16.mxu0 0
    %993 = vmatpush1.bf16.msra.mxu0 %v968
    %994 = vmatprep.subr.bf16.mxu0 0
    %995 = vmatpush1.bf16.msra.mxu0 %v967
    %996 = vmatprep.subr.bf16.mxu0 0
    %997 = vmatpush1.bf16.msra.mxu0 %v966
    %998 = vmatprep.subr.bf16.mxu0 0
    %999 = vmatpush2.bf16.msra.mxu0 0
    %1000 = vmatprep.subr.bf16.mxu0 0
    %1001 = vmatpush2.bf16.msra.mxu0 0
    %1002 = vmatprep.subr.bf16.mxu0 0
    %1003 = vmatpush2.bf16.msra.mxu0 0
    %1004 = vmatprep.subr.bf16.mxu0 0
    %1005 = vmatpush2.bf16.msra.mxu0 0
    %1006 = vmatprep.subr.bf16.mxu0 0
    %1007 = vmatpush2.bf16.msra.mxu0 0
    %1008 = vmatprep.subr.bf16.mxu0 0
    %1009 = vmatpush2.bf16.msra.mxu0 0
    %1010 = vmatprep.subr.bf16.mxu0 0
    %1011 = vmatpush2.bf16.msra.mxu0 0
    %1012 = vmatprep.subr.bf16.mxu0 0
    %1013 = vmatpush2.bf16.msra.mxu0 0
    %1014 = vmatprep.mubr.bf16.mxu0 0
    %1015 = vmatmul.mubr.bf16.gmra.mxu0 %v916
    %v1016 = vpop.f32.mrf.mxu0
    %v1017 = vadd.f32 0.0, %v1016
    %v1018 = vpop.f32.mrf.mxu0
    %v1019 = vpop.f32.mrf.mxu0
    %v1020 = vadd.f32 0.0, %v1019
    %v1021 = vpop.f32.mrf.mxu0
    %1022 = vdwg.mxu0
    %v1039 = vunpack.c.l.b16 %v888
    %v1040 = vunpack.c.l.b16 %v889
    %v1041 = vunpack.c.l.b16 %v890
    %v1042 = vunpack.c.l.b16 %v891
    %v1043 = vunpack.c.l.b16 %v892
    %v1044 = vunpack.c.l.b16 %v893
    %v1045 = vunpack.c.l.b16 %v894
    %v1046 = vunpack.c.l.b16 %v895
    %v1047 = vunpack.c.l.b16 %v896
    %v1048 = vunpack.c.l.b16 %v897
    %v1049 = vunpack.c.l.b16 %v898
    %v1050 = vunpack.c.l.b16 %v899
    %v1051 = vunpack.c.l.b16 %v900
    %v1052 = vunpack.c.l.b16 %v901
    %v1053 = vunpack.c.l.b16 %v902
    %v1054 = vunpack.c.l.b16 %v903
    %v1055 = vpack.c.b16 %v1040, %v1039
    %v1056 = vpack.c.b16 %v1042, %v1041
    %v1057 = vpack.c.b16 %v1044, %v1043
    %v1058 = vpack.c.b16 %v1046, %v1045
    %v1059 = vpack.c.b16 %v1048, %v1047
    %v1060 = vpack.c.b16 %v1050, %v1049
    %v1061 = vpack.c.b16 %v1052, %v1051
    %v1062 = vpack.c.b16 %v1054, %v1053
    %1071 = vmatprep.subr.bf16.mxu0 0
    %1072 = vmatpush1.bf16.msra.mxu0 %v1062
    %1073 = vmatprep.subr.bf16.mxu0 0
    %1074 = vmatpush1.bf16.msra.mxu0 %v1061
    %1075 = vmatprep.subr.bf16.mxu0 0
    %1076 = vmatpush1.bf16.msra.mxu0 %v1060
    %1077 = vmatprep.subr.bf16.mxu0 0
    %1078 = vmatpush1.bf16.msra.mxu0 %v1059
    %1079 = vmatprep.subr.bf16.mxu0 0
    %1080 = vmatpush1.bf16.msra.mxu0 %v1058
    %1081 = vmatprep.subr.bf16.mxu0 0
    %1082 = vmatpush1.bf16.msra.mxu0 %v1057
    %1083 = vmatprep.subr.bf16.mxu0 0
    %1084 = vmatpush1.bf16.msra.mxu0 %v1056
    %1085 = vmatprep.subr.bf16.mxu0 0
    %1086 = vmatpush1.bf16.msra.mxu0 %v1055
    %1087 = vmatprep.subr.bf16.mxu0 0
    %1088 = vmatpush2.bf16.msra.mxu0 0
    %1089 = vmatprep.subr.bf16.mxu0 0
    %1090 = vmatpush2.bf16.msra.mxu0 0
    %1091 = vmatprep.subr.bf16.mxu0 0
    %1092 = vmatpush2.bf16.msra.mxu0 0
    %1093 = vmatprep.subr.bf16.mxu0 0
    %1094 = vmatpush2.bf16.msra.mxu0 0
    %1095 = vmatprep.subr.bf16.mxu0 0
    %1096 = vmatpush2.bf16.msra.mxu0 0
    %1097 = vmatprep.subr.bf16.mxu0 0
    %1098 = vmatpush2.bf16.msra.mxu0 0
    %1099 = vmatprep.subr.bf16.mxu0 0
    %1100 = vmatpush2.bf16.msra.mxu0 0
    %1101 = vmatprep.subr.bf16.mxu0 0
    %1102 = vmatpush2.bf16.msra.mxu0 0
    %1103 = vmatprep.mubr.bf16.mxu0 0
    %1104 = vmatmul.mubr.bf16.gmra.mxu0 %v887
    %v1105 = vpop.f32.mrf.mxu0
    %v1106 = vadd.f32 %v1017, %v1105
    %v1107 = vpop.f32.mrf.mxu0
    %v1108 = vpop.f32.mrf.mxu0
    %v1109 = vadd.f32 %v1020, %v1108
    %v1110 = vpop.f32.mrf.mxu0
    %1111 = vdwg.mxu0
    %v1112 = vrot.slane %v883, 2
    %v1113 = vrot.slane %v885, 2
    %v1114 = vsel %vm366, %v1112, %v1113
    %v1115 = vrot.slane %v884, 2
    %v1116 = vrot.slane %v886, 2
    %v1117 = vsel %vm366, %v1115, %v1116
    %v1120 = vpack.c.bf16 %v1117, %v1114
    %s1121 = scalar_lea.vmem [#allocation7], 128
    %v1122 = vld [vmem:[%s1121] sm:$0xf]
    %v1123 = vld [vmem:[%s1121 + $0x4] sm:$0xf]
    %v1124 = vld [vmem:[%s1121 + $0x8] sm:$0xf]
    %v1125 = vld [vmem:[%s1121 + $0xc] sm:$0xf]
    %v1126 = vld [vmem:[%s1121 + $0x10] sm:$0xf]
    %v1127 = vld [vmem:[%s1121 + $0x14] sm:$0xf]
    %v1128 = vld [vmem:[%s1121 + $0x18] sm:$0xf]
    %v1129 = vld [vmem:[%s1121 + $0x1c] sm:$0xf]
    %v1130 = vld [vmem:[%s1121 + $0x20] sm:$0xf]
    %v1131 = vld [vmem:[%s1121 + $0x24] sm:$0xf]
    %v1132 = vld [vmem:[%s1121 + $0x28] sm:$0xf]
    %v1133 = vld [vmem:[%s1121 + $0x2c] sm:$0xf]
    %v1134 = vld [vmem:[%s1121 + $0x30] sm:$0xf]
    %v1135 = vld [vmem:[%s1121 + $0x34] sm:$0xf]
    %v1136 = vld [vmem:[%s1121 + $0x38] sm:$0xf]
    %v1137 = vld [vmem:[%s1121 + $0x3c] sm:$0xf]
    %v1154 = vunpack.c.l.b16 %v1122
    %v1155 = vunpack.c.l.b16 %v1123
    %v1156 = vunpack.c.l.b16 %v1124
    %v1157 = vunpack.c.l.b16 %v1125
    %v1158 = vunpack.c.l.b16 %v1126
    %v1159 = vunpack.c.l.b16 %v1127
    %v1160 = vunpack.c.l.b16 %v1128
    %v1161 = vunpack.c.l.b16 %v1129
    %v1162 = vunpack.c.l.b16 %v1130
    %v1163 = vunpack.c.l.b16 %v1131
    %v1164 = vunpack.c.l.b16 %v1132
    %v1165 = vunpack.c.l.b16 %v1133
    %v1166 = vunpack.c.l.b16 %v1134
    %v1167 = vunpack.c.l.b16 %v1135
    %v1168 = vunpack.c.l.b16 %v1136
    %v1169 = vunpack.c.l.b16 %v1137
    %v1170 = vpack.c.b16 %v1155, %v1154
    %v1171 = vpack.c.b16 %v1157, %v1156
    %v1172 = vpack.c.b16 %v1159, %v1158
    %v1173 = vpack.c.b16 %v1161, %v1160
    %v1174 = vpack.c.b16 %v1163, %v1162
    %v1175 = vpack.c.b16 %v1165, %v1164
    %v1176 = vpack.c.b16 %v1167, %v1166
    %v1177 = vpack.c.b16 %v1169, %v1168
    %1186 = vmatprep.subr.bf16.mxu0 0
    %1187 = vmatpush1.bf16.msra.mxu0 %v1177
    %1188 = vmatprep.subr.bf16.mxu0 0
    %1189 = vmatpush1.bf16.msra.mxu0 %v1176
    %1190 = vmatprep.subr.bf16.mxu0 0
    %1191 = vmatpush1.bf16.msra.mxu0 %v1175
    %1192 = vmatprep.subr.bf16.mxu0 0
    %1193 = vmatpush1.bf16.msra.mxu0 %v1174
    %1194 = vmatprep.subr.bf16.mxu0 0
    %1195 = vmatpush1.bf16.msra.mxu0 %v1173
    %1196 = vmatprep.subr.bf16.mxu0 0
    %1197 = vmatpush1.bf16.msra.mxu0 %v1172
    %1198 = vmatprep.subr.bf16.mxu0 0
    %1199 = vmatpush1.bf16.msra.mxu0 %v1171
    %1200 = vmatprep.subr.bf16.mxu0 0
    %1201 = vmatpush1.bf16.msra.mxu0 %v1170
    %1202 = vmatprep.subr.bf16.mxu0 0
    %1203 = vmatpush2.bf16.msra.mxu0 0
    %1204 = vmatprep.subr.bf16.mxu0 0
    %1205 = vmatpush2.bf16.msra.mxu0 0
    %1206 = vmatprep.subr.bf16.mxu0 0
    %1207 = vmatpush2.bf16.msra.mxu0 0
    %1208 = vmatprep.subr.bf16.mxu0 0
    %1209 = vmatpush2.bf16.msra.mxu0 0
    %1210 = vmatprep.subr.bf16.mxu0 0
    %1211 = vmatpush2.bf16.msra.mxu0 0
    %1212 = vmatprep.subr.bf16.mxu0 0
    %1213 = vmatpush2.bf16.msra.mxu0 0
    %1214 = vmatprep.subr.bf16.mxu0 0
    %1215 = vmatpush2.bf16.msra.mxu0 0
    %1216 = vmatprep.subr.bf16.mxu0 0
    %1217 = vmatpush2.bf16.msra.mxu0 0
    %1218 = vmatprep.mubr.bf16.mxu0 0
    %1219 = vmatmul.mubr.bf16.gmra.mxu0 %v1120
    %v1220 = vpop.f32.mrf.mxu0
    %v1221 = vadd.f32 0.0, %v1220
    %v1222 = vpop.f32.mrf.mxu0
    %v1223 = vpop.f32.mrf.mxu0
    %v1224 = vadd.f32 0.0, %v1223
    %v1225 = vpop.f32.mrf.mxu0
    %1226 = vdwg.mxu0
    %v1227 = vadd.f32 %v1106, %v1221
    %v1228 = vadd.f32 %v1109, %v1224
    %v1229 = vld [vmem:[#allocation8] sm:$0x1]
    %v1230 = vld [vmem:[#allocation10] sm:$0x1]
    %v1231 = vadd.f32 %v1227, %v1228
    %v1232 = vrot.slane %v1231, 4
    %v1233 = vadd.f32 %v1231, %v1232
    %v1234 = vrot.slane %v1233, 2
    %v1235 = vadd.f32 %v1233, %v1234
    %v1236 = vrot.slane %v1235, 1
    %v1237 = vadd.f32 %v1235, %v1236
    %v1238 = vmul.f32 %v1227, %v1227
    %v1239 = vmul.f32 %v1228, %v1228
    %v1240 = vadd.f32 %v1238, %v1239
    %v1241 = vrot.slane %v1240, 4
    %v1242 = vadd.f32 %v1240, %v1241
    %v1243 = vrot.slane %v1242, 2
    %v1244 = vadd.f32 %v1242, %v1243
    %v1245 = vrot.slane %v1244, 1
    %v1246 = vadd.f32 %v1244, %v1245
    %1247 = vmatprep.subr.mxu0 0.0
    %1248 = vmatpush1.msra.mxu0 %v217
    %1249 = vmatprep.subr.mxu0 0.0
    %1250 = vmatpush1.msra.mxu0 %v216
    %1251 = vmatprep.subr.mxu0 0.0
    %1252 = vmatpush1.msra.mxu0 %v215
    %1253 = vmatprep.subr.mxu0 0.0
    %1254 = vmatpush1.msra.mxu0 %v214
    %1255 = vmatprep.subr.mxu0 0.0
    %1256 = vmatpush1.msra.mxu0 %v213
    %1257 = vmatprep.subr.mxu0 0.0
    %1258 = vmatpush1.msra.mxu0 %v212
    %1259 = vmatprep.subr.mxu0 0.0
    %1260 = vmatpush1.msra.mxu0 %v211
    %1261 = vmatprep.subr.mxu0 0.0
    %1262 = vmatpush1.msra.mxu0 %v210
    %1263 = vmatprep.subr.mxu0 0.0
    %1264 = vmatpush1.msra.mxu0 %v209
    %1265 = vmatprep.subr.mxu0 0.0
    %1266 = vmatpush1.msra.mxu0 %v208
    %1267 = vmatprep.subr.mxu0 0.0
    %1268 = vmatpush1.msra.mxu0 %v207
    %1269 = vmatprep.subr.mxu0 0.0
    %1270 = vmatpush1.msra.mxu0 %v206
    %1271 = vmatprep.subr.mxu0 0.0
    %1272 = vmatpush1.msra.mxu0 %v205
    %1273 = vmatprep.subr.mxu0 0.0
    %1274 = vmatpush1.msra.mxu0 %v204
    %1275 = vmatprep.subr.mxu0 0.0
    %1276 = vmatpush1.msra.mxu0 %v203
    %1277 = vmatprep.subr.mxu0 0.0
    %1278 = vmatpush1.msra.mxu0 %v202
    %1279 = vmatprep.subr.mxu0 0.0
    %1280 = vmatpush2.msra.mxu0 0.0
    %1281 = vmatprep.subr.mxu0 0.0
    %1282 = vmatpush2.msra.mxu0 0.0
    %1283 = vmatprep.subr.mxu0 0.0
    %1284 = vmatpush2.msra.mxu0 0.0
    %1285 = vmatprep.subr.mxu0 0.0
    %1286 = vmatpush2.msra.mxu0 0.0
    %1287 = vmatprep.subr.mxu0 0.0
    %1288 = vmatpush2.msra.mxu0 0.0
    %1289 = vmatprep.subr.mxu0 0.0
    %1290 = vmatpush2.msra.mxu0 0.0
    %1291 = vmatprep.subr.mxu0 0.0
    %1292 = vmatpush2.msra.mxu0 0.0
    %1293 = vmatprep.subr.mxu0 0.0
    %1294 = vmatpush2.msra.mxu0 0.0
    %1295 = vmatprep.subr.mxu0 0.0
    %1296 = vmatpush2.msra.mxu0 0.0
    %1297 = vmatprep.subr.mxu0 0.0
    %1298 = vmatpush2.msra.mxu0 0.0
    %1299 = vmatprep.subr.mxu0 0.0
    %1300 = vmatpush2.msra.mxu0 0.0
    %1301 = vmatprep.subr.mxu0 0.0
    %1302 = vmatpush2.msra.mxu0 0.0
    %1303 = vmatprep.subr.mxu0 0.0
    %1304 = vmatpush2.msra.mxu0 0.0
    %1305 = vmatprep.subr.mxu0 0.0
    %1306 = vmatpush2.msra.mxu0 0.0
    %1307 = vmatprep.subr.mxu0 0.0
    %1308 = vmatpush2.msra.mxu0 0.0
    %1309 = vmatprep.subr.mxu0 0.0
    %1310 = vmatpush2.msra.mxu0 0.0
    %1311 = vmatprep.mubr.f32.mxu0 0.0
    %1312 = vmatmul.mubr.f32.gmra.mxu0 %v1237
    %v1313 = vpop.f32.mrf.mxu0
    %v1314 = vadd.f32 0.0, %v1313
    %v1315 = vpop.f32.mrf.mxu0
    %1316 = vdwg.mxu0
    %v1317 = vrcp.pop 128.0
    %v1318 = vmul.f32 %v1314, %v1317
    %1319 = vmatprep.subr.mxu0 0.0
    %1320 = vmatpush1.msra.mxu0 %v217
    %1321 = vmatprep.subr.mxu0 0.0
    %1322 = vmatpush1.msra.mxu0 %v216
    %1323 = vmatprep.subr.mxu0 0.0
    %1324 = vmatpush1.msra.mxu0 %v215
    %1325 = vmatprep.subr.mxu0 0.0
    %1326 = vmatpush1.msra.mxu0 %v214
    %1327 = vmatprep.subr.mxu0 0.0
    %1328 = vmatpush1.msra.mxu0 %v213
    %1329 = vmatprep.subr.mxu0 0.0
    %1330 = vmatpush1.msra.mxu0 %v212
    %1331 = vmatprep.subr.mxu0 0.0
    %1332 = vmatpush1.msra.mxu0 %v211
    %1333 = vmatprep.subr.mxu0 0.0
    %1334 = vmatpush1.msra.mxu0 %v210
    %1335 = vmatprep.subr.mxu0 0.0
    %1336 = vmatpush1.msra.mxu0 %v209
    %1337 = vmatprep.subr.mxu0 0.0
    %1338 = vmatpush1.msra.mxu0 %v208
    %1339 = vmatprep.subr.mxu0 0.0
    %1340 = vmatpush1.msra.mxu0 %v207
    %1341 = vmatprep.subr.mxu0 0.0
    %1342 = vmatpush1.msra.mxu0 %v206
    %1343 = vmatprep.subr.mxu0 0.0
    %1344 = vmatpush1.msra.mxu0 %v205
    %1345 = vmatprep.subr.mxu0 0.0
    %1346 = vmatpush1.msra.mxu0 %v204
    %1347 = vmatprep.subr.mxu0 0.0
    %1348 = vmatpush1.msra.mxu0 %v203
    %1349 = vmatprep.subr.mxu0 0.0
    %1350 = vmatpush1.msra.mxu0 %v202
    %1351 = vmatprep.subr.mxu0 0.0
    %1352 = vmatpush2.msra.mxu0 0.0
    %1353 = vmatprep.subr.mxu0 0.0
    %1354 = vmatpush2.msra.mxu0 0.0
    %1355 = vmatprep.subr.mxu0 0.0
    %1356 = vmatpush2.msra.mxu0 0.0
    %1357 = vmatprep.subr.mxu0 0.0
    %1358 = vmatpush2.msra.mxu0 0.0
    %1359 = vmatprep.subr.mxu0 0.0
    %1360 = vmatpush2.msra.mxu0 0.0
    %1361 = vmatprep.subr.mxu0 0.0
    %1362 = vmatpush2.msra.mxu0 0.0
    %1363 = vmatprep.subr.mxu0 0.0
    %1364 = vmatpush2.msra.mxu0 0.0
    %1365 = vmatprep.subr.mxu0 0.0
    %1366 = vmatpush2.msra.mxu0 0.0
    %1367 = vmatprep.subr.mxu0 0.0
    %1368 = vmatpush2.msra.mxu0 0.0
    %1369 = vmatprep.subr.mxu0 0.0
    %1370 = vmatpush2.msra.mxu0 0.0
    %1371 = vmatprep.subr.mxu0 0.0
    %1372 = vmatpush2.msra.mxu0 0.0
    %1373 = vmatprep.subr.mxu0 0.0
    %1374 = vmatpush2.msra.mxu0 0.0
    %1375 = vmatprep.subr.mxu0 0.0
    %1376 = vmatpush2.msra.mxu0 0.0
    %1377 = vmatprep.subr.mxu0 0.0
    %1378 = vmatpush2.msra.mxu0 0.0
    %1379 = vmatprep.subr.mxu0 0.0
    %1380 = vmatpush2.msra.mxu0 0.0
    %1381 = vmatprep.subr.mxu0 0.0
    %1382 = vmatpush2.msra.mxu0 0.0
    %1383 = vmatprep.mubr.f32.mxu0 0.0
    %1384 = vmatmul.mubr.f32.gmra.mxu0 %v1246
    %v1385 = vpop.f32.mrf.mxu0
    %v1386 = vadd.f32 0.0, %v1385
    %v1387 = vpop.f32.mrf.mxu0
    %1388 = vdwg.mxu0
    %v1389 = vmul.f32 %v1386, %v1317
    %v1390 = vmul.f32 %v1318, %v1318
    %v1391 = vsub.f32 %v1389, %v1390
    %v1392 = vadd.f32 %v1391, 1e-05
    %v1393 = vrsqrt.pop %v1392
    %v1394 = vmul.f32 %v1229, %v1393
    %v1395 = vmul.f32 %v1318, %v1394
    %v1396 = vsub.f32 %v1230, %v1395
    %v1398 = vlaneseq
    %v1399 = vshrl.u32 %v1398, 7
    %v1400 = vsub.s32 0, %v1399
    %v1401 = vrot.slane %v1394, %v1400
    %1402 = vrot.lane.b32.xlu0 %v1401, 16
    %v1403 = vpop.permute.xlu0 %1402
    %1405 = vrot.lane.b32.xlu0 %v1401, 32
    %v1406 = vpop.permute.xlu0 %1405
    %1408 = vrot.lane.b32.xlu0 %v1401, 48
    %v1409 = vpop.permute.xlu0 %1408
    %1411 = vrot.lane.b32.xlu0 %v1401, 64
    %v1412 = vpop.permute.xlu0 %1411
    %1414 = vrot.lane.b32.xlu0 %v1401, 80
    %v1415 = vpop.permute.xlu0 %1414
    %1417 = vrot.lane.b32.xlu0 %v1401, 96
    %v1418 = vpop.permute.xlu0 %1417
    %1420 = vrot.lane.b32.xlu0 %v1401, 112
    %v1421 = vpop.permute.xlu0 %1420
    %vm1423 = vcmask 130048
    %v1424 = vsel %vm1423, %v1394, %v1403
    %vm1425 = vcmask 261120
    %v1426 = vsel %vm1425, %v1424, %v1406
    %vm1427 = vcmask 392192
    %v1428 = vsel %vm1427, %v1426, %v1409
    %vm1429 = vcmask 523264
    %v1430 = vsel %vm1429, %v1428, %v1412
    %vm1431 = vcmask 654336
    %v1432 = vsel %vm1431, %v1430, %v1415
    %vm1433 = vcmask 785408
    %v1434 = vsel %vm1433, %v1432, %v1418
    %vm1435 = vcmask 916480
    %v1436 = vsel %vm1435, %v1434, %v1421
    %v1438 = vlaneseq
    %v1439 = vshrl.u32 %v1438, 7
    %v1440 = vsub.s32 0, %v1439
    %v1441 = vrot.slane %v1396, %v1440
    %1442 = vrot.lane.b32.xlu0 %v1441, 16
    %v1443 = vpop.permute.xlu0 %1442
    %1445 = vrot.lane.b32.xlu0 %v1441, 32
    %v1446 = vpop.permute.xlu0 %1445
    %1448 = vrot.lane.b32.xlu0 %v1441, 48
    %v1449 = vpop.permute.xlu0 %1448
    %1451 = vrot.lane.b32.xlu0 %v1441, 64
    %v1452 = vpop.permute.xlu0 %1451
    %1454 = vrot.lane.b32.xlu0 %v1441, 80
    %v1455 = vpop.permute.xlu0 %1454
    %1457 = vrot.lane.b32.xlu0 %v1441, 96
    %v1458 = vpop.permute.xlu0 %1457
    %1460 = vrot.lane.b32.xlu0 %v1441, 112
    %v1461 = vpop.permute.xlu0 %1460
    %v1463 = vsel %vm1423, %v1396, %v1443
    %v1464 = vsel %vm1425, %v1463, %v1446
    %v1465 = vsel %vm1427, %v1464, %v1449
    %v1466 = vsel %vm1429, %v1465, %v1452
    %v1467 = vsel %vm1431, %v1466, %v1455
    %v1468 = vsel %vm1433, %v1467, %v1458
    %v1469 = vsel %vm1435, %v1468, %v1461
    %v1470 = vlaneseq
    %v1471 = vshrl.u32 %v1470, 7
    %v1472 = vsub.s32 0, %v1471
    %v1473 = vrot.slane %v1436, %v1472
    %v1474 = vmul.f32 %v1227, %v1473
    %v1475 = vmul.f32 %v1228, %v1473
    %v1476 = vlaneseq
    %v1477 = vshrl.u32 %v1476, 7
    %v1478 = vsub.s32 0, %v1477
    %v1479 = vrot.slane %v1469, %v1478
    %v1480 = vadd.f32 %v1474, %v1479
    %v1481 = vadd.f32 %v1475, %v1479
    %s1482 = sld [smem:[#allocation20 + $0x1]]
    %vm1483 = vcmp.ge.f32.partialorder %v1480, 0.0
    %vm1484 = vcmp.ge.f32.partialorder %v1481, 0.0
    %v1485 = vstv %s1482
    %v1486 = vmul.f32 %v1485, %v1480
    %v1487 = vmul.f32 %v1485, %v1481
    %v1488 = vsel %vm1483, %v1480, %v1486
    %v1489 = vsel %vm1484, %v1481, %v1487
    %v1492 = vrot.slane %v1488, 7
    %v1493 = vrot.slane %v1489, 7
    %v1496 = vsel %vm725, 0.0, %v1492
    %v1497 = vsel %vm725, 0.0, %v1493
    %v1498 = vsel %vm725, %v1492, 0.0
    %v1499 = vsel %vm725, %v1493, 0.0
    %v1500 = vpack.c.bf16 %v1497, %v1496
    %v1501 = vld [vmem:[#allocation11] sm:$0xf]
    %v1502 = vld [vmem:[#allocation11 + $0x4] sm:$0xf]
    %v1503 = vld [vmem:[#allocation11 + $0x8] sm:$0xf]
    %v1504 = vld [vmem:[#allocation11 + $0xc] sm:$0xf]
    %v1505 = vld [vmem:[#allocation11 + $0x10] sm:$0xf]
    %v1506 = vld [vmem:[#allocation11 + $0x14] sm:$0xf]
    %v1507 = vld [vmem:[#allocation11 + $0x18] sm:$0xf]
    %v1508 = vld [vmem:[#allocation11 + $0x1c] sm:$0xf]
    %v1509 = vld [vmem:[#allocation11 + $0x20] sm:$0xf]
    %v1510 = vld [vmem:[#allocation11 + $0x24] sm:$0xf]
    %v1511 = vld [vmem:[#allocation11 + $0x28] sm:$0xf]
    %v1512 = vld [vmem:[#allocation11 + $0x2c] sm:$0xf]
    %v1513 = vld [vmem:[#allocation11 + $0x30] sm:$0xf]
    %v1514 = vld [vmem:[#allocation11 + $0x34] sm:$0xf]
    %v1515 = vld [vmem:[#allocation11 + $0x38] sm:$0xf]
    %v1516 = vld [vmem:[#allocation11 + $0x3c] sm:$0xf]
    %v1521 = vrot.slane %v1496, 1
    %v1522 = vrot.slane %v1498, 1
    %v1523 = vsel %vm239, %v1521, %v1522
    %v1524 = vrot.slane %v1497, 1
    %v1525 = vrot.slane %v1499, 1
    %v1526 = vsel %vm239, %v1524, %v1525
    %v1529 = vpack.c.bf16 %v1526, %v1523
    %s1530 = scalar_lea.vmem [#allocation11], 64
    %v1531 = vld [vmem:[%s1530] sm:$0xf]
    %v1532 = vld [vmem:[%s1530 + $0x4] sm:$0xf]
    %v1533 = vld [vmem:[%s1530 + $0x8] sm:$0xf]
    %v1534 = vld [vmem:[%s1530 + $0xc] sm:$0xf]
    %v1535 = vld [vmem:[%s1530 + $0x10] sm:$0xf]
    %v1536 = vld [vmem:[%s1530 + $0x14] sm:$0xf]
    %v1537 = vld [vmem:[%s1530 + $0x18] sm:$0xf]
    %v1538 = vld [vmem:[%s1530 + $0x1c] sm:$0xf]
    %v1539 = vld [vmem:[%s1530 + $0x20] sm:$0xf]
    %v1540 = vld [vmem:[%s1530 + $0x24] sm:$0xf]
    %v1541 = vld [vmem:[%s1530 + $0x28] sm:$0xf]
    %v1542 = vld [vmem:[%s1530 + $0x2c] sm:$0xf]
    %v1543 = vld [vmem:[%s1530 + $0x30] sm:$0xf]
    %v1544 = vld [vmem:[%s1530 + $0x34] sm:$0xf]
    %v1545 = vld [vmem:[%s1530 + $0x38] sm:$0xf]
    %v1546 = vld [vmem:[%s1530 + $0x3c] sm:$0xf]
    %v1563 = vunpack.c.l.b16 %v1531
    %v1564 = vunpack.c.l.b16 %v1532
    %v1565 = vunpack.c.l.b16 %v1533
    %v1566 = vunpack.c.l.b16 %v1534
    %v1567 = vunpack.c.l.b16 %v1535
    %v1568 = vunpack.c.l.b16 %v1536
    %v1569 = vunpack.c.l.b16 %v1537
    %v1570 = vunpack.c.l.b16 %v1538
    %v1571 = vunpack.c.l.b16 %v1539
    %v1572 = vunpack.c.l.b16 %v1540
    %v1573 = vunpack.c.l.b16 %v1541
    %v1574 = vunpack.c.l.b16 %v1542
    %v1575 = vunpack.c.l.b16 %v1543
    %v1576 = vunpack.c.l.b16 %v1544
    %v1577 = vunpack.c.l.b16 %v1545
    %v1578 = vunpack.c.l.b16 %v1546
    %v1579 = vpack.c.b16 %v1564, %v1563
    %v1580 = vpack.c.b16 %v1566, %v1565
    %v1581 = vpack.c.b16 %v1568, %v1567
    %v1582 = vpack.c.b16 %v1570, %v1569
    %v1583 = vpack.c.b16 %v1572, %v1571
    %v1584 = vpack.c.b16 %v1574, %v1573
    %v1585 = vpack.c.b16 %v1576, %v1575
    %v1586 = vpack.c.b16 %v1578, %v1577
    %1595 = vmatprep.subr.bf16.mxu0 0
    %1596 = vmatpush1.bf16.msra.mxu0 %v1586
    %1597 = vmatprep.subr.bf16.mxu0 0
    %1598 = vmatpush1.bf16.msra.mxu0 %v1585
    %1599 = vmatprep.subr.bf16.mxu0 0
    %1600 = vmatpush1.bf16.msra.mxu0 %v1584
    %1601 = vmatprep.subr.bf16.mxu0 0
    %1602 = vmatpush1.bf16.msra.mxu0 %v1583
    %1603 = vmatprep.subr.bf16.mxu0 0
    %1604 = vmatpush1.bf16.msra.mxu0 %v1582
    %1605 = vmatprep.subr.bf16.mxu0 0
    %1606 = vmatpush1.bf16.msra.mxu0 %v1581
    %1607 = vmatprep.subr.bf16.mxu0 0
    %1608 = vmatpush1.bf16.msra.mxu0 %v1580
    %1609 = vmatprep.subr.bf16.mxu0 0
    %1610 = vmatpush1.bf16.msra.mxu0 %v1579
    %1611 = vmatprep.subr.bf16.mxu0 0
    %1612 = vmatpush2.bf16.msra.mxu0 0
    %1613 = vmatprep.subr.bf16.mxu0 0
    %1614 = vmatpush2.bf16.msra.mxu0 0
    %1615 = vmatprep.subr.bf16.mxu0 0
    %1616 = vmatpush2.bf16.msra.mxu0 0
    %1617 = vmatprep.subr.bf16.mxu0 0
    %1618 = vmatpush2.bf16.msra.mxu0 0
    %1619 = vmatprep.subr.bf16.mxu0 0
    %1620 = vmatpush2.bf16.msra.mxu0 0
    %1621 = vmatprep.subr.bf16.mxu0 0
    %1622 = vmatpush2.bf16.msra.mxu0 0
    %1623 = vmatprep.subr.bf16.mxu0 0
    %1624 = vmatpush2.bf16.msra.mxu0 0
    %1625 = vmatprep.subr.bf16.mxu0 0
    %1626 = vmatpush2.bf16.msra.mxu0 0
    %1627 = vmatprep.mubr.bf16.mxu0 0
    %1628 = vmatmul.mubr.bf16.gmra.mxu0 %v1529
    %v1629 = vpop.f32.mrf.mxu0
    %v1630 = vadd.f32 0.0, %v1629
    %v1631 = vpop.f32.mrf.mxu0
    %v1632 = vpop.f32.mrf.mxu0
    %v1633 = vadd.f32 0.0, %v1632
    %v1634 = vpop.f32.mrf.mxu0
    %1635 = vdwg.mxu0
    %v1652 = vunpack.c.l.b16 %v1501
    %v1653 = vunpack.c.l.b16 %v1502
    %v1654 = vunpack.c.l.b16 %v1503
    %v1655 = vunpack.c.l.b16 %v1504
    %v1656 = vunpack.c.l.b16 %v1505
    %v1657 = vunpack.c.l.b16 %v1506
    %v1658 = vunpack.c.l.b16 %v1507
    %v1659 = vunpack.c.l.b16 %v1508
    %v1660 = vunpack.c.l.b16 %v1509
    %v1661 = vunpack.c.l.b16 %v1510
    %v1662 = vunpack.c.l.b16 %v1511
    %v1663 = vunpack.c.l.b16 %v1512
    %v1664 = vunpack.c.l.b16 %v1513
    %v1665 = vunpack.c.l.b16 %v1514
    %v1666 = vunpack.c.l.b16 %v1515
    %v1667 = vunpack.c.l.b16 %v1516
    %v1668 = vpack.c.b16 %v1653, %v1652
    %v1669 = vpack.c.b16 %v1655, %v1654
    %v1670 = vpack.c.b16 %v1657, %v1656
    %v1671 = vpack.c.b16 %v1659, %v1658
    %v1672 = vpack.c.b16 %v1661, %v1660
    %v1673 = vpack.c.b16 %v1663, %v1662
    %v1674 = vpack.c.b16 %v1665, %v1664
    %v1675 = vpack.c.b16 %v1667, %v1666
    %1684 = vmatprep.subr.bf16.mxu0 0
    %1685 = vmatpush1.bf16.msra.mxu0 %v1675
    %1686 = vmatprep.subr.bf16.mxu0 0
    %1687 = vmatpush1.bf16.msra.mxu0 %v1674
    %1688 = vmatprep.subr.bf16.mxu0 0
    %1689 = vmatpush1.bf16.msra.mxu0 %v1673
    %1690 = vmatprep.subr.bf16.mxu0 0
    %1691 = vmatpush1.bf16.msra.mxu0 %v1672
    %1692 = vmatprep.subr.bf16.mxu0 0
    %1693 = vmatpush1.bf16.msra.mxu0 %v1671
    %1694 = vmatprep.subr.bf16.mxu0 0
    %1695 = vmatpush1.bf16.msra.mxu0 %v1670
    %1696 = vmatprep.subr.bf16.mxu0 0
    %1697 = vmatpush1.bf16.msra.mxu0 %v1669
    %1698 = vmatprep.subr.bf16.mxu0 0
    %1699 = vmatpush1.bf16.msra.mxu0 %v1668
    %1700 = vmatprep.subr.bf16.mxu0 0
    %1701 = vmatpush2.bf16.msra.mxu0 0
    %1702 = vmatprep.subr.bf16.mxu0 0
    %1703 = vmatpush2.bf16.msra.mxu0 0
    %1704 = vmatprep.subr.bf16.mxu0 0
    %1705 = vmatpush2.bf16.msra.mxu0 0
    %1706 = vmatprep.subr.bf16.mxu0 0
    %1707 = vmatpush2.bf16.msra.mxu0 0
    %1708 = vmatprep.subr.bf16.mxu0 0
    %1709 = vmatpush2.bf16.msra.mxu0 0
    %1710 = vmatprep.subr.bf16.mxu0 0
    %1711 = vmatpush2.bf16.msra.mxu0 0
    %1712 = vmatprep.subr.bf16.mxu0 0
    %1713 = vmatpush2.bf16.msra.mxu0 0
    %1714 = vmatprep.subr.bf16.mxu0 0
    %1715 = vmatpush2.bf16.msra.mxu0 0
    %1716 = vmatprep.mubr.bf16.mxu0 0
    %1717 = vmatmul.mubr.bf16.gmra.mxu0 %v1500
    %v1718 = vpop.f32.mrf.mxu0
    %v1719 = vadd.f32 %v1630, %v1718
    %v1720 = vpop.f32.mrf.mxu0
    %v1721 = vpop.f32.mrf.mxu0
    %v1722 = vadd.f32 %v1633, %v1721
    %v1723 = vpop.f32.mrf.mxu0
    %1724 = vdwg.mxu0
    %v1725 = vrot.slane %v1496, 2
    %v1726 = vrot.slane %v1498, 2
    %v1727 = vsel %vm366, %v1725, %v1726
    %v1728 = vrot.slane %v1497, 2
    %v1729 = vrot.slane %v1499, 2
    %v1730 = vsel %vm366, %v1728, %v1729
    %v1733 = vpack.c.bf16 %v1730, %v1727
    %s1734 = scalar_lea.vmem [#allocation11], 128
    %v1735 = vld [vmem:[%s1734] sm:$0xf]
    %v1736 = vld [vmem:[%s1734 + $0x4] sm:$0xf]
    %v1737 = vld [vmem:[%s1734 + $0x8] sm:$0xf]
    %v1738 = vld [vmem:[%s1734 + $0xc] sm:$0xf]
    %v1739 = vld [vmem:[%s1734 + $0x10] sm:$0xf]
    %v1740 = vld [vmem:[%s1734 + $0x14] sm:$0xf]
    %v1741 = vld [vmem:[%s1734 + $0x18] sm:$0xf]
    %v1742 = vld [vmem:[%s1734 + $0x1c] sm:$0xf]
    %v1743 = vld [vmem:[%s1734 + $0x20] sm:$0xf]
    %v1744 = vld [vmem:[%s1734 + $0x24] sm:$0xf]
    %v1745 = vld [vmem:[%s1734 + $0x28] sm:$0xf]
    %v1746 = vld [vmem:[%s1734 + $0x2c] sm:$0xf]
    %v1747 = vld [vmem:[%s1734 + $0x30] sm:$0xf]
    %v1748 = vld [vmem:[%s1734 + $0x34] sm:$0xf]
    %v1749 = vld [vmem:[%s1734 + $0x38] sm:$0xf]
    %v1750 = vld [vmem:[%s1734 + $0x3c] sm:$0xf]
    %v1767 = vunpack.c.l.b16 %v1735
    %v1768 = vunpack.c.l.b16 %v1736
    %v1769 = vunpack.c.l.b16 %v1737
    %v1770 = vunpack.c.l.b16 %v1738
    %v1771 = vunpack.c.l.b16 %v1739
    %v1772 = vunpack.c.l.b16 %v1740
    %v1773 = vunpack.c.l.b16 %v1741
    %v1774 = vunpack.c.l.b16 %v1742
    %v1775 = vunpack.c.l.b16 %v1743
    %v1776 = vunpack.c.l.b16 %v1744
    %v1777 = vunpack.c.l.b16 %v1745
    %v1778 = vunpack.c.l.b16 %v1746
    %v1779 = vunpack.c.l.b16 %v1747
    %v1780 = vunpack.c.l.b16 %v1748
    %v1781 = vunpack.c.l.b16 %v1749
    %v1782 = vunpack.c.l.b16 %v1750
    %v1783 = vpack.c.b16 %v1768, %v1767
    %v1784 = vpack.c.b16 %v1770, %v1769
    %v1785 = vpack.c.b16 %v1772, %v1771
    %v1786 = vpack.c.b16 %v1774, %v1773
    %v1787 = vpack.c.b16 %v1776, %v1775
    %v1788 = vpack.c.b16 %v1778, %v1777
    %v1789 = vpack.c.b16 %v1780, %v1779
    %v1790 = vpack.c.b16 %v1782, %v1781
    %1799 = vmatprep.subr.bf16.mxu0 0
    %1800 = vmatpush1.bf16.msra.mxu0 %v1790
    %1801 = vmatprep.subr.bf16.mxu0 0
    %1802 = vmatpush1.bf16.msra.mxu0 %v1789
    %1803 = vmatprep.subr.bf16.mxu0 0
    %1804 = vmatpush1.bf16.msra.mxu0 %v1788
    %1805 = vmatprep.subr.bf16.mxu0 0
    %1806 = vmatpush1.bf16.msra.mxu0 %v1787
    %1807 = vmatprep.subr.bf16.mxu0 0
    %1808 = vmatpush1.bf16.msra.mxu0 %v1786
    %1809 = vmatprep.subr.bf16.mxu0 0
    %1810 = vmatpush1.bf16.msra.mxu0 %v1785
    %1811 = vmatprep.subr.bf16.mxu0 0
    %1812 = vmatpush1.bf16.msra.mxu0 %v1784
    %1813 = vmatprep.subr.bf16.mxu0 0
    %1814 = vmatpush1.bf16.msra.mxu0 %v1783
    %1815 = vmatprep.subr.bf16.mxu0 0
    %1816 = vmatpush2.bf16.msra.mxu0 0
    %1817 = vmatprep.subr.bf16.mxu0 0
    %1818 = vmatpush2.bf16.msra.mxu0 0
    %1819 = vmatprep.subr.bf16.mxu0 0
    %1820 = vmatpush2.bf16.msra.mxu0 0
    %1821 = vmatprep.subr.bf16.mxu0 0
    %1822 = vmatpush2.bf16.msra.mxu0 0
    %1823 = vmatprep.subr.bf16.mxu0 0
    %1824 = vmatpush2.bf16.msra.mxu0 0
    %1825 = vmatprep.subr.bf16.mxu0 0
    %1826 = vmatpush2.bf16.msra.mxu0 0
    %1827 = vmatprep.subr.bf16.mxu0 0
    %1828 = vmatpush2.bf16.msra.mxu0 0
    %1829 = vmatprep.subr.bf16.mxu0 0
    %1830 = vmatpush2.bf16.msra.mxu0 0
    %1831 = vmatprep.mubr.bf16.mxu0 0
    %1832 = vmatmul.mubr.bf16.gmra.mxu0 %v1733
    %v1833 = vpop.f32.mrf.mxu0
    %v1834 = vadd.f32 0.0, %v1833
    %v1835 = vpop.f32.mrf.mxu0
    %v1836 = vpop.f32.mrf.mxu0
    %v1837 = vadd.f32 0.0, %v1836
    %v1838 = vpop.f32.mrf.mxu0
    %1839 = vdwg.mxu0
    %v1840 = vadd.f32 %v1719, %v1834
    %v1841 = vadd.f32 %v1722, %v1837
    %v1842 = vld [vmem:[#allocation13] sm:$0x1]
    %v1843 = vld [vmem:[#allocation14] sm:$0x1]
    %v1844 = vadd.f32 %v1840, %v1841
    %v1845 = vrot.slane %v1844, 4
    %v1846 = vadd.f32 %v1844, %v1845
    %v1847 = vrot.slane %v1846, 2
    %v1848 = vadd.f32 %v1846, %v1847
    %v1849 = vrot.slane %v1848, 1
    %v1850 = vadd.f32 %v1848, %v1849
    %v1851 = vmul.f32 %v1840, %v1840
    %v1852 = vmul.f32 %v1841, %v1841
    %v1853 = vadd.f32 %v1851, %v1852
    %v1854 = vrot.slane %v1853, 4
    %v1855 = vadd.f32 %v1853, %v1854
    %v1856 = vrot.slane %v1855, 2
    %v1857 = vadd.f32 %v1855, %v1856
    %v1858 = vrot.slane %v1857, 1
    %v1859 = vadd.f32 %v1857, %v1858
    %1860 = vmatprep.subr.mxu0 0.0
    %1861 = vmatpush1.msra.mxu0 %v217
    %1862 = vmatprep.subr.mxu0 0.0
    %1863 = vmatpush1.msra.mxu0 %v216
    %1864 = vmatprep.subr.mxu0 0.0
    %1865 = vmatpush1.msra.mxu0 %v215
    %1866 = vmatprep.subr.mxu0 0.0
    %1867 = vmatpush1.msra.mxu0 %v214
    %1868 = vmatprep.subr.mxu0 0.0
    %1869 = vmatpush1.msra.mxu0 %v213
    %1870 = vmatprep.subr.mxu0 0.0
    %1871 = vmatpush1.msra.mxu0 %v212
    %1872 = vmatprep.subr.mxu0 0.0
    %1873 = vmatpush1.msra.mxu0 %v211
    %1874 = vmatprep.subr.mxu0 0.0
    %1875 = vmatpush1.msra.mxu0 %v210
    %1876 = vmatprep.subr.mxu0 0.0
    %1877 = vmatpush1.msra.mxu0 %v209
    %1878 = vmatprep.subr.mxu0 0.0
    %1879 = vmatpush1.msra.mxu0 %v208
    %1880 = vmatprep.subr.mxu0 0.0
    %1881 = vmatpush1.msra.mxu0 %v207
    %1882 = vmatprep.subr.mxu0 0.0
    %1883 = vmatpush1.msra.mxu0 %v206
    %1884 = vmatprep.subr.mxu0 0.0
    %1885 = vmatpush1.msra.mxu0 %v205
    %1886 = vmatprep.subr.mxu0 0.0
    %1887 = vmatpush1.msra.mxu0 %v204
    %1888 = vmatprep.subr.mxu0 0.0
    %1889 = vmatpush1.msra.mxu0 %v203
    %1890 = vmatprep.subr.mxu0 0.0
    %1891 = vmatpush1.msra.mxu0 %v202
    %1892 = vmatprep.subr.mxu0 0.0
    %1893 = vmatpush2.msra.mxu0 0.0
    %1894 = vmatprep.subr.mxu0 0.0
    %1895 = vmatpush2.msra.mxu0 0.0
    %1896 = vmatprep.subr.mxu0 0.0
    %1897 = vmatpush2.msra.mxu0 0.0
    %1898 = vmatprep.subr.mxu0 0.0
    %1899 = vmatpush2.msra.mxu0 0.0
    %1900 = vmatprep.subr.mxu0 0.0
    %1901 = vmatpush2.msra.mxu0 0.0
    %1902 = vmatprep.subr.mxu0 0.0
    %1903 = vmatpush2.msra.mxu0 0.0
    %1904 = vmatprep.subr.mxu0 0.0
    %1905 = vmatpush2.msra.mxu0 0.0
    %1906 = vmatprep.subr.mxu0 0.0
    %1907 = vmatpush2.msra.mxu0 0.0
    %1908 = vmatprep.subr.mxu0 0.0
    %1909 = vmatpush2.msra.mxu0 0.0
    %1910 = vmatprep.subr.mxu0 0.0
    %1911 = vmatpush2.msra.mxu0 0.0
    %1912 = vmatprep.subr.mxu0 0.0
    %1913 = vmatpush2.msra.mxu0 0.0
    %1914 = vmatprep.subr.mxu0 0.0
    %1915 = vmatpush2.msra.mxu0 0.0
    %1916 = vmatprep.subr.mxu0 0.0
    %1917 = vmatpush2.msra.mxu0 0.0
    %1918 = vmatprep.subr.mxu0 0.0
    %1919 = vmatpush2.msra.mxu0 0.0
    %1920 = vmatprep.subr.mxu0 0.0
    %1921 = vmatpush2.msra.mxu0 0.0
    %1922 = vmatprep.subr.mxu0 0.0
    %1923 = vmatpush2.msra.mxu0 0.0
    %1924 = vmatprep.mubr.f32.mxu0 0.0
    %1925 = vmatmul.mubr.f32.gmra.mxu0 %v1850
    %v1926 = vpop.f32.mrf.mxu0
    %v1927 = vadd.f32 0.0, %v1926
    %v1928 = vpop.f32.mrf.mxu0
    %1929 = vdwg.mxu0
    %v1930 = vmul.f32 %v1927, %v1317
    %1931 = vmatprep.subr.mxu0 0.0
    %1932 = vmatpush1.msra.mxu0 %v217
    %1933 = vmatprep.subr.mxu0 0.0
    %1934 = vmatpush1.msra.mxu0 %v216
    %1935 = vmatprep.subr.mxu0 0.0
    %1936 = vmatpush1.msra.mxu0 %v215
    %1937 = vmatprep.subr.mxu0 0.0
    %1938 = vmatpush1.msra.mxu0 %v214
    %1939 = vmatprep.subr.mxu0 0.0
    %1940 = vmatpush1.msra.mxu0 %v213
    %1941 = vmatprep.subr.mxu0 0.0
    %1942 = vmatpush1.msra.mxu0 %v212
    %1943 = vmatprep.subr.mxu0 0.0
    %1944 = vmatpush1.msra.mxu0 %v211
    %1945 = vmatprep.subr.mxu0 0.0
    %1946 = vmatpush1.msra.mxu0 %v210
    %1947 = vmatprep.subr.mxu0 0.0
    %1948 = vmatpush1.msra.mxu0 %v209
    %1949 = vmatprep.subr.mxu0 0.0
    %1950 = vmatpush1.msra.mxu0 %v208
    %1951 = vmatprep.subr.mxu0 0.0
    %1952 = vmatpush1.msra.mxu0 %v207
    %1953 = vmatprep.subr.mxu0 0.0
    %1954 = vmatpush1.msra.mxu0 %v206
    %1955 = vmatprep.subr.mxu0 0.0
    %1956 = vmatpush1.msra.mxu0 %v205
    %1957 = vmatprep.subr.mxu0 0.0
    %1958 = vmatpush1.msra.mxu0 %v204
    %1959 = vmatprep.subr.mxu0 0.0
    %1960 = vmatpush1.msra.mxu0 %v203
    %1961 = vmatprep.subr.mxu0 0.0
    %1962 = vmatpush1.msra.mxu0 %v202
    %1963 = vmatprep.subr.mxu0 0.0
    %1964 = vmatpush2.msra.mxu0 0.0
    %1965 = vmatprep.subr.mxu0 0.0
    %1966 = vmatpush2.msra.mxu0 0.0
    %1967 = vmatprep.subr.mxu0 0.0
    %1968 = vmatpush2.msra.mxu0 0.0
    %1969 = vmatprep.subr.mxu0 0.0
    %1970 = vmatpush2.msra.mxu0 0.0
    %1971 = vmatprep.subr.mxu0 0.0
    %1972 = vmatpush2.msra.mxu0 0.0
    %1973 = vmatprep.subr.mxu0 0.0
    %1974 = vmatpush2.msra.mxu0 0.0
    %1975 = vmatprep.subr.mxu0 0.0
    %1976 = vmatpush2.msra.mxu0 0.0
    %1977 = vmatprep.subr.mxu0 0.0
    %1978 = vmatpush2.msra.mxu0 0.0
    %1979 = vmatprep.subr.mxu0 0.0
    %1980 = vmatpush2.msra.mxu0 0.0
    %1981 = vmatprep.subr.mxu0 0.0
    %1982 = vmatpush2.msra.mxu0 0.0
    %1983 = vmatprep.subr.mxu0 0.0
    %1984 = vmatpush2.msra.mxu0 0.0
    %1985 = vmatprep.subr.mxu0 0.0
    %1986 = vmatpush2.msra.mxu0 0.0
    %1987 = vmatprep.subr.mxu0 0.0
    %1988 = vmatpush2.msra.mxu0 0.0
    %1989 = vmatprep.subr.mxu0 0.0
    %1990 = vmatpush2.msra.mxu0 0.0
    %1991 = vmatprep.subr.mxu0 0.0
    %1992 = vmatpush2.msra.mxu0 0.0
    %1993 = vmatprep.subr.mxu0 0.0
    %1994 = vmatpush2.msra.mxu0 0.0
    %1995 = vmatprep.mubr.f32.mxu0 0.0
    %1996 = vmatmul.mubr.f32.gmra.mxu0 %v1859
    %v1997 = vpop.f32.mrf.mxu0
    %v1998 = vadd.f32 0.0, %v1997
    %v1999 = vpop.f32.mrf.mxu0
    %2000 = vdwg.mxu0
    %v2001 = vmul.f32 %v1998, %v1317
    %v2002 = vmul.f32 %v1930, %v1930
    %v2003 = vsub.f32 %v2001, %v2002
    %v2004 = vadd.f32 %v2003, 1e-05
    %v2005 = vrsqrt.pop %v2004
    %v2006 = vmul.f32 %v1842, %v2005
    %v2007 = vmul.f32 %v1930, %v2006
    %v2008 = vsub.f32 %v1843, %v2007
    %v2010 = vlaneseq
    %v2011 = vshrl.u32 %v2010, 7
    %v2012 = vsub.s32 0, %v2011
    %v2013 = vrot.slane %v2006, %v2012
    %2014 = vrot.lane.b32.xlu0 %v2013, 16
    %v2015 = vpop.permute.xlu0 %2014
    %2017 = vrot.lane.b32.xlu0 %v2013, 32
    %v2018 = vpop.permute.xlu0 %2017
    %2020 = vrot.lane.b32.xlu0 %v2013, 48
    %v2021 = vpop.permute.xlu0 %2020
    %2023 = vrot.lane.b32.xlu0 %v2013, 64
    %v2024 = vpop.permute.xlu0 %2023
    %2026 = vrot.lane.b32.xlu0 %v2013, 80
    %v2027 = vpop.permute.xlu0 %2026
    %2029 = vrot.lane.b32.xlu0 %v2013, 96
    %v2030 = vpop.permute.xlu0 %2029
    %2032 = vrot.lane.b32.xlu0 %v2013, 112
    %v2033 = vpop.permute.xlu0 %2032
    %v2035 = vsel %vm1423, %v2006, %v2015
    %v2036 = vsel %vm1425, %v2035, %v2018
    %v2037 = vsel %vm1427, %v2036, %v2021
    %v2038 = vsel %vm1429, %v2037, %v2024
    %v2039 = vsel %vm1431, %v2038, %v2027
    %v2040 = vsel %vm1433, %v2039, %v2030
    %v2041 = vsel %vm1435, %v2040, %v2033
    %v2043 = vlaneseq
    %v2044 = vshrl.u32 %v2043, 7
    %v2045 = vsub.s32 0, %v2044
    %v2046 = vrot.slane %v2008, %v2045
    %2047 = vrot.lane.b32.xlu0 %v2046, 16
    %v2048 = vpop.permute.xlu0 %2047
    %2050 = vrot.lane.b32.xlu0 %v2046, 32
    %v2051 = vpop.permute.xlu0 %2050
    %2053 = vrot.lane.b32.xlu0 %v2046, 48
    %v2054 = vpop.permute.xlu0 %2053
    %2056 = vrot.lane.b32.xlu0 %v2046, 64
    %v2057 = vpop.permute.xlu0 %2056
    %2059 = vrot.lane.b32.xlu0 %v2046, 80
    %v2060 = vpop.permute.xlu0 %2059
    %2062 = vrot.lane.b32.xlu0 %v2046, 96
    %v2063 = vpop.permute.xlu0 %2062
    %2065 = vrot.lane.b32.xlu0 %v2046, 112
    %v2066 = vpop.permute.xlu0 %2065
    %v2068 = vsel %vm1423, %v2008, %v2048
    %v2069 = vsel %vm1425, %v2068, %v2051
    %v2070 = vsel %vm1427, %v2069, %v2054
    %v2071 = vsel %vm1429, %v2070, %v2057
    %v2072 = vsel %vm1431, %v2071, %v2060
    %v2073 = vsel %vm1433, %v2072, %v2063
    %v2074 = vsel %vm1435, %v2073, %v2066
    %v2075 = vlaneseq
    %v2076 = vshrl.u32 %v2075, 7
    %v2077 = vsub.s32 0, %v2076
    %v2078 = vrot.slane %v2041, %v2077
    %v2079 = vmul.f32 %v1840, %v2078
    %v2080 = vmul.f32 %v1841, %v2078
    %v2081 = vlaneseq
    %v2082 = vshrl.u32 %v2081, 7
    %v2083 = vsub.s32 0, %v2082
    %v2084 = vrot.slane %v2074, %v2083
    %v2085 = vadd.f32 %v2079, %v2084
    %v2086 = vadd.f32 %v2080, %v2084
    %v2087 = vadd.f32 %v875, %v2085
    %v2088 = vadd.f32 %v876, %v2086
    %v2091 = vrot.slane %v2087, 7
    %v2092 = vrot.slane %v2088, 7
    %v2095 = vsel %vm725, 0.0, %v2091
    %v2096 = vsel %vm725, 0.0, %v2092
    %v2097 = vsel %vm725, %v2091, 0.0
    %v2098 = vsel %vm725, %v2092, 0.0
    %v2099 = vpack.c.bf16 %v2096, %v2095
    %s2100 = scalar_lea.vmem [#allocation7], 192
    %v2101 = vld [vmem:[%s2100] sm:$0xf]
    %v2102 = vld [vmem:[%s2100 + $0x4] sm:$0xf]
    %v2103 = vld [vmem:[%s2100 + $0x8] sm:$0xf]
    %v2104 = vld [vmem:[%s2100 + $0xc] sm:$0xf]
    %v2105 = vld [vmem:[%s2100 + $0x10] sm:$0xf]
    %v2106 = vld [vmem:[%s2100 + $0x14] sm:$0xf]
    %v2107 = vld [vmem:[%s2100 + $0x18] sm:$0xf]
    %v2108 = vld [vmem:[%s2100 + $0x1c] sm:$0xf]
    %v2109 = vld [vmem:[%s2100 + $0x20] sm:$0xf]
    %v2110 = vld [vmem:[%s2100 + $0x24] sm:$0xf]
    %v2111 = vld [vmem:[%s2100 + $0x28] sm:$0xf]
    %v2112 = vld [vmem:[%s2100 + $0x2c] sm:$0xf]
    %v2113 = vld [vmem:[%s2100 + $0x30] sm:$0xf]
    %v2114 = vld [vmem:[%s2100 + $0x34] sm:$0xf]
    %v2115 = vld [vmem:[%s2100 + $0x38] sm:$0xf]
    %v2116 = vld [vmem:[%s2100 + $0x3c] sm:$0xf]
    %v2121 = vrot.slane %v2095, 1
    %v2122 = vrot.slane %v2097, 1
    %v2123 = vsel %vm239, %v2121, %v2122
    %v2124 = vrot.slane %v2096, 1
    %v2125 = vrot.slane %v2098, 1
    %v2126 = vsel %vm239, %v2124, %v2125
    %v2129 = vpack.c.bf16 %v2126, %v2123
    %s2130 = scalar_lea.vmem [#allocation7], 256
    %v2131 = vld [vmem:[%s2130] sm:$0xf]
    %v2132 = vld [vmem:[%s2130 + $0x4] sm:$0xf]
    %v2133 = vld [vmem:[%s2130 + $0x8] sm:$0xf]
    %v2134 = vld [vmem:[%s2130 + $0xc] sm:$0xf]
    %v2135 = vld [vmem:[%s2130 + $0x10] sm:$0xf]
    %v2136 = vld [vmem:[%s2130 + $0x14] sm:$0xf]
    %v2137 = vld [vmem:[%s2130 + $0x18] sm:$0xf]
    %v2138 = vld [vmem:[%s2130 + $0x1c] sm:$0xf]
    %v2139 = vld [vmem:[%s2130 + $0x20] sm:$0xf]
    %v2140 = vld [vmem:[%s2130 + $0x24] sm:$0xf]
    %v2141 = vld [vmem:[%s2130 + $0x28] sm:$0xf]
    %v2142 = vld [vmem:[%s2130 + $0x2c] sm:$0xf]
    %v2143 = vld [vmem:[%s2130 + $0x30] sm:$0xf]
    %v2144 = vld [vmem:[%s2130 + $0x34] sm:$0xf]
    %v2145 = vld [vmem:[%s2130 + $0x38] sm:$0xf]
    %v2146 = vld [vmem:[%s2130 + $0x3c] sm:$0xf]
    %v2163 = vunpack.c.l.b16 %v2131
    %v2164 = vunpack.c.l.b16 %v2132
    %v2165 = vunpack.c.l.b16 %v2133
    %v2166 = vunpack.c.l.b16 %v2134
    %v2167 = vunpack.c.l.b16 %v2135
    %v2168 = vunpack.c.l.b16 %v2136
    %v2169 = vunpack.c.l.b16 %v2137
    %v2170 = vunpack.c.l.b16 %v2138
    %v2171 = vunpack.c.l.b16 %v2139
    %v2172 = vunpack.c.l.b16 %v2140
    %v2173 = vunpack.c.l.b16 %v2141
    %v2174 = vunpack.c.l.b16 %v2142
    %v2175 = vunpack.c.l.b16 %v2143
    %v2176 = vunpack.c.l.b16 %v2144
    %v2177 = vunpack.c.l.b16 %v2145
    %v2178 = vunpack.c.l.b16 %v2146
    %v2179 = vpack.c.b16 %v2164, %v2163
    %v2180 = vpack.c.b16 %v2166, %v2165
    %v2181 = vpack.c.b16 %v2168, %v2167
    %v2182 = vpack.c.b16 %v2170, %v2169
    %v2183 = vpack.c.b16 %v2172, %v2171
    %v2184 = vpack.c.b16 %v2174, %v2173
    %v2185 = vpack.c.b16 %v2176, %v2175
    %v2186 = vpack.c.b16 %v2178, %v2177
    %2195 = vmatprep.subr.bf16.mxu0 0
    %2196 = vmatpush1.bf16.msra.mxu0 %v2186
    %2197 = vmatprep.subr.bf16.mxu0 0
    %2198 = vmatpush1.bf16.msra.mxu0 %v2185
    %2199 = vmatprep.subr.bf16.mxu0 0
    %2200 = vmatpush1.bf16.msra.mxu0 %v2184
    %2201 = vmatprep.subr.bf16.mxu0 0
    %2202 = vmatpush1.bf16.msra.mxu0 %v2183
    %2203 = vmatprep.subr.bf16.mxu0 0
    %2204 = vmatpush1.bf16.msra.mxu0 %v2182
    %2205 = vmatprep.subr.bf16.mxu0 0
    %2206 = vmatpush1.bf16.msra.mxu0 %v2181
    %2207 = vmatprep.subr.bf16.mxu0 0
    %2208 = vmatpush1.bf16.msra.mxu0 %v2180
    %2209 = vmatprep.subr.bf16.mxu0 0
    %2210 = vmatpush1.bf16.msra.mxu0 %v2179
    %2211 = vmatprep.subr.bf16.mxu0 0
    %2212 = vmatpush2.bf16.msra.mxu0 0
    %2213 = vmatprep.subr.bf16.mxu0 0
    %2214 = vmatpush2.bf16.msra.mxu0 0
    %2215 = vmatprep.subr.bf16.mxu0 0
    %2216 = vmatpush2.bf16.msra.mxu0 0
    %2217 = vmatprep.subr.bf16.mxu0 0
    %2218 = vmatpush2.bf16.msra.mxu0 0
    %2219 = vmatprep.subr.bf16.mxu0 0
    %2220 = vmatpush2.bf16.msra.mxu0 0
    %2221 = vmatprep.subr.bf16.mxu0 0
    %2222 = vmatpush2.bf16.msra.mxu0 0
    %2223 = vmatprep.subr.bf16.mxu0 0
    %2224 = vmatpush2.bf16.msra.mxu0 0
    %2225 = vmatprep.subr.bf16.mxu0 0
    %2226 = vmatpush2.bf16.msra.mxu0 0
    %2227 = vmatprep.mubr.bf16.mxu0 0
    %2228 = vmatmul.mubr.bf16.gmra.mxu0 %v2129
    %v2229 = vpop.f32.mrf.mxu0
    %v2230 = vadd.f32 0.0, %v2229
    %v2231 = vpop.f32.mrf.mxu0
    %v2232 = vpop.f32.mrf.mxu0
    %v2233 = vadd.f32 0.0, %v2232
    %v2234 = vpop.f32.mrf.mxu0
    %2235 = vdwg.mxu0
    %v2252 = vunpack.c.l.b16 %v2101
    %v2253 = vunpack.c.l.b16 %v2102
    %v2254 = vunpack.c.l.b16 %v2103
    %v2255 = vunpack.c.l.b16 %v2104
    %v2256 = vunpack.c.l.b16 %v2105
    %v2257 = vunpack.c.l.b16 %v2106
    %v2258 = vunpack.c.l.b16 %v2107
    %v2259 = vunpack.c.l.b16 %v2108
    %v2260 = vunpack.c.l.b16 %v2109
    %v2261 = vunpack.c.l.b16 %v2110
    %v2262 = vunpack.c.l.b16 %v2111
    %v2263 = vunpack.c.l.b16 %v2112
    %v2264 = vunpack.c.l.b16 %v2113
    %v2265 = vunpack.c.l.b16 %v2114
    %v2266 = vunpack.c.l.b16 %v2115
    %v2267 = vunpack.c.l.b16 %v2116
    %v2268 = vpack.c.b16 %v2253, %v2252
    %v2269 = vpack.c.b16 %v2255, %v2254
    %v2270 = vpack.c.b16 %v2257, %v2256
    %v2271 = vpack.c.b16 %v2259, %v2258
    %v2272 = vpack.c.b16 %v2261, %v2260
    %v2273 = vpack.c.b16 %v2263, %v2262
    %v2274 = vpack.c.b16 %v2265, %v2264
    %v2275 = vpack.c.b16 %v2267, %v2266
    %2284 = vmatprep.subr.bf16.mxu0 0
    %2285 = vmatpush1.bf16.msra.mxu0 %v2275
    %2286 = vmatprep.subr.bf16.mxu0 0
    %2287 = vmatpush1.bf16.msra.mxu0 %v2274
    %2288 = vmatprep.subr.bf16.mxu0 0
    %2289 = vmatpush1.bf16.msra.mxu0 %v2273
    %2290 = vmatprep.subr.bf16.mxu0 0
    %2291 = vmatpush1.bf16.msra.mxu0 %v2272
    %2292 = vmatprep.subr.bf16.mxu0 0
    %2293 = vmatpush1.bf16.msra.mxu0 %v2271
    %2294 = vmatprep.subr.bf16.mxu0 0
    %2295 = vmatpush1.bf16.msra.mxu0 %v2270
    %2296 = vmatprep.subr.bf16.mxu0 0
    %2297 = vmatpush1.bf16.msra.mxu0 %v2269
    %2298 = vmatprep.subr.bf16.mxu0 0
    %2299 = vmatpush1.bf16.msra.mxu0 %v2268
    %2300 = vmatprep.subr.bf16.mxu0 0
    %2301 = vmatpush2.bf16.msra.mxu0 0
    %2302 = vmatprep.subr.bf16.mxu0 0
    %2303 = vmatpush2.bf16.msra.mxu0 0
    %2304 = vmatprep.subr.bf16.mxu0 0
    %2305 = vmatpush2.bf16.msra.mxu0 0
    %2306 = vmatprep.subr.bf16.mxu0 0
    %2307 = vmatpush2.bf16.msra.mxu0 0
    %2308 = vmatprep.subr.bf16.mxu0 0
    %2309 = vmatpush2.bf16.msra.mxu0 0
    %2310 = vmatprep.subr.bf16.mxu0 0
    %2311 = vmatpush2.bf16.msra.mxu0 0
    %2312 = vmatprep.subr.bf16.mxu0 0
    %2313 = vmatpush2.bf16.msra.mxu0 0
    %2314 = vmatprep.subr.bf16.mxu0 0
    %2315 = vmatpush2.bf16.msra.mxu0 0
    %2316 = vmatprep.mubr.bf16.mxu0 0
    %2317 = vmatmul.mubr.bf16.gmra.mxu0 %v2099
    %v2318 = vpop.f32.mrf.mxu0
    %v2319 = vadd.f32 %v2230, %v2318
    %v2320 = vpop.f32.mrf.mxu0
    %v2321 = vpop.f32.mrf.mxu0
    %v2322 = vadd.f32 %v2233, %v2321
    %v2323 = vpop.f32.mrf.mxu0
    %2324 = vdwg.mxu0
    %v2325 = vrot.slane %v2095, 2
    %v2326 = vrot.slane %v2097, 2
    %v2327 = vsel %vm366, %v2325, %v2326
    %v2328 = vrot.slane %v2096, 2
    %v2329 = vrot.slane %v2098, 2
    %v2330 = vsel %vm366, %v2328, %v2329
    %v2333 = vpack.c.bf16 %v2330, %v2327
    %s2334 = scalar_lea.vmem [#allocation7], 320
    %v2335 = vld [vmem:[%s2334] sm:$0xf]
    %v2336 = vld [vmem:[%s2334 + $0x4] sm:$0xf]
    %v2337 = vld [vmem:[%s2334 + $0x8] sm:$0xf]
    %v2338 = vld [vmem:[%s2334 + $0xc] sm:$0xf]
    %v2339 = vld [vmem:[%s2334 + $0x10] sm:$0xf]
    %v2340 = vld [vmem:[%s2334 + $0x14] sm:$0xf]
    %v2341 = vld [vmem:[%s2334 + $0x18] sm:$0xf]
    %v2342 = vld [vmem:[%s2334 + $0x1c] sm:$0xf]
    %v2343 = vld [vmem:[%s2334 + $0x20] sm:$0xf]
    %v2344 = vld [vmem:[%s2334 + $0x24] sm:$0xf]
    %v2345 = vld [vmem:[%s2334 + $0x28] sm:$0xf]
    %v2346 = vld [vmem:[%s2334 + $0x2c] sm:$0xf]
    %v2347 = vld [vmem:[%s2334 + $0x30] sm:$0xf]
    %v2348 = vld [vmem:[%s2334 + $0x34] sm:$0xf]
    %v2349 = vld [vmem:[%s2334 + $0x38] sm:$0xf]
    %v2350 = vld [vmem:[%s2334 + $0x3c] sm:$0xf]
    %v2367 = vunpack.c.l.b16 %v2335
    %v2368 = vunpack.c.l.b16 %v2336
    %v2369 = vunpack.c.l.b16 %v2337
    %v2370 = vunpack.c.l.b16 %v2338
    %v2371 = vunpack.c.l.b16 %v2339
    %v2372 = vunpack.c.l.b16 %v2340
    %v2373 = vunpack.c.l.b16 %v2341
    %v2374 = vunpack.c.l.b16 %v2342
    %v2375 = vunpack.c.l.b16 %v2343
    %v2376 = vunpack.c.l.b16 %v2344
    %v2377 = vunpack.c.l.b16 %v2345
    %v2378 = vunpack.c.l.b16 %v2346
    %v2379 = vunpack.c.l.b16 %v2347
    %v2380 = vunpack.c.l.b16 %v2348
    %v2381 = vunpack.c.l.b16 %v2349
    %v2382 = vunpack.c.l.b16 %v2350
    %v2383 = vpack.c.b16 %v2368, %v2367
    %v2384 = vpack.c.b16 %v2370, %v2369
    %v2385 = vpack.c.b16 %v2372, %v2371
    %v2386 = vpack.c.b16 %v2374, %v2373
    %v2387 = vpack.c.b16 %v2376, %v2375
    %v2388 = vpack.c.b16 %v2378, %v2377
    %v2389 = vpack.c.b16 %v2380, %v2379
    %v2390 = vpack.c.b16 %v2382, %v2381
    %2399 = vmatprep.subr.bf16.mxu0 0
    %2400 = vmatpush1.bf16.msra.mxu0 %v2390
    %2401 = vmatprep.subr.bf16.mxu0 0
    %2402 = vmatpush1.bf16.msra.mxu0 %v2389
    %2403 = vmatprep.subr.bf16.mxu0 0
    %2404 = vmatpush1.bf16.msra.mxu0 %v2388
    %2405 = vmatprep.subr.bf16.mxu0 0
    %2406 = vmatpush1.bf16.msra.mxu0 %v2387
    %2407 = vmatprep.subr.bf16.mxu0 0
    %2408 = vmatpush1.bf16.msra.mxu0 %v2386
    %2409 = vmatprep.subr.bf16.mxu0 0
    %2410 = vmatpush1.bf16.msra.mxu0 %v2385
    %2411 = vmatprep.subr.bf16.mxu0 0
    %2412 = vmatpush1.bf16.msra.mxu0 %v2384
    %2413 = vmatprep.subr.bf16.mxu0 0
    %2414 = vmatpush1.bf16.msra.mxu0 %v2383
    %2415 = vmatprep.subr.bf16.mxu0 0
    %2416 = vmatpush2.bf16.msra.mxu0 0
    %2417 = vmatprep.subr.bf16.mxu0 0
    %2418 = vmatpush2.bf16.msra.mxu0 0
    %2419 = vmatprep.subr.bf16.mxu0 0
    %2420 = vmatpush2.bf16.msra.mxu0 0
    %2421 = vmatprep.subr.bf16.mxu0 0
    %2422 = vmatpush2.bf16.msra.mxu0 0
    %2423 = vmatprep.subr.bf16.mxu0 0
    %2424 = vmatpush2.bf16.msra.mxu0 0
    %2425 = vmatprep.subr.bf16.mxu0 0
    %2426 = vmatpush2.bf16.msra.mxu0 0
    %2427 = vmatprep.subr.bf16.mxu0 0
    %2428 = vmatpush2.bf16.msra.mxu0 0
    %2429 = vmatprep.subr.bf16.mxu0 0
    %2430 = vmatpush2.bf16.msra.mxu0 0
    %2431 = vmatprep.mubr.bf16.mxu0 0
    %2432 = vmatmul.mubr.bf16.gmra.mxu0 %v2333
    %v2433 = vpop.f32.mrf.mxu0
    %v2434 = vadd.f32 0.0, %v2433
    %v2435 = vpop.f32.mrf.mxu0
    %v2436 = vpop.f32.mrf.mxu0
    %v2437 = vadd.f32 0.0, %v2436
    %v2438 = vpop.f32.mrf.mxu0
    %2439 = vdwg.mxu0
    %v2440 = vadd.f32 %v2319, %v2434
    %v2441 = vadd.f32 %v2322, %v2437
    %s2442 = scalar_lea.vmem [#allocation8], 1
    %v2443 = vld [vmem:[%s2442] sm:$0x1]
    %s2444 = scalar_lea.vmem [#allocation10], 1
    %v2445 = vld [vmem:[%s2444] sm:$0x1]
    %v2446 = vadd.f32 %v2440, %v2441
    %v2447 = vrot.slane %v2446, 4
    %v2448 = vadd.f32 %v2446, %v2447
    %v2449 = vrot.slane %v2448, 2
    %v2450 = vadd.f32 %v2448, %v2449
    %v2451 = vrot.slane %v2450, 1
    %v2452 = vadd.f32 %v2450, %v2451
    %v2453 = vmul.f32 %v2440, %v2440
    %v2454 = vmul.f32 %v2441, %v2441
    %v2455 = vadd.f32 %v2453, %v2454
    %v2456 = vrot.slane %v2455, 4
    %v2457 = vadd.f32 %v2455, %v2456
    %v2458 = vrot.slane %v2457, 2
    %v2459 = vadd.f32 %v2457, %v2458
    %v2460 = vrot.slane %v2459, 1
    %v2461 = vadd.f32 %v2459, %v2460
    %2462 = vmatprep.subr.mxu0 0.0
    %2463 = vmatpush1.msra.mxu0 %v217
    %2464 = vmatprep.subr.mxu0 0.0
    %2465 = vmatpush1.msra.mxu0 %v216
    %2466 = vmatprep.subr.mxu0 0.0
    %2467 = vmatpush1.msra.mxu0 %v215
    %2468 = vmatprep.subr.mxu0 0.0
    %2469 = vmatpush1.msra.mxu0 %v214
    %2470 = vmatprep.subr.mxu0 0.0
    %2471 = vmatpush1.msra.mxu0 %v213
    %2472 = vmatprep.subr.mxu0 0.0
    %2473 = vmatpush1.msra.mxu0 %v212
    %2474 = vmatprep.subr.mxu0 0.0
    %2475 = vmatpush1.msra.mxu0 %v211
    %2476 = vmatprep.subr.mxu0 0.0
    %2477 = vmatpush1.msra.mxu0 %v210
    %2478 = vmatprep.subr.mxu0 0.0
    %2479 = vmatpush1.msra.mxu0 %v209
    %2480 = vmatprep.subr.mxu0 0.0
    %2481 = vmatpush1.msra.mxu0 %v208
    %2482 = vmatprep.subr.mxu0 0.0
    %2483 = vmatpush1.msra.mxu0 %v207
    %2484 = vmatprep.subr.mxu0 0.0
    %2485 = vmatpush1.msra.mxu0 %v206
    %2486 = vmatprep.subr.mxu0 0.0
    %2487 = vmatpush1.msra.mxu0 %v205
    %2488 = vmatprep.subr.mxu0 0.0
    %2489 = vmatpush1.msra.mxu0 %v204
    %2490 = vmatprep.subr.mxu0 0.0
    %2491 = vmatpush1.msra.mxu0 %v203
    %2492 = vmatprep.subr.mxu0 0.0
    %2493 = vmatpush1.msra.mxu0 %v202
    %2494 = vmatprep.subr.mxu0 0.0
    %2495 = vmatpush2.msra.mxu0 0.0
    %2496 = vmatprep.subr.mxu0 0.0
    %2497 = vmatpush2.msra.mxu0 0.0
    %2498 = vmatprep.subr.mxu0 0.0
    %2499 = vmatpush2.msra.mxu0 0.0
    %2500 = vmatprep.subr.mxu0 0.0
    %2501 = vmatpush2.msra.mxu0 0.0
    %2502 = vmatprep.subr.mxu0 0.0
    %2503 = vmatpush2.msra.mxu0 0.0
    %2504 = vmatprep.subr.mxu0 0.0
    %2505 = vmatpush2.msra.mxu0 0.0
    %2506 = vmatprep.subr.mxu0 0.0
    %2507 = vmatpush2.msra.mxu0 0.0
    %2508 = vmatprep.subr.mxu0 0.0
    %2509 = vmatpush2.msra.mxu0 0.0
    %2510 = vmatprep.subr.mxu0 0.0
    %2511 = vmatpush2.msra.mxu0 0.0
    %2512 = vmatprep.subr.mxu0 0.0
    %2513 = vmatpush2.msra.mxu0 0.0
    %2514 = vmatprep.subr.mxu0 0.0
    %2515 = vmatpush2.msra.mxu0 0.0
    %2516 = vmatprep.subr.mxu0 0.0
    %2517 = vmatpush2.msra.mxu0 0.0
    %2518 = vmatprep.subr.mxu0 0.0
    %2519 = vmatpush2.msra.mxu0 0.0
    %2520 = vmatprep.subr.mxu0 0.0
    %2521 = vmatpush2.msra.mxu0 0.0
    %2522 = vmatprep.subr.mxu0 0.0
    %2523 = vmatpush2.msra.mxu0 0.0
    %2524 = vmatprep.subr.mxu0 0.0
    %2525 = vmatpush2.msra.mxu0 0.0
    %2526 = vmatprep.mubr.f32.mxu0 0.0
    %2527 = vmatmul.mubr.f32.gmra.mxu0 %v2452
    %v2528 = vpop.f32.mrf.mxu0
    %v2529 = vadd.f32 0.0, %v2528
    %v2530 = vpop.f32.mrf.mxu0
    %2531 = vdwg.mxu0
    %v2532 = vmul.f32 %v2529, %v1317
    %2533 = vmatprep.subr.mxu0 0.0
    %2534 = vmatpush1.msra.mxu0 %v217
    %2535 = vmatprep.subr.mxu0 0.0
    %2536 = vmatpush1.msra.mxu0 %v216
    %2537 = vmatprep.subr.mxu0 0.0
    %2538 = vmatpush1.msra.mxu0 %v215
    %2539 = vmatprep.subr.mxu0 0.0
    %2540 = vmatpush1.msra.mxu0 %v214
    %2541 = vmatprep.subr.mxu0 0.0
    %2542 = vmatpush1.msra.mxu0 %v213
    %2543 = vmatprep.subr.mxu0 0.0
    %2544 = vmatpush1.msra.mxu0 %v212
    %2545 = vmatprep.subr.mxu0 0.0
    %2546 = vmatpush1.msra.mxu0 %v211
    %2547 = vmatprep.subr.mxu0 0.0
    %2548 = vmatpush1.msra.mxu0 %v210
    %2549 = vmatprep.subr.mxu0 0.0
    %2550 = vmatpush1.msra.mxu0 %v209
    %2551 = vmatprep.subr.mxu0 0.0
    %2552 = vmatpush1.msra.mxu0 %v208
    %2553 = vmatprep.subr.mxu0 0.0
    %2554 = vmatpush1.msra.mxu0 %v207
    %2555 = vmatprep.subr.mxu0 0.0
    %2556 = vmatpush1.msra.mxu0 %v206
    %2557 = vmatprep.subr.mxu0 0.0
    %2558 = vmatpush1.msra.mxu0 %v205
    %2559 = vmatprep.subr.mxu0 0.0
    %2560 = vmatpush1.msra.mxu0 %v204
    %2561 = vmatprep.subr.mxu0 0.0
    %2562 = vmatpush1.msra.mxu0 %v203
    %2563 = vmatprep.subr.mxu0 0.0
    %2564 = vmatpush1.msra.mxu0 %v202
    %2565 = vmatprep.subr.mxu0 0.0
    %2566 = vmatpush2.msra.mxu0 0.0
    %2567 = vmatprep.subr.mxu0 0.0
    %2568 = vmatpush2.msra.mxu0 0.0
    %2569 = vmatprep.subr.mxu0 0.0
    %2570 = vmatpush2.msra.mxu0 0.0
    %2571 = vmatprep.subr.mxu0 0.0
    %2572 = vmatpush2.msra.mxu0 0.0
    %2573 = vmatprep.subr.mxu0 0.0
    %2574 = vmatpush2.msra.mxu0 0.0
    %2575 = vmatprep.subr.mxu0 0.0
    %2576 = vmatpush2.msra.mxu0 0.0
    %2577 = vmatprep.subr.mxu0 0.0
    %2578 = vmatpush2.msra.mxu0 0.0
    %2579 = vmatprep.subr.mxu0 0.0
    %2580 = vmatpush2.msra.mxu0 0.0
    %2581 = vmatprep.subr.mxu0 0.0
    %2582 = vmatpush2.msra.mxu0 0.0
    %2583 = vmatprep.subr.mxu0 0.0
    %2584 = vmatpush2.msra.mxu0 0.0
    %2585 = vmatprep.subr.mxu0 0.0
    %2586 = vmatpush2.msra.mxu0 0.0
    %2587 = vmatprep.subr.mxu0 0.0
    %2588 = vmatpush2.msra.mxu0 0.0
    %2589 = vmatprep.subr.mxu0 0.0
    %2590 = vmatpush2.msra.mxu0 0.0
    %2591 = vmatprep.subr.mxu0 0.0
    %2592 = vmatpush2.msra.mxu0 0.0
    %2593 = vmatprep.subr.mxu0 0.0
    %2594 = vmatpush2.msra.mxu0 0.0
    %2595 = vmatprep.subr.mxu0 0.0
    %2596 = vmatpush2.msra.mxu0 0.0
    %2597 = vmatprep.mubr.f32.mxu0 0.0
    %2598 = vmatmul.mubr.f32.gmra.mxu0 %v2461
    %v2599 = vpop.f32.mrf.mxu0
    %v2600 = vadd.f32 0.0, %v2599
    %v2601 = vpop.f32.mrf.mxu0
    %2602 = vdwg.mxu0
    %v2603 = vmul.f32 %v2600, %v1317
    %v2604 = vmul.f32 %v2532, %v2532
    %v2605 = vsub.f32 %v2603, %v2604
    %v2606 = vadd.f32 %v2605, 1e-05
    %v2607 = vrsqrt.pop %v2606
    %v2608 = vmul.f32 %v2443, %v2607
    %v2609 = vmul.f32 %v2532, %v2608
    %v2610 = vsub.f32 %v2445, %v2609
    %v2612 = vlaneseq
    %v2613 = vshrl.u32 %v2612, 7
    %v2614 = vsub.s32 0, %v2613
    %v2615 = vrot.slane %v2608, %v2614
    %2616 = vrot.lane.b32.xlu0 %v2615, 16
    %v2617 = vpop.permute.xlu0 %2616
    %2619 = vrot.lane.b32.xlu0 %v2615, 32
    %v2620 = vpop.permute.xlu0 %2619
    %2622 = vrot.lane.b32.xlu0 %v2615, 48
    %v2623 = vpop.permute.xlu0 %2622
    %2625 = vrot.lane.b32.xlu0 %v2615, 64
    %v2626 = vpop.permute.xlu0 %2625
    %2628 = vrot.lane.b32.xlu0 %v2615, 80
    %v2629 = vpop.permute.xlu0 %2628
    %2631 = vrot.lane.b32.xlu0 %v2615, 96
    %v2632 = vpop.permute.xlu0 %2631
    %2634 = vrot.lane.b32.xlu0 %v2615, 112
    %v2635 = vpop.permute.xlu0 %2634
    %v2637 = vsel %vm1423, %v2608, %v2617
    %v2638 = vsel %vm1425, %v2637, %v2620
    %v2639 = vsel %vm1427, %v2638, %v2623
    %v2640 = vsel %vm1429, %v2639, %v2626
    %v2641 = vsel %vm1431, %v2640, %v2629
    %v2642 = vsel %vm1433, %v2641, %v2632
    %v2643 = vsel %vm1435, %v2642, %v2635
    %v2645 = vlaneseq
    %v2646 = vshrl.u32 %v2645, 7
    %v2647 = vsub.s32 0, %v2646
    %v2648 = vrot.slane %v2610, %v2647
    %2649 = vrot.lane.b32.xlu0 %v2648, 16
    %v2650 = vpop.permute.xlu0 %2649
    %2652 = vrot.lane.b32.xlu0 %v2648, 32
    %v2653 = vpop.permute.xlu0 %2652
    %2655 = vrot.lane.b32.xlu0 %v2648, 48
    %v2656 = vpop.permute.xlu0 %2655
    %2658 = vrot.lane.b32.xlu0 %v2648, 64
    %v2659 = vpop.permute.xlu0 %2658
    %2661 = vrot.lane.b32.xlu0 %v2648, 80
    %v2662 = vpop.permute.xlu0 %2661
    %2664 = vrot.lane.b32.xlu0 %v2648, 96
    %v2665 = vpop.permute.xlu0 %2664
    %2667 = vrot.lane.b32.xlu0 %v2648, 112
    %v2668 = vpop.permute.xlu0 %2667
    %v2670 = vsel %vm1423, %v2610, %v2650
    %v2671 = vsel %vm1425, %v2670, %v2653
    %v2672 = vsel %vm1427, %v2671, %v2656
    %v2673 = vsel %vm1429, %v2672, %v2659
    %v2674 = vsel %vm1431, %v2673, %v2662
    %v2675 = vsel %vm1433, %v2674, %v2665
    %v2676 = vsel %vm1435, %v2675, %v2668
    %v2677 = vlaneseq
    %v2678 = vshrl.u32 %v2677, 7
    %v2679 = vsub.s32 0, %v2678
    %v2680 = vrot.slane %v2643, %v2679
    %v2681 = vmul.f32 %v2440, %v2680
    %v2682 = vmul.f32 %v2441, %v2680
    %v2683 = vlaneseq
    %v2684 = vshrl.u32 %v2683, 7
    %v2685 = vsub.s32 0, %v2684
    %v2686 = vrot.slane %v2676, %v2685
    %v2687 = vadd.f32 %v2681, %v2686
    %v2688 = vadd.f32 %v2682, %v2686
    %s2689 = sld [smem:[#allocation20 + $0x2]]
    %vm2690 = vcmp.ge.f32.partialorder %v2687, 0.0
    %vm2691 = vcmp.ge.f32.partialorder %v2688, 0.0
    %v2692 = vstv %s2689
    %v2693 = vmul.f32 %v2692, %v2687
    %v2694 = vmul.f32 %v2692, %v2688
    %v2695 = vsel %vm2690, %v2687, %v2693
    %v2696 = vsel %vm2691, %v2688, %v2694
    %v2699 = vrot.slane %v2695, 7
    %v2700 = vrot.slane %v2696, 7
    %v2703 = vsel %vm725, 0.0, %v2699
    %v2704 = vsel %vm725, 0.0, %v2700
    %v2705 = vsel %vm725, %v2699, 0.0
    %v2706 = vsel %vm725, %v2700, 0.0
    %v2707 = vpack.c.bf16 %v2704, %v2703
    %s2708 = scalar_lea.vmem [#allocation11], 192
    %v2709 = vld [vmem:[%s2708] sm:$0xf]
    %v2710 = vld [vmem:[%s2708 + $0x4] sm:$0xf]
    %v2711 = vld [vmem:[%s2708 + $0x8] sm:$0xf]
    %v2712 = vld [vmem:[%s2708 + $0xc] sm:$0xf]
    %v2713 = vld [vmem:[%s2708 + $0x10] sm:$0xf]
    %v2714 = vld [vmem:[%s2708 + $0x14] sm:$0xf]
    %v2715 = vld [vmem:[%s2708 + $0x18] sm:$0xf]
    %v2716 = vld [vmem:[%s2708 + $0x1c] sm:$0xf]
    %v2717 = vld [vmem:[%s2708 + $0x20] sm:$0xf]
    %v2718 = vld [vmem:[%s2708 + $0x24] sm:$0xf]
    %v2719 = vld [vmem:[%s2708 + $0x28] sm:$0xf]
    %v2720 = vld [vmem:[%s2708 + $0x2c] sm:$0xf]
    %v2721 = vld [vmem:[%s2708 + $0x30] sm:$0xf]
    %v2722 = vld [vmem:[%s2708 + $0x34] sm:$0xf]
    %v2723 = vld [vmem:[%s2708 + $0x38] sm:$0xf]
    %v2724 = vld [vmem:[%s2708 + $0x3c] sm:$0xf]
    %v2729 = vrot.slane %v2703, 1
    %v2730 = vrot.slane %v2705, 1
    %v2731 = vsel %vm239, %v2729, %v2730
    %v2732 = vrot.slane %v2704, 1
    %v2733 = vrot.slane %v2706, 1
    %v2734 = vsel %vm239, %v2732, %v2733
    %v2737 = vpack.c.bf16 %v2734, %v2731
    %s2738 = scalar_lea.vmem [#allocation11], 256
    %v2739 = vld [vmem:[%s2738] sm:$0xf]
    %v2740 = vld [vmem:[%s2738 + $0x4] sm:$0xf]
    %v2741 = vld [vmem:[%s2738 + $0x8] sm:$0xf]
    %v2742 = vld [vmem:[%s2738 + $0xc] sm:$0xf]
    %v2743 = vld [vmem:[%s2738 + $0x10] sm:$0xf]
    %v2744 = vld [vmem:[%s2738 + $0x14] sm:$0xf]
    %v2745 = vld [vmem:[%s2738 + $0x18] sm:$0xf]
    %v2746 = vld [vmem:[%s2738 + $0x1c] sm:$0xf]
    %v2747 = vld [vmem:[%s2738 + $0x20] sm:$0xf]
    %v2748 = vld [vmem:[%s2738 + $0x24] sm:$0xf]
    %v2749 = vld [vmem:[%s2738 + $0x28] sm:$0xf]
    %v2750 = vld [vmem:[%s2738 + $0x2c] sm:$0xf]
    %v2751 = vld [vmem:[%s2738 + $0x30] sm:$0xf]
    %v2752 = vld [vmem:[%s2738 + $0x34] sm:$0xf]
    %v2753 = vld [vmem:[%s2738 + $0x38] sm:$0xf]
    %v2754 = vld [vmem:[%s2738 + $0x3c] sm:$0xf]
    %v2771 = vunpack.c.l.b16 %v2739
    %v2772 = vunpack.c.l.b16 %v2740
    %v2773 = vunpack.c.l.b16 %v2741
    %v2774 = vunpack.c.l.b16 %v2742
    %v2775 = vunpack.c.l.b16 %v2743
    %v2776 = vunpack.c.l.b16 %v2744
    %v2777 = vunpack.c.l.b16 %v2745
    %v2778 = vunpack.c.l.b16 %v2746
    %v2779 = vunpack.c.l.b16 %v2747
    %v2780 = vunpack.c.l.b16 %v2748
    %v2781 = vunpack.c.l.b16 %v2749
    %v2782 = vunpack.c.l.b16 %v2750
    %v2783 = vunpack.c.l.b16 %v2751
    %v2784 = vunpack.c.l.b16 %v2752
    %v2785 = vunpack.c.l.b16 %v2753
    %v2786 = vunpack.c.l.b16 %v2754
    %v2787 = vpack.c.b16 %v2772, %v2771
    %v2788 = vpack.c.b16 %v2774, %v2773
    %v2789 = vpack.c.b16 %v2776, %v2775
    %v2790 = vpack.c.b16 %v2778, %v2777
    %v2791 = vpack.c.b16 %v2780, %v2779
    %v2792 = vpack.c.b16 %v2782, %v2781
    %v2793 = vpack.c.b16 %v2784, %v2783
    %v2794 = vpack.c.b16 %v2786, %v2785
    %2803 = vmatprep.subr.bf16.mxu0 0
    %2804 = vmatpush1.bf16.msra.mxu0 %v2794
    %2805 = vmatprep.subr.bf16.mxu0 0
    %2806 = vmatpush1.bf16.msra.mxu0 %v2793
    %2807 = vmatprep.subr.bf16.mxu0 0
    %2808 = vmatpush1.bf16.msra.mxu0 %v2792
    %2809 = vmatprep.subr.bf16.mxu0 0
    %2810 = vmatpush1.bf16.msra.mxu0 %v2791
    %2811 = vmatprep.subr.bf16.mxu0 0
    %2812 = vmatpush1.bf16.msra.mxu0 %v2790
    %2813 = vmatprep.subr.bf16.mxu0 0
    %2814 = vmatpush1.bf16.msra.mxu0 %v2789
    %2815 = vmatprep.subr.bf16.mxu0 0
    %2816 = vmatpush1.bf16.msra.mxu0 %v2788
    %2817 = vmatprep.subr.bf16.mxu0 0
    %2818 = vmatpush1.bf16.msra.mxu0 %v2787
    %2819 = vmatprep.subr.bf16.mxu0 0
    %2820 = vmatpush2.bf16.msra.mxu0 0
    %2821 = vmatprep.subr.bf16.mxu0 0
    %2822 = vmatpush2.bf16.msra.mxu0 0
    %2823 = vmatprep.subr.bf16.mxu0 0
    %2824 = vmatpush2.bf16.msra.mxu0 0
    %2825 = vmatprep.subr.bf16.mxu0 0
    %2826 = vmatpush2.bf16.msra.mxu0 0
    %2827 = vmatprep.subr.bf16.mxu0 0
    %2828 = vmatpush2.bf16.msra.mxu0 0
    %2829 = vmatprep.subr.bf16.mxu0 0
    %2830 = vmatpush2.bf16.msra.mxu0 0
    %2831 = vmatprep.subr.bf16.mxu0 0
    %2832 = vmatpush2.bf16.msra.mxu0 0
    %2833 = vmatprep.subr.bf16.mxu0 0
    %2834 = vmatpush2.bf16.msra.mxu0 0
    %2835 = vmatprep.mubr.bf16.mxu0 0
    %2836 = vmatmul.mubr.bf16.gmra.mxu0 %v2737
    %v2837 = vpop.f32.mrf.mxu0
    %v2838 = vadd.f32 0.0, %v2837
    %v2839 = vpop.f32.mrf.mxu0
    %v2840 = vpop.f32.mrf.mxu0
    %v2841 = vadd.f32 0.0, %v2840
    %v2842 = vpop.f32.mrf.mxu0
    %2843 = vdwg.mxu0
    %v2860 = vunpack.c.l.b16 %v2709
    %v2861 = vunpack.c.l.b16 %v2710
    %v2862 = vunpack.c.l.b16 %v2711
    %v2863 = vunpack.c.l.b16 %v2712
    %v2864 = vunpack.c.l.b16 %v2713
    %v2865 = vunpack.c.l.b16 %v2714
    %v2866 = vunpack.c.l.b16 %v2715
    %v2867 = vunpack.c.l.b16 %v2716
    %v2868 = vunpack.c.l.b16 %v2717
    %v2869 = vunpack.c.l.b16 %v2718
    %v2870 = vunpack.c.l.b16 %v2719
    %v2871 = vunpack.c.l.b16 %v2720
    %v2872 = vunpack.c.l.b16 %v2721
    %v2873 = vunpack.c.l.b16 %v2722
    %v2874 = vunpack.c.l.b16 %v2723
    %v2875 = vunpack.c.l.b16 %v2724
    %v2876 = vpack.c.b16 %v2861, %v2860
    %v2877 = vpack.c.b16 %v2863, %v2862
    %v2878 = vpack.c.b16 %v2865, %v2864
    %v2879 = vpack.c.b16 %v2867, %v2866
    %v2880 = vpack.c.b16 %v2869, %v2868
    %v2881 = vpack.c.b16 %v2871, %v2870
    %v2882 = vpack.c.b16 %v2873, %v2872
    %v2883 = vpack.c.b16 %v2875, %v2874
    %2892 = vmatprep.subr.bf16.mxu0 0
    %2893 = vmatpush1.bf16.msra.mxu0 %v2883
    %2894 = vmatprep.subr.bf16.mxu0 0
    %2895 = vmatpush1.bf16.msra.mxu0 %v2882
    %2896 = vmatprep.subr.bf16.mxu0 0
    %2897 = vmatpush1.bf16.msra.mxu0 %v2881
    %2898 = vmatprep.subr.bf16.mxu0 0
    %2899 = vmatpush1.bf16.msra.mxu0 %v2880
    %2900 = vmatprep.subr.bf16.mxu0 0
    %2901 = vmatpush1.bf16.msra.mxu0 %v2879
    %2902 = vmatprep.subr.bf16.mxu0 0
    %2903 = vmatpush1.bf16.msra.mxu0 %v2878
    %2904 = vmatprep.subr.bf16.mxu0 0
    %2905 = vmatpush1.bf16.msra.mxu0 %v2877
    %2906 = vmatprep.subr.bf16.mxu0 0
    %2907 = vmatpush1.bf16.msra.mxu0 %v2876
    %2908 = vmatprep.subr.bf16.mxu0 0
    %2909 = vmatpush2.bf16.msra.mxu0 0
    %2910 = vmatprep.subr.bf16.mxu0 0
    %2911 = vmatpush2.bf16.msra.mxu0 0
    %2912 = vmatprep.subr.bf16.mxu0 0
    %2913 = vmatpush2.bf16.msra.mxu0 0
    %2914 = vmatprep.subr.bf16.mxu0 0
    %2915 = vmatpush2.bf16.msra.mxu0 0
    %2916 = vmatprep.subr.bf16.mxu0 0
    %2917 = vmatpush2.bf16.msra.mxu0 0
    %2918 = vmatprep.subr.bf16.mxu0 0
    %2919 = vmatpush2.bf16.msra.mxu0 0
    %2920 = vmatprep.subr.bf16.mxu0 0
    %2921 = vmatpush2.bf16.msra.mxu0 0
    %2922 = vmatprep.subr.bf16.mxu0 0
    %2923 = vmatpush2.bf16.msra.mxu0 0
    %2924 = vmatprep.mubr.bf16.mxu0 0
    %2925 = vmatmul.mubr.bf16.gmra.mxu0 %v2707
    %v2926 = vpop.f32.mrf.mxu0
    %v2927 = vadd.f32 %v2838, %v2926
    %v2928 = vpop.f32.mrf.mxu0
    %v2929 = vpop.f32.mrf.mxu0
    %v2930 = vadd.f32 %v2841, %v2929
    %v2931 = vpop.f32.mrf.mxu0
    %2932 = vdwg.mxu0
    %v2933 = vrot.slane %v2703, 2
    %v2934 = vrot.slane %v2705, 2
    %v2935 = vsel %vm366, %v2933, %v2934
    %v2936 = vrot.slane %v2704, 2
    %v2937 = vrot.slane %v2706, 2
    %v2938 = vsel %vm366, %v2936, %v2937
    %v2941 = vpack.c.bf16 %v2938, %v2935
    %s2942 = scalar_lea.vmem [#allocation11], 320
    %v2943 = vld [vmem:[%s2942] sm:$0xf]
    %v2944 = vld [vmem:[%s2942 + $0x4] sm:$0xf]
    %v2945 = vld [vmem:[%s2942 + $0x8] sm:$0xf]
    %v2946 = vld [vmem:[%s2942 + $0xc] sm:$0xf]
    %v2947 = vld [vmem:[%s2942 + $0x10] sm:$0xf]
    %v2948 = vld [vmem:[%s2942 + $0x14] sm:$0xf]
    %v2949 = vld [vmem:[%s2942 + $0x18] sm:$0xf]
    %v2950 = vld [vmem:[%s2942 + $0x1c] sm:$0xf]
    %v2951 = vld [vmem:[%s2942 + $0x20] sm:$0xf]
    %v2952 = vld [vmem:[%s2942 + $0x24] sm:$0xf]
    %v2953 = vld [vmem:[%s2942 + $0x28] sm:$0xf]
    %v2954 = vld [vmem:[%s2942 + $0x2c] sm:$0xf]
    %v2955 = vld [vmem:[%s2942 + $0x30] sm:$0xf]
    %v2956 = vld [vmem:[%s2942 + $0x34] sm:$0xf]
    %v2957 = vld [vmem:[%s2942 + $0x38] sm:$0xf]
    %v2958 = vld [vmem:[%s2942 + $0x3c] sm:$0xf]
    %v2975 = vunpack.c.l.b16 %v2943
    %v2976 = vunpack.c.l.b16 %v2944
    %v2977 = vunpack.c.l.b16 %v2945
    %v2978 = vunpack.c.l.b16 %v2946
    %v2979 = vunpack.c.l.b16 %v2947
    %v2980 = vunpack.c.l.b16 %v2948
    %v2981 = vunpack.c.l.b16 %v2949
    %v2982 = vunpack.c.l.b16 %v2950
    %v2983 = vunpack.c.l.b16 %v2951
    %v2984 = vunpack.c.l.b16 %v2952
    %v2985 = vunpack.c.l.b16 %v2953
    %v2986 = vunpack.c.l.b16 %v2954
    %v2987 = vunpack.c.l.b16 %v2955
    %v2988 = vunpack.c.l.b16 %v2956
    %v2989 = vunpack.c.l.b16 %v2957
    %v2990 = vunpack.c.l.b16 %v2958
    %v2991 = vpack.c.b16 %v2976, %v2975
    %v2992 = vpack.c.b16 %v2978, %v2977
    %v2993 = vpack.c.b16 %v2980, %v2979
    %v2994 = vpack.c.b16 %v2982, %v2981
    %v2995 = vpack.c.b16 %v2984, %v2983
    %v2996 = vpack.c.b16 %v2986, %v2985
    %v2997 = vpack.c.b16 %v2988, %v2987
    %v2998 = vpack.c.b16 %v2990, %v2989
    %3007 = vmatprep.subr.bf16.mxu0 0
    %3008 = vmatpush1.bf16.msra.mxu0 %v2998
    %3009 = vmatprep.subr.bf16.mxu0 0
    %3010 = vmatpush1.bf16.msra.mxu0 %v2997
    %3011 = vmatprep.subr.bf16.mxu0 0
    %3012 = vmatpush1.bf16.msra.mxu0 %v2996
    %3013 = vmatprep.subr.bf16.mxu0 0
    %3014 = vmatpush1.bf16.msra.mxu0 %v2995
    %3015 = vmatprep.subr.bf16.mxu0 0
    %3016 = vmatpush1.bf16.msra.mxu0 %v2994
    %3017 = vmatprep.subr.bf16.mxu0 0
    %3018 = vmatpush1.bf16.msra.mxu0 %v2993
    %3019 = vmatprep.subr.bf16.mxu0 0
    %3020 = vmatpush1.bf16.msra.mxu0 %v2992
    %3021 = vmatprep.subr.bf16.mxu0 0
    %3022 = vmatpush1.bf16.msra.mxu0 %v2991
    %3023 = vmatprep.subr.bf16.mxu0 0
    %3024 = vmatpush2.bf16.msra.mxu0 0
    %3025 = vmatprep.subr.bf16.mxu0 0
    %3026 = vmatpush2.bf16.msra.mxu0 0
    %3027 = vmatprep.subr.bf16.mxu0 0
    %3028 = vmatpush2.bf16.msra.mxu0 0
    %3029 = vmatprep.subr.bf16.mxu0 0
    %3030 = vmatpush2.bf16.msra.mxu0 0
    %3031 = vmatprep.subr.bf16.mxu0 0
    %3032 = vmatpush2.bf16.msra.mxu0 0
    %3033 = vmatprep.subr.bf16.mxu0 0
    %3034 = vmatpush2.bf16.msra.mxu0 0
    %3035 = vmatprep.subr.bf16.mxu0 0
    %3036 = vmatpush2.bf16.msra.mxu0 0
    %3037 = vmatprep.subr.bf16.mxu0 0
    %3038 = vmatpush2.bf16.msra.mxu0 0
    %3039 = vmatprep.mubr.bf16.mxu0 0
    %3040 = vmatmul.mubr.bf16.gmra.mxu0 %v2941
    %v3041 = vpop.f32.mrf.mxu0
    %v3042 = vadd.f32 0.0, %v3041
    %v3043 = vpop.f32.mrf.mxu0
    %v3044 = vpop.f32.mrf.mxu0
    %v3045 = vadd.f32 0.0, %v3044
    %v3046 = vpop.f32.mrf.mxu0
    %3047 = vdwg.mxu0
    %v3048 = vadd.f32 %v2927, %v3042
    %v3049 = vadd.f32 %v2930, %v3045
    %s3050 = scalar_lea.vmem [#allocation13], 1
    %v3051 = vld [vmem:[%s3050] sm:$0x1]
    %s3052 = scalar_lea.vmem [#allocation14], 1
    %v3053 = vld [vmem:[%s3052] sm:$0x1]
    %v3054 = vadd.f32 %v3048, %v3049
    %v3055 = vrot.slane %v3054, 4
    %v3056 = vadd.f32 %v3054, %v3055
    %v3057 = vrot.slane %v3056, 2
    %v3058 = vadd.f32 %v3056, %v3057
    %v3059 = vrot.slane %v3058, 1
    %v3060 = vadd.f32 %v3058, %v3059
    %v3061 = vmul.f32 %v3048, %v3048
    %v3062 = vmul.f32 %v3049, %v3049
    %v3063 = vadd.f32 %v3061, %v3062
    %v3064 = vrot.slane %v3063, 4
    %v3065 = vadd.f32 %v3063, %v3064
    %v3066 = vrot.slane %v3065, 2
    %v3067 = vadd.f32 %v3065, %v3066
    %v3068 = vrot.slane %v3067, 1
    %v3069 = vadd.f32 %v3067, %v3068
    %3070 = vmatprep.subr.mxu0 0.0
    %3071 = vmatpush1.msra.mxu0 %v217
    %3072 = vmatprep.subr.mxu0 0.0
    %3073 = vmatpush1.msra.mxu0 %v216
    %3074 = vmatprep.subr.mxu0 0.0
    %3075 = vmatpush1.msra.mxu0 %v215
    %3076 = vmatprep.subr.mxu0 0.0
    %3077 = vmatpush1.msra.mxu0 %v214
    %3078 = vmatprep.subr.mxu0 0.0
    %3079 = vmatpush1.msra.mxu0 %v213
    %3080 = vmatprep.subr.mxu0 0.0
    %3081 = vmatpush1.msra.mxu0 %v212
    %3082 = vmatprep.subr.mxu0 0.0
    %3083 = vmatpush1.msra.mxu0 %v211
    %3084 = vmatprep.subr.mxu0 0.0
    %3085 = vmatpush1.msra.mxu0 %v210
    %3086 = vmatprep.subr.mxu0 0.0
    %3087 = vmatpush1.msra.mxu0 %v209
    %3088 = vmatprep.subr.mxu0 0.0
    %3089 = vmatpush1.msra.mxu0 %v208
    %3090 = vmatprep.subr.mxu0 0.0
    %3091 = vmatpush1.msra.mxu0 %v207
    %3092 = vmatprep.subr.mxu0 0.0
    %3093 = vmatpush1.msra.mxu0 %v206
    %3094 = vmatprep.subr.mxu0 0.0
    %3095 = vmatpush1.msra.mxu0 %v205
    %3096 = vmatprep.subr.mxu0 0.0
    %3097 = vmatpush1.msra.mxu0 %v204
    %3098 = vmatprep.subr.mxu0 0.0
    %3099 = vmatpush1.msra.mxu0 %v203
    %3100 = vmatprep.subr.mxu0 0.0
    %3101 = vmatpush1.msra.mxu0 %v202
    %3102 = vmatprep.subr.mxu0 0.0
    %3103 = vmatpush2.msra.mxu0 0.0
    %3104 = vmatprep.subr.mxu0 0.0
    %3105 = vmatpush2.msra.mxu0 0.0
    %3106 = vmatprep.subr.mxu0 0.0
    %3107 = vmatpush2.msra.mxu0 0.0
    %3108 = vmatprep.subr.mxu0 0.0
    %3109 = vmatpush2.msra.mxu0 0.0
    %3110 = vmatprep.subr.mxu0 0.0
    %3111 = vmatpush2.msra.mxu0 0.0
    %3112 = vmatprep.subr.mxu0 0.0
    %3113 = vmatpush2.msra.mxu0 0.0
    %3114 = vmatprep.subr.mxu0 0.0
    %3115 = vmatpush2.msra.mxu0 0.0
    %3116 = vmatprep.subr.mxu0 0.0
    %3117 = vmatpush2.msra.mxu0 0.0
    %3118 = vmatprep.subr.mxu0 0.0
    %3119 = vmatpush2.msra.mxu0 0.0
    %3120 = vmatprep.subr.mxu0 0.0
    %3121 = vmatpush2.msra.mxu0 0.0
    %3122 = vmatprep.subr.mxu0 0.0
    %3123 = vmatpush2.msra.mxu0 0.0
    %3124 = vmatprep.subr.mxu0 0.0
    %3125 = vmatpush2.msra.mxu0 0.0
    %3126 = vmatprep.subr.mxu0 0.0
    %3127 = vmatpush2.msra.mxu0 0.0
    %3128 = vmatprep.subr.mxu0 0.0
    %3129 = vmatpush2.msra.mxu0 0.0
    %3130 = vmatprep.subr.mxu0 0.0
    %3131 = vmatpush2.msra.mxu0 0.0
    %3132 = vmatprep.subr.mxu0 0.0
    %3133 = vmatpush2.msra.mxu0 0.0
    %3134 = vmatprep.mubr.f32.mxu0 0.0
    %3135 = vmatmul.mubr.f32.gmra.mxu0 %v3060
    %v3136 = vpop.f32.mrf.mxu0
    %v3137 = vadd.f32 0.0, %v3136
    %v3138 = vpop.f32.mrf.mxu0
    %3139 = vdwg.mxu0
    %v3140 = vmul.f32 %v3137, %v1317
    %3141 = vmatprep.subr.mxu0 0.0
    %3142 = vmatpush1.msra.mxu0 %v217
    %3143 = vmatprep.subr.mxu0 0.0
    %3144 = vmatpush1.msra.mxu0 %v216
    %3145 = vmatprep.subr.mxu0 0.0
    %3146 = vmatpush1.msra.mxu0 %v215
    %3147 = vmatprep.subr.mxu0 0.0
    %3148 = vmatpush1.msra.mxu0 %v214
    %3149 = vmatprep.subr.mxu0 0.0
    %3150 = vmatpush1.msra.mxu0 %v213
    %3151 = vmatprep.subr.mxu0 0.0
    %3152 = vmatpush1.msra.mxu0 %v212
    %3153 = vmatprep.subr.mxu0 0.0
    %3154 = vmatpush1.msra.mxu0 %v211
    %3155 = vmatprep.subr.mxu0 0.0
    %3156 = vmatpush1.msra.mxu0 %v210
    %3157 = vmatprep.subr.mxu0 0.0
    %3158 = vmatpush1.msra.mxu0 %v209
    %3159 = vmatprep.subr.mxu0 0.0
    %3160 = vmatpush1.msra.mxu0 %v208
    %3161 = vmatprep.subr.mxu0 0.0
    %3162 = vmatpush1.msra.mxu0 %v207
    %3163 = vmatprep.subr.mxu0 0.0
    %3164 = vmatpush1.msra.mxu0 %v206
    %3165 = vmatprep.subr.mxu0 0.0
    %3166 = vmatpush1.msra.mxu0 %v205
    %3167 = vmatprep.subr.mxu0 0.0
    %3168 = vmatpush1.msra.mxu0 %v204
    %3169 = vmatprep.subr.mxu0 0.0
    %3170 = vmatpush1.msra.mxu0 %v203
    %3171 = vmatprep.subr.mxu0 0.0
    %3172 = vmatpush1.msra.mxu0 %v202
    %3173 = vmatprep.subr.mxu0 0.0
    %3174 = vmatpush2.msra.mxu0 0.0
    %3175 = vmatprep.subr.mxu0 0.0
    %3176 = vmatpush2.msra.mxu0 0.0
    %3177 = vmatprep.subr.mxu0 0.0
    %3178 = vmatpush2.msra.mxu0 0.0
    %3179 = vmatprep.subr.mxu0 0.0
    %3180 = vmatpush2.msra.mxu0 0.0
    %3181 = vmatprep.subr.mxu0 0.0
    %3182 = vmatpush2.msra.mxu0 0.0
    %3183 = vmatprep.subr.mxu0 0.0
    %3184 = vmatpush2.msra.mxu0 0.0
    %3185 = vmatprep.subr.mxu0 0.0
    %3186 = vmatpush2.msra.mxu0 0.0
    %3187 = vmatprep.subr.mxu0 0.0
    %3188 = vmatpush2.msra.mxu0 0.0
    %3189 = vmatprep.subr.mxu0 0.0
    %3190 = vmatpush2.msra.mxu0 0.0
    %3191 = vmatprep.subr.mxu0 0.0
    %3192 = vmatpush2.msra.mxu0 0.0
    %3193 = vmatprep.subr.mxu0 0.0
    %3194 = vmatpush2.msra.mxu0 0.0
    %3195 = vmatprep.subr.mxu0 0.0
    %3196 = vmatpush2.msra.mxu0 0.0
    %3197 = vmatprep.subr.mxu0 0.0
    %3198 = vmatpush2.msra.mxu0 0.0
    %3199 = vmatprep.subr.mxu0 0.0
    %3200 = vmatpush2.msra.mxu0 0.0
    %3201 = vmatprep.subr.mxu0 0.0
    %3202 = vmatpush2.msra.mxu0 0.0
    %3203 = vmatprep.subr.mxu0 0.0
    %3204 = vmatpush2.msra.mxu0 0.0
    %3205 = vmatprep.mubr.f32.mxu0 0.0
    %3206 = vmatmul.mubr.f32.gmra.mxu0 %v3069
    %v3207 = vpop.f32.mrf.mxu0
    %v3208 = vadd.f32 0.0, %v3207
    %v3209 = vpop.f32.mrf.mxu0
    %3210 = vdwg.mxu0
    %v3211 = vmul.f32 %v3208, %v1317
    %v3212 = vmul.f32 %v3140, %v3140
    %v3213 = vsub.f32 %v3211, %v3212
    %v3214 = vadd.f32 %v3213, 1e-05
    %v3215 = vrsqrt.pop %v3214
    %v3216 = vmul.f32 %v3051, %v3215
    %v3217 = vmul.f32 %v3140, %v3216
    %v3218 = vsub.f32 %v3053, %v3217
    %v3220 = vlaneseq
    %v3221 = vshrl.u32 %v3220, 7
    %v3222 = vsub.s32 0, %v3221
    %v3223 = vrot.slane %v3216, %v3222
    %3224 = vrot.lane.b32.xlu0 %v3223, 16
    %v3225 = vpop.permute.xlu0 %3224
    %3227 = vrot.lane.b32.xlu0 %v3223, 32
    %v3228 = vpop.permute.xlu0 %3227
    %3230 = vrot.lane.b32.xlu0 %v3223, 48
    %v3231 = vpop.permute.xlu0 %3230
    %3233 = vrot.lane.b32.xlu0 %v3223, 64
    %v3234 = vpop.permute.xlu0 %3233
    %3236 = vrot.lane.b32.xlu0 %v3223, 80
    %v3237 = vpop.permute.xlu0 %3236
    %3239 = vrot.lane.b32.xlu0 %v3223, 96
    %v3240 = vpop.permute.xlu0 %3239
    %3242 = vrot.lane.b32.xlu0 %v3223, 112
    %v3243 = vpop.permute.xlu0 %3242
    %v3245 = vsel %vm1423, %v3216, %v3225
    %v3246 = vsel %vm1425, %v3245, %v3228
    %v3247 = vsel %vm1427, %v3246, %v3231
    %v3248 = vsel %vm1429, %v3247, %v3234
    %v3249 = vsel %vm1431, %v3248, %v3237
    %v3250 = vsel %vm1433, %v3249, %v3240
    %v3251 = vsel %vm1435, %v3250, %v3243
    %v3253 = vlaneseq
    %v3254 = vshrl.u32 %v3253, 7
    %v3255 = vsub.s32 0, %v3254
    %v3256 = vrot.slane %v3218, %v3255
    %3257 = vrot.lane.b32.xlu0 %v3256, 16
    %v3258 = vpop.permute.xlu0 %3257
    %3260 = vrot.lane.b32.xlu0 %v3256, 32
    %v3261 = vpop.permute.xlu0 %3260
    %3263 = vrot.lane.b32.xlu0 %v3256, 48
    %v3264 = vpop.permute.xlu0 %3263
    %3266 = vrot.lane.b32.xlu0 %v3256, 64
    %v3267 = vpop.permute.xlu0 %3266
    %3269 = vrot.lane.b32.xlu0 %v3256, 80
    %v3270 = vpop.permute.xlu0 %3269
    %3272 = vrot.lane.b32.xlu0 %v3256, 96
    %v3273 = vpop.permute.xlu0 %3272
    %3275 = vrot.lane.b32.xlu0 %v3256, 112
    %v3276 = vpop.permute.xlu0 %3275
    %v3278 = vsel %vm1423, %v3218, %v3258
    %v3279 = vsel %vm1425, %v3278, %v3261
    %v3280 = vsel %vm1427, %v3279, %v3264
    %v3281 = vsel %vm1429, %v3280, %v3267
    %v3282 = vsel %vm1431, %v3281, %v3270
    %v3283 = vsel %vm1433, %v3282, %v3273
    %v3284 = vsel %vm1435, %v3283, %v3276
    %v3285 = vlaneseq
    %v3286 = vshrl.u32 %v3285, 7
    %v3287 = vsub.s32 0, %v3286
    %v3288 = vrot.slane %v3251, %v3287
    %v3289 = vmul.f32 %v3048, %v3288
    %v3290 = vmul.f32 %v3049, %v3288
    %v3291 = vlaneseq
    %v3292 = vshrl.u32 %v3291, 7
    %v3293 = vsub.s32 0, %v3292
    %v3294 = vrot.slane %v3284, %v3293
    %v3295 = vadd.f32 %v3289, %v3294
    %v3296 = vadd.f32 %v3290, %v3294
    %v3297 = vadd.f32 %v2087, %v3295
    %v3298 = vadd.f32 %v2088, %v3296
    %v3301 = vrot.slane %v3297, 7
    %v3302 = vrot.slane %v3298, 7
    %v3305 = vsel %vm725, 0.0, %v3301
    %v3306 = vsel %vm725, 0.0, %v3302
    %v3307 = vsel %vm725, %v3301, 0.0
    %v3308 = vsel %vm725, %v3302, 0.0
    %v3309 = vpack.c.bf16 %v3306, %v3305
    %v3310 = vld [vmem:[#allocation16] sm:$0xf]
    %v3311 = vld [vmem:[#allocation16 + $0x4] sm:$0xf]
    %v3312 = vld [vmem:[#allocation16 + $0x8] sm:$0xf]
    %v3313 = vld [vmem:[#allocation16 + $0xc] sm:$0xf]
    %v3314 = vld [vmem:[#allocation16 + $0x10] sm:$0xf]
    %v3315 = vld [vmem:[#allocation16 + $0x14] sm:$0xf]
    %v3316 = vld [vmem:[#allocation16 + $0x18] sm:$0xf]
    %v3317 = vld [vmem:[#allocation16 + $0x1c] sm:$0xf]
    %v3318 = vld [vmem:[#allocation16 + $0x20] sm:$0xf]
    %v3319 = vld [vmem:[#allocation16 + $0x24] sm:$0xf]
    %v3320 = vld [vmem:[#allocation16 + $0x28] sm:$0xf]
    %v3321 = vld [vmem:[#allocation16 + $0x2c] sm:$0xf]
    %v3322 = vld [vmem:[#allocation16 + $0x30] sm:$0xf]
    %v3323 = vld [vmem:[#allocation16 + $0x34] sm:$0xf]
    %v3324 = vld [vmem:[#allocation16 + $0x38] sm:$0xf]
    %v3325 = vld [vmem:[#allocation16 + $0x3c] sm:$0xf]
    %v3330 = vrot.slane %v3305, 1
    %v3331 = vrot.slane %v3307, 1
    %v3332 = vsel %vm239, %v3330, %v3331
    %v3333 = vrot.slane %v3306, 1
    %v3334 = vrot.slane %v3308, 1
    %v3335 = vsel %vm239, %v3333, %v3334
    %v3338 = vpack.c.bf16 %v3335, %v3332
    %s3339 = scalar_lea.vmem [#allocation16], 64
    %v3340 = vld [vmem:[%s3339] sm:$0xf]
    %v3341 = vld [vmem:[%s3339 + $0x4] sm:$0xf]
    %v3342 = vld [vmem:[%s3339 + $0x8] sm:$0xf]
    %v3343 = vld [vmem:[%s3339 + $0xc] sm:$0xf]
    %v3344 = vld [vmem:[%s3339 + $0x10] sm:$0xf]
    %v3345 = vld [vmem:[%s3339 + $0x14] sm:$0xf]
    %v3346 = vld [vmem:[%s3339 + $0x18] sm:$0xf]
    %v3347 = vld [vmem:[%s3339 + $0x1c] sm:$0xf]
    %v3348 = vld [vmem:[%s3339 + $0x20] sm:$0xf]
    %v3349 = vld [vmem:[%s3339 + $0x24] sm:$0xf]
    %v3350 = vld [vmem:[%s3339 + $0x28] sm:$0xf]
    %v3351 = vld [vmem:[%s3339 + $0x2c] sm:$0xf]
    %v3352 = vld [vmem:[%s3339 + $0x30] sm:$0xf]
    %v3353 = vld [vmem:[%s3339 + $0x34] sm:$0xf]
    %v3354 = vld [vmem:[%s3339 + $0x38] sm:$0xf]
    %v3355 = vld [vmem:[%s3339 + $0x3c] sm:$0xf]
    %v3372 = vunpack.c.l.b16 %v3340
    %v3373 = vunpack.c.l.b16 %v3341
    %v3374 = vunpack.c.l.b16 %v3342
    %v3375 = vunpack.c.l.b16 %v3343
    %v3376 = vunpack.c.l.b16 %v3344
    %v3377 = vunpack.c.l.b16 %v3345
    %v3378 = vunpack.c.l.b16 %v3346
    %v3379 = vunpack.c.l.b16 %v3347
    %v3380 = vunpack.c.l.b16 %v3348
    %v3381 = vunpack.c.l.b16 %v3349
    %v3382 = vunpack.c.l.b16 %v3350
    %v3383 = vunpack.c.l.b16 %v3351
    %v3384 = vunpack.c.l.b16 %v3352
    %v3385 = vunpack.c.l.b16 %v3353
    %v3386 = vunpack.c.l.b16 %v3354
    %v3387 = vunpack.c.l.b16 %v3355
    %v3388 = vpack.c.b16 %v3373, %v3372
    %v3389 = vpack.c.b16 %v3375, %v3374
    %v3390 = vpack.c.b16 %v3377, %v3376
    %v3391 = vpack.c.b16 %v3379, %v3378
    %v3392 = vpack.c.b16 %v3381, %v3380
    %v3393 = vpack.c.b16 %v3383, %v3382
    %v3394 = vpack.c.b16 %v3385, %v3384
    %v3395 = vpack.c.b16 %v3387, %v3386
    %3404 = vmatprep.subr.bf16.mxu0 0
    %3405 = vmatpush1.bf16.msra.mxu0 %v3395
    %3406 = vmatprep.subr.bf16.mxu0 0
    %3407 = vmatpush1.bf16.msra.mxu0 %v3394
    %3408 = vmatprep.subr.bf16.mxu0 0
    %3409 = vmatpush1.bf16.msra.mxu0 %v3393
    %3410 = vmatprep.subr.bf16.mxu0 0
    %3411 = vmatpush1.bf16.msra.mxu0 %v3392
    %3412 = vmatprep.subr.bf16.mxu0 0
    %3413 = vmatpush1.bf16.msra.mxu0 %v3391
    %3414 = vmatprep.subr.bf16.mxu0 0
    %3415 = vmatpush1.bf16.msra.mxu0 %v3390
    %3416 = vmatprep.subr.bf16.mxu0 0
    %3417 = vmatpush1.bf16.msra.mxu0 %v3389
    %3418 = vmatprep.subr.bf16.mxu0 0
    %3419 = vmatpush1.bf16.msra.mxu0 %v3388
    %3420 = vmatprep.subr.bf16.mxu0 0
    %3421 = vmatpush2.bf16.msra.mxu0 0
    %3422 = vmatprep.subr.bf16.mxu0 0
    %3423 = vmatpush2.bf16.msra.mxu0 0
    %3424 = vmatprep.subr.bf16.mxu0 0
    %3425 = vmatpush2.bf16.msra.mxu0 0
    %3426 = vmatprep.subr.bf16.mxu0 0
    %3427 = vmatpush2.bf16.msra.mxu0 0
    %3428 = vmatprep.subr.bf16.mxu0 0
    %3429 = vmatpush2.bf16.msra.mxu0 0
    %3430 = vmatprep.subr.bf16.mxu0 0
    %3431 = vmatpush2.bf16.msra.mxu0 0
    %3432 = vmatprep.subr.bf16.mxu0 0
    %3433 = vmatpush2.bf16.msra.mxu0 0
    %3434 = vmatprep.subr.bf16.mxu0 0
    %3435 = vmatpush2.bf16.msra.mxu0 0
    %3436 = vmatprep.mubr.bf16.mxu0 0
    %3437 = vmatmul.mubr.bf16.gmra.mxu0 %v3338
    %v3438 = vpop.f32.mrf.mxu0
    %v3439 = vadd.f32 0.0, %v3438
    %v3440 = vpop.f32.mrf.mxu0
    %v3441 = vpop.f32.mrf.mxu0
    %v3442 = vadd.f32 0.0, %v3441
    %v3443 = vpop.f32.mrf.mxu0
    %3444 = vdwg.mxu0
    %v3461 = vunpack.c.l.b16 %v3310
    %v3462 = vunpack.c.l.b16 %v3311
    %v3463 = vunpack.c.l.b16 %v3312
    %v3464 = vunpack.c.l.b16 %v3313
    %v3465 = vunpack.c.l.b16 %v3314
    %v3466 = vunpack.c.l.b16 %v3315
    %v3467 = vunpack.c.l.b16 %v3316
    %v3468 = vunpack.c.l.b16 %v3317
    %v3469 = vunpack.c.l.b16 %v3318
    %v3470 = vunpack.c.l.b16 %v3319
    %v3471 = vunpack.c.l.b16 %v3320
    %v3472 = vunpack.c.l.b16 %v3321
    %v3473 = vunpack.c.l.b16 %v3322
    %v3474 = vunpack.c.l.b16 %v3323
    %v3475 = vunpack.c.l.b16 %v3324
    %v3476 = vunpack.c.l.b16 %v3325
    %v3477 = vpack.c.b16 %v3462, %v3461
    %v3478 = vpack.c.b16 %v3464, %v3463
    %v3479 = vpack.c.b16 %v3466, %v3465
    %v3480 = vpack.c.b16 %v3468, %v3467
    %v3481 = vpack.c.b16 %v3470, %v3469
    %v3482 = vpack.c.b16 %v3472, %v3471
    %v3483 = vpack.c.b16 %v3474, %v3473
    %v3484 = vpack.c.b16 %v3476, %v3475
    %3493 = vmatprep.subr.bf16.mxu0 0
    %3494 = vmatpush1.bf16.msra.mxu0 %v3484
    %3495 = vmatprep.subr.bf16.mxu0 0
    %3496 = vmatpush1.bf16.msra.mxu0 %v3483
    %3497 = vmatprep.subr.bf16.mxu0 0
    %3498 = vmatpush1.bf16.msra.mxu0 %v3482
    %3499 = vmatprep.subr.bf16.mxu0 0
    %3500 = vmatpush1.bf16.msra.mxu0 %v3481
    %3501 = vmatprep.subr.bf16.mxu0 0
    %3502 = vmatpush1.bf16.msra.mxu0 %v3480
    %3503 = vmatprep.subr.bf16.mxu0 0
    %3504 = vmatpush1.bf16.msra.mxu0 %v3479
    %3505 = vmatprep.subr.bf16.mxu0 0
    %3506 = vmatpush1.bf16.msra.mxu0 %v3478
    %3507 = vmatprep.subr.bf16.mxu0 0
    %3508 = vmatpush1.bf16.msra.mxu0 %v3477
    %3509 = vmatprep.subr.bf16.mxu0 0
    %3510 = vmatpush2.bf16.msra.mxu0 0
    %3511 = vmatprep.subr.bf16.mxu0 0
    %3512 = vmatpush2.bf16.msra.mxu0 0
    %3513 = vmatprep.subr.bf16.mxu0 0
    %3514 = vmatpush2.bf16.msra.mxu0 0
    %3515 = vmatprep.subr.bf16.mxu0 0
    %3516 = vmatpush2.bf16.msra.mxu0 0
    %3517 = vmatprep.subr.bf16.mxu0 0
    %3518 = vmatpush2.bf16.msra.mxu0 0
    %3519 = vmatprep.subr.bf16.mxu0 0
    %3520 = vmatpush2.bf16.msra.mxu0 0
    %3521 = vmatprep.subr.bf16.mxu0 0
    %3522 = vmatpush2.bf16.msra.mxu0 0
    %3523 = vmatprep.subr.bf16.mxu0 0
    %3524 = vmatpush2.bf16.msra.mxu0 0
    %3525 = vmatprep.mubr.bf16.mxu0 0
    %3526 = vmatmul.mubr.bf16.gmra.mxu0 %v3309
    %v3527 = vpop.f32.mrf.mxu0
    %v3528 = vadd.f32 %v3439, %v3527
    %v3529 = vpop.f32.mrf.mxu0
    %v3530 = vpop.f32.mrf.mxu0
    %v3531 = vadd.f32 %v3442, %v3530
    %v3532 = vpop.f32.mrf.mxu0
    %3533 = vdwg.mxu0
    %v3534 = vrot.slane %v3305, 2
    %v3535 = vrot.slane %v3307, 2
    %v3536 = vsel %vm366, %v3534, %v3535
    %v3537 = vrot.slane %v3306, 2
    %v3538 = vrot.slane %v3308, 2
    %v3539 = vsel %vm366, %v3537, %v3538
    %v3542 = vpack.c.bf16 %v3539, %v3536
    %s3543 = scalar_lea.vmem [#allocation16], 128
    %v3544 = vld [vmem:[%s3543] sm:$0xf]
    %v3545 = vld [vmem:[%s3543 + $0x4] sm:$0xf]
    %v3546 = vld [vmem:[%s3543 + $0x8] sm:$0xf]
    %v3547 = vld [vmem:[%s3543 + $0xc] sm:$0xf]
    %v3548 = vld [vmem:[%s3543 + $0x10] sm:$0xf]
    %v3549 = vld [vmem:[%s3543 + $0x14] sm:$0xf]
    %v3550 = vld [vmem:[%s3543 + $0x18] sm:$0xf]
    %v3551 = vld [vmem:[%s3543 + $0x1c] sm:$0xf]
    %v3552 = vld [vmem:[%s3543 + $0x20] sm:$0xf]
    %v3553 = vld [vmem:[%s3543 + $0x24] sm:$0xf]
    %v3554 = vld [vmem:[%s3543 + $0x28] sm:$0xf]
    %v3555 = vld [vmem:[%s3543 + $0x2c] sm:$0xf]
    %v3556 = vld [vmem:[%s3543 + $0x30] sm:$0xf]
    %v3557 = vld [vmem:[%s3543 + $0x34] sm:$0xf]
    %v3558 = vld [vmem:[%s3543 + $0x38] sm:$0xf]
    %v3559 = vld [vmem:[%s3543 + $0x3c] sm:$0xf]
    %v3576 = vunpack.c.l.b16 %v3544
    %v3577 = vunpack.c.l.b16 %v3545
    %v3578 = vunpack.c.l.b16 %v3546
    %v3579 = vunpack.c.l.b16 %v3547
    %v3580 = vunpack.c.l.b16 %v3548
    %v3581 = vunpack.c.l.b16 %v3549
    %v3582 = vunpack.c.l.b16 %v3550
    %v3583 = vunpack.c.l.b16 %v3551
    %v3584 = vunpack.c.l.b16 %v3552
    %v3585 = vunpack.c.l.b16 %v3553
    %v3586 = vunpack.c.l.b16 %v3554
    %v3587 = vunpack.c.l.b16 %v3555
    %v3588 = vunpack.c.l.b16 %v3556
    %v3589 = vunpack.c.l.b16 %v3557
    %v3590 = vunpack.c.l.b16 %v3558
    %v3591 = vunpack.c.l.b16 %v3559
    %v3592 = vpack.c.b16 %v3577, %v3576
    %v3593 = vpack.c.b16 %v3579, %v3578
    %v3594 = vpack.c.b16 %v3581, %v3580
    %v3595 = vpack.c.b16 %v3583, %v3582
    %v3596 = vpack.c.b16 %v3585, %v3584
    %v3597 = vpack.c.b16 %v3587, %v3586
    %v3598 = vpack.c.b16 %v3589, %v3588
    %v3599 = vpack.c.b16 %v3591, %v3590
    %3608 = vmatprep.subr.bf16.mxu0 0
    %3609 = vmatpush1.bf16.msra.mxu0 %v3599
    %3610 = vmatprep.subr.bf16.mxu0 0
    %3611 = vmatpush1.bf16.msra.mxu0 %v3598
    %3612 = vmatprep.subr.bf16.mxu0 0
    %3613 = vmatpush1.bf16.msra.mxu0 %v3597
    %3614 = vmatprep.subr.bf16.mxu0 0
    %3615 = vmatpush1.bf16.msra.mxu0 %v3596
    %3616 = vmatprep.subr.bf16.mxu0 0
    %3617 = vmatpush1.bf16.msra.mxu0 %v3595
    %3618 = vmatprep.subr.bf16.mxu0 0
    %3619 = vmatpush1.bf16.msra.mxu0 %v3594
    %3620 = vmatprep.subr.bf16.mxu0 0
    %3621 = vmatpush1.bf16.msra.mxu0 %v3593
    %3622 = vmatprep.subr.bf16.mxu0 0
    %3623 = vmatpush1.bf16.msra.mxu0 %v3592
    %3624 = vmatprep.subr.bf16.mxu0 0
    %3625 = vmatpush2.bf16.msra.mxu0 0
    %3626 = vmatprep.subr.bf16.mxu0 0
    %3627 = vmatpush2.bf16.msra.mxu0 0
    %3628 = vmatprep.subr.bf16.mxu0 0
    %3629 = vmatpush2.bf16.msra.mxu0 0
    %3630 = vmatprep.subr.bf16.mxu0 0
    %3631 = vmatpush2.bf16.msra.mxu0 0
    %3632 = vmatprep.subr.bf16.mxu0 0
    %3633 = vmatpush2.bf16.msra.mxu0 0
    %3634 = vmatprep.subr.bf16.mxu0 0
    %3635 = vmatpush2.bf16.msra.mxu0 0
    %3636 = vmatprep.subr.bf16.mxu0 0
    %3637 = vmatpush2.bf16.msra.mxu0 0
    %3638 = vmatprep.subr.bf16.mxu0 0
    %3639 = vmatpush2.bf16.msra.mxu0 0
    %3640 = vmatprep.mubr.bf16.mxu0 0
    %3641 = vmatmul.mubr.bf16.gmra.mxu0 %v3542
    %v3642 = vpop.f32.mrf.mxu0
    %v3643 = vadd.f32 0.0, %v3642
    %v3644 = vpop.f32.mrf.mxu0
    %v3645 = vpop.f32.mrf.mxu0
    %v3646 = vadd.f32 0.0, %v3645
    %v3647 = vpop.f32.mrf.mxu0
    %3648 = vdwg.mxu0
    %v3649 = vadd.f32 %v3528, %v3643
    %v3650 = vadd.f32 %v3531, %v3646
    %v3651 = vld [vmem:[#allocation17] sm:$0x1]
    %v3652 = vld [vmem:[#allocation19] sm:$0x1]
    %v3653 = vadd.f32 %v3649, %v3650
    %v3654 = vrot.slane %v3653, 4
    %v3655 = vadd.f32 %v3653, %v3654
    %v3656 = vrot.slane %v3655, 2
    %v3657 = vadd.f32 %v3655, %v3656
    %v3658 = vrot.slane %v3657, 1
    %v3659 = vadd.f32 %v3657, %v3658
    %v3660 = vmul.f32 %v3649, %v3649
    %v3661 = vmul.f32 %v3650, %v3650
    %v3662 = vadd.f32 %v3660, %v3661
    %v3663 = vrot.slane %v3662, 4
    %v3664 = vadd.f32 %v3662, %v3663
    %v3665 = vrot.slane %v3664, 2
    %v3666 = vadd.f32 %v3664, %v3665
    %v3667 = vrot.slane %v3666, 1
    %v3668 = vadd.f32 %v3666, %v3667
    %3669 = vmatprep.subr.mxu0 0.0
    %3670 = vmatpush1.msra.mxu0 %v217
    %3671 = vmatprep.subr.mxu0 0.0
    %3672 = vmatpush1.msra.mxu0 %v216
    %3673 = vmatprep.subr.mxu0 0.0
    %3674 = vmatpush1.msra.mxu0 %v215
    %3675 = vmatprep.subr.mxu0 0.0
    %3676 = vmatpush1.msra.mxu0 %v214
    %3677 = vmatprep.subr.mxu0 0.0
    %3678 = vmatpush1.msra.mxu0 %v213
    %3679 = vmatprep.subr.mxu0 0.0
    %3680 = vmatpush1.msra.mxu0 %v212
    %3681 = vmatprep.subr.mxu0 0.0
    %3682 = vmatpush1.msra.mxu0 %v211
    %3683 = vmatprep.subr.mxu0 0.0
    %3684 = vmatpush1.msra.mxu0 %v210
    %3685 = vmatprep.subr.mxu0 0.0
    %3686 = vmatpush1.msra.mxu0 %v209
    %3687 = vmatprep.subr.mxu0 0.0
    %3688 = vmatpush1.msra.mxu0 %v208
    %3689 = vmatprep.subr.mxu0 0.0
    %3690 = vmatpush1.msra.mxu0 %v207
    %3691 = vmatprep.subr.mxu0 0.0
    %3692 = vmatpush1.msra.mxu0 %v206
    %3693 = vmatprep.subr.mxu0 0.0
    %3694 = vmatpush1.msra.mxu0 %v205
    %3695 = vmatprep.subr.mxu0 0.0
    %3696 = vmatpush1.msra.mxu0 %v204
    %3697 = vmatprep.subr.mxu0 0.0
    %3698 = vmatpush1.msra.mxu0 %v203
    %3699 = vmatprep.subr.mxu0 0.0
    %3700 = vmatpush1.msra.mxu0 %v202
    %3701 = vmatprep.subr.mxu0 0.0
    %3702 = vmatpush2.msra.mxu0 0.0
    %3703 = vmatprep.subr.mxu0 0.0
    %3704 = vmatpush2.msra.mxu0 0.0
    %3705 = vmatprep.subr.mxu0 0.0
    %3706 = vmatpush2.msra.mxu0 0.0
    %3707 = vmatprep.subr.mxu0 0.0
    %3708 = vmatpush2.msra.mxu0 0.0
    %3709 = vmatprep.subr.mxu0 0.0
    %3710 = vmatpush2.msra.mxu0 0.0
    %3711 = vmatprep.subr.mxu0 0.0
    %3712 = vmatpush2.msra.mxu0 0.0
    %3713 = vmatprep.subr.mxu0 0.0
    %3714 = vmatpush2.msra.mxu0 0.0
    %3715 = vmatprep.subr.mxu0 0.0
    %3716 = vmatpush2.msra.mxu0 0.0
    %3717 = vmatprep.subr.mxu0 0.0
    %3718 = vmatpush2.msra.mxu0 0.0
    %3719 = vmatprep.subr.mxu0 0.0
    %3720 = vmatpush2.msra.mxu0 0.0
    %3721 = vmatprep.subr.mxu0 0.0
    %3722 = vmatpush2.msra.mxu0 0.0
    %3723 = vmatprep.subr.mxu0 0.0
    %3724 = vmatpush2.msra.mxu0 0.0
    %3725 = vmatprep.subr.mxu0 0.0
    %3726 = vmatpush2.msra.mxu0 0.0
    %3727 = vmatprep.subr.mxu0 0.0
    %3728 = vmatpush2.msra.mxu0 0.0
    %3729 = vmatprep.subr.mxu0 0.0
    %3730 = vmatpush2.msra.mxu0 0.0
    %3731 = vmatprep.subr.mxu0 0.0
    %3732 = vmatpush2.msra.mxu0 0.0
    %3733 = vmatprep.mubr.f32.mxu0 0.0
    %3734 = vmatmul.mubr.f32.gmra.mxu0 %v3659
    %v3735 = vpop.f32.mrf.mxu0
    %v3736 = vadd.f32 0.0, %v3735
    %v3737 = vpop.f32.mrf.mxu0
    %3738 = vdwg.mxu0
    %v3739 = vmul.f32 %v3736, %v1317
    %3740 = vmatprep.subr.mxu0 0.0
    %3741 = vmatpush1.msra.mxu0 %v217
    %3742 = vmatprep.subr.mxu0 0.0
    %3743 = vmatpush1.msra.mxu0 %v216
    %3744 = vmatprep.subr.mxu0 0.0
    %3745 = vmatpush1.msra.mxu0 %v215
    %3746 = vmatprep.subr.mxu0 0.0
    %3747 = vmatpush1.msra.mxu0 %v214
    %3748 = vmatprep.subr.mxu0 0.0
    %3749 = vmatpush1.msra.mxu0 %v213
    %3750 = vmatprep.subr.mxu0 0.0
    %3751 = vmatpush1.msra.mxu0 %v212
    %3752 = vmatprep.subr.mxu0 0.0
    %3753 = vmatpush1.msra.mxu0 %v211
    %3754 = vmatprep.subr.mxu0 0.0
    %3755 = vmatpush1.msra.mxu0 %v210
    %3756 = vmatprep.subr.mxu0 0.0
    %3757 = vmatpush1.msra.mxu0 %v209
    %3758 = vmatprep.subr.mxu0 0.0
    %3759 = vmatpush1.msra.mxu0 %v208
    %3760 = vmatprep.subr.mxu0 0.0
    %3761 = vmatpush1.msra.mxu0 %v207
    %3762 = vmatprep.subr.mxu0 0.0
    %3763 = vmatpush1.msra.mxu0 %v206
    %3764 = vmatprep.subr.mxu0 0.0
    %3765 = vmatpush1.msra.mxu0 %v205
    %3766 = vmatprep.subr.mxu0 0.0
    %3767 = vmatpush1.msra.mxu0 %v204
    %3768 = vmatprep.subr.mxu0 0.0
    %3769 = vmatpush1.msra.mxu0 %v203
    %3770 = vmatprep.subr.mxu0 0.0
    %3771 = vmatpush1.msra.mxu0 %v202
    %3772 = vmatprep.subr.mxu0 0.0
    %3773 = vmatpush2.msra.mxu0 0.0
    %3774 = vmatprep.subr.mxu0 0.0
    %3775 = vmatpush2.msra.mxu0 0.0
    %3776 = vmatprep.subr.mxu0 0.0
    %3777 = vmatpush2.msra.mxu0 0.0
    %3778 = vmatprep.subr.mxu0 0.0
    %3779 = vmatpush2.msra.mxu0 0.0
    %3780 = vmatprep.subr.mxu0 0.0
    %3781 = vmatpush2.msra.mxu0 0.0
    %3782 = vmatprep.subr.mxu0 0.0
    %3783 = vmatpush2.msra.mxu0 0.0
    %3784 = vmatprep.subr.mxu0 0.0
    %3785 = vmatpush2.msra.mxu0 0.0
    %3786 = vmatprep.subr.mxu0 0.0
    %3787 = vmatpush2.msra.mxu0 0.0
    %3788 = vmatprep.subr.mxu0 0.0
    %3789 = vmatpush2.msra.mxu0 0.0
    %3790 = vmatprep.subr.mxu0 0.0
    %3791 = vmatpush2.msra.mxu0 0.0
    %3792 = vmatprep.subr.mxu0 0.0
    %3793 = vmatpush2.msra.mxu0 0.0
    %3794 = vmatprep.subr.mxu0 0.0
    %3795 = vmatpush2.msra.mxu0 0.0
    %3796 = vmatprep.subr.mxu0 0.0
    %3797 = vmatpush2.msra.mxu0 0.0
    %3798 = vmatprep.subr.mxu0 0.0
    %3799 = vmatpush2.msra.mxu0 0.0
    %3800 = vmatprep.subr.mxu0 0.0
    %3801 = vmatpush2.msra.mxu0 0.0
    %3802 = vmatprep.subr.mxu0 0.0
    %3803 = vmatpush2.msra.mxu0 0.0
    %3804 = vmatprep.mubr.f32.mxu0 0.0
    %3805 = vmatmul.mubr.f32.gmra.mxu0 %v3668
    %v3806 = vpop.f32.mrf.mxu0
    %v3807 = vadd.f32 0.0, %v3806
    %v3808 = vpop.f32.mrf.mxu0
    %3809 = vdwg.mxu0
    %v3810 = vmul.f32 %v3807, %v1317
    %v3811 = vmul.f32 %v3739, %v3739
    %v3812 = vsub.f32 %v3810, %v3811
    %v3813 = vadd.f32 %v3812, 1e-05
    %v3814 = vrsqrt.pop %v3813
    %v3815 = vmul.f32 %v3651, %v3814
    %v3816 = vmul.f32 %v3739, %v3815
    %v3817 = vsub.f32 %v3652, %v3816
    %v3819 = vlaneseq
    %v3820 = vshrl.u32 %v3819, 7
    %v3821 = vsub.s32 0, %v3820
    %v3822 = vrot.slane %v3815, %v3821
    %3823 = vrot.lane.b32.xlu0 %v3822, 16
    %v3824 = vpop.permute.xlu0 %3823
    %3826 = vrot.lane.b32.xlu0 %v3822, 32
    %v3827 = vpop.permute.xlu0 %3826
    %3829 = vrot.lane.b32.xlu0 %v3822, 48
    %v3830 = vpop.permute.xlu0 %3829
    %3832 = vrot.lane.b32.xlu0 %v3822, 64
    %v3833 = vpop.permute.xlu0 %3832
    %3835 = vrot.lane.b32.xlu0 %v3822, 80
    %v3836 = vpop.permute.xlu0 %3835
    %3838 = vrot.lane.b32.xlu0 %v3822, 96
    %v3839 = vpop.permute.xlu0 %3838
    %3841 = vrot.lane.b32.xlu0 %v3822, 112
    %v3842 = vpop.permute.xlu0 %3841
    %v3844 = vsel %vm1423, %v3815, %v3824
    %v3845 = vsel %vm1425, %v3844, %v3827
    %v3846 = vsel %vm1427, %v3845, %v3830
    %v3847 = vsel %vm1429, %v3846, %v3833
    %v3848 = vsel %vm1431, %v3847, %v3836
    %v3849 = vsel %vm1433, %v3848, %v3839
    %v3850 = vsel %vm1435, %v3849, %v3842
    %v3852 = vlaneseq
    %v3853 = vshrl.u32 %v3852, 7
    %v3854 = vsub.s32 0, %v3853
    %v3855 = vrot.slane %v3817, %v3854
    %3856 = vrot.lane.b32.xlu0 %v3855, 16
    %v3857 = vpop.permute.xlu0 %3856
    %3859 = vrot.lane.b32.xlu0 %v3855, 32
    %v3860 = vpop.permute.xlu0 %3859
    %3862 = vrot.lane.b32.xlu0 %v3855, 48
    %v3863 = vpop.permute.xlu0 %3862
    %3865 = vrot.lane.b32.xlu0 %v3855, 64
    %v3866 = vpop.permute.xlu0 %3865
    %3868 = vrot.lane.b32.xlu0 %v3855, 80
    %v3869 = vpop.permute.xlu0 %3868
    %3871 = vrot.lane.b32.xlu0 %v3855, 96
    %v3872 = vpop.permute.xlu0 %3871
    %3874 = vrot.lane.b32.xlu0 %v3855, 112
    %v3875 = vpop.permute.xlu0 %3874
    %v3877 = vsel %vm1423, %v3817, %v3857
    %v3878 = vsel %vm1425, %v3877, %v3860
    %v3879 = vsel %vm1427, %v3878, %v3863
    %v3880 = vsel %vm1429, %v3879, %v3866
    %v3881 = vsel %vm1431, %v3880, %v3869
    %v3882 = vsel %vm1433, %v3881, %v3872
    %v3883 = vsel %vm1435, %v3882, %v3875
    %v3884 = vlaneseq
    %v3885 = vshrl.u32 %v3884, 7
    %v3886 = vsub.s32 0, %v3885
    %v3887 = vrot.slane %v3850, %v3886
    %v3888 = vmul.f32 %v3649, %v3887
    %v3889 = vmul.f32 %v3650, %v3887
    %v3890 = vlaneseq
    %v3891 = vshrl.u32 %v3890, 7
    %v3892 = vsub.s32 0, %v3891
    %v3893 = vrot.slane %v3883, %v3892
    %v3894 = vadd.f32 %v3888, %v3893
    %v3895 = vadd.f32 %v3889, %v3893
    %v3896 = vadd.f32 %v3894, %v875
    %v3897 = vadd.f32 %v3895, %v876
    %3898 = vst [vmem:[%s14] sm:$0xff] %v3896
    %3899 = vst [vmem:[%s14 + $0x8] sm:$0xff] %v3897
    // Predicated region
    $region106: #{srnet_forward.4} parent=1 // pred_check
      _
    $region107: #{srnet_forward.4} parent=1 // pred_check_branch
      %3901 = sbr.rel (0) target = $region109
    $region108: #{srnet_forward.4} parent=1 // pred_region
      _
    $region109: #{srnet_forward.4} parent=1 // pred_fallthru
      _
    // Predicated region
    $region110: #{srnet_forward.4} parent=1 // pred_check
      _
    $region111: #{srnet_forward.4} parent=1 // pred_check_branch
      %3903 = sbr.rel (0) target = $region113
    $region112: #{srnet_forward.4} parent=1 // pred_region
      _
    $region113: #{srnet_forward.4} parent=1 // pred_fallthru
      _
    %3904 = vsyncpa [#allocation3], 1
    %3905 = vsyncpa [#allocation6], 1
    %3906 = vsyncpa [#allocation9], 1
    %3907 = vsyncpa [#allocation12], 1
    %3908 = vsyncpa [#allocation15], 1
    %3909 = vsyncpa [#allocation18], 1
    %3910 = vsyncpa [#allocation4], 1

// kernel: srnet_forward.6
$region0: #{srnet_forward.6}
  #allocation0 [shape = 'u32[]', space=smem, size = 0x4, offset = 0x4, fixed_abs, tag = 'smem constant byte address 0x4 - core index']
  #allocation1 [shape = 'u32[144,128]{1,0:T(1,128)}', space=vmem, size = 0x12000, scoped, tag = 'internal scratch']
  #allocation2 [shape = 's32[1]{0}', space=sflag, size = 0x4, scoped, tag = 'scoped memory for srnet_forward.6']
  #allocation3 [shape = 'f32[1]{0:T(128)S(6)}', space=smem, size = 0x200, scoped, tag = 'prefetched SMEM operand 0']
  %s0 = inlined_call_operand.<no memory space> [shape: f32[1], index: 0, kind: input, shape index: {}]
  %s1 = inlined_call_operand.vmem [shape: f32[2,16,256], index: 1, kind: input, shape index: {}]
  %s2 = inlined_call_operand.vmem [shape: bf16[3,256,1024], index: 2, kind: input, shape index: {}]
  %s3 = inlined_call_operand.vmem [shape: f32[1,1024], index: 3, kind: input, shape index: {}]
  %s4 = inlined_call_operand.vmem [shape: f32[32,1024], index: 4, kind: output, shape index: {}]
  %s5 = sld [smem:[#allocation0]]
  $region45: #{srnet_forward.6} parent=0
    _
  %s7 = ssub.s32 1, %s5
  %s8 = scalar_select 0, %s7, %s5
  %9 = sst [smem:[#allocation3]] %s0
  loop: start=0, step=1, limit=4
  $region2: #{srnet_forward.6} parent=0 // loop_pre_header
    _
  $region3: #{srnet_forward.6} parent=0 // loop_header
    %s11 = sphi 0, %s15
    %p12 = scmp.ge.s32.totalorder %s11, 4
    %s21 = sphi 0, %s23
    %s24 = sphi 0, %s21
    %s25 = sphi 0, %s24
    %s41 = sphi 0, %s25
    %s45 = sphi 0, %s45
    %s47 = sphi 0, %s45
    %s48 = sphi 0, %s47
    %s62 = sphi 0, %s48
    %s66 = sphi 0, %s66
    %s68 = sphi 0, %s66
    %s69 = sphi 0, %s68
    %s83 = sphi 0, %s69
    %s89 = sphi 0, %s91
    %s92 = sphi 0, %s89
    %s93 = sphi 0, %s92
    %s109 = sphi 0, %s93
  $region4: #{srnet_forward.6} parent=0 // loop_header_branch
    %14 = sbr.rel (%p12) target = $region8
  $region5: #{srnet_forward.6} parent=0 // loop_body
    %s16 = ssub.s32 %s11, 1
    %s17 = ssub.s32 %s11, 2
    %s18 = sadd.s32 %s11, 1
    %s19 = ssub.s32 %s11, %s18
    %p20 = scmp.eq.s32.totalorder %s19, 0
    %s22 = sadd.s32 %s21, 1
    %s23 = scalar_select %p20, %s21, %s22
    %p26 = pneg %p20
    %p27 = scmp.eq.s32.totalorder %s11, 1
    %p28 = por %p26, %p27
    %p29 = scmp.ne.s32.totalorder %s21, %s24
    %p30 = scmp.eq.s32.totalorder %s11, 0
    %p31 = por %p29, %p30
    %p32 = scmp.ne.s32.totalorder %s21, %s24
    %p33 = scmp.eq.s32.totalorder %s16, 1
    %p34 = por %p32, %p33
    %p35 = scmp.ne.s32.totalorder %s24, %s25
    %p36 = scmp.eq.s32.totalorder %s16, 0
    %p37 = por %p35, %p36
    %p38 = scmp.ne.s32.totalorder %s24, %s25
    %p39 = scmp.eq.s32.totalorder %s17, 1
    %p40 = por %p38, %p39
    %p42 = scmp.ne.s32.totalorder %s25, %s41
    %p43 = scmp.eq.s32.totalorder %s17, 0
    %p44 = por %p42, %p43
    %s46 = sadd.s32 %s45, 1
    %p49 = scmp.eq.s32.totalorder %s11, 1
    %p50 = scmp.ne.s32.totalorder %s45, %s47
    %p51 = scmp.eq.s32.totalorder %s11, 0
    %p52 = por %p50, %p51
    %p53 = scmp.ne.s32.totalorder %s45, %s47
    %p54 = scmp.eq.s32.totalorder %s16, 1
    %p55 = por %p53, %p54
    %p56 = scmp.ne.s32.totalorder %s47, %s48
    %p57 = scmp.eq.s32.totalorder %s16, 0
    %p58 = por %p56, %p57
    %p59 = scmp.ne.s32.totalorder %s47, %s48
    %p60 = scmp.eq.s32.totalorder %s17, 1
    %p61 = por %p59, %p60
    %p63 = scmp.ne.s32.totalorder %s48, %s62
    %p64 = scmp.eq.s32.totalorder %s17, 0
    %p65 = por %p63, %p64
    %s67 = sadd.s32 %s66, 1
    %p70 = scmp.eq.s32.totalorder %s11, 1
    %p71 = scmp.ne.s32.totalorder %s66, %s68
    %p72 = scmp.eq.s32.totalorder %s11, 0
    %p73 = por %p71, %p72
    %p74 = scmp.ne.s32.totalorder %s66, %s68
    %p75 = scmp.eq.s32.totalorder %s16, 1
    %p76 = por %p74, %p75
    %p77 = scmp.ne.s32.totalorder %s68, %s69
    %p78 = scmp.eq.s32.totalorder %s16, 0
    %p79 = por %p77, %p78
    %p80 = scmp.ne.s32.totalorder %s68, %s69
    %p81 = scmp.eq.s32.totalorder %s17, 1
    %p82 = por %p80, %p81
    %p84 = scmp.ne.s32.totalorder %s69, %s83
    %p85 = scmp.eq.s32.totalorder %s17, 0
    %p86 = por %p84, %p85
    %s87 = ssub.s32 %s11, %s18
    %p88 = scmp.eq.s32.totalorder %s87, 0
    %s90 = sadd.s32 %s89, 1
    %s91 = scalar_select %p88, %s89, %s90
    %p94 = pneg %p88
    %p95 = scmp.eq.s32.totalorder %s11, 1
    %p96 = por %p94, %p95
    %p97 = scmp.ne.s32.totalorder %s89, %s92
    %p98 = scmp.eq.s32.totalorder %s11, 0
    %p99 = por %p97, %p98
    %p100 = scmp.ne.s32.totalorder %s89, %s92
    %p101 = scmp.eq.s32.totalorder %s16, 1
    %p102 = por %p100, %p101
    %p103 = scmp.ne.s32.totalorder %s92, %s93
    %p104 = scmp.eq.s32.totalorder %s16, 0
    %p105 = por %p103, %p104
    %p106 = scmp.ne.s32.totalorder %s92, %s93
    %p107 = scmp.eq.s32.totalorder %s17, 1
    %p108 = por %p106, %p107
    %p110 = scmp.ne.s32.totalorder %s93, %s109
    %p111 = scmp.eq.s32.totalorder %s17, 0
    %p112 = por %p110, %p111
    %p113 = scmp.le.s32.totalorder 1, %s11
    %p114 = scmp.lt.s32.totalorder %s11, 3
    %p115 = pnand %p113, %p114
    %p116 = pneg %p115
    // Predicated region
    $region9: #{srnet_forward.6} parent=5 // pred_check
      _
    $region10: #{srnet_forward.6} parent=5 // pred_check_branch
      %118 = sbr.rel (%p115) target = $region12
    $region11: #{srnet_forward.6} parent=5 // pred_region
      %s119 = ssub.s32 %s11, 1
      // Predicated region
      $region13: #{srnet_forward.6} parent=11 // pred_check
        %p120 = pneg %p58
      $region14: #{srnet_forward.6} parent=11 // pred_check_branch
        %122 = sbr.rel (%p120) target = $region16
      $region15: #{srnet_forward.6} parent=11 // pred_region
        _
      $region16: #{srnet_forward.6} parent=11 // pred_fallthru
        _
      // Predicated region
      $region17: #{srnet_forward.6} parent=11 // pred_check
        %p123 = pneg %p79
      $region18: #{srnet_forward.6} parent=11 // pred_check_branch
        %125 = sbr.rel (%p123) target = $region20
      $region19: #{srnet_forward.6} parent=11 // pred_region
        _
      $region20: #{srnet_forward.6} parent=11 // pred_fallthru
        _
    $region12: #{srnet_forward.6} parent=5 // pred_fallthru
      _
    %p126 = scmp.lt.s32.totalorder %s11, 2
    // Predicated region
    $region21: #{srnet_forward.6} parent=5 // pred_check
      %p127 = pneg %p126
    $region22: #{srnet_forward.6} parent=5 // pred_check_branch
      %129 = sbr.rel (%p127) target = $region24
    $region23: #{srnet_forward.6} parent=5 // pred_region
      // Predicated region
      $region25: #{srnet_forward.6} parent=23 // pred_check
        %p130 = pneg %p31
      $region26: #{srnet_forward.6} parent=23 // pred_check_branch
        %132 = sbr.rel (%p130) target = $region28
      $region27: #{srnet_forward.6} parent=23 // pred_region
        %p133 = scmp.lt.s32.totalorder %s11, 1
        %s134 = scalar_select %p133, %s11, 1
        %s135 = smul.addr %s134, 4
        %s136 = smul.addr %s135, 8
        %s137 = scalar_lea.vmem %s1, %s136
      $region28: #{srnet_forward.6} parent=23 // pred_fallthru
        _
    $region24: #{srnet_forward.6} parent=5 // pred_fallthru
      _
    %p138 = scmp.le.s32.totalorder 1, %s11
    %p139 = scmp.lt.s32.totalorder %s11, 3
    %p140 = pnand %p138, %p139
    %p141 = pneg %p140
    // Predicated region
    $region29: #{srnet_forward.6} parent=5 // pred_check
      _
    $region30: #{srnet_forward.6} parent=5 // pred_check_branch
      %143 = sbr.rel (%p140) target = $region32
    $region31: #{srnet_forward.6} parent=5 // pred_region
      %s144 = ssub.s32 %s11, 1
      %p145 = scmp.lt.s32.totalorder %s16, 1
      %s146 = scalar_select %p145, %s16, 1
      %s147 = smul.addr %s146, 4
      %s148 = smul.addr %s147, 8
      %s149 = scalar_lea.vmem %s1, %s148
      %p150 = pneg %p37
      %p151 = pneg %p34
      %p152 = pneg %p58
      %p153 = pneg %p55
      %p154 = pneg %p79
      %p155 = pneg %p76
      %p156 = pneg %p105
      %p157 = pneg %p102
      %s158 = smul.u32 2, %s16
      %p159 = scmp.lt.s32.totalorder %s158, 3
      %s160 = scalar_select %p159, %s158, 3
      %s161 = smul.addr %s160, 8
      %s162 = smul.addr %s161, 8
      %s163 = scalar_lea.vmem %s4, %s162
      %p164 = scmp.lt.s32.totalorder %s16, 1
      %s165 = scalar_select %p164, %s16, 1
      %s166 = smul.addr %s165, 4
      %s167 = smul.addr %s166, 8
      %s168 = scalar_lea.vmem %s1, %s167
      %s169 = smul.u32 2, %s16
      %p170 = scmp.lt.s32.totalorder %s169, 3
      %s171 = scalar_select %p170, %s169, 3
      %s172 = smul.addr %s171, 8
      %s173 = smul.addr %s172, 8
      %s174 = scalar_lea.vmem %s4, %s173
      %s175 = smul.u32 2, %s16
      %v176 = vld [vmem:[%s168] sm:$0xff]
      %v177 = vld [vmem:[%s168 + $0x8] sm:$0xff]
      %v178 = vld [vmem:[%s168 + $0x10] sm:$0xff]
      %v179 = vld [vmem:[%s168 + $0x18] sm:$0xff]
      %vm184 = vcmask 1040384
      %v185 = vrot.slane %v176, 7
      %v186 = vrot.slane %v177, 7
      %v187 = vrot.slane %v178, 7
      %v188 = vsel %vm184, %v185, %v187
      %v189 = vrot.slane %v179, 7
      %v190 = vsel %vm184, %v186, %v189
      %v197 = vsel %vm184, 0.0, %v185
      %v198 = vsel %vm184, 0.0, %v186
      %v199 = vsel %vm184, %v187, 0.0
      %v200 = vsel %vm184, %v189, 0.0
      %v201 = vpack.c.bf16 %v188, %v197
      %v202 = vpack.c.bf16 %v190, %v198
      %v203 = vld [vmem:[%s2] sm:$0xff]
      %v204 = vld [vmem:[%s2 + $0x8] sm:$0xff]
      %v205 = vld [vmem:[%s2 + $0x10] sm:$0xff]
      %v206 = vld [vmem:[%s2 + $0x18] sm:$0xff]
      %v207 = vld [vmem:[%s2 + $0x20] sm:$0xff]
      %v208 = vld [vmem:[%s2 + $0x28] sm:$0xff]
      %v209 = vld [vmem:[%s2 + $0x30] sm:$0xff]
      %v210 = vld [vmem:[%s2 + $0x38] sm:$0xff]
      %v211 = vld [vmem:[%s2 + $0x40] sm:$0xff]
      %v212 = vld [vmem:[%s2 + $0x48] sm:$0xff]
      %v213 = vld [vmem:[%s2 + $0x50] sm:$0xff]
      %v214 = vld [vmem:[%s2 + $0x58] sm:$0xff]
      %v215 = vld [vmem:[%s2 + $0x60] sm:$0xff]
      %v216 = vld [vmem:[%s2 + $0x68] sm:$0xff]
      %v217 = vld [vmem:[%s2 + $0x70] sm:$0xff]
      %v218 = vld [vmem:[%s2 + $0x78] sm:$0xff]
      %v219 = vld [vmem:[%s2 + $0x80] sm:$0xff]
      %v220 = vld [vmem:[%s2 + $0x88] sm:$0xff]
      %v221 = vld [vmem:[%s2 + $0x90] sm:$0xff]
      %v222 = vld [vmem:[%s2 + $0x98] sm:$0xff]
      %v223 = vld [vmem:[%s2 + $0xa0] sm:$0xff]
      %v224 = vld [vmem:[%s2 + $0xa8] sm:$0xff]
      %v225 = vld [vmem:[%s2 + $0xb0] sm:$0xff]
      %v226 = vld [vmem:[%s2 + $0xb8] sm:$0xff]
      %v227 = vld [vmem:[%s2 + $0xc0] sm:$0xff]
      %v228 = vld [vmem:[%s2 + $0xc8] sm:$0xff]
      %v229 = vld [vmem:[%s2 + $0xd0] sm:$0xff]
      %v230 = vld [vmem:[%s2 + $0xd8] sm:$0xff]
      %v231 = vld [vmem:[%s2 + $0xe0] sm:$0xff]
      %v232 = vld [vmem:[%s2 + $0xe8] sm:$0xff]
      %v233 = vld [vmem:[%s2 + $0xf0] sm:$0xff]
      %v234 = vld [vmem:[%s2 + $0xf8] sm:$0xff]
      %v235 = vld [vmem:[%s2 + $0x100] sm:$0xff]
      %v236 = vld [vmem:[%s2 + $0x108] sm:$0xff]
      %v237 = vld [vmem:[%s2 + $0x110] sm:$0xff]
      %v238 = vld [vmem:[%s2 + $0x118] sm:$0xff]
      %v239 = vld [vmem:[%s2 + $0x120] sm:$0xff]
      %v240 = vld [vmem:[%s2 + $0x128] sm:$0xff]
      %v241 = vld [vmem:[%s2 + $0x130] sm:$0xff]
      %v242 = vld [vmem:[%s2 + $0x138] sm:$0xff]
      %v243 = vld [vmem:[%s2 + $0x140] sm:$0xff]
      %v244 = vld [vmem:[%s2 + $0x148] sm:$0xff]
      %v245 = vld [vmem:[%s2 + $0x150] sm:$0xff]
      %v246 = vld [vmem:[%s2 + $0x158] sm:$0xff]
      %v247 = vld [vmem:[%s2 + $0x160] sm:$0xff]
      %v248 = vld [vmem:[%s2 + $0x168] sm:$0xff]
      %v249 = vld [vmem:[%s2 + $0x170] sm:$0xff]
      %v250 = vld [vmem:[%s2 + $0x178] sm:$0xff]
      %v251 = vld [vmem:[%s2 + $0x180] sm:$0xff]
      %v252 = vld [vmem:[%s2 + $0x188] sm:$0xff]
      %v253 = vld [vmem:[%s2 + $0x190] sm:$0xff]
      %v254 = vld [vmem:[%s2 + $0x198] sm:$0xff]
      %v255 = vld [vmem:[%s2 + $0x1a0] sm:$0xff]
      %v256 = vld [vmem:[%s2 + $0x1a8] sm:$0xff]
      %v257 = vld [vmem:[%s2 + $0x1b0] sm:$0xff]
      %v258 = vld [vmem:[%s2 + $0x1b8] sm:$0xff]
      %v259 = vld [vmem:[%s2 + $0x1c0] sm:$0xff]
      %v260 = vld [vmem:[%s2 + $0x1c8] sm:$0xff]
      %v261 = vld [vmem:[%s2 + $0x1d0] sm:$0xff]
      %v262 = vld [vmem:[%s2 + $0x1d8] sm:$0xff]
      %v263 = vld [vmem:[%s2 + $0x1e0] sm:$0xff]
      %v264 = vld [vmem:[%s2 + $0x1e8] sm:$0xff]
      %v265 = vld [vmem:[%s2 + $0x1f0] sm:$0xff]
      %v266 = vld [vmem:[%s2 + $0x1f8] sm:$0xff]
      %v267 = vld [vmem:[%s2 + $0x200] sm:$0xff]
      %v268 = vld [vmem:[%s2 + $0x208] sm:$0xff]
      %v269 = vld [vmem:[%s2 + $0x210] sm:$0xff]
      %v270 = vld [vmem:[%s2 + $0x218] sm:$0xff]
      %v271 = vld [vmem:[%s2 + $0x220] sm:$0xff]
      %v272 = vld [vmem:[%s2 + $0x228] sm:$0xff]
      %v273 = vld [vmem:[%s2 + $0x230] sm:$0xff]
      %v274 = vld [vmem:[%s2 + $0x238] sm:$0xff]
      %v275 = vld [vmem:[%s2 + $0x240] sm:$0xff]
      %v276 = vld [vmem:[%s2 + $0x248] sm:$0xff]
      %v277 = vld [vmem:[%s2 + $0x250] sm:$0xff]
      %v278 = vld [vmem:[%s2 + $0x258] sm:$0xff]
      %v279 = vld [vmem:[%s2 + $0x260] sm:$0xff]
      %v280 = vld [vmem:[%s2 + $0x268] sm:$0xff]
      %v281 = vld [vmem:[%s2 + $0x270] sm:$0xff]
      %v282 = vld [vmem:[%s2 + $0x278] sm:$0xff]
      %v283 = vld [vmem:[%s2 + $0x280] sm:$0xff]
      %v284 = vld [vmem:[%s2 + $0x288] sm:$0xff]
      %v285 = vld [vmem:[%s2 + $0x290] sm:$0xff]
      %v286 = vld [vmem:[%s2 + $0x298] sm:$0xff]
      %v287 = vld [vmem:[%s2 + $0x2a0] sm:$0xff]
      %v288 = vld [vmem:[%s2 + $0x2a8] sm:$0xff]
      %v289 = vld [vmem:[%s2 + $0x2b0] sm:$0xff]
      %v290 = vld [vmem:[%s2 + $0x2b8] sm:$0xff]
      %v291 = vld [vmem:[%s2 + $0x2c0] sm:$0xff]
      %v292 = vld [vmem:[%s2 + $0x2c8] sm:$0xff]
      %v293 = vld [vmem:[%s2 + $0x2d0] sm:$0xff]
      %v294 = vld [vmem:[%s2 + $0x2d8] sm:$0xff]
      %v295 = vld [vmem:[%s2 + $0x2e0] sm:$0xff]
      %v296 = vld [vmem:[%s2 + $0x2e8] sm:$0xff]
      %v297 = vld [vmem:[%s2 + $0x2f0] sm:$0xff]
      %v298 = vld [vmem:[%s2 + $0x2f8] sm:$0xff]
      %v299 = vld [vmem:[%s2 + $0x300] sm:$0xff]
      %v300 = vld [vmem:[%s2 + $0x308] sm:$0xff]
      %v301 = vld [vmem:[%s2 + $0x310] sm:$0xff]
      %v302 = vld [vmem:[%s2 + $0x318] sm:$0xff]
      %v303 = vld [vmem:[%s2 + $0x320] sm:$0xff]
      %v304 = vld [vmem:[%s2 + $0x328] sm:$0xff]
      %v305 = vld [vmem:[%s2 + $0x330] sm:$0xff]
      %v306 = vld [vmem:[%s2 + $0x338] sm:$0xff]
      %v307 = vld [vmem:[%s2 + $0x340] sm:$0xff]
      %v308 = vld [vmem:[%s2 + $0x348] sm:$0xff]
      %v309 = vld [vmem:[%s2 + $0x350] sm:$0xff]
      %v310 = vld [vmem:[%s2 + $0x358] sm:$0xff]
      %v311 = vld [vmem:[%s2 + $0x360] sm:$0xff]
      %v312 = vld [vmem:[%s2 + $0x368] sm:$0xff]
      %v313 = vld [vmem:[%s2 + $0x370] sm:$0xff]
      %v314 = vld [vmem:[%s2 + $0x378] sm:$0xff]
      %v315 = vld [vmem:[%s2 + $0x380] sm:$0xff]
      %v316 = vld [vmem:[%s2 + $0x388] sm:$0xff]
      %v317 = vld [vmem:[%s2 + $0x390] sm:$0xff]
      %v318 = vld [vmem:[%s2 + $0x398] sm:$0xff]
      %v319 = vld [vmem:[%s2 + $0x3a0] sm:$0xff]
      %v320 = vld [vmem:[%s2 + $0x3a8] sm:$0xff]
      %v321 = vld [vmem:[%s2 + $0x3b0] sm:$0xff]
      %v322 = vld [vmem:[%s2 + $0x3b8] sm:$0xff]
      %v323 = vld [vmem:[%s2 + $0x3c0] sm:$0xff]
      %v324 = vld [vmem:[%s2 + $0x3c8] sm:$0xff]
      %v325 = vld [vmem:[%s2 + $0x3d0] sm:$0xff]
      %v326 = vld [vmem:[%s2 + $0x3d8] sm:$0xff]
      %v327 = vld [vmem:[%s2 + $0x3e0] sm:$0xff]
      %v328 = vld [vmem:[%s2 + $0x3e8] sm:$0xff]
      %v329 = vld [vmem:[%s2 + $0x3f0] sm:$0xff]
      %v330 = vld [vmem:[%s2 + $0x3f8] sm:$0xff]
      %v331 = vpack.c.bf16 %v199, %v199
      %v332 = vpack.c.bf16 %v200, %v200
      %s333 = scalar_lea.vmem %s2, 1024
      %v334 = vld [vmem:[%s333] sm:$0xff]
      %v335 = vld [vmem:[%s333 + $0x8] sm:$0xff]
      %v336 = vld [vmem:[%s333 + $0x10] sm:$0xff]
      %v337 = vld [vmem:[%s333 + $0x18] sm:$0xff]
      %v338 = vld [vmem:[%s333 + $0x20] sm:$0xff]
      %v339 = vld [vmem:[%s333 + $0x28] sm:$0xff]
      %v340 = vld [vmem:[%s333 + $0x30] sm:$0xff]
      %v341 = vld [vmem:[%s333 + $0x38] sm:$0xff]
      %v342 = vld [vmem:[%s333 + $0x40] sm:$0xff]
      %v343 = vld [vmem:[%s333 + $0x48] sm:$0xff]
      %v344 = vld [vmem:[%s333 + $0x50] sm:$0xff]
      %v345 = vld [vmem:[%s333 + $0x58] sm:$0xff]
      %v346 = vld [vmem:[%s333 + $0x60] sm:$0xff]
      %v347 = vld [vmem:[%s333 + $0x68] sm:$0xff]
      %v348 = vld [vmem:[%s333 + $0x70] sm:$0xff]
      %v349 = vld [vmem:[%s333 + $0x78] sm:$0xff]
      %v350 = vld [vmem:[%s333 + $0x80] sm:$0xff]
      %v351 = vld [vmem:[%s333 + $0x88] sm:$0xff]
      %v352 = vld [vmem:[%s333 + $0x90] sm:$0xff]
      %v353 = vld [vmem:[%s333 + $0x98] sm:$0xff]
      %v354 = vld [vmem:[%s333 + $0xa0] sm:$0xff]
      %v355 = vld [vmem:[%s333 + $0xa8] sm:$0xff]
      %v356 = vld [vmem:[%s333 + $0xb0] sm:$0xff]
      %v357 = vld [vmem:[%s333 + $0xb8] sm:$0xff]
      %v358 = vld [vmem:[%s333 + $0xc0] sm:$0xff]
      %v359 = vld [vmem:[%s333 + $0xc8] sm:$0xff]
      %v360 = vld [vmem:[%s333 + $0xd0] sm:$0xff]
      %v361 = vld [vmem:[%s333 + $0xd8] sm:$0xff]
      %v362 = vld [vmem:[%s333 + $0xe0] sm:$0xff]
      %v363 = vld [vmem:[%s333 + $0xe8] sm:$0xff]
      %v364 = vld [vmem:[%s333 + $0xf0] sm:$0xff]
      %v365 = vld [vmem:[%s333 + $0xf8] sm:$0xff]
      %v366 = vld [vmem:[%s333 + $0x100] sm:$0xff]
      %v367 = vld [vmem:[%s333 + $0x108] sm:$0xff]
      %v368 = vld [vmem:[%s333 + $0x110] sm:$0xff]
      %v369 = vld [vmem:[%s333 + $0x118] sm:$0xff]
      %v370 = vld [vmem:[%s333 + $0x120] sm:$0xff]
      %v371 = vld [vmem:[%s333 + $0x128] sm:$0xff]
      %v372 = vld [vmem:[%s333 + $0x130] sm:$0xff]
      %v373 = vld [vmem:[%s333 + $0x138] sm:$0xff]
      %v374 = vld [vmem:[%s333 + $0x140] sm:$0xff]
      %v375 = vld [vmem:[%s333 + $0x148] sm:$0xff]
      %v376 = vld [vmem:[%s333 + $0x150] sm:$0xff]
      %v377 = vld [vmem:[%s333 + $0x158] sm:$0xff]
      %v378 = vld [vmem:[%s333 + $0x160] sm:$0xff]
      %v379 = vld [vmem:[%s333 + $0x168] sm:$0xff]
      %v380 = vld [vmem:[%s333 + $0x170] sm:$0xff]
      %v381 = vld [vmem:[%s333 + $0x178] sm:$0xff]
      %v382 = vld [vmem:[%s333 + $0x180] sm:$0xff]
      %v383 = vld [vmem:[%s333 + $0x188] sm:$0xff]
      %v384 = vld [vmem:[%s333 + $0x190] sm:$0xff]
      %v385 = vld [vmem:[%s333 + $0x198] sm:$0xff]
      %v386 = vld [vmem:[%s333 + $0x1a0] sm:$0xff]
      %v387 = vld [vmem:[%s333 + $0x1a8] sm:$0xff]
      %v388 = vld [vmem:[%s333 + $0x1b0] sm:$0xff]
      %v389 = vld [vmem:[%s333 + $0x1b8] sm:$0xff]
      %v390 = vld [vmem:[%s333 + $0x1c0] sm:$0xff]
      %v391 = vld [vmem:[%s333 + $0x1c8] sm:$0xff]
      %v392 = vld [vmem:[%s333 + $0x1d0] sm:$0xff]
      %v393 = vld [vmem:[%s333 + $0x1d8] sm:$0xff]
      %v394 = vld [vmem:[%s333 + $0x1e0] sm:$0xff]
      %v395 = vld [vmem:[%s333 + $0x1e8] sm:$0xff]
      %v396 = vld [vmem:[%s333 + $0x1f0] sm:$0xff]
      %v397 = vld [vmem:[%s333 + $0x1f8] sm:$0xff]
      %v398 = vld [vmem:[%s333 + $0x200] sm:$0xff]
      %v399 = vld [vmem:[%s333 + $0x208] sm:$0xff]
      %v400 = vld [vmem:[%s333 + $0x210] sm:$0xff]
      %v401 = vld [vmem:[%s333 + $0x218] sm:$0xff]
      %v402 = vld [vmem:[%s333 + $0x220] sm:$0xff]
      %v403 = vld [vmem:[%s333 + $0x228] sm:$0xff]
      %v404 = vld [vmem:[%s333 + $0x230] sm:$0xff]
      %v405 = vld [vmem:[%s333 + $0x238] sm:$0xff]
      %v406 = vld [vmem:[%s333 + $0x240] sm:$0xff]
      %v407 = vld [vmem:[%s333 + $0x248] sm:$0xff]
      %v408 = vld [vmem:[%s333 + $0x250] sm:$0xff]
      %v409 = vld [vmem:[%s333 + $0x258] sm:$0xff]
      %v410 = vld [vmem:[%s333 + $0x260] sm:$0xff]
      %v411 = vld [vmem:[%s333 + $0x268] sm:$0xff]
      %v412 = vld [vmem:[%s333 + $0x270] sm:$0xff]
      %v413 = vld [vmem:[%s333 + $0x278] sm:$0xff]
      %v414 = vld [vmem:[%s333 + $0x280] sm:$0xff]
      %v415 = vld [vmem:[%s333 + $0x288] sm:$0xff]
      %v416 = vld [vmem:[%s333 + $0x290] sm:$0xff]
      %v417 = vld [vmem:[%s333 + $0x298] sm:$0xff]
      %v418 = vld [vmem:[%s333 + $0x2a0] sm:$0xff]
      %v419 = vld [vmem:[%s333 + $0x2a8] sm:$0xff]
      %v420 = vld [vmem:[%s333 + $0x2b0] sm:$0xff]
      %v421 = vld [vmem:[%s333 + $0x2b8] sm:$0xff]
      %v422 = vld [vmem:[%s333 + $0x2c0] sm:$0xff]
      %v423 = vld [vmem:[%s333 + $0x2c8] sm:$0xff]
      %v424 = vld [vmem:[%s333 + $0x2d0] sm:$0xff]
      %v425 = vld [vmem:[%s333 + $0x2d8] sm:$0xff]
      %v426 = vld [vmem:[%s333 + $0x2e0] sm:$0xff]
      %v427 = vld [vmem:[%s333 + $0x2e8] sm:$0xff]
      %v428 = vld [vmem:[%s333 + $0x2f0] sm:$0xff]
      %v429 = vld [vmem:[%s333 + $0x2f8] sm:$0xff]
      %v430 = vld [vmem:[%s333 + $0x300] sm:$0xff]
      %v431 = vld [vmem:[%s333 + $0x308] sm:$0xff]
      %v432 = vld [vmem:[%s333 + $0x310] sm:$0xff]
      %v433 = vld [vmem:[%s333 + $0x318] sm:$0xff]
      %v434 = vld [vmem:[%s333 + $0x320] sm:$0xff]
      %v435 = vld [vmem:[%s333 + $0x328] sm:$0xff]
      %v436 = vld [vmem:[%s333 + $0x330] sm:$0xff]
      %v437 = vld [vmem:[%s333 + $0x338] sm:$0xff]
      %v438 = vld [vmem:[%s333 + $0x340] sm:$0xff]
      %v439 = vld [vmem:[%s333 + $0x348] sm:$0xff]
      %v440 = vld [vmem:[%s333 + $0x350] sm:$0xff]
      %v441 = vld [vmem:[%s333 + $0x358] sm:$0xff]
      %v442 = vld [vmem:[%s333 + $0x360] sm:$0xff]
      %v443 = vld [vmem:[%s333 + $0x368] sm:$0xff]
      %v444 = vld [vmem:[%s333 + $0x370] sm:$0xff]
      %v445 = vld [vmem:[%s333 + $0x378] sm:$0xff]
      %v446 = vld [vmem:[%s333 + $0x380] sm:$0xff]
      %v447 = vld [vmem:[%s333 + $0x388] sm:$0xff]
      %v448 = vld [vmem:[%s333 + $0x390] sm:$0xff]
      %v449 = vld [vmem:[%s333 + $0x398] sm:$0xff]
      %v450 = vld [vmem:[%s333 + $0x3a0] sm:$0xff]
      %v451 = vld [vmem:[%s333 + $0x3a8] sm:$0xff]
      %v452 = vld [vmem:[%s333 + $0x3b0] sm:$0xff]
      %v453 = vld [vmem:[%s333 + $0x3b8] sm:$0xff]
      %v454 = vld [vmem:[%s333 + $0x3c0] sm:$0xff]
      %v455 = vld [vmem:[%s333 + $0x3c8] sm:$0xff]
      %v456 = vld [vmem:[%s333 + $0x3d0] sm:$0xff]
      %v457 = vld [vmem:[%s333 + $0x3d8] sm:$0xff]
      %v458 = vld [vmem:[%s333 + $0x3e0] sm:$0xff]
      %v459 = vld [vmem:[%s333 + $0x3e8] sm:$0xff]
      %v460 = vld [vmem:[%s333 + $0x3f0] sm:$0xff]
      %v461 = vld [vmem:[%s333 + $0x3f8] sm:$0xff]
      %vm462 = vsmask.f32 7424
      %v464 = vshrl.u32 %v201, 16
      %v466 = vshll.u32 %v201, 16
      %v468 = vrot.slane %v466, 1
      %v469 = vor.u32 %v464, %v468
      %v471 = vshll.u32 %v331, 16
      %v473 = vrot.slane %v471, 1
      %v474 = vsel %vm462, %v469, %v473
      %v476 = vshrl.u32 %v202, 16
      %v478 = vshll.u32 %v202, 16
      %v480 = vrot.slane %v478, 1
      %v481 = vor.u32 %v476, %v480
      %v483 = vshll.u32 %v332, 16
      %v485 = vrot.slane %v483, 1
      %v486 = vsel %vm462, %v481, %v485
      %v617 = vunpack.c.l.b16 %v334
      %v618 = vunpack.c.h.b16 %v334
      %v619 = vunpack.c.l.b16 %v335
      %v620 = vunpack.c.h.b16 %v335
      %v621 = vunpack.c.l.b16 %v336
      %v622 = vunpack.c.h.b16 %v336
      %v623 = vunpack.c.l.b16 %v337
      %v624 = vunpack.c.h.b16 %v337
      %v625 = vunpack.c.l.b16 %v338
      %v626 = vunpack.c.h.b16 %v338
      %v627 = vunpack.c.l.b16 %v339
      %v628 = vunpack.c.h.b16 %v339
      %v629 = vunpack.c.l.b16 %v340
      %v630 = vunpack.c.h.b16 %v340
      %v631 = vunpack.c.l.b16 %v341
      %v632 = vunpack.c.h.b16 %v341
      %v633 = vunpack.c.l.b16 %v342
      %v634 = vunpack.c.h.b16 %v342
      %v635 = vunpack.c.l.b16 %v343
      %v636 = vunpack.c.h.b16 %v343
      %v637 = vunpack.c.l.b16 %v344
      %v638 = vunpack.c.h.b16 %v344
      %v639 = vunpack.c.l.b16 %v345
      %v640 = vunpack.c.h.b16 %v345
      %v641 = vunpack.c.l.b16 %v346
      %v642 = vunpack.c.h.b16 %v346
      %v643 = vunpack.c.l.b16 %v347
      %v644 = vunpack.c.h.b16 %v347
      %v645 = vunpack.c.l.b16 %v348
      %v646 = vunpack.c.h.b16 %v348
      %v647 = vunpack.c.l.b16 %v349
      %v648 = vunpack.c.h.b16 %v349
      %v649 = vunpack.c.l.b16 %v350
      %v650 = vunpack.c.h.b16 %v350
      %v651 = vunpack.c.l.b16 %v351
      %v652 = vunpack.c.h.b16 %v351
      %v653 = vunpack.c.l.b16 %v352
      %v654 = vunpack.c.h.b16 %v352
      %v655 = vunpack.c.l.b16 %v353
      %v656 = vunpack.c.h.b16 %v353
      %v657 = vunpack.c.l.b16 %v354
      %v658 = vunpack.c.h.b16 %v354
      %v659 = vunpack.c.l.b16 %v355
      %v660 = vunpack.c.h.b16 %v355
      %v661 = vunpack.c.l.b16 %v356
      %v662 = vunpack.c.h.b16 %v356
      %v663 = vunpack.c.l.b16 %v357
      %v664 = vunpack.c.h.b16 %v357
      %v665 = vunpack.c.l.b16 %v358
      %v666 = vunpack.c.h.b16 %v358
      %v667 = vunpack.c.l.b16 %v359
      %v668 = vunpack.c.h.b16 %v359
      %v669 = vunpack.c.l.b16 %v360
      %v670 = vunpack.c.h.b16 %v360
      %v671 = vunpack.c.l.b16 %v361
      %v672 = vunpack.c.h.b16 %v361
      %v673 = vunpack.c.l.b16 %v362
      %v674 = vunpack.c.h.b16 %v362
      %v675 = vunpack.c.l.b16 %v363
      %v676 = vunpack.c.h.b16 %v363
      %v677 = vunpack.c.l.b16 %v364
      %v678 = vunpack.c.h.b16 %v364
      %v679 = vunpack.c.l.b16 %v365
      %v680 = vunpack.c.h.b16 %v365
      %v681 = vunpack.c.l.b16 %v366
      %v682 = vunpack.c.h.b16 %v366
      %v683 = vunpack.c.l.b16 %v367
      %v684 = vunpack.c.h.b16 %v367
      %v685 = vunpack.c.l.b16 %v368
      %v686 = vunpack.c.h.b16 %v368
      %v687 = vunpack.c.l.b16 %v369
      %v688 = vunpack.c.h.b16 %v369
      %v689 = vunpack.c.l.b16 %v370
      %v690 = vunpack.c.h.b16 %v370
      %v691 = vunpack.c.l.b16 %v371
      %v692 = vunpack.c.h.b16 %v371
      %v693 = vunpack.c.l.b16 %v372
      %v694 = vunpack.c.h.b16 %v372
      %v695 = vunpack.c.l.b16 %v373
      %v696 = vunpack.c.h.b16 %v373
      %v697 = vunpack.c.l.b16 %v374
      %v698 = vunpack.c.h.b16 %v374
      %v699 = vunpack.c.l.b16 %v375
      %v700 = vunpack.c.h.b16 %v375
      %v701 = vunpack.c.l.b16 %v376
      %v702 = vunpack.c.h.b16 %v376
      %v703 = vunpack.c.l.b16 %v377
      %v704 = vunpack.c.h.b16 %v377
      %v705 = vunpack.c.l.b16 %v378
      %v706 = vunpack.c.h.b16 %v378
      %v707 = vunpack.c.l.b16 %v379
      %v708 = vunpack.c.h.b16 %v379
      %v709 = vunpack.c.l.b16 %v380
      %v710 = vunpack.c.h.b16 %v380
      %v711 = vunpack.c.l.b16 %v381
      %v712 = vunpack.c.h.b16 %v381
      %v713 = vunpack.c.l.b16 %v382
      %v714 = vunpack.c.h.b16 %v382
      %v715 = vunpack.c.l.b16 %v383
      %v716 = vunpack.c.h.b16 %v383
      %v717 = vunpack.c.l.b16 %v384
      %v718 = vunpack.c.h.b16 %v384
      %v719 = vunpack.c.l.b16 %v385
      %v720 = vunpack.c.h.b16 %v385
      %v721 = vunpack.c.l.b16 %v386
      %v722 = vunpack.c.h.b16 %v386
      %v723 = vunpack.c.l.b16 %v387
      %v724 = vunpack.c.h.b16 %v387
      %v725 = vunpack.c.l.b16 %v388
      %v726 = vunpack.c.h.b16 %v388
      %v727 = vunpack.c.l.b16 %v389
      %v728 = vunpack.c.h.b16 %v389
      %v729 = vunpack.c.l.b16 %v390
      %v730 = vunpack.c.h.b16 %v390
      %v731 = vunpack.c.l.b16 %v391
      %v732 = vunpack.c.h.b16 %v391
      %v733 = vunpack.c.l.b16 %v392
      %v734 = vunpack.c.h.b16 %v392
      %v735 = vunpack.c.l.b16 %v393
      %v736 = vunpack.c.h.b16 %v393
      %v737 = vunpack.c.l.b16 %v394
      %v738 = vunpack.c.h.b16 %v394
      %v739 = vunpack.c.l.b16 %v395
      %v740 = vunpack.c.h.b16 %v395
      %v741 = vunpack.c.l.b16 %v396
      %v742 = vunpack.c.h.b16 %v396
      %v743 = vunpack.c.l.b16 %v397
      %v744 = vunpack.c.h.b16 %v397
      %v745 = vunpack.c.l.b16 %v398
      %v746 = vunpack.c.h.b16 %v398
      %v747 = vunpack.c.l.b16 %v399
      %v748 = vunpack.c.h.b16 %v399
      %v749 = vunpack.c.l.b16 %v400
      %v750 = vunpack.c.h.b16 %v400
      %v751 = vunpack.c.l.b16 %v401
      %v752 = vunpack.c.h.b16 %v401
      %v753 = vunpack.c.l.b16 %v402
      %v754 = vunpack.c.h.b16 %v402
      %v755 = vunpack.c.l.b16 %v403
      %v756 = vunpack.c.h.b16 %v403
      %v757 = vunpack.c.l.b16 %v404
      %v758 = vunpack.c.h.b16 %v404
      %v759 = vunpack.c.l.b16 %v405
      %v760 = vunpack.c.h.b16 %v405
      %v761 = vunpack.c.l.b16 %v406
      %v762 = vunpack.c.h.b16 %v406
      %v763 = vunpack.c.l.b16 %v407
      %v764 = vunpack.c.h.b16 %v407
      %v765 = vunpack.c.l.b16 %v408
      %v766 = vunpack.c.h.b16 %v408
      %v767 = vunpack.c.l.b16 %v409
      %v768 = vunpack.c.h.b16 %v409
      %v769 = vunpack.c.l.b16 %v410
      %v770 = vunpack.c.h.b16 %v410
      %v771 = vunpack.c.l.b16 %v411
      %v772 = vunpack.c.h.b16 %v411
      %v773 = vunpack.c.l.b16 %v412
      %v774 = vunpack.c.h.b16 %v412
      %v775 = vunpack.c.l.b16 %v413
      %v776 = vunpack.c.h.b16 %v413
      %v777 = vunpack.c.l.b16 %v414
      %v778 = vunpack.c.h.b16 %v414
      %v779 = vunpack.c.l.b16 %v415
      %v780 = vunpack.c.h.b16 %v415
      %v781 = vunpack.c.l.b16 %v416
      %v782 = vunpack.c.h.b16 %v416
      %v783 = vunpack.c.l.b16 %v417
      %v784 = vunpack.c.h.b16 %v417
      %v785 = vunpack.c.l.b16 %v418
      %v786 = vunpack.c.h.b16 %v418
      %v787 = vunpack.c.l.b16 %v419
      %v788 = vunpack.c.h.b16 %v419
      %v789 = vunpack.c.l.b16 %v420
      %v790 = vunpack.c.h.b16 %v420
      %v791 = vunpack.c.l.b16 %v421
      %v792 = vunpack.c.h.b16 %v421
      %v793 = vunpack.c.l.b16 %v422
      %v794 = vunpack.c.h.b16 %v422
      %v795 = vunpack.c.l.b16 %v423
      %v796 = vunpack.c.h.b16 %v423
      %v797 = vunpack.c.l.b16 %v424
      %v798 = vunpack.c.h.b16 %v424
      %v799 = vunpack.c.l.b16 %v425
      %v800 = vunpack.c.h.b16 %v425
      %v801 = vunpack.c.l.b16 %v426
      %v802 = vunpack.c.h.b16 %v426
      %v803 = vunpack.c.l.b16 %v427
      %v804 = vunpack.c.h.b16 %v427
      %v805 = vunpack.c.l.b16 %v428
      %v806 = vunpack.c.h.b16 %v428
      %v807 = vunpack.c.l.b16 %v429
      %v808 = vunpack.c.h.b16 %v429
      %v809 = vunpack.c.l.b16 %v430
      %v810 = vunpack.c.h.b16 %v430
      %v811 = vunpack.c.l.b16 %v431
      %v812 = vunpack.c.h.b16 %v431
      %v813 = vunpack.c.l.b16 %v432
      %v814 = vunpack.c.h.b16 %v432
      %v815 = vunpack.c.l.b16 %v433
      %v816 = vunpack.c.h.b16 %v433
      %v817 = vunpack.c.l.b16 %v434
      %v818 = vunpack.c.h.b16 %v434
      %v819 = vunpack.c.l.b16 %v435
      %v820 = vunpack.c.h.b16 %v435
      %v821 = vunpack.c.l.b16 %v436
      %v822 = vunpack.c.h.b16 %v436
      %v823 = vunpack.c.l.b16 %v437
      %v824 = vunpack.c.h.b16 %v437
      %v825 = vunpack.c.l.b16 %v438
      %v826 = vunpack.c.h.b16 %v438
      %v827 = vunpack.c.l.b16 %v439
      %v828 = vunpack.c.h.b16 %v439
      %v829 = vunpack.c.l.b16 %v440
      %v830 = vunpack.c.h.b16 %v440
      %v831 = vunpack.c.l.b16 %v441
      %v832 = vunpack.c.h.b16 %v441
      %v833 = vunpack.c.l.b16 %v442
      %v834 = vunpack.c.h.b16 %v442
      %v835 = vunpack.c.l.b16 %v443
      %v836 = vunpack.c.h.b16 %v443
      %v837 = vunpack.c.l.b16 %v444
      %v838 = vunpack.c.h.b16 %v444
      %v839 = vunpack.c.l.b16 %v445
      %v840 = vunpack.c.h.b16 %v445
      %v841 = vunpack.c.l.b16 %v446
      %v842 = vunpack.c.h.b16 %v446
      %v843 = vunpack.c.l.b16 %v447
      %v844 = vunpack.c.h.b16 %v447
      %v845 = vunpack.c.l.b16 %v448
      %v846 = vunpack.c.h.b16 %v448
      %v847 = vunpack.c.l.b16 %v449
      %v848 = vunpack.c.h.b16 %v449
      %v849 = vunpack.c.l.b16 %v450
      %v850 = vunpack.c.h.b16 %v450
      %v851 = vunpack.c.l.b16 %v451
      %v852 = vunpack.c.h.b16 %v451
      %v853 = vunpack.c.l.b16 %v452
      %v854 = vunpack.c.h.b16 %v452
      %v855 = vunpack.c.l.b16 %v453
      %v856 = vunpack.c.h.b16 %v453
      %v857 = vunpack.c.l.b16 %v454
      %v858 = vunpack.c.h.b16 %v454
      %v859 = vunpack.c.l.b16 %v455
      %v860 = vunpack.c.h.b16 %v455
      %v861 = vunpack.c.l.b16 %v456
      %v862 = vunpack.c.h.b16 %v456
      %v863 = vunpack.c.l.b16 %v457
      %v864 = vunpack.c.h.b16 %v457
      %v865 = vunpack.c.l.b16 %v458
      %v866 = vunpack.c.h.b16 %v458
      %v867 = vunpack.c.l.b16 %v459
      %v868 = vunpack.c.h.b16 %v459
      %v869 = vunpack.c.l.b16 %v460
      %v870 = vunpack.c.h.b16 %v460
      %v871 = vunpack.c.l.b16 %v461
      %v872 = vunpack.c.h.b16 %v461
      %v873 = vpack.c.b16 %v625, %v617
      %v874 = vpack.c.b16 %v626, %v618
      %v875 = vpack.c.b16 %v627, %v619
      %v876 = vpack.c.b16 %v628, %v620
      %v877 = vpack.c.b16 %v629, %v621
      %v878 = vpack.c.b16 %v630, %v622
      %v879 = vpack.c.b16 %v631, %v623
      %v880 = vpack.c.b16 %v632, %v624
      %v881 = vpack.c.b16 %v641, %v633
      %v882 = vpack.c.b16 %v642, %v634
      %v883 = vpack.c.b16 %v643, %v635
      %v884 = vpack.c.b16 %v644, %v636
      %v885 = vpack.c.b16 %v645, %v637
      %v886 = vpack.c.b16 %v646, %v638
      %v887 = vpack.c.b16 %v647, %v639
      %v888 = vpack.c.b16 %v648, %v640
      %v889 = vpack.c.b16 %v657, %v649
      %v890 = vpack.c.b16 %v658, %v650
      %v891 = vpack.c.b16 %v659, %v651
      %v892 = vpack.c.b16 %v660, %v652
      %v893 = vpack.c.b16 %v661, %v653
      %v894 = vpack.c.b16 %v662, %v654
      %v895 = vpack.c.b16 %v663, %v655
      %v896 = vpack.c.b16 %v664, %v656
      %v897 = vpack.c.b16 %v673, %v665
      %v898 = vpack.c.b16 %v674, %v666
      %v899 = vpack.c.b16 %v675, %v667
      %v900 = vpack.c.b16 %v676, %v668
      %v901 = vpack.c.b16 %v677, %v669
      %v902 = vpack.c.b16 %v678, %v670
      %v903 = vpack.c.b16 %v679, %v671
      %v904 = vpack.c.b16 %v680, %v672
      %v905 = vpack.c.b16 %v689, %v681
      %v906 = vpack.c.b16 %v690, %v682
      %v907 = vpack.c.b16 %v691, %v683
      %v908 = vpack.c.b16 %v692, %v684
      %v909 = vpack.c.b16 %v693, %v685
      %v910 = vpack.c.b16 %v694, %v686
      %v911 = vpack.c.b16 %v695, %v687
      %v912 = vpack.c.b16 %v696, %v688
      %v913 = vpack.c.b16 %v705, %v697
      %v914 = vpack.c.b16 %v706, %v698
      %v915 = vpack.c.b16 %v707, %v699
      %v916 = vpack.c.b16 %v708, %v700
      %v917 = vpack.c.b16 %v709, %v701
      %v918 = vpack.c.b16 %v710, %v702
      %v919 = vpack.c.b16 %v711, %v703
      %v920 = vpack.c.b16 %v712, %v704
      %v921 = vpack.c.b16 %v721, %v713
      %v922 = vpack.c.b16 %v722, %v714
      %v923 = vpack.c.b16 %v723, %v715
      %v924 = vpack.c.b16 %v724, %v716
      %v925 = vpack.c.b16 %v725, %v717
      %v926 = vpack.c.b16 %v726, %v718
      %v927 = vpack.c.b16 %v727, %v719
      %v928 = vpack.c.b16 %v728, %v720
      %v929 = vpack.c.b16 %v737, %v729
      %v930 = vpack.c.b16 %v738, %v730
      %v931 = vpack.c.b16 %v739, %v731
      %v932 = vpack.c.b16 %v740, %v732
      %v933 = vpack.c.b16 %v741, %v733
      %v934 = vpack.c.b16 %v742, %v734
      %v935 = vpack.c.b16 %v743, %v735
      %v936 = vpack.c.b16 %v744, %v736
      %v937 = vpack.c.b16 %v753, %v745
      %v938 = vpack.c.b16 %v754, %v746
      %v939 = vpack.c.b16 %v755, %v747
      %v940 = vpack.c.b16 %v756, %v748
      %v941 = vpack.c.b16 %v757, %v749
      %v942 = vpack.c.b16 %v758, %v750
      %v943 = vpack.c.b16 %v759, %v751
      %v944 = vpack.c.b16 %v760, %v752
      %v945 = vpack.c.b16 %v769, %v761
      %v946 = vpack.c.b16 %v770, %v762
      %v947 = vpack.c.b16 %v771, %v763
      %v948 = vpack.c.b16 %v772, %v764
      %v949 = vpack.c.b16 %v773, %v765
      %v950 = vpack.c.b16 %v774, %v766
      %v951 = vpack.c.b16 %v775, %v767
      %v952 = vpack.c.b16 %v776, %v768
      %v953 = vpack.c.b16 %v785, %v777
      %v954 = vpack.c.b16 %v786, %v778
      %v955 = vpack.c.b16 %v787, %v779
      %v956 = vpack.c.b16 %v788, %v780
      %v957 = vpack.c.b16 %v789, %v781
      %v958 = vpack.c.b16 %v790, %v782
      %v959 = vpack.c.b16 %v791, %v783
      %v960 = vpack.c.b16 %v792, %v784
      %v961 = vpack.c.b16 %v801, %v793
      %v962 = vpack.c.b16 %v802, %v794
      %v963 = vpack.c.b16 %v803, %v795
      %v964 = vpack.c.b16 %v804, %v796
      %v965 = vpack.c.b16 %v805, %v797
      %v966 = vpack.c.b16 %v806, %v798
      %v967 = vpack.c.b16 %v807, %v799
      %v968 = vpack.c.b16 %v808, %v800
      %v969 = vpack.c.b16 %v817, %v809
      %v970 = vpack.c.b16 %v818, %v810
      %v971 = vpack.c.b16 %v819, %v811
      %v972 = vpack.c.b16 %v820, %v812
      %v973 = vpack.c.b16 %v821, %v813
      %v974 = vpack.c.b16 %v822, %v814
      %v975 = vpack.c.b16 %v823, %v815
      %v976 = vpack.c.b16 %v824, %v816
      %v977 = vpack.c.b16 %v833, %v825
      %v978 = vpack.c.b16 %v834, %v826
      %v979 = vpack.c.b16 %v835, %v827
      %v980 = vpack.c.b16 %v836, %v828
      %v981 = vpack.c.b16 %v837, %v829
      %v982 = vpack.c.b16 %v838, %v830
      %v983 = vpack.c.b16 %v839, %v831
      %v984 = vpack.c.b16 %v840, %v832
      %v985 = vpack.c.b16 %v849, %v841
      %v986 = vpack.c.b16 %v850, %v842
      %v987 = vpack.c.b16 %v851, %v843
      %v988 = vpack.c.b16 %v852, %v844
      %v989 = vpack.c.b16 %v853, %v845
      %v990 = vpack.c.b16 %v854, %v846
      %v991 = vpack.c.b16 %v855, %v847
      %v992 = vpack.c.b16 %v856, %v848
      %v993 = vpack.c.b16 %v865, %v857
      %v994 = vpack.c.b16 %v866, %v858
      %v995 = vpack.c.b16 %v867, %v859
      %v996 = vpack.c.b16 %v868, %v860
      %v997 = vpack.c.b16 %v869, %v861
      %v998 = vpack.c.b16 %v870, %v862
      %v999 = vpack.c.b16 %v871, %v863
      %v1000 = vpack.c.b16 %v872, %v864
      %1129 = vmatprep.subr.bf16.mxu0 %v930
      %1130 = vmatpush1.bf16.msra.mxu0 %v929
      %1131 = vmatprep.subr.bf16.mxu0 %v922
      %1132 = vmatpush1.bf16.msra.mxu0 %v921
      %1133 = vmatprep.subr.bf16.mxu0 %v914
      %1134 = vmatpush1.bf16.msra.mxu0 %v913
      %1135 = vmatprep.subr.bf16.mxu0 %v906
      %1136 = vmatpush1.bf16.msra.mxu0 %v905
      %1137 = vmatprep.subr.bf16.mxu0 %v898
      %1138 = vmatpush1.bf16.msra.mxu0 %v897
      %1139 = vmatprep.subr.bf16.mxu0 %v890
      %1140 = vmatpush1.bf16.msra.mxu0 %v889
      %1141 = vmatprep.subr.bf16.mxu0 %v882
      %1142 = vmatpush1.bf16.msra.mxu0 %v881
      %1143 = vmatprep.subr.bf16.mxu0 %v874
      %1144 = vmatpush1.bf16.msra.mxu0 %v873
      %1145 = vmatprep.subr.bf16.mxu0 %v994
      %1146 = vmatpush2.bf16.msra.mxu0 %v993
      %1147 = vmatprep.subr.bf16.mxu0 %v986
      %1148 = vmatpush2.bf16.msra.mxu0 %v985
      %1149 = vmatprep.subr.bf16.mxu0 %v978
      %1150 = vmatpush2.bf16.msra.mxu0 %v977
      %1151 = vmatprep.subr.bf16.mxu0 %v970
      %1152 = vmatpush2.bf16.msra.mxu0 %v969
      %1153 = vmatprep.subr.bf16.mxu0 %v962
      %1154 = vmatpush2.bf16.msra.mxu0 %v961
      %1155 = vmatprep.subr.bf16.mxu0 %v954
      %1156 = vmatpush2.bf16.msra.mxu0 %v953
      %1157 = vmatprep.subr.bf16.mxu0 %v946
      %1158 = vmatpush2.bf16.msra.mxu0 %v945
      %1159 = vmatprep.subr.bf16.mxu0 %v938
      %1160 = vmatpush2.bf16.msra.mxu0 %v937
      %1161 = vmatprep.mubr.bf16.mxu0 %v486
      %1162 = vmatmul.mubr.bf16.gmra.mxu0 %v474
      %v1163 = vpop.f32.mrf.mxu0
      %v1164 = vadd.f32 0.0, %v1163
      %v1165 = vpop.f32.mrf.mxu0
      %v1166 = vadd.f32 0.0, %v1165
      %v1167 = vpop.f32.mrf.mxu0
      %v1168 = vadd.f32 0.0, %v1167
      %v1169 = vpop.f32.mrf.mxu0
      %v1170 = vadd.f32 0.0, %v1169
      %1171 = vdwg.mxu0
      %1172 = vmatprep.subr.bf16.mxu0 %v932
      %1173 = vmatpush1.bf16.msra.mxu0 %v931
      %1174 = vmatprep.subr.bf16.mxu0 %v924
      %1175 = vmatpush1.bf16.msra.mxu0 %v923
      %1176 = vmatprep.subr.bf16.mxu0 %v916
      %1177 = vmatpush1.bf16.msra.mxu0 %v915
      %1178 = vmatprep.subr.bf16.mxu0 %v908
      %1179 = vmatpush1.bf16.msra.mxu0 %v907
      %1180 = vmatprep.subr.bf16.mxu0 %v900
      %1181 = vmatpush1.bf16.msra.mxu0 %v899
      %1182 = vmatprep.subr.bf16.mxu0 %v892
      %1183 = vmatpush1.bf16.msra.mxu0 %v891
      %1184 = vmatprep.subr.bf16.mxu0 %v884
      %1185 = vmatpush1.bf16.msra.mxu0 %v883
      %1186 = vmatprep.subr.bf16.mxu0 %v876
      %1187 = vmatpush1.bf16.msra.mxu0 %v875
      %1188 = vmatprep.subr.bf16.mxu0 %v996
      %1189 = vmatpush2.bf16.msra.mxu0 %v995
      %1190 = vmatprep.subr.bf16.mxu0 %v988
      %1191 = vmatpush2.bf16.msra.mxu0 %v987
      %1192 = vmatprep.subr.bf16.mxu0 %v980
      %1193 = vmatpush2.bf16.msra.mxu0 %v979
      %1194 = vmatprep.subr.bf16.mxu0 %v972
      %1195 = vmatpush2.bf16.msra.mxu0 %v971
      %1196 = vmatprep.subr.bf16.mxu0 %v964
      %1197 = vmatpush2.bf16.msra.mxu0 %v963
      %1198 = vmatprep.subr.bf16.mxu0 %v956
      %1199 = vmatpush2.bf16.msra.mxu0 %v955
      %1200 = vmatprep.subr.bf16.mxu0 %v948
      %1201 = vmatpush2.bf16.msra.mxu0 %v947
      %1202 = vmatprep.subr.bf16.mxu0 %v940
      %1203 = vmatpush2.bf16.msra.mxu0 %v939
      %1204 = vmatprep.mubr.bf16.mxu0 %v486
      %1205 = vmatmul.mubr.bf16.gmra.mxu0 %v474
      %v1206 = vpop.f32.mrf.mxu0
      %v1207 = vadd.f32 0.0, %v1206
      %v1208 = vpop.f32.mrf.mxu0
      %v1209 = vadd.f32 0.0, %v1208
      %v1210 = vpop.f32.mrf.mxu0
      %v1211 = vadd.f32 0.0, %v1210
      %v1212 = vpop.f32.mrf.mxu0
      %v1213 = vadd.f32 0.0, %v1212
      %1214 = vdwg.mxu0
      %1215 = vmatprep.subr.bf16.mxu0 %v934
      %1216 = vmatpush1.bf16.msra.mxu0 %v933
      %1217 = vmatprep.subr.bf16.mxu0 %v926
      %1218 = vmatpush1.bf16.msra.mxu0 %v925
      %1219 = vmatprep.subr.bf16.mxu0 %v918
      %1220 = vmatpush1.bf16.msra.mxu0 %v917
      %1221 = vmatprep.subr.bf16.mxu0 %v910
      %1222 = vmatpush1.bf16.msra.mxu0 %v909
      %1223 = vmatprep.subr.bf16.mxu0 %v902
      %1224 = vmatpush1.bf16.msra.mxu0 %v901
      %1225 = vmatprep.subr.bf16.mxu0 %v894
      %1226 = vmatpush1.bf16.msra.mxu0 %v893
      %1227 = vmatprep.subr.bf16.mxu0 %v886
      %1228 = vmatpush1.bf16.msra.mxu0 %v885
      %1229 = vmatprep.subr.bf16.mxu0 %v878
      %1230 = vmatpush1.bf16.msra.mxu0 %v877
      %1231 = vmatprep.subr.bf16.mxu0 %v998
      %1232 = vmatpush2.bf16.msra.mxu0 %v997
      %1233 = vmatprep.subr.bf16.mxu0 %v990
      %1234 = vmatpush2.bf16.msra.mxu0 %v989
      %1235 = vmatprep.subr.bf16.mxu0 %v982
      %1236 = vmatpush2.bf16.msra.mxu0 %v981
      %1237 = vmatprep.subr.bf16.mxu0 %v974
      %1238 = vmatpush2.bf16.msra.mxu0 %v973
      %1239 = vmatprep.subr.bf16.mxu0 %v966
      %1240 = vmatpush2.bf16.msra.mxu0 %v965
      %1241 = vmatprep.subr.bf16.mxu0 %v958
      %1242 = vmatpush2.bf16.msra.mxu0 %v957
      %1243 = vmatprep.subr.bf16.mxu0 %v950
      %1244 = vmatpush2.bf16.msra.mxu0 %v949
      %1245 = vmatprep.subr.bf16.mxu0 %v942
      %1246 = vmatpush2.bf16.msra.mxu0 %v941
      %1247 = vmatprep.mubr.bf16.mxu0 %v486
      %1248 = vmatmul.mubr.bf16.gmra.mxu0 %v474
      %v1249 = vpop.f32.mrf.mxu0
      %v1250 = vadd.f32 0.0, %v1249
      %v1251 = vpop.f32.mrf.mxu0
      %v1252 = vadd.f32 0.0, %v1251
      %v1253 = vpop.f32.mrf.mxu0
      %v1254 = vadd.f32 0.0, %v1253
      %v1255 = vpop.f32.mrf.mxu0
      %v1256 = vadd.f32 0.0, %v1255
      %1257 = vdwg.mxu0
      %1258 = vmatprep.subr.bf16.mxu0 %v936
      %1259 = vmatpush1.bf16.msra.mxu0 %v935
      %1260 = vmatprep.subr.bf16.mxu0 %v928
      %1261 = vmatpush1.bf16.msra.mxu0 %v927
      %1262 = vmatprep.subr.bf16.mxu0 %v920
      %1263 = vmatpush1.bf16.msra.mxu0 %v919
      %1264 = vmatprep.subr.bf16.mxu0 %v912
      %1265 = vmatpush1.bf16.msra.mxu0 %v911
      %1266 = vmatprep.subr.bf16.mxu0 %v904
      %1267 = vmatpush1.bf16.msra.mxu0 %v903
      %1268 = vmatprep.subr.bf16.mxu0 %v896
      %1269 = vmatpush1.bf16.msra.mxu0 %v895
      %1270 = vmatprep.subr.bf16.mxu0 %v888
      %1271 = vmatpush1.bf16.msra.mxu0 %v887
      %1272 = vmatprep.subr.bf16.mxu0 %v880
      %1273 = vmatpush1.bf16.msra.mxu0 %v879
      %1274 = vmatprep.subr.bf16.mxu0 %v1000
      %1275 = vmatpush2.bf16.msra.mxu0 %v999
      %1276 = vmatprep.subr.bf16.mxu0 %v992
      %1277 = vmatpush2.bf16.msra.mxu0 %v991
      %1278 = vmatprep.subr.bf16.mxu0 %v984
      %1279 = vmatpush2.bf16.msra.mxu0 %v983
      %1280 = vmatprep.subr.bf16.mxu0 %v976
      %1281 = vmatpush2.bf16.msra.mxu0 %v975
      %1282 = vmatprep.subr.bf16.mxu0 %v968
      %1283 = vmatpush2.bf16.msra.mxu0 %v967
      %1284 = vmatprep.subr.bf16.mxu0 %v960
      %1285 = vmatpush2.bf16.msra.mxu0 %v959
      %1286 = vmatprep.subr.bf16.mxu0 %v952
      %1287 = vmatpush2.bf16.msra.mxu0 %v951
      %1288 = vmatprep.subr.bf16.mxu0 %v944
      %1289 = vmatpush2.bf16.msra.mxu0 %v943
      %1290 = vmatprep.mubr.bf16.mxu0 %v486
      %1291 = vmatmul.mubr.bf16.gmra.mxu0 %v474
      %v1292 = vpop.f32.mrf.mxu0
      %v1293 = vadd.f32 0.0, %v1292
      %v1294 = vpop.f32.mrf.mxu0
      %v1295 = vadd.f32 0.0, %v1294
      %v1296 = vpop.f32.mrf.mxu0
      %v1297 = vadd.f32 0.0, %v1296
      %v1298 = vpop.f32.mrf.mxu0
      %v1299 = vadd.f32 0.0, %v1298
      %1300 = vdwg.mxu0
      %v1429 = vunpack.c.l.b16 %v203
      %v1430 = vunpack.c.h.b16 %v203
      %v1431 = vunpack.c.l.b16 %v204
      %v1432 = vunpack.c.h.b16 %v204
      %v1433 = vunpack.c.l.b16 %v205
      %v1434 = vunpack.c.h.b16 %v205
      %v1435 = vunpack.c.l.b16 %v206
      %v1436 = vunpack.c.h.b16 %v206
      %v1437 = vunpack.c.l.b16 %v207
      %v1438 = vunpack.c.h.b16 %v207
      %v1439 = vunpack.c.l.b16 %v208
      %v1440 = vunpack.c.h.b16 %v208
      %v1441 = vunpack.c.l.b16 %v209
      %v1442 = vunpack.c.h.b16 %v209
      %v1443 = vunpack.c.l.b16 %v210
      %v1444 = vunpack.c.h.b16 %v210
      %v1445 = vunpack.c.l.b16 %v211
      %v1446 = vunpack.c.h.b16 %v211
      %v1447 = vunpack.c.l.b16 %v212
      %v1448 = vunpack.c.h.b16 %v212
      %v1449 = vunpack.c.l.b16 %v213
      %v1450 = vunpack.c.h.b16 %v213
      %v1451 = vunpack.c.l.b16 %v214
      %v1452 = vunpack.c.h.b16 %v214
      %v1453 = vunpack.c.l.b16 %v215
      %v1454 = vunpack.c.h.b16 %v215
      %v1455 = vunpack.c.l.b16 %v216
      %v1456 = vunpack.c.h.b16 %v216
      %v1457 = vunpack.c.l.b16 %v217
      %v1458 = vunpack.c.h.b16 %v217
      %v1459 = vunpack.c.l.b16 %v218
      %v1460 = vunpack.c.h.b16 %v218
      %v1461 = vunpack.c.l.b16 %v219
      %v1462 = vunpack.c.h.b16 %v219
      %v1463 = vunpack.c.l.b16 %v220
      %v1464 = vunpack.c.h.b16 %v220
      %v1465 = vunpack.c.l.b16 %v221
      %v1466 = vunpack.c.h.b16 %v221
      %v1467 = vunpack.c.l.b16 %v222
      %v1468 = vunpack.c.h.b16 %v222
      %v1469 = vunpack.c.l.b16 %v223
      %v1470 = vunpack.c.h.b16 %v223
      %v1471 = vunpack.c.l.b16 %v224
      %v1472 = vunpack.c.h.b16 %v224
      %v1473 = vunpack.c.l.b16 %v225
      %v1474 = vunpack.c.h.b16 %v225
      %v1475 = vunpack.c.l.b16 %v226
      %v1476 = vunpack.c.h.b16 %v226
      %v1477 = vunpack.c.l.b16 %v227
      %v1478 = vunpack.c.h.b16 %v227
      %v1479 = vunpack.c.l.b16 %v228
      %v1480 = vunpack.c.h.b16 %v228
      %v1481 = vunpack.c.l.b16 %v229
      %v1482 = vunpack.c.h.b16 %v229
      %v1483 = vunpack.c.l.b16 %v230
      %v1484 = vunpack.c.h.b16 %v230
      %v1485 = vunpack.c.l.b16 %v231
      %v1486 = vunpack.c.h.b16 %v231
      %v1487 = vunpack.c.l.b16 %v232
      %v1488 = vunpack.c.h.b16 %v232
      %v1489 = vunpack.c.l.b16 %v233
      %v1490 = vunpack.c.h.b16 %v233
      %v1491 = vunpack.c.l.b16 %v234
      %v1492 = vunpack.c.h.b16 %v234
      %v1493 = vunpack.c.l.b16 %v235
      %v1494 = vunpack.c.h.b16 %v235
      %v1495 = vunpack.c.l.b16 %v236
      %v1496 = vunpack.c.h.b16 %v236
      %v1497 = vunpack.c.l.b16 %v237
      %v1498 = vunpack.c.h.b16 %v237
      %v1499 = vunpack.c.l.b16 %v238
      %v1500 = vunpack.c.h.b16 %v238
      %v1501 = vunpack.c.l.b16 %v239
      %v1502 = vunpack.c.h.b16 %v239
      %v1503 = vunpack.c.l.b16 %v240
      %v1504 = vunpack.c.h.b16 %v240
      %v1505 = vunpack.c.l.b16 %v241
      %v1506 = vunpack.c.h.b16 %v241
      %v1507 = vunpack.c.l.b16 %v242
      %v1508 = vunpack.c.h.b16 %v242
      %v1509 = vunpack.c.l.b16 %v243
      %v1510 = vunpack.c.h.b16 %v243
      %v1511 = vunpack.c.l.b16 %v244
      %v1512 = vunpack.c.h.b16 %v244
      %v1513 = vunpack.c.l.b16 %v245
      %v1514 = vunpack.c.h.b16 %v245
      %v1515 = vunpack.c.l.b16 %v246
      %v1516 = vunpack.c.h.b16 %v246
      %v1517 = vunpack.c.l.b16 %v247
      %v1518 = vunpack.c.h.b16 %v247
      %v1519 = vunpack.c.l.b16 %v248
      %v1520 = vunpack.c.h.b16 %v248
      %v1521 = vunpack.c.l.b16 %v249
      %v1522 = vunpack.c.h.b16 %v249
      %v1523 = vunpack.c.l.b16 %v250
      %v1524 = vunpack.c.h.b16 %v250
      %v1525 = vunpack.c.l.b16 %v251
      %v1526 = vunpack.c.h.b16 %v251
      %v1527 = vunpack.c.l.b16 %v252
      %v1528 = vunpack.c.h.b16 %v252
      %v1529 = vunpack.c.l.b16 %v253
      %v1530 = vunpack.c.h.b16 %v253
      %v1531 = vunpack.c.l.b16 %v254
      %v1532 = vunpack.c.h.b16 %v254
      %v1533 = vunpack.c.l.b16 %v255
      %v1534 = vunpack.c.h.b16 %v255
      %v1535 = vunpack.c.l.b16 %v256
      %v1536 = vunpack.c.h.b16 %v256
      %v1537 = vunpack.c.l.b16 %v257
      %v1538 = vunpack.c.h.b16 %v257
      %v1539 = vunpack.c.l.b16 %v258
      %v1540 = vunpack.c.h.b16 %v258
      %v1541 = vunpack.c.l.b16 %v259
      %v1542 = vunpack.c.h.b16 %v259
      %v1543 = vunpack.c.l.b16 %v260
      %v1544 = vunpack.c.h.b16 %v260
      %v1545 = vunpack.c.l.b16 %v261
      %v1546 = vunpack.c.h.b16 %v261
      %v1547 = vunpack.c.l.b16 %v262
      %v1548 = vunpack.c.h.b16 %v262
      %v1549 = vunpack.c.l.b16 %v263
      %v1550 = vunpack.c.h.b16 %v263
      %v1551 = vunpack.c.l.b16 %v264
      %v1552 = vunpack.c.h.b16 %v264
      %v1553 = vunpack.c.l.b16 %v265
      %v1554 = vunpack.c.h.b16 %v265
      %v1555 = vunpack.c.l.b16 %v266
      %v1556 = vunpack.c.h.b16 %v266
      %v1557 = vunpack.c.l.b16 %v267
      %v1558 = vunpack.c.h.b16 %v267
      %v1559 = vunpack.c.l.b16 %v268
      %v1560 = vunpack.c.h.b16 %v268
      %v1561 = vunpack.c.l.b16 %v269
      %v1562 = vunpack.c.h.b16 %v269
      %v1563 = vunpack.c.l.b16 %v270
      %v1564 = vunpack.c.h.b16 %v270
      %v1565 = vunpack.c.l.b16 %v271
      %v1566 = vunpack.c.h.b16 %v271
      %v1567 = vunpack.c.l.b16 %v272
      %v1568 = vunpack.c.h.b16 %v272
      %v1569 = vunpack.c.l.b16 %v273
      %v1570 = vunpack.c.h.b16 %v273
      %v1571 = vunpack.c.l.b16 %v274
      %v1572 = vunpack.c.h.b16 %v274
      %v1573 = vunpack.c.l.b16 %v275
      %v1574 = vunpack.c.h.b16 %v275
      %v1575 = vunpack.c.l.b16 %v276
      %v1576 = vunpack.c.h.b16 %v276
      %v1577 = vunpack.c.l.b16 %v277
      %v1578 = vunpack.c.h.b16 %v277
      %v1579 = vunpack.c.l.b16 %v278
      %v1580 = vunpack.c.h.b16 %v278
      %v1581 = vunpack.c.l.b16 %v279
      %v1582 = vunpack.c.h.b16 %v279
      %v1583 = vunpack.c.l.b16 %v280
      %v1584 = vunpack.c.h.b16 %v280
      %v1585 = vunpack.c.l.b16 %v281
      %v1586 = vunpack.c.h.b16 %v281
      %v1587 = vunpack.c.l.b16 %v282
      %v1588 = vunpack.c.h.b16 %v282
      %v1589 = vunpack.c.l.b16 %v283
      %v1590 = vunpack.c.h.b16 %v283
      %v1591 = vunpack.c.l.b16 %v284
      %v1592 = vunpack.c.h.b16 %v284
      %v1593 = vunpack.c.l.b16 %v285
      %v1594 = vunpack.c.h.b16 %v285
      %v1595 = vunpack.c.l.b16 %v286
      %v1596 = vunpack.c.h.b16 %v286
      %v1597 = vunpack.c.l.b16 %v287
      %v1598 = vunpack.c.h.b16 %v287
      %v1599 = vunpack.c.l.b16 %v288
      %v1600 = vunpack.c.h.b16 %v288
      %v1601 = vunpack.c.l.b16 %v289
      %v1602 = vunpack.c.h.b16 %v289
      %v1603 = vunpack.c.l.b16 %v290
      %v1604 = vunpack.c.h.b16 %v290
      %v1605 = vunpack.c.l.b16 %v291
      %v1606 = vunpack.c.h.b16 %v291
      %v1607 = vunpack.c.l.b16 %v292
      %v1608 = vunpack.c.h.b16 %v292
      %v1609 = vunpack.c.l.b16 %v293
      %v1610 = vunpack.c.h.b16 %v293
      %v1611 = vunpack.c.l.b16 %v294
      %v1612 = vunpack.c.h.b16 %v294
      %v1613 = vunpack.c.l.b16 %v295
      %v1614 = vunpack.c.h.b16 %v295
      %v1615 = vunpack.c.l.b16 %v296
      %v1616 = vunpack.c.h.b16 %v296
      %v1617 = vunpack.c.l.b16 %v297
      %v1618 = vunpack.c.h.b16 %v297
      %v1619 = vunpack.c.l.b16 %v298
      %v1620 = vunpack.c.h.b16 %v298
      %v1621 = vunpack.c.l.b16 %v299
      %v1622 = vunpack.c.h.b16 %v299
      %v1623 = vunpack.c.l.b16 %v300
      %v1624 = vunpack.c.h.b16 %v300
      %v1625 = vunpack.c.l.b16 %v301
      %v1626 = vunpack.c.h.b16 %v301
      %v1627 = vunpack.c.l.b16 %v302
      %v1628 = vunpack.c.h.b16 %v302
      %v1629 = vunpack.c.l.b16 %v303
      %v1630 = vunpack.c.h.b16 %v303
      %v1631 = vunpack.c.l.b16 %v304
      %v1632 = vunpack.c.h.b16 %v304
      %v1633 = vunpack.c.l.b16 %v305
      %v1634 = vunpack.c.h.b16 %v305
      %v1635 = vunpack.c.l.b16 %v306
      %v1636 = vunpack.c.h.b16 %v306
      %v1637 = vunpack.c.l.b16 %v307
      %v1638 = vunpack.c.h.b16 %v307
      %v1639 = vunpack.c.l.b16 %v308
      %v1640 = vunpack.c.h.b16 %v308
      %v1641 = vunpack.c.l.b16 %v309
      %v1642 = vunpack.c.h.b16 %v309
      %v1643 = vunpack.c.l.b16 %v310
      %v1644 = vunpack.c.h.b16 %v310
      %v1645 = vunpack.c.l.b16 %v311
      %v1646 = vunpack.c.h.b16 %v311
      %v1647 = vunpack.c.l.b16 %v312
      %v1648 = vunpack.c.h.b16 %v312
      %v1649 = vunpack.c.l.b16 %v313
      %v1650 = vunpack.c.h.b16 %v313
      %v1651 = vunpack.c.l.b16 %v314
      %v1652 = vunpack.c.h.b16 %v314
      %v1653 = vunpack.c.l.b16 %v315
      %v1654 = vunpack.c.h.b16 %v315
      %v1655 = vunpack.c.l.b16 %v316
      %v1656 = vunpack.c.h.b16 %v316
      %v1657 = vunpack.c.l.b16 %v317
      %v1658 = vunpack.c.h.b16 %v317
      %v1659 = vunpack.c.l.b16 %v318
      %v1660 = vunpack.c.h.b16 %v318
      %v1661 = vunpack.c.l.b16 %v319
      %v1662 = vunpack.c.h.b16 %v319
      %v1663 = vunpack.c.l.b16 %v320
      %v1664 = vunpack.c.h.b16 %v320
      %v1665 = vunpack.c.l.b16 %v321
      %v1666 = vunpack.c.h.b16 %v321
      %v1667 = vunpack.c.l.b16 %v322
      %v1668 = vunpack.c.h.b16 %v322
      %v1669 = vunpack.c.l.b16 %v323
      %v1670 = vunpack.c.h.b16 %v323
      %v1671 = vunpack.c.l.b16 %v324
      %v1672 = vunpack.c.h.b16 %v324
      %v1673 = vunpack.c.l.b16 %v325
      %v1674 = vunpack.c.h.b16 %v325
      %v1675 = vunpack.c.l.b16 %v326
      %v1676 = vunpack.c.h.b16 %v326
      %v1677 = vunpack.c.l.b16 %v327
      %v1678 = vunpack.c.h.b16 %v327
      %v1679 = vunpack.c.l.b16 %v328
      %v1680 = vunpack.c.h.b16 %v328
      %v1681 = vunpack.c.l.b16 %v329
      %v1682 = vunpack.c.h.b16 %v329
      %v1683 = vunpack.c.l.b16 %v330
      %v1684 = vunpack.c.h.b16 %v330
      %v1685 = vpack.c.b16 %v1437, %v1429
      %v1686 = vpack.c.b16 %v1438, %v1430
      %v1687 = vpack.c.b16 %v1439, %v1431
      %v1688 = vpack.c.b16 %v1440, %v1432
      %v1689 = vpack.c.b16 %v1441, %v1433
      %v1690 = vpack.c.b16 %v1442, %v1434
      %v1691 = vpack.c.b16 %v1443, %v1435
      %v1692 = vpack.c.b16 %v1444, %v1436
      %v1693 = vpack.c.b16 %v1453, %v1445
      %v1694 = vpack.c.b16 %v1454, %v1446
      %v1695 = vpack.c.b16 %v1455, %v1447
      %v1696 = vpack.c.b16 %v1456, %v1448
      %v1697 = vpack.c.b16 %v1457, %v1449
      %v1698 = vpack.c.b16 %v1458, %v1450
      %v1699 = vpack.c.b16 %v1459, %v1451
      %v1700 = vpack.c.b16 %v1460, %v1452
      %v1701 = vpack.c.b16 %v1469, %v1461
      %v1702 = vpack.c.b16 %v1470, %v1462
      %v1703 = vpack.c.b16 %v1471, %v1463
      %v1704 = vpack.c.b16 %v1472, %v1464
      %v1705 = vpack.c.b16 %v1473, %v1465
      %v1706 = vpack.c.b16 %v1474, %v1466
      %v1707 = vpack.c.b16 %v1475, %v1467
      %v1708 = vpack.c.b16 %v1476, %v1468
      %v1709 = vpack.c.b16 %v1485, %v1477
      %v1710 = vpack.c.b16 %v1486, %v1478
      %v1711 = vpack.c.b16 %v1487, %v1479
      %v1712 = vpack.c.b16 %v1488, %v1480
      %v1713 = vpack.c.b16 %v1489, %v1481
      %v1714 = vpack.c.b16 %v1490, %v1482
      %v1715 = vpack.c.b16 %v1491, %v1483
      %v1716 = vpack.c.b16 %v1492, %v1484
      %v1717 = vpack.c.b16 %v1501, %v1493
      %v1718 = vpack.c.b16 %v1502, %v1494
      %v1719 = vpack.c.b16 %v1503, %v1495
      %v1720 = vpack.c.b16 %v1504, %v1496
      %v1721 = vpack.c.b16 %v1505, %v1497
      %v1722 = vpack.c.b16 %v1506, %v1498
      %v1723 = vpack.c.b16 %v1507, %v1499
      %v1724 = vpack.c.b16 %v1508, %v1500
      %v1725 = vpack.c.b16 %v1517, %v1509
      %v1726 = vpack.c.b16 %v1518, %v1510
      %v1727 = vpack.c.b16 %v1519, %v1511
      %v1728 = vpack.c.b16 %v1520, %v1512
      %v1729 = vpack.c.b16 %v1521, %v1513
      %v1730 = vpack.c.b16 %v1522, %v1514
      %v1731 = vpack.c.b16 %v1523, %v1515
      %v1732 = vpack.c.b16 %v1524, %v1516
      %v1733 = vpack.c.b16 %v1533, %v1525
      %v1734 = vpack.c.b16 %v1534, %v1526
      %v1735 = vpack.c.b16 %v1535, %v1527
      %v1736 = vpack.c.b16 %v1536, %v1528
      %v1737 = vpack.c.b16 %v1537, %v1529
      %v1738 = vpack.c.b16 %v1538, %v1530
      %v1739 = vpack.c.b16 %v1539, %v1531
      %v1740 = vpack.c.b16 %v1540, %v1532
      %v1741 = vpack.c.b16 %v1549, %v1541
      %v1742 = vpack.c.b16 %v1550, %v1542
      %v1743 = vpack.c.b16 %v1551, %v1543
      %v1744 = vpack.c.b16 %v1552, %v1544
      %v1745 = vpack.c.b16 %v1553, %v1545
      %v1746 = vpack.c.b16 %v1554, %v1546
      %v1747 = vpack.c.b16 %v1555, %v1547
      %v1748 = vpack.c.b16 %v1556, %v1548
      %v1749 = vpack.c.b16 %v1565, %v1557
      %v1750 = vpack.c.b16 %v1566, %v1558
      %v1751 = vpack.c.b16 %v1567, %v1559
      %v1752 = vpack.c.b16 %v1568, %v1560
      %v1753 = vpack.c.b16 %v1569, %v1561
      %v1754 = vpack.c.b16 %v1570, %v1562
      %v1755 = vpack.c.b16 %v1571, %v1563
      %v1756 = vpack.c.b16 %v1572, %v1564
      %v1757 = vpack.c.b16 %v1581, %v1573
      %v1758 = vpack.c.b16 %v1582, %v1574
      %v1759 = vpack.c.b16 %v1583, %v1575
      %v1760 = vpack.c.b16 %v1584, %v1576
      %v1761 = vpack.c.b16 %v1585, %v1577
      %v1762 = vpack.c.b16 %v1586, %v1578
      %v1763 = vpack.c.b16 %v1587, %v1579
      %v1764 = vpack.c.b16 %v1588, %v1580
      %v1765 = vpack.c.b16 %v1597, %v1589
      %v1766 = vpack.c.b16 %v1598, %v1590
      %v1767 = vpack.c.b16 %v1599, %v1591
      %v1768 = vpack.c.b16 %v1600, %v1592
      %v1769 = vpack.c.b16 %v1601, %v1593
      %v1770 = vpack.c.b16 %v1602, %v1594
      %v1771 = vpack.c.b16 %v1603, %v1595
      %v1772 = vpack.c.b16 %v1604, %v1596
      %v1773 = vpack.c.b16 %v1613, %v1605
      %v1774 = vpack.c.b16 %v1614, %v1606
      %v1775 = vpack.c.b16 %v1615, %v1607
      %v1776 = vpack.c.b16 %v1616, %v1608
      %v1777 = vpack.c.b16 %v1617, %v1609
      %v1778 = vpack.c.b16 %v1618, %v1610
      %v1779 = vpack.c.b16 %v1619, %v1611
      %v1780 = vpack.c.b16 %v1620, %v1612
      %v1781 = vpack.c.b16 %v1629, %v1621
      %v1782 = vpack.c.b16 %v1630, %v1622
      %v1783 = vpack.c.b16 %v1631, %v1623
      %v1784 = vpack.c.b16 %v1632, %v1624
      %v1785 = vpack.c.b16 %v1633, %v1625
      %v1786 = vpack.c.b16 %v1634, %v1626
      %v1787 = vpack.c.b16 %v1635, %v1627
      %v1788 = vpack.c.b16 %v1636, %v1628
      %v1789 = vpack.c.b16 %v1645, %v1637
      %v1790 = vpack.c.b16 %v1646, %v1638
      %v1791 = vpack.c.b16 %v1647, %v1639
      %v1792 = vpack.c.b16 %v1648, %v1640
      %v1793 = vpack.c.b16 %v1649, %v1641
      %v1794 = vpack.c.b16 %v1650, %v1642
      %v1795 = vpack.c.b16 %v1651, %v1643
      %v1796 = vpack.c.b16 %v1652, %v1644
      %v1797 = vpack.c.b16 %v1661, %v1653
      %v1798 = vpack.c.b16 %v1662, %v1654
      %v1799 = vpack.c.b16 %v1663, %v1655
      %v1800 = vpack.c.b16 %v1664, %v1656
      %v1801 = vpack.c.b16 %v1665, %v1657
      %v1802 = vpack.c.b16 %v1666, %v1658
      %v1803 = vpack.c.b16 %v1667, %v1659
      %v1804 = vpack.c.b16 %v1668, %v1660
      %v1805 = vpack.c.b16 %v1677, %v1669
      %v1806 = vpack.c.b16 %v1678, %v1670
      %v1807 = vpack.c.b16 %v1679, %v1671
      %v1808 = vpack.c.b16 %v1680, %v1672
      %v1809 = vpack.c.b16 %v1681, %v1673
      %v1810 = vpack.c.b16 %v1682, %v1674
      %v1811 = vpack.c.b16 %v1683, %v1675
      %v1812 = vpack.c.b16 %v1684, %v1676
      %1941 = vmatprep.subr.bf16.mxu0 %v1742
      %1942 = vmatpush1.bf16.msra.mxu0 %v1741
      %1943 = vmatprep.subr.bf16.mxu0 %v1734
      %1944 = vmatpush1.bf16.msra.mxu0 %v1733
      %1945 = vmatprep.subr.bf16.mxu0 %v1726
      %1946 = vmatpush1.bf16.msra.mxu0 %v1725
      %1947 = vmatprep.subr.bf16.mxu0 %v1718
      %1948 = vmatpush1.bf16.msra.mxu0 %v1717
      %1949 = vmatprep.subr.bf16.mxu0 %v1710
      %1950 = vmatpush1.bf16.msra.mxu0 %v1709
      %1951 = vmatprep.subr.bf16.mxu0 %v1702
      %1952 = vmatpush1.bf16.msra.mxu0 %v1701
      %1953 = vmatprep.subr.bf16.mxu0 %v1694
      %1954 = vmatpush1.bf16.msra.mxu0 %v1693
      %1955 = vmatprep.subr.bf16.mxu0 %v1686
      %1956 = vmatpush1.bf16.msra.mxu0 %v1685
      %1957 = vmatprep.subr.bf16.mxu0 %v1806
      %1958 = vmatpush2.bf16.msra.mxu0 %v1805
      %1959 = vmatprep.subr.bf16.mxu0 %v1798
      %1960 = vmatpush2.bf16.msra.mxu0 %v1797
      %1961 = vmatprep.subr.bf16.mxu0 %v1790
      %1962 = vmatpush2.bf16.msra.mxu0 %v1789
      %1963 = vmatprep.subr.bf16.mxu0 %v1782
      %1964 = vmatpush2.bf16.msra.mxu0 %v1781
      %1965 = vmatprep.subr.bf16.mxu0 %v1774
      %1966 = vmatpush2.bf16.msra.mxu0 %v1773
      %1967 = vmatprep.subr.bf16.mxu0 %v1766
      %1968 = vmatpush2.bf16.msra.mxu0 %v1765
      %1969 = vmatprep.subr.bf16.mxu0 %v1758
      %1970 = vmatpush2.bf16.msra.mxu0 %v1757
      %1971 = vmatprep.subr.bf16.mxu0 %v1750
      %1972 = vmatpush2.bf16.msra.mxu0 %v1749
      %1973 = vmatprep.mubr.bf16.mxu0 %v202
      %1974 = vmatmul.mubr.bf16.gmra.mxu0 %v201
      %v1975 = vpop.f32.mrf.mxu0
      %v1976 = vadd.f32 %v1164, %v1975
      %v1977 = vpop.f32.mrf.mxu0
      %v1978 = vadd.f32 %v1166, %v1977
      %v1979 = vpop.f32.mrf.mxu0
      %v1980 = vadd.f32 %v1168, %v1979
      %v1981 = vpop.f32.mrf.mxu0
      %v1982 = vadd.f32 %v1170, %v1981
      %1983 = vdwg.mxu0
      %1984 = vmatprep.subr.bf16.mxu0 %v1744
      %1985 = vmatpush1.bf16.msra.mxu0 %v1743
      %1986 = vmatprep.subr.bf16.mxu0 %v1736
      %1987 = vmatpush1.bf16.msra.mxu0 %v1735
      %1988 = vmatprep.subr.bf16.mxu0 %v1728
      %1989 = vmatpush1.bf16.msra.mxu0 %v1727
      %1990 = vmatprep.subr.bf16.mxu0 %v1720
      %1991 = vmatpush1.bf16.msra.mxu0 %v1719
      %1992 = vmatprep.subr.bf16.mxu0 %v1712
      %1993 = vmatpush1.bf16.msra.mxu0 %v1711
      %1994 = vmatprep.subr.bf16.mxu0 %v1704
      %1995 = vmatpush1.bf16.msra.mxu0 %v1703
      %1996 = vmatprep.subr.bf16.mxu0 %v1696
      %1997 = vmatpush1.bf16.msra.mxu0 %v1695
      %1998 = vmatprep.subr.bf16.mxu0 %v1688
      %1999 = vmatpush1.bf16.msra.mxu0 %v1687
      %2000 = vmatprep.subr.bf16.mxu0 %v1808
      %2001 = vmatpush2.bf16.msra.mxu0 %v1807
      %2002 = vmatprep.subr.bf16.mxu0 %v1800
      %2003 = vmatpush2.bf16.msra.mxu0 %v1799
      %2004 = vmatprep.subr.bf16.mxu0 %v1792
      %2005 = vmatpush2.bf16.msra.mxu0 %v1791
      %2006 = vmatprep.subr.bf16.mxu0 %v1784
      %2007 = vmatpush2.bf16.msra.mxu0 %v1783
      %2008 = vmatprep.subr.bf16.mxu0 %v1776
      %2009 = vmatpush2.bf16.msra.mxu0 %v1775
      %2010 = vmatprep.subr.bf16.mxu0 %v1768
      %2011 = vmatpush2.bf16.msra.mxu0 %v1767
      %2012 = vmatprep.subr.bf16.mxu0 %v1760
      %2013 = vmatpush2.bf16.msra.mxu0 %v1759
      %2014 = vmatprep.subr.bf16.mxu0 %v1752
      %2015 = vmatpush2.bf16.msra.mxu0 %v1751
      %2016 = vmatprep.mubr.bf16.mxu0 %v202
      %2017 = vmatmul.mubr.bf16.gmra.mxu0 %v201
      %v2018 = vpop.f32.mrf.mxu0
      %v2019 = vadd.f32 %v1207, %v2018
      %v2020 = vpop.f32.mrf.mxu0
      %v2021 = vadd.f32 %v1209, %v2020
      %v2022 = vpop.f32.mrf.mxu0
      %v2023 = vadd.f32 %v1211, %v2022
      %v2024 = vpop.f32.mrf.mxu0
      %v2025 = vadd.f32 %v1213, %v2024
      %2026 = vdwg.mxu0
      %2027 = vmatprep.subr.bf16.mxu0 %v1746
      %2028 = vmatpush1.bf16.msra.mxu0 %v1745
      %2029 = vmatprep.subr.bf16.mxu0 %v1738
      %2030 = vmatpush1.bf16.msra.mxu0 %v1737
      %2031 = vmatprep.subr.bf16.mxu0 %v1730
      %2032 = vmatpush1.bf16.msra.mxu0 %v1729
      %2033 = vmatprep.subr.bf16.mxu0 %v1722
      %2034 = vmatpush1.bf16.msra.mxu0 %v1721
      %2035 = vmatprep.subr.bf16.mxu0 %v1714
      %2036 = vmatpush1.bf16.msra.mxu0 %v1713
      %2037 = vmatprep.subr.bf16.mxu0 %v1706
      %2038 = vmatpush1.bf16.msra.mxu0 %v1705
      %2039 = vmatprep.subr.bf16.mxu0 %v1698
      %2040 = vmatpush1.bf16.msra.mxu0 %v1697
      %2041 = vmatprep.subr.bf16.mxu0 %v1690
      %2042 = vmatpush1.bf16.msra.mxu0 %v1689
      %2043 = vmatprep.subr.bf16.mxu0 %v1810
      %2044 = vmatpush2.bf16.msra.mxu0 %v1809
      %2045 = vmatprep.subr.bf16.mxu0 %v1802
      %2046 = vmatpush2.bf16.msra.mxu0 %v1801
      %2047 = vmatprep.subr.bf16.mxu0 %v1794
      %2048 = vmatpush2.bf16.msra.mxu0 %v1793
      %2049 = vmatprep.subr.bf16.mxu0 %v1786
      %2050 = vmatpush2.bf16.msra.mxu0 %v1785
      %2051 = vmatprep.subr.bf16.mxu0 %v1778
      %2052 = vmatpush2.bf16.msra.mxu0 %v1777
      %2053 = vmatprep.subr.bf16.mxu0 %v1770
      %2054 = vmatpush2.bf16.msra.mxu0 %v1769
      %2055 = vmatprep.subr.bf16.mxu0 %v1762
      %2056 = vmatpush2.bf16.msra.mxu0 %v1761
      %2057 = vmatprep.subr.bf16.mxu0 %v1754
      %2058 = vmatpush2.bf16.msra.mxu0 %v1753
      %2059 = vmatprep.mubr.bf16.mxu0 %v202
      %2060 = vmatmul.mubr.bf16.gmra.mxu0 %v201
      %v2061 = vpop.f32.mrf.mxu0
      %v2062 = vadd.f32 %v1250, %v2061
      %v2063 = vpop.f32.mrf.mxu0
      %v2064 = vadd.f32 %v1252, %v2063
      %v2065 = vpop.f32.mrf.mxu0
      %v2066 = vadd.f32 %v1254, %v2065
      %v2067 = vpop.f32.mrf.mxu0
      %v2068 = vadd.f32 %v1256, %v2067
      %2069 = vdwg.mxu0
      %2070 = vmatprep.subr.bf16.mxu0 %v1748
      %2071 = vmatpush1.bf16.msra.mxu0 %v1747
      %2072 = vmatprep.subr.bf16.mxu0 %v1740
      %2073 = vmatpush1.bf16.msra.mxu0 %v1739
      %2074 = vmatprep.subr.bf16.mxu0 %v1732
      %2075 = vmatpush1.bf16.msra.mxu0 %v1731
      %2076 = vmatprep.subr.bf16.mxu0 %v1724
      %2077 = vmatpush1.bf16.msra.mxu0 %v1723
      %2078 = vmatprep.subr.bf16.mxu0 %v1716
      %2079 = vmatpush1.bf16.msra.mxu0 %v1715
      %2080 = vmatprep.subr.bf16.mxu0 %v1708
      %2081 = vmatpush1.bf16.msra.mxu0 %v1707
      %2082 = vmatprep.subr.bf16.mxu0 %v1700
      %2083 = vmatpush1.bf16.msra.mxu0 %v1699
      %2084 = vmatprep.subr.bf16.mxu0 %v1692
      %2085 = vmatpush1.bf16.msra.mxu0 %v1691
      %2086 = vmatprep.subr.bf16.mxu0 %v1812
      %2087 = vmatpush2.bf16.msra.mxu0 %v1811
      %2088 = vmatprep.subr.bf16.mxu0 %v1804
      %2089 = vmatpush2.bf16.msra.mxu0 %v1803
      %2090 = vmatprep.subr.bf16.mxu0 %v1796
      %2091 = vmatpush2.bf16.msra.mxu0 %v1795
      %2092 = vmatprep.subr.bf16.mxu0 %v1788
      %2093 = vmatpush2.bf16.msra.mxu0 %v1787
      %2094 = vmatprep.subr.bf16.mxu0 %v1780
      %2095 = vmatpush2.bf16.msra.mxu0 %v1779
      %2096 = vmatprep.subr.bf16.mxu0 %v1772
      %2097 = vmatpush2.bf16.msra.mxu0 %v1771
      %2098 = vmatprep.subr.bf16.mxu0 %v1764
      %2099 = vmatpush2.bf16.msra.mxu0 %v1763
      %2100 = vmatprep.subr.bf16.mxu0 %v1756
      %2101 = vmatpush2.bf16.msra.mxu0 %v1755
      %2102 = vmatprep.mubr.bf16.mxu0 %v202
      %2103 = vmatmul.mubr.bf16.gmra.mxu0 %v201
      %v2104 = vpop.f32.mrf.mxu0
      %v2105 = vadd.f32 %v1293, %v2104
      %v2106 = vpop.f32.mrf.mxu0
      %v2107 = vadd.f32 %v1295, %v2106
      %v2108 = vpop.f32.mrf.mxu0
      %v2109 = vadd.f32 %v1297, %v2108
      %v2110 = vpop.f32.mrf.mxu0
      %v2111 = vadd.f32 %v1299, %v2110
      %2112 = vdwg.mxu0
      %s2113 = scalar_lea.vmem %s2, 2048
      %v2114 = vld [vmem:[%s2113] sm:$0xff]
      %v2115 = vld [vmem:[%s2113 + $0x8] sm:$0xff]
      %v2116 = vld [vmem:[%s2113 + $0x10] sm:$0xff]
      %v2117 = vld [vmem:[%s2113 + $0x18] sm:$0xff]
      %v2118 = vld [vmem:[%s2113 + $0x20] sm:$0xff]
      %v2119 = vld [vmem:[%s2113 + $0x28] sm:$0xff]
      %v2120 = vld [vmem:[%s2113 + $0x30] sm:$0xff]
      %v2121 = vld [vmem:[%s2113 + $0x38] sm:$0xff]
      %v2122 = vld [vmem:[%s2113 + $0x40] sm:$0xff]
      %v2123 = vld [vmem:[%s2113 + $0x48] sm:$0xff]
      %v2124 = vld [vmem:[%s2113 + $0x50] sm:$0xff]
      %v2125 = vld [vmem:[%s2113 + $0x58] sm:$0xff]
      %v2126 = vld [vmem:[%s2113 + $0x60] sm:$0xff]
      %v2127 = vld [vmem:[%s2113 + $0x68] sm:$0xff]
      %v2128 = vld [vmem:[%s2113 + $0x70] sm:$0xff]
      %v2129 = vld [vmem:[%s2113 + $0x78] sm:$0xff]
      %v2130 = vld [vmem:[%s2113 + $0x80] sm:$0xff]
      %v2131 = vld [vmem:[%s2113 + $0x88] sm:$0xff]
      %v2132 = vld [vmem:[%s2113 + $0x90] sm:$0xff]
      %v2133 = vld [vmem:[%s2113 + $0x98] sm:$0xff]
      %v2134 = vld [vmem:[%s2113 + $0xa0] sm:$0xff]
      %v2135 = vld [vmem:[%s2113 + $0xa8] sm:$0xff]
      %v2136 = vld [vmem:[%s2113 + $0xb0] sm:$0xff]
      %v2137 = vld [vmem:[%s2113 + $0xb8] sm:$0xff]
      %v2138 = vld [vmem:[%s2113 + $0xc0] sm:$0xff]
      %v2139 = vld [vmem:[%s2113 + $0xc8] sm:$0xff]
      %v2140 = vld [vmem:[%s2113 + $0xd0] sm:$0xff]
      %v2141 = vld [vmem:[%s2113 + $0xd8] sm:$0xff]
      %v2142 = vld [vmem:[%s2113 + $0xe0] sm:$0xff]
      %v2143 = vld [vmem:[%s2113 + $0xe8] sm:$0xff]
      %v2144 = vld [vmem:[%s2113 + $0xf0] sm:$0xff]
      %v2145 = vld [vmem:[%s2113 + $0xf8] sm:$0xff]
      %v2146 = vld [vmem:[%s2113 + $0x100] sm:$0xff]
      %v2147 = vld [vmem:[%s2113 + $0x108] sm:$0xff]
      %v2148 = vld [vmem:[%s2113 + $0x110] sm:$0xff]
      %v2149 = vld [vmem:[%s2113 + $0x118] sm:$0xff]
      %v2150 = vld [vmem:[%s2113 + $0x120] sm:$0xff]
      %v2151 = vld [vmem:[%s2113 + $0x128] sm:$0xff]
      %v2152 = vld [vmem:[%s2113 + $0x130] sm:$0xff]
      %v2153 = vld [vmem:[%s2113 + $0x138] sm:$0xff]
      %v2154 = vld [vmem:[%s2113 + $0x140] sm:$0xff]
      %v2155 = vld [vmem:[%s2113 + $0x148] sm:$0xff]
      %v2156 = vld [vmem:[%s2113 + $0x150] sm:$0xff]
      %v2157 = vld [vmem:[%s2113 + $0x158] sm:$0xff]
      %v2158 = vld [vmem:[%s2113 + $0x160] sm:$0xff]
      %v2159 = vld [vmem:[%s2113 + $0x168] sm:$0xff]
      %v2160 = vld [vmem:[%s2113 + $0x170] sm:$0xff]
      %v2161 = vld [vmem:[%s2113 + $0x178] sm:$0xff]
      %v2162 = vld [vmem:[%s2113 + $0x180] sm:$0xff]
      %v2163 = vld [vmem:[%s2113 + $0x188] sm:$0xff]
      %v2164 = vld [vmem:[%s2113 + $0x190] sm:$0xff]
      %v2165 = vld [vmem:[%s2113 + $0x198] sm:$0xff]
      %v2166 = vld [vmem:[%s2113 + $0x1a0] sm:$0xff]
      %v2167 = vld [vmem:[%s2113 + $0x1a8] sm:$0xff]
      %v2168 = vld [vmem:[%s2113 + $0x1b0] sm:$0xff]
      %v2169 = vld [vmem:[%s2113 + $0x1b8] sm:$0xff]
      %v2170 = vld [vmem:[%s2113 + $0x1c0] sm:$0xff]
      %v2171 = vld [vmem:[%s2113 + $0x1c8] sm:$0xff]
      %v2172 = vld [vmem:[%s2113 + $0x1d0] sm:$0xff]
      %v2173 = vld [vmem:[%s2113 + $0x1d8] sm:$0xff]
      %v2174 = vld [vmem:[%s2113 + $0x1e0] sm:$0xff]
      %v2175 = vld [vmem:[%s2113 + $0x1e8] sm:$0xff]
      %v2176 = vld [vmem:[%s2113 + $0x1f0] sm:$0xff]
      %v2177 = vld [vmem:[%s2113 + $0x1f8] sm:$0xff]
      %v2178 = vld [vmem:[%s2113 + $0x200] sm:$0xff]
      %v2179 = vld [vmem:[%s2113 + $0x208] sm:$0xff]
      %v2180 = vld [vmem:[%s2113 + $0x210] sm:$0xff]
      %v2181 = vld [vmem:[%s2113 + $0x218] sm:$0xff]
      %v2182 = vld [vmem:[%s2113 + $0x220] sm:$0xff]
      %v2183 = vld [vmem:[%s2113 + $0x228] sm:$0xff]
      %v2184 = vld [vmem:[%s2113 + $0x230] sm:$0xff]
      %v2185 = vld [vmem:[%s2113 + $0x238] sm:$0xff]
      %v2186 = vld [vmem:[%s2113 + $0x240] sm:$0xff]
      %v2187 = vld [vmem:[%s2113 + $0x248] sm:$0xff]
      %v2188 = vld [vmem:[%s2113 + $0x250] sm:$0xff]
      %v2189 = vld [vmem:[%s2113 + $0x258] sm:$0xff]
      %v2190 = vld [vmem:[%s2113 + $0x260] sm:$0xff]
      %v2191 = vld [vmem:[%s2113 + $0x268] sm:$0xff]
      %v2192 = vld [vmem:[%s2113 + $0x270] sm:$0xff]
      %v2193 = vld [vmem:[%s2113 + $0x278] sm:$0xff]
      %v2194 = vld [vmem:[%s2113 + $0x280] sm:$0xff]
      %v2195 = vld [vmem:[%s2113 + $0x288] sm:$0xff]
      %v2196 = vld [vmem:[%s2113 + $0x290] sm:$0xff]
      %v2197 = vld [vmem:[%s2113 + $0x298] sm:$0xff]
      %v2198 = vld [vmem:[%s2113 + $0x2a0] sm:$0xff]
      %v2199 = vld [vmem:[%s2113 + $0x2a8] sm:$0xff]
      %v2200 = vld [vmem:[%s2113 + $0x2b0] sm:$0xff]
      %v2201 = vld [vmem:[%s2113 + $0x2b8] sm:$0xff]
      %v2202 = vld [vmem:[%s2113 + $0x2c0] sm:$0xff]
      %v2203 = vld [vmem:[%s2113 + $0x2c8] sm:$0xff]
      %v2204 = vld [vmem:[%s2113 + $0x2d0] sm:$0xff]
      %v2205 = vld [vmem:[%s2113 + $0x2d8] sm:$0xff]
      %v2206 = vld [vmem:[%s2113 + $0x2e0] sm:$0xff]
      %v2207 = vld [vmem:[%s2113 + $0x2e8] sm:$0xff]
      %v2208 = vld [vmem:[%s2113 + $0x2f0] sm:$0xff]
      %v2209 = vld [vmem:[%s2113 + $0x2f8] sm:$0xff]
      %v2210 = vld [vmem:[%s2113 + $0x300] sm:$0xff]
      %v2211 = vld [vmem:[%s2113 + $0x308] sm:$0xff]
      %v2212 = vld [vmem:[%s2113 + $0x310] sm:$0xff]
      %v2213 = vld [vmem:[%s2113 + $0x318] sm:$0xff]
      %v2214 = vld [vmem:[%s2113 + $0x320] sm:$0xff]
      %v2215 = vld [vmem:[%s2113 + $0x328] sm:$0xff]
      %v2216 = vld [vmem:[%s2113 + $0x330] sm:$0xff]
      %v2217 = vld [vmem:[%s2113 + $0x338] sm:$0xff]
      %v2218 = vld [vmem:[%s2113 + $0x340] sm:$0xff]
      %v2219 = vld [vmem:[%s2113 + $0x348] sm:$0xff]
      %v2220 = vld [vmem:[%s2113 + $0x350] sm:$0xff]
      %v2221 = vld [vmem:[%s2113 + $0x358] sm:$0xff]
      %v2222 = vld [vmem:[%s2113 + $0x360] sm:$0xff]
      %v2223 = vld [vmem:[%s2113 + $0x368] sm:$0xff]
      %v2224 = vld [vmem:[%s2113 + $0x370] sm:$0xff]
      %v2225 = vld [vmem:[%s2113 + $0x378] sm:$0xff]
      %v2226 = vld [vmem:[%s2113 + $0x380] sm:$0xff]
      %v2227 = vld [vmem:[%s2113 + $0x388] sm:$0xff]
      %v2228 = vld [vmem:[%s2113 + $0x390] sm:$0xff]
      %v2229 = vld [vmem:[%s2113 + $0x398] sm:$0xff]
      %v2230 = vld [vmem:[%s2113 + $0x3a0] sm:$0xff]
      %v2231 = vld [vmem:[%s2113 + $0x3a8] sm:$0xff]
      %v2232 = vld [vmem:[%s2113 + $0x3b0] sm:$0xff]
      %v2233 = vld [vmem:[%s2113 + $0x3b8] sm:$0xff]
      %v2234 = vld [vmem:[%s2113 + $0x3c0] sm:$0xff]
      %v2235 = vld [vmem:[%s2113 + $0x3c8] sm:$0xff]
      %v2236 = vld [vmem:[%s2113 + $0x3d0] sm:$0xff]
      %v2237 = vld [vmem:[%s2113 + $0x3d8] sm:$0xff]
      %v2238 = vld [vmem:[%s2113 + $0x3e0] sm:$0xff]
      %v2239 = vld [vmem:[%s2113 + $0x3e8] sm:$0xff]
      %v2240 = vld [vmem:[%s2113 + $0x3f0] sm:$0xff]
      %v2241 = vld [vmem:[%s2113 + $0x3f8] sm:$0xff]
      %vm2246 = vcmask 1046528
      %v2247 = vrot.slane %v201, 1
      %v2248 = vrot.slane %v331, 1
      %v2249 = vsel %vm2246, %v2247, %v2248
      %v2250 = vrot.slane %v202, 1
      %v2251 = vrot.slane %v332, 1
      %v2252 = vsel %vm2246, %v2250, %v2251
      %v2383 = vunpack.c.l.b16 %v2114
      %v2384 = vunpack.c.h.b16 %v2114
      %v2385 = vunpack.c.l.b16 %v2115
      %v2386 = vunpack.c.h.b16 %v2115
      %v2387 = vunpack.c.l.b16 %v2116
      %v2388 = vunpack.c.h.b16 %v2116
      %v2389 = vunpack.c.l.b16 %v2117
      %v2390 = vunpack.c.h.b16 %v2117
      %v2391 = vunpack.c.l.b16 %v2118
      %v2392 = vunpack.c.h.b16 %v2118
      %v2393 = vunpack.c.l.b16 %v2119
      %v2394 = vunpack.c.h.b16 %v2119
      %v2395 = vunpack.c.l.b16 %v2120
      %v2396 = vunpack.c.h.b16 %v2120
      %v2397 = vunpack.c.l.b16 %v2121
      %v2398 = vunpack.c.h.b16 %v2121
      %v2399 = vunpack.c.l.b16 %v2122
      %v2400 = vunpack.c.h.b16 %v2122
      %v2401 = vunpack.c.l.b16 %v2123
      %v2402 = vunpack.c.h.b16 %v2123
      %v2403 = vunpack.c.l.b16 %v2124
      %v2404 = vunpack.c.h.b16 %v2124
      %v2405 = vunpack.c.l.b16 %v2125
      %v2406 = vunpack.c.h.b16 %v2125
      %v2407 = vunpack.c.l.b16 %v2126
      %v2408 = vunpack.c.h.b16 %v2126
      %v2409 = vunpack.c.l.b16 %v2127
      %v2410 = vunpack.c.h.b16 %v2127
      %v2411 = vunpack.c.l.b16 %v2128
      %v2412 = vunpack.c.h.b16 %v2128
      %v2413 = vunpack.c.l.b16 %v2129
      %v2414 = vunpack.c.h.b16 %v2129
      %v2415 = vunpack.c.l.b16 %v2130
      %v2416 = vunpack.c.h.b16 %v2130
      %v2417 = vunpack.c.l.b16 %v2131
      %v2418 = vunpack.c.h.b16 %v2131
      %v2419 = vunpack.c.l.b16 %v2132
      %v2420 = vunpack.c.h.b16 %v2132
      %v2421 = vunpack.c.l.b16 %v2133
      %v2422 = vunpack.c.h.b16 %v2133
      %v2423 = vunpack.c.l.b16 %v2134
      %v2424 = vunpack.c.h.b16 %v2134
      %v2425 = vunpack.c.l.b16 %v2135
      %v2426 = vunpack.c.h.b16 %v2135
      %v2427 = vunpack.c.l.b16 %v2136
      %v2428 = vunpack.c.h.b16 %v2136
      %v2429 = vunpack.c.l.b16 %v2137
      %v2430 = vunpack.c.h.b16 %v2137
      %v2431 = vunpack.c.l.b16 %v2138
      %v2432 = vunpack.c.h.b16 %v2138
      %v2433 = vunpack.c.l.b16 %v2139
      %v2434 = vunpack.c.h.b16 %v2139
      %v2435 = vunpack.c.l.b16 %v2140
      %v2436 = vunpack.c.h.b16 %v2140
      %v2437 = vunpack.c.l.b16 %v2141
      %v2438 = vunpack.c.h.b16 %v2141
      %v2439 = vunpack.c.l.b16 %v2142
      %v2440 = vunpack.c.h.b16 %v2142
      %v2441 = vunpack.c.l.b16 %v2143
      %v2442 = vunpack.c.h.b16 %v2143
      %v2443 = vunpack.c.l.b16 %v2144
      %v2444 = vunpack.c.h.b16 %v2144
      %v2445 = vunpack.c.l.b16 %v2145
      %v2446 = vunpack.c.h.b16 %v2145
      %v2447 = vunpack.c.l.b16 %v2146
      %v2448 = vunpack.c.h.b16 %v2146
      %v2449 = vunpack.c.l.b16 %v2147
      %v2450 = vunpack.c.h.b16 %v2147
      %v2451 = vunpack.c.l.b16 %v2148
      %v2452 = vunpack.c.h.b16 %v2148
      %v2453 = vunpack.c.l.b16 %v2149
      %v2454 = vunpack.c.h.b16 %v2149
      %v2455 = vunpack.c.l.b16 %v2150
      %v2456 = vunpack.c.h.b16 %v2150
      %v2457 = vunpack.c.l.b16 %v2151
      %v2458 = vunpack.c.h.b16 %v2151
      %v2459 = vunpack.c.l.b16 %v2152
      %v2460 = vunpack.c.h.b16 %v2152
      %v2461 = vunpack.c.l.b16 %v2153
      %v2462 = vunpack.c.h.b16 %v2153
      %v2463 = vunpack.c.l.b16 %v2154
      %v2464 = vunpack.c.h.b16 %v2154
      %v2465 = vunpack.c.l.b16 %v2155
      %v2466 = vunpack.c.h.b16 %v2155
      %v2467 = vunpack.c.l.b16 %v2156
      %v2468 = vunpack.c.h.b16 %v2156
      %v2469 = vunpack.c.l.b16 %v2157
      %v2470 = vunpack.c.h.b16 %v2157
      %v2471 = vunpack.c.l.b16 %v2158
      %v2472 = vunpack.c.h.b16 %v2158
      %v2473 = vunpack.c.l.b16 %v2159
      %v2474 = vunpack.c.h.b16 %v2159
      %v2475 = vunpack.c.l.b16 %v2160
      %v2476 = vunpack.c.h.b16 %v2160
      %v2477 = vunpack.c.l.b16 %v2161
      %v2478 = vunpack.c.h.b16 %v2161
      %v2479 = vunpack.c.l.b16 %v2162
      %v2480 = vunpack.c.h.b16 %v2162
      %v2481 = vunpack.c.l.b16 %v2163
      %v2482 = vunpack.c.h.b16 %v2163
      %v2483 = vunpack.c.l.b16 %v2164
      %v2484 = vunpack.c.h.b16 %v2164
      %v2485 = vunpack.c.l.b16 %v2165
      %v2486 = vunpack.c.h.b16 %v2165
      %v2487 = vunpack.c.l.b16 %v2166
      %v2488 = vunpack.c.h.b16 %v2166
      %v2489 = vunpack.c.l.b16 %v2167
      %v2490 = vunpack.c.h.b16 %v2167
      %v2491 = vunpack.c.l.b16 %v2168
      %v2492 = vunpack.c.h.b16 %v2168
      %v2493 = vunpack.c.l.b16 %v2169
      %v2494 = vunpack.c.h.b16 %v2169
      %v2495 = vunpack.c.l.b16 %v2170
      %v2496 = vunpack.c.h.b16 %v2170
      %v2497 = vunpack.c.l.b16 %v2171
      %v2498 = vunpack.c.h.b16 %v2171
      %v2499 = vunpack.c.l.b16 %v2172
      %v2500 = vunpack.c.h.b16 %v2172
      %v2501 = vunpack.c.l.b16 %v2173
      %v2502 = vunpack.c.h.b16 %v2173
      %v2503 = vunpack.c.l.b16 %v2174
      %v2504 = vunpack.c.h.b16 %v2174
      %v2505 = vunpack.c.l.b16 %v2175
      %v2506 = vunpack.c.h.b16 %v2175
      %v2507 = vunpack.c.l.b16 %v2176
      %v2508 = vunpack.c.h.b16 %v2176
      %v2509 = vunpack.c.l.b16 %v2177
      %v2510 = vunpack.c.h.b16 %v2177
      %v2511 = vunpack.c.l.b16 %v2178
      %v2512 = vunpack.c.h.b16 %v2178
      %v2513 = vunpack.c.l.b16 %v2179
      %v2514 = vunpack.c.h.b16 %v2179
      %v2515 = vunpack.c.l.b16 %v2180
      %v2516 = vunpack.c.h.b16 %v2180
      %v2517 = vunpack.c.l.b16 %v2181
      %v2518 = vunpack.c.h.b16 %v2181
      %v2519 = vunpack.c.l.b16 %v2182
      %v2520 = vunpack.c.h.b16 %v2182
      %v2521 = vunpack.c.l.b16 %v2183
      %v2522 = vunpack.c.h.b16 %v2183
      %v2523 = vunpack.c.l.b16 %v2184
      %v2524 = vunpack.c.h.b16 %v2184
      %v2525 = vunpack.c.l.b16 %v2185
      %v2526 = vunpack.c.h.b16 %v2185
      %v2527 = vunpack.c.l.b16 %v2186
      %v2528 = vunpack.c.h.b16 %v2186
      %v2529 = vunpack.c.l.b16 %v2187
      %v2530 = vunpack.c.h.b16 %v2187
      %v2531 = vunpack.c.l.b16 %v2188
      %v2532 = vunpack.c.h.b16 %v2188
      %v2533 = vunpack.c.l.b16 %v2189
      %v2534 = vunpack.c.h.b16 %v2189
      %v2535 = vunpack.c.l.b16 %v2190
      %v2536 = vunpack.c.h.b16 %v2190
      %v2537 = vunpack.c.l.b16 %v2191
      %v2538 = vunpack.c.h.b16 %v2191
      %v2539 = vunpack.c.l.b16 %v2192
      %v2540 = vunpack.c.h.b16 %v2192
      %v2541 = vunpack.c.l.b16 %v2193
      %v2542 = vunpack.c.h.b16 %v2193
      %v2543 = vunpack.c.l.b16 %v2194
      %v2544 = vunpack.c.h.b16 %v2194
      %v2545 = vunpack.c.l.b16 %v2195
      %v2546 = vunpack.c.h.b16 %v2195
      %v2547 = vunpack.c.l.b16 %v2196
      %v2548 = vunpack.c.h.b16 %v2196
      %v2549 = vunpack.c.l.b16 %v2197
      %v2550 = vunpack.c.h.b16 %v2197
      %v2551 = vunpack.c.l.b16 %v2198
      %v2552 = vunpack.c.h.b16 %v2198
      %v2553 = vunpack.c.l.b16 %v2199
      %v2554 = vunpack.c.h.b16 %v2199
      %v2555 = vunpack.c.l.b16 %v2200
      %v2556 = vunpack.c.h.b16 %v2200
      %v2557 = vunpack.c.l.b16 %v2201
      %v2558 = vunpack.c.h.b16 %v2201
      %v2559 = vunpack.c.l.b16 %v2202
      %v2560 = vunpack.c.h.b16 %v2202
      %v2561 = vunpack.c.l.b16 %v2203
      %v2562 = vunpack.c.h.b16 %v2203
      %v2563 = vunpack.c.l.b16 %v2204
      %v2564 = vunpack.c.h.b16 %v2204
      %v2565 = vunpack.c.l.b16 %v2205
      %v2566 = vunpack.c.h.b16 %v2205
      %v2567 = vunpack.c.l.b16 %v2206
      %v2568 = vunpack.c.h.b16 %v2206
      %v2569 = vunpack.c.l.b16 %v2207
      %v2570 = vunpack.c.h.b16 %v2207
      %v2571 = vunpack.c.l.b16 %v2208
      %v2572 = vunpack.c.h.b16 %v2208
      %v2573 = vunpack.c.l.b16 %v2209
      %v2574 = vunpack.c.h.b16 %v2209
      %v2575 = vunpack.c.l.b16 %v2210
      %v2576 = vunpack.c.h.b16 %v2210
      %v2577 = vunpack.c.l.b16 %v2211
      %v2578 = vunpack.c.h.b16 %v2211
      %v2579 = vunpack.c.l.b16 %v2212
      %v2580 = vunpack.c.h.b16 %v2212
      %v2581 = vunpack.c.l.b16 %v2213
      %v2582 = vunpack.c.h.b16 %v2213
      %v2583 = vunpack.c.l.b16 %v2214
      %v2584 = vunpack.c.h.b16 %v2214
      %v2585 = vunpack.c.l.b16 %v2215
      %v2586 = vunpack.c.h.b16 %v2215
      %v2587 = vunpack.c.l.b16 %v2216
      %v2588 = vunpack.c.h.b16 %v2216
      %v2589 = vunpack.c.l.b16 %v2217
      %v2590 = vunpack.c.h.b16 %v2217
      %v2591 = vunpack.c.l.b16 %v2218
      %v2592 = vunpack.c.h.b16 %v2218
      %v2593 = vunpack.c.l.b16 %v2219
      %v2594 = vunpack.c.h.b16 %v2219
      %v2595 = vunpack.c.l.b16 %v2220
      %v2596 = vunpack.c.h.b16 %v2220
      %v2597 = vunpack.c.l.b16 %v2221
      %v2598 = vunpack.c.h.b16 %v2221
      %v2599 = vunpack.c.l.b16 %v2222
      %v2600 = vunpack.c.h.b16 %v2222
      %v2601 = vunpack.c.l.b16 %v2223
      %v2602 = vunpack.c.h.b16 %v2223
      %v2603 = vunpack.c.l.b16 %v2224
      %v2604 = vunpack.c.h.b16 %v2224
      %v2605 = vunpack.c.l.b16 %v2225
      %v2606 = vunpack.c.h.b16 %v2225
      %v2607 = vunpack.c.l.b16 %v2226
      %v2608 = vunpack.c.h.b16 %v2226
      %v2609 = vunpack.c.l.b16 %v2227
      %v2610 = vunpack.c.h.b16 %v2227
      %v2611 = vunpack.c.l.b16 %v2228
      %v2612 = vunpack.c.h.b16 %v2228
      %v2613 = vunpack.c.l.b16 %v2229
      %v2614 = vunpack.c.h.b16 %v2229
      %v2615 = vunpack.c.l.b16 %v2230
      %v2616 = vunpack.c.h.b16 %v2230
      %v2617 = vunpack.c.l.b16 %v2231
      %v2618 = vunpack.c.h.b16 %v2231
      %v2619 = vunpack.c.l.b16 %v2232
      %v2620 = vunpack.c.h.b16 %v2232
      %v2621 = vunpack.c.l.b16 %v2233
      %v2622 = vunpack.c.h.b16 %v2233
      %v2623 = vunpack.c.l.b16 %v2234
      %v2624 = vunpack.c.h.b16 %v2234
      %v2625 = vunpack.c.l.b16 %v2235
      %v2626 = vunpack.c.h.b16 %v2235
      %v2627 = vunpack.c.l.b16 %v2236
      %v2628 = vunpack.c.h.b16 %v2236
      %v2629 = vunpack.c.l.b16 %v2237
      %v2630 = vunpack.c.h.b16 %v2237
      %v2631 = vunpack.c.l.b16 %v2238
      %v2632 = vunpack.c.h.b16 %v2238
      %v2633 = vunpack.c.l.b16 %v2239
      %v2634 = vunpack.c.h.b16 %v2239
      %v2635 = vunpack.c.l.b16 %v2240
      %v2636 = vunpack.c.h.b16 %v2240
      %v2637 = vunpack.c.l.b16 %v2241
      %v2638 = vunpack.c.h.b16 %v2241
      %v2639 = vpack.c.b16 %v2391, %v2383
      %v2640 = vpack.c.b16 %v2392, %v2384
      %v2641 = vpack.c.b16 %v2393, %v2385
      %v2642 = vpack.c.b16 %v2394, %v2386
      %v2643 = vpack.c.b16 %v2395, %v2387
      %v2644 = vpack.c.b16 %v2396, %v2388
      %v2645 = vpack.c.b16 %v2397, %v2389
      %v2646 = vpack.c.b16 %v2398, %v2390
      %v2647 = vpack.c.b16 %v2407, %v2399
      %v2648 = vpack.c.b16 %v2408, %v2400
      %v2649 = vpack.c.b16 %v2409, %v2401
      %v2650 = vpack.c.b16 %v2410, %v2402
      %v2651 = vpack.c.b16 %v2411, %v2403
      %v2652 = vpack.c.b16 %v2412, %v2404
      %v2653 = vpack.c.b16 %v2413, %v2405
      %v2654 = vpack.c.b16 %v2414, %v2406
      %v2655 = vpack.c.b16 %v2423, %v2415
      %v2656 = vpack.c.b16 %v2424, %v2416
      %v2657 = vpack.c.b16 %v2425, %v2417
      %v2658 = vpack.c.b16 %v2426, %v2418
      %v2659 = vpack.c.b16 %v2427, %v2419
      %v2660 = vpack.c.b16 %v2428, %v2420
      %v2661 = vpack.c.b16 %v2429, %v2421
      %v2662 = vpack.c.b16 %v2430, %v2422
      %v2663 = vpack.c.b16 %v2439, %v2431
      %v2664 = vpack.c.b16 %v2440, %v2432
      %v2665 = vpack.c.b16 %v2441, %v2433
      %v2666 = vpack.c.b16 %v2442, %v2434
      %v2667 = vpack.c.b16 %v2443, %v2435
      %v2668 = vpack.c.b16 %v2444, %v2436
      %v2669 = vpack.c.b16 %v2445, %v2437
      %v2670 = vpack.c.b16 %v2446, %v2438
      %v2671 = vpack.c.b16 %v2455, %v2447
      %v2672 = vpack.c.b16 %v2456, %v2448
      %v2673 = vpack.c.b16 %v2457, %v2449
      %v2674 = vpack.c.b16 %v2458, %v2450
      %v2675 = vpack.c.b16 %v2459, %v2451
      %v2676 = vpack.c.b16 %v2460, %v2452
      %v2677 = vpack.c.b16 %v2461, %v2453
      %v2678 = vpack.c.b16 %v2462, %v2454
      %v2679 = vpack.c.b16 %v2471, %v2463
      %v2680 = vpack.c.b16 %v2472, %v2464
      %v2681 = vpack.c.b16 %v2473, %v2465
      %v2682 = vpack.c.b16 %v2474, %v2466
      %v2683 = vpack.c.b16 %v2475, %v2467
      %v2684 = vpack.c.b16 %v2476, %v2468
      %v2685 = vpack.c.b16 %v2477, %v2469
      %v2686 = vpack.c.b16 %v2478, %v2470
      %v2687 = vpack.c.b16 %v2487, %v2479
      %v2688 = vpack.c.b16 %v2488, %v2480
      %v2689 = vpack.c.b16 %v2489, %v2481
      %v2690 = vpack.c.b16 %v2490, %v2482
      %v2691 = vpack.c.b16 %v2491, %v2483
      %v2692 = vpack.c.b16 %v2492, %v2484
      %v2693 = vpack.c.b16 %v2493, %v2485
      %v2694 = vpack.c.b16 %v2494, %v2486
      %v2695 = vpack.c.b16 %v2503, %v2495
      %v2696 = vpack.c.b16 %v2504, %v2496
      %v2697 = vpack.c.b16 %v2505, %v2497
      %v2698 = vpack.c.b16 %v2506, %v2498
      %v2699 = vpack.c.b16 %v2507, %v2499
      %v2700 = vpack.c.b16 %v2508, %v2500
      %v2701 = vpack.c.b16 %v2509, %v2501
      %v2702 = vpack.c.b16 %v2510, %v2502
      %v2703 = vpack.c.b16 %v2519, %v2511
      %v2704 = vpack.c.b16 %v2520, %v2512
      %v2705 = vpack.c.b16 %v2521, %v2513
      %v2706 = vpack.c.b16 %v2522, %v2514
      %v2707 = vpack.c.b16 %v2523, %v2515
      %v2708 = vpack.c.b16 %v2524, %v2516
      %v2709 = vpack.c.b16 %v2525, %v2517
      %v2710 = vpack.c.b16 %v2526, %v2518
      %v2711 = vpack.c.b16 %v2535, %v2527
      %v2712 = vpack.c.b16 %v2536, %v2528
      %v2713 = vpack.c.b16 %v2537, %v2529
      %v2714 = vpack.c.b16 %v2538, %v2530
      %v2715 = vpack.c.b16 %v2539, %v2531
      %v2716 = vpack.c.b16 %v2540, %v2532
      %v2717 = vpack.c.b16 %v2541, %v2533
      %v2718 = vpack.c.b16 %v2542, %v2534
      %v2719 = vpack.c.b16 %v2551, %v2543
      %v2720 = vpack.c.b16 %v2552, %v2544
      %v2721 = vpack.c.b16 %v2553, %v2545
      %v2722 = vpack.c.b16 %v2554, %v2546
      %v2723 = vpack.c.b16 %v2555, %v2547
      %v2724 = vpack.c.b16 %v2556, %v2548
      %v2725 = vpack.c.b16 %v2557, %v2549
      %v2726 = vpack.c.b16 %v2558, %v2550
      %v2727 = vpack.c.b16 %v2567, %v2559
      %v2728 = vpack.c.b16 %v2568, %v2560
      %v2729 = vpack.c.b16 %v2569, %v2561
      %v2730 = vpack.c.b16 %v2570, %v2562
      %v2731 = vpack.c.b16 %v2571, %v2563
      %v2732 = vpack.c.b16 %v2572, %v2564
      %v2733 = vpack.c.b16 %v2573, %v2565
      %v2734 = vpack.c.b16 %v2574, %v2566
      %v2735 = vpack.c.b16 %v2583, %v2575
      %v2736 = vpack.c.b16 %v2584, %v2576
      %v2737 = vpack.c.b16 %v2585, %v2577
      %v2738 = vpack.c.b16 %v2586, %v2578
      %v2739 = vpack.c.b16 %v2587, %v2579
      %v2740 = vpack.c.b16 %v2588, %v2580
      %v2741 = vpack.c.b16 %v2589, %v2581
      %v2742 = vpack.c.b16 %v2590, %v2582
      %v2743 = vpack.c.b16 %v2599, %v2591
      %v2744 = vpack.c.b16 %v2600, %v2592
      %v2745 = vpack.c.b16 %v2601, %v2593
      %v2746 = vpack.c.b16 %v2602, %v2594
      %v2747 = vpack.c.b16 %v2603, %v2595
      %v2748 = vpack.c.b16 %v2604, %v2596
      %v2749 = vpack.c.b16 %v2605, %v2597
      %v2750 = vpack.c.b16 %v2606, %v2598
      %v2751 = vpack.c.b16 %v2615, %v2607
      %v2752 = vpack.c.b16 %v2616, %v2608
      %v2753 = vpack.c.b16 %v2617, %v2609
      %v2754 = vpack.c.b16 %v2618, %v2610
      %v2755 = vpack.c.b16 %v2619, %v2611
      %v2756 = vpack.c.b16 %v2620, %v2612
      %v2757 = vpack.c.b16 %v2621, %v2613
      %v2758 = vpack.c.b16 %v2622, %v2614
      %v2759 = vpack.c.b16 %v2631, %v2623
      %v2760 = vpack.c.b16 %v2632, %v2624
      %v2761 = vpack.c.b16 %v2633, %v2625
      %v2762 = vpack.c.b16 %v2634, %v2626
      %v2763 = vpack.c.b16 %v2635, %v2627
      %v2764 = vpack.c.b16 %v2636, %v2628
      %v2765 = vpack.c.b16 %v2637, %v2629
      %v2766 = vpack.c.b16 %v2638, %v2630
      %2895 = vmatprep.subr.bf16.mxu0 %v2696
      %2896 = vmatpush1.bf16.msra.mxu0 %v2695
      %2897 = vmatprep.subr.bf16.mxu0 %v2688
      %2898 = vmatpush1.bf16.msra.mxu0 %v2687
      %2899 = vmatprep.subr.bf16.mxu0 %v2680
      %2900 = vmatpush1.bf16.msra.mxu0 %v2679
      %2901 = vmatprep.subr.bf16.mxu0 %v2672
      %2902 = vmatpush1.bf16.msra.mxu0 %v2671
      %2903 = vmatprep.subr.bf16.mxu0 %v2664
      %2904 = vmatpush1.bf16.msra.mxu0 %v2663
      %2905 = vmatprep.subr.bf16.mxu0 %v2656
      %2906 = vmatpush1.bf16.msra.mxu0 %v2655
      %2907 = vmatprep.subr.bf16.mxu0 %v2648
      %2908 = vmatpush1.bf16.msra.mxu0 %v2647
      %2909 = vmatprep.subr.bf16.mxu0 %v2640
      %2910 = vmatpush1.bf16.msra.mxu0 %v2639
      %2911 = vmatprep.subr.bf16.mxu0 %v2760
      %2912 = vmatpush2.bf16.msra.mxu0 %v2759
      %2913 = vmatprep.subr.bf16.mxu0 %v2752
      %2914 = vmatpush2.bf16.msra.mxu0 %v2751
      %2915 = vmatprep.subr.bf16.mxu0 %v2744
      %2916 = vmatpush2.bf16.msra.mxu0 %v2743
      %2917 = vmatprep.subr.bf16.mxu0 %v2736
      %2918 = vmatpush2.bf16.msra.mxu0 %v2735
      %2919 = vmatprep.subr.bf16.mxu0 %v2728
      %2920 = vmatpush2.bf16.msra.mxu0 %v2727
      %2921 = vmatprep.subr.bf16.mxu0 %v2720
      %2922 = vmatpush2.bf16.msra.mxu0 %v2719
      %2923 = vmatprep.subr.bf16.mxu0 %v2712
      %2924 = vmatpush2.bf16.msra.mxu0 %v2711
      %2925 = vmatprep.subr.bf16.mxu0 %v2704
      %2926 = vmatpush2.bf16.msra.mxu0 %v2703
      %2927 = vmatprep.mubr.bf16.mxu0 %v2252
      %2928 = vmatmul.mubr.bf16.gmra.mxu0 %v2249
      %v2929 = vpop.f32.mrf.mxu0
      %v2930 = vadd.f32 0.0, %v2929
      %v2931 = vpop.f32.mrf.mxu0
      %v2932 = vadd.f32 0.0, %v2931
      %v2933 = vpop.f32.mrf.mxu0
      %v2934 = vadd.f32 0.0, %v2933
      %v2935 = vpop.f32.mrf.mxu0
      %v2936 = vadd.f32 0.0, %v2935
      %2937 = vdwg.mxu0
      %2938 = vmatprep.subr.bf16.mxu0 %v2698
      %2939 = vmatpush1.bf16.msra.mxu0 %v2697
      %2940 = vmatprep.subr.bf16.mxu0 %v2690
      %2941 = vmatpush1.bf16.msra.mxu0 %v2689
      %2942 = vmatprep.subr.bf16.mxu0 %v2682
      %2943 = vmatpush1.bf16.msra.mxu0 %v2681
      %2944 = vmatprep.subr.bf16.mxu0 %v2674
      %2945 = vmatpush1.bf16.msra.mxu0 %v2673
      %2946 = vmatprep.subr.bf16.mxu0 %v2666
      %2947 = vmatpush1.bf16.msra.mxu0 %v2665
      %2948 = vmatprep.subr.bf16.mxu0 %v2658
      %2949 = vmatpush1.bf16.msra.mxu0 %v2657
      %2950 = vmatprep.subr.bf16.mxu0 %v2650
      %2951 = vmatpush1.bf16.msra.mxu0 %v2649
      %2952 = vmatprep.subr.bf16.mxu0 %v2642
      %2953 = vmatpush1.bf16.msra.mxu0 %v2641
      %2954 = vmatprep.subr.bf16.mxu0 %v2762
      %2955 = vmatpush2.bf16.msra.mxu0 %v2761
      %2956 = vmatprep.subr.bf16.mxu0 %v2754
      %2957 = vmatpush2.bf16.msra.mxu0 %v2753
      %2958 = vmatprep.subr.bf16.mxu0 %v2746
      %2959 = vmatpush2.bf16.msra.mxu0 %v2745
      %2960 = vmatprep.subr.bf16.mxu0 %v2738
      %2961 = vmatpush2.bf16.msra.mxu0 %v2737
      %2962 = vmatprep.subr.bf16.mxu0 %v2730
      %2963 = vmatpush2.bf16.msra.mxu0 %v2729
      %2964 = vmatprep.subr.bf16.mxu0 %v2722
      %2965 = vmatpush2.bf16.msra.mxu0 %v2721
      %2966 = vmatprep.subr.bf16.mxu0 %v2714
      %2967 = vmatpush2.bf16.msra.mxu0 %v2713
      %2968 = vmatprep.subr.bf16.mxu0 %v2706
      %2969 = vmatpush2.bf16.msra.mxu0 %v2705
      %2970 = vmatprep.mubr.bf16.mxu0 %v2252
      %2971 = vmatmul.mubr.bf16.gmra.mxu0 %v2249
      %v2972 = vpop.f32.mrf.mxu0
      %v2973 = vadd.f32 0.0, %v2972
      %v2974 = vpop.f32.mrf.mxu0
      %v2975 = vadd.f32 0.0, %v2974
      %v2976 = vpop.f32.mrf.mxu0
      %v2977 = vadd.f32 0.0, %v2976
      %v2978 = vpop.f32.mrf.mxu0
      %v2979 = vadd.f32 0.0, %v2978
      %2980 = vdwg.mxu0
      %2981 = vmatprep.subr.bf16.mxu0 %v2700
      %2982 = vmatpush1.bf16.msra.mxu0 %v2699
      %2983 = vmatprep.subr.bf16.mxu0 %v2692
      %2984 = vmatpush1.bf16.msra.mxu0 %v2691
      %2985 = vmatprep.subr.bf16.mxu0 %v2684
      %2986 = vmatpush1.bf16.msra.mxu0 %v2683
      %2987 = vmatprep.subr.bf16.mxu0 %v2676
      %2988 = vmatpush1.bf16.msra.mxu0 %v2675
      %2989 = vmatprep.subr.bf16.mxu0 %v2668
      %2990 = vmatpush1.bf16.msra.mxu0 %v2667
      %2991 = vmatprep.subr.bf16.mxu0 %v2660
      %2992 = vmatpush1.bf16.msra.mxu0 %v2659
      %2993 = vmatprep.subr.bf16.mxu0 %v2652
      %2994 = vmatpush1.bf16.msra.mxu0 %v2651
      %2995 = vmatprep.subr.bf16.mxu0 %v2644
      %2996 = vmatpush1.bf16.msra.mxu0 %v2643
      %2997 = vmatprep.subr.bf16.mxu0 %v2764
      %2998 = vmatpush2.bf16.msra.mxu0 %v2763
      %2999 = vmatprep.subr.bf16.mxu0 %v2756
      %3000 = vmatpush2.bf16.msra.mxu0 %v2755
      %3001 = vmatprep.subr.bf16.mxu0 %v2748
      %3002 = vmatpush2.bf16.msra.mxu0 %v2747
      %3003 = vmatprep.subr.bf16.mxu0 %v2740
      %3004 = vmatpush2.bf16.msra.mxu0 %v2739
      %3005 = vmatprep.subr.bf16.mxu0 %v2732
      %3006 = vmatpush2.bf16.msra.mxu0 %v2731
      %3007 = vmatprep.subr.bf16.mxu0 %v2724
      %3008 = vmatpush2.bf16.msra.mxu0 %v2723
      %3009 = vmatprep.subr.bf16.mxu0 %v2716
      %3010 = vmatpush2.bf16.msra.mxu0 %v2715
      %3011 = vmatprep.subr.bf16.mxu0 %v2708
      %3012 = vmatpush2.bf16.msra.mxu0 %v2707
      %3013 = vmatprep.mubr.bf16.mxu0 %v2252
      %3014 = vmatmul.mubr.bf16.gmra.mxu0 %v2249
      %v3015 = vpop.f32.mrf.mxu0
      %v3016 = vadd.f32 0.0, %v3015
      %v3017 = vpop.f32.mrf.mxu0
      %v3018 = vadd.f32 0.0, %v3017
      %v3019 = vpop.f32.mrf.mxu0
      %v3020 = vadd.f32 0.0, %v3019
      %v3021 = vpop.f32.mrf.mxu0
      %v3022 = vadd.f32 0.0, %v3021
      %3023 = vdwg.mxu0
      %3024 = vmatprep.subr.bf16.mxu0 %v2702
      %3025 = vmatpush1.bf16.msra.mxu0 %v2701
      %3026 = vmatprep.subr.bf16.mxu0 %v2694
      %3027 = vmatpush1.bf16.msra.mxu0 %v2693
      %3028 = vmatprep.subr.bf16.mxu0 %v2686
      %3029 = vmatpush1.bf16.msra.mxu0 %v2685
      %3030 = vmatprep.subr.bf16.mxu0 %v2678
      %3031 = vmatpush1.bf16.msra.mxu0 %v2677
      %3032 = vmatprep.subr.bf16.mxu0 %v2670
      %3033 = vmatpush1.bf16.msra.mxu0 %v2669
      %3034 = vmatprep.subr.bf16.mxu0 %v2662
      %3035 = vmatpush1.bf16.msra.mxu0 %v2661
      %3036 = vmatprep.subr.bf16.mxu0 %v2654
      %3037 = vmatpush1.bf16.msra.mxu0 %v2653
      %3038 = vmatprep.subr.bf16.mxu0 %v2646
      %3039 = vmatpush1.bf16.msra.mxu0 %v2645
      %3040 = vmatprep.subr.bf16.mxu0 %v2766
      %3041 = vmatpush2.bf16.msra.mxu0 %v2765
      %3042 = vmatprep.subr.bf16.mxu0 %v2758
      %3043 = vmatpush2.bf16.msra.mxu0 %v2757
      %3044 = vmatprep.subr.bf16.mxu0 %v2750
      %3045 = vmatpush2.bf16.msra.mxu0 %v2749
      %3046 = vmatprep.subr.bf16.mxu0 %v2742
      %3047 = vmatpush2.bf16.msra.mxu0 %v2741
      %3048 = vmatprep.subr.bf16.mxu0 %v2734
      %3049 = vmatpush2.bf16.msra.mxu0 %v2733
      %3050 = vmatprep.subr.bf16.mxu0 %v2726
      %3051 = vmatpush2.bf16.msra.mxu0 %v2725
      %3052 = vmatprep.subr.bf16.mxu0 %v2718
      %3053 = vmatpush2.bf16.msra.mxu0 %v2717
      %3054 = vmatprep.subr.bf16.mxu0 %v2710
      %3055 = vmatpush2.bf16.msra.mxu0 %v2709
      %3056 = vmatprep.mubr.bf16.mxu0 %v2252
      %3057 = vmatmul.mubr.bf16.gmra.mxu0 %v2249
      %v3058 = vpop.f32.mrf.mxu0
      %v3059 = vadd.f32 0.0, %v3058
      %v3060 = vpop.f32.mrf.mxu0
      %v3061 = vadd.f32 0.0, %v3060
      %v3062 = vpop.f32.mrf.mxu0
      %v3063 = vadd.f32 0.0, %v3062
      %v3064 = vpop.f32.mrf.mxu0
      %v3065 = vadd.f32 0.0, %v3064
      %3066 = vdwg.mxu0
      %v3067 = vadd.f32 %v1976, %v2930
      %v3068 = vadd.f32 %v1978, %v2932
      %v3069 = vadd.f32 %v2019, %v2973
      %v3070 = vadd.f32 %v2021, %v2975
      %v3071 = vadd.f32 %v2062, %v3016
      %v3072 = vadd.f32 %v2064, %v3018
      %v3073 = vadd.f32 %v2105, %v3059
      %v3074 = vadd.f32 %v2107, %v3061
      %v3075 = vadd.f32 %v1980, %v2934
      %v3076 = vadd.f32 %v1982, %v2936
      %v3077 = vadd.f32 %v2023, %v2977
      %v3078 = vadd.f32 %v2025, %v2979
      %v3079 = vadd.f32 %v2066, %v3020
      %v3080 = vadd.f32 %v2068, %v3022
      %v3081 = vadd.f32 %v2109, %v3063
      %v3082 = vadd.f32 %v2111, %v3065
      %v3083 = vld [vmem:[%s3] sm:$0xff]
      %v3085 = vlaneseq
      %v3086 = vshrl.u32 %v3085, 7
      %v3087 = vsub.s32 0, %v3086
      %v3088 = vrot.slane %v3083, %v3087
      %v3089 = vlaneseq
      %v3090 = vshrl.u32 %v3089, 7
      %v3091 = vsub.s32 1, %v3090
      %v3092 = vrot.slane %v3083, %v3091
      %v3093 = vlaneseq
      %v3094 = vshrl.u32 %v3093, 7
      %v3095 = vsub.s32 2, %v3094
      %v3096 = vrot.slane %v3083, %v3095
      %v3097 = vlaneseq
      %v3098 = vshrl.u32 %v3097, 7
      %v3099 = vsub.s32 3, %v3098
      %v3100 = vrot.slane %v3083, %v3099
      %v3101 = vlaneseq
      %v3102 = vshrl.u32 %v3101, 7
      %v3103 = vsub.s32 4, %v3102
      %v3104 = vrot.slane %v3083, %v3103
      %v3105 = vlaneseq
      %v3106 = vshrl.u32 %v3105, 7
      %v3107 = vsub.s32 5, %v3106
      %v3108 = vrot.slane %v3083, %v3107
      %v3109 = vlaneseq
      %v3110 = vshrl.u32 %v3109, 7
      %v3111 = vsub.s32 6, %v3110
      %v3112 = vrot.slane %v3083, %v3111
      %v3113 = vlaneseq
      %v3114 = vshrl.u32 %v3113, 7
      %v3115 = vsub.s32 7, %v3114
      %v3116 = vrot.slane %v3083, %v3115
      %v3125 = vadd.f32 %v3067, %v3088
      %v3126 = vadd.f32 %v3068, %v3092
      %v3127 = vadd.f32 %v3069, %v3096
      %v3128 = vadd.f32 %v3070, %v3100
      %v3129 = vadd.f32 %v3071, %v3104
      %v3130 = vadd.f32 %v3072, %v3108
      %v3131 = vadd.f32 %v3073, %v3112
      %v3132 = vadd.f32 %v3074, %v3116
      %v3133 = vadd.f32 %v3075, %v3088
      %v3134 = vadd.f32 %v3076, %v3092
      %v3135 = vadd.f32 %v3077, %v3096
      %v3136 = vadd.f32 %v3078, %v3100
      %v3137 = vadd.f32 %v3079, %v3104
      %v3138 = vadd.f32 %v3080, %v3108
      %v3139 = vadd.f32 %v3081, %v3112
      %v3140 = vadd.f32 %v3082, %v3116
      %s3141 = sld [smem:[#allocation3]]
      %vm3142 = vcmp.ge.f32.partialorder %v3125, 0.0
      %vm3143 = vcmp.ge.f32.partialorder %v3126, 0.0
      %vm3144 = vcmp.ge.f32.partialorder %v3127, 0.0
      %vm3145 = vcmp.ge.f32.partialorder %v3128, 0.0
      %vm3146 = vcmp.ge.f32.partialorder %v3129, 0.0
      %vm3147 = vcmp.ge.f32.partialorder %v3130, 0.0
      %vm3148 = vcmp.ge.f32.partialorder %v3131, 0.0
      %vm3149 = vcmp.ge.f32.partialorder %v3132, 0.0
      %vm3150 = vcmp.ge.f32.partialorder %v3133, 0.0
      %vm3151 = vcmp.ge.f32.partialorder %v3134, 0.0
      %vm3152 = vcmp.ge.f32.partialorder %v3135, 0.0
      %vm3153 = vcmp.ge.f32.partialorder %v3136, 0.0
      %vm3154 = vcmp.ge.f32.partialorder %v3137, 0.0
      %vm3155 = vcmp.ge.f32.partialorder %v3138, 0.0
      %vm3156 = vcmp.ge.f32.partialorder %v3139, 0.0
      %vm3157 = vcmp.ge.f32.partialorder %v3140, 0.0
      %v3158 = vstv %s3141
      %v3159 = vmul.f32 %v3158, %v3125
      %v3160 = vmul.f32 %v3158, %v3126
      %v3161 = vmul.f32 %v3158, %v3127
      %v3162 = vmul.f32 %v3158, %v3128
      %v3163 = vmul.f32 %v3158, %v3129
      %v3164 = vmul.f32 %v3158, %v3130
      %v3165 = vmul.f32 %v3158, %v3131
      %v3166 = vmul.f32 %v3158, %v3132
      %v3167 = vmul.f32 %v3158, %v3133
      %v3168 = vmul.f32 %v3158, %v3134
      %v3169 = vmul.f32 %v3158, %v3135
      %v3170 = vmul.f32 %v3158, %v3136
      %v3171 = vmul.f32 %v3158, %v3137
      %v3172 = vmul.f32 %v3158, %v3138
      %v3173 = vmul.f32 %v3158, %v3139
      %v3174 = vmul.f32 %v3158, %v3140
      %v3175 = vsel %vm3142, %v3125, %v3159
      %v3176 = vsel %vm3143, %v3126, %v3160
      %v3177 = vsel %vm3144, %v3127, %v3161
      %v3178 = vsel %vm3145, %v3128, %v3162
      %v3179 = vsel %vm3146, %v3129, %v3163
      %v3180 = vsel %vm3147, %v3130, %v3164
      %v3181 = vsel %vm3148, %v3131, %v3165
      %v3182 = vsel %vm3149, %v3132, %v3166
      %v3183 = vsel %vm3150, %v3133, %v3167
      %v3184 = vsel %vm3151, %v3134, %v3168
      %v3185 = vsel %vm3152, %v3135, %v3169
      %v3186 = vsel %vm3153, %v3136, %v3170
      %v3187 = vsel %vm3154, %v3137, %v3171
      %v3188 = vsel %vm3155, %v3138, %v3172
      %v3189 = vsel %vm3156, %v3139, %v3173
      %v3190 = vsel %vm3157, %v3140, %v3174
      %3191 = vst [vmem:[%s174] sm:$0xff] %v3175
      %3192 = vst [vmem:[%s174 + $0x8] sm:$0xff] %v3176
      %3193 = vst [vmem:[%s174 + $0x10] sm:$0xff] %v3177
      %3194 = vst [vmem:[%s174 + $0x18] sm:$0xff] %v3178
      %3195 = vst [vmem:[%s174 + $0x20] sm:$0xff] %v3179
      %3196 = vst [vmem:[%s174 + $0x28] sm:$0xff] %v3180
      %3197 = vst [vmem:[%s174 + $0x30] sm:$0xff] %v3181
      %3198 = vst [vmem:[%s174 + $0x38] sm:$0xff] %v3182
      %3199 = vst [vmem:[%s174 + $0x40] sm:$0xff] %v3183
      %3200 = vst [vmem:[%s174 + $0x48] sm:$0xff] %v3184
      %3201 = vst [vmem:[%s174 + $0x50] sm:$0xff] %v3185
      %3202 = vst [vmem:[%s174 + $0x58] sm:$0xff] %v3186
      %3203 = vst [vmem:[%s174 + $0x60] sm:$0xff] %v3187
      %3204 = vst [vmem:[%s174 + $0x68] sm:$0xff] %v3188
      %3205 = vst [vmem:[%s174 + $0x70] sm:$0xff] %v3189
      %3206 = vst [vmem:[%s174 + $0x78] sm:$0xff] %v3190
      %s3207 = smul.u32 2, %s16
      %p3208 = scmp.lt.s32.totalorder %s3207, 3
      %s3209 = scalar_select %p3208, %s3207, 3
      %s3210 = smul.addr %s3209, 8
      %s3211 = smul.addr %s3210, 8
      %s3212 = scalar_lea.vmem %s4, %s3211
      // Predicated region
      $region33: #{srnet_forward.6} parent=31 // pred_check
        %p3213 = pneg %p102
      $region34: #{srnet_forward.6} parent=31 // pred_check_branch
        %3215 = sbr.rel (%p3213) target = $region36
      $region35: #{srnet_forward.6} parent=31 // pred_region
        %s3216 = smul.u32 2, %s16
      $region36: #{srnet_forward.6} parent=31 // pred_fallthru
        _
    $region32: #{srnet_forward.6} parent=5 // pred_fallthru
      _
    %p3217 = scmp.le.s32.totalorder 2, %s11
    // Predicated region
    $region37: #{srnet_forward.6} parent=5 // pred_check
      %p3218 = pneg %p3217
    $region38: #{srnet_forward.6} parent=5 // pred_check_branch
      %3220 = sbr.rel (%p3218) target = $region40
    $region39: #{srnet_forward.6} parent=5 // pred_region
      %s3221 = ssub.s32 %s11, 2
      // Predicated region
      $region41: #{srnet_forward.6} parent=39 // pred_check
        %p3222 = pneg %p108
      $region42: #{srnet_forward.6} parent=39 // pred_check_branch
        %3224 = sbr.rel (%p3222) target = $region44
      $region43: #{srnet_forward.6} parent=39 // pred_region
        %s3225 = smul.u32 2, %s17
        %p3226 = scmp.lt.s32.totalorder %s3225, 3
        %s3227 = scalar_select %p3226, %s3225, 3
        %s3228 = smul.addr %s3227, 8
        %s3229 = smul.addr %s3228, 8
        %s3230 = scalar_lea.vmem %s4, %s3229
      $region44: #{srnet_forward.6} parent=39 // pred_fallthru
        _
    $region40: #{srnet_forward.6} parent=5 // pred_fallthru
      _
  $region6: #{srnet_forward.6} parent=0 // loop_footer
    %s15 = sadd.s32 1, %s11
  $region7: #{srnet_forward.6} parent=0 // loop_footer_branch
    %10 = sbr.rel target = $region3
  $region8: #{srnet_forward.6} parent=0 // loop_exit
    _

// kernel: srnet_forward.7
$region0: #{srnet_forward.7}
  #allocation0 [shape = 'u32[]', space=smem, size = 0x4, offset = 0x4, fixed_abs, tag = 'smem constant byte address 0x4 - core index']
  #allocation1 [shape = 'u32[144,128]{1,0:T(1,128)}', space=vmem, size = 0x12000, scoped, tag = 'internal scratch']
  #allocation2 [shape = 's32[1]{0}', space=sflag, size = 0x4, scoped, tag = 'scoped memory for srnet_forward.7']
  #allocation3 [shape = 'f32[1]{0:T(128)S(6)}', space=smem, size = 0x200, scoped, tag = 'prefetched SMEM operand 0']
  %s0 = inlined_call_operand.<no memory space> [shape: f32[1], index: 0, kind: input, shape index: {}]
  %s1 = inlined_call_operand.vmem [shape: f32[2,32,512], index: 1, kind: input, shape index: {}]
  %s2 = inlined_call_operand.vmem [shape: bf16[9,512,96], index: 2, kind: input, shape index: {}]
  %s3 = inlined_call_operand.vmem [shape: f32[1,96], index: 3, kind: input, shape index: {}]
  %s4 = inlined_call_operand.vmem [shape: f32[64,96], index: 4, kind: output, shape index: {}]
  %s5 = sld [smem:[#allocation0]]
  $region45: #{srnet_forward.7} parent=0
    _
  %s7 = ssub.s32 1, %s5
  %s8 = scalar_select 0, %s7, %s5
  %9 = sst [smem:[#allocation3]] %s0
  loop: start=0, step=1, limit=4
  $region2: #{srnet_forward.7} parent=0 // loop_pre_header
    _
  $region3: #{srnet_forward.7} parent=0 // loop_header
    %s11 = sphi 0, %s15
    %p12 = scmp.ge.s32.totalorder %s11, 4
    %s21 = sphi 0, %s23
    %s24 = sphi 0, %s21
    %s25 = sphi 0, %s24
    %s41 = sphi 0, %s25
    %s45 = sphi 0, %s45
    %s47 = sphi 0, %s45
    %s48 = sphi 0, %s47
    %s62 = sphi 0, %s48
    %s66 = sphi 0, %s66
    %s68 = sphi 0, %s66
    %s69 = sphi 0, %s68
    %s83 = sphi 0, %s69
    %s89 = sphi 0, %s91
    %s92 = sphi 0, %s89
    %s93 = sphi 0, %s92
    %s109 = sphi 0, %s93
  $region4: #{srnet_forward.7} parent=0 // loop_header_branch
    %14 = sbr.rel (%p12) target = $region8
  $region5: #{srnet_forward.7} parent=0 // loop_body
    %s16 = ssub.s32 %s11, 1
    %s17 = ssub.s32 %s11, 2
    %s18 = sadd.s32 %s11, 1
    %s19 = ssub.s32 %s11, %s18
    %p20 = scmp.eq.s32.totalorder %s19, 0
    %s22 = sadd.s32 %s21, 1
    %s23 = scalar_select %p20, %s21, %s22
    %p26 = pneg %p20
    %p27 = scmp.eq.s32.totalorder %s11, 1
    %p28 = por %p26, %p27
    %p29 = scmp.ne.s32.totalorder %s21, %s24
    %p30 = scmp.eq.s32.totalorder %s11, 0
    %p31 = por %p29, %p30
    %p32 = scmp.ne.s32.totalorder %s21, %s24
    %p33 = scmp.eq.s32.totalorder %s16, 1
    %p34 = por %p32, %p33
    %p35 = scmp.ne.s32.totalorder %s24, %s25
    %p36 = scmp.eq.s32.totalorder %s16, 0
    %p37 = por %p35, %p36
    %p38 = scmp.ne.s32.totalorder %s24, %s25
    %p39 = scmp.eq.s32.totalorder %s17, 1
    %p40 = por %p38, %p39
    %p42 = scmp.ne.s32.totalorder %s25, %s41
    %p43 = scmp.eq.s32.totalorder %s17, 0
    %p44 = por %p42, %p43
    %s46 = sadd.s32 %s45, 1
    %p49 = scmp.eq.s32.totalorder %s11, 1
    %p50 = scmp.ne.s32.totalorder %s45, %s47
    %p51 = scmp.eq.s32.totalorder %s11, 0
    %p52 = por %p50, %p51
    %p53 = scmp.ne.s32.totalorder %s45, %s47
    %p54 = scmp.eq.s32.totalorder %s16, 1
    %p55 = por %p53, %p54
    %p56 = scmp.ne.s32.totalorder %s47, %s48
    %p57 = scmp.eq.s32.totalorder %s16, 0
    %p58 = por %p56, %p57
    %p59 = scmp.ne.s32.totalorder %s47, %s48
    %p60 = scmp.eq.s32.totalorder %s17, 1
    %p61 = por %p59, %p60
    %p63 = scmp.ne.s32.totalorder %s48, %s62
    %p64 = scmp.eq.s32.totalorder %s17, 0
    %p65 = por %p63, %p64
    %s67 = sadd.s32 %s66, 1
    %p70 = scmp.eq.s32.totalorder %s11, 1
    %p71 = scmp.ne.s32.totalorder %s66, %s68
    %p72 = scmp.eq.s32.totalorder %s11, 0
    %p73 = por %p71, %p72
    %p74 = scmp.ne.s32.totalorder %s66, %s68
    %p75 = scmp.eq.s32.totalorder %s16, 1
    %p76 = por %p74, %p75
    %p77 = scmp.ne.s32.totalorder %s68, %s69
    %p78 = scmp.eq.s32.totalorder %s16, 0
    %p79 = por %p77, %p78
    %p80 = scmp.ne.s32.totalorder %s68, %s69
    %p81 = scmp.eq.s32.totalorder %s17, 1
    %p82 = por %p80, %p81
    %p84 = scmp.ne.s32.totalorder %s69, %s83
    %p85 = scmp.eq.s32.totalorder %s17, 0
    %p86 = por %p84, %p85
    %s87 = ssub.s32 %s11, %s18
    %p88 = scmp.eq.s32.totalorder %s87, 0
    %s90 = sadd.s32 %s89, 1
    %s91 = scalar_select %p88, %s89, %s90
    %p94 = pneg %p88
    %p95 = scmp.eq.s32.totalorder %s11, 1
    %p96 = por %p94, %p95
    %p97 = scmp.ne.s32.totalorder %s89, %s92
    %p98 = scmp.eq.s32.totalorder %s11, 0
    %p99 = por %p97, %p98
    %p100 = scmp.ne.s32.totalorder %s89, %s92
    %p101 = scmp.eq.s32.totalorder %s16, 1
    %p102 = por %p100, %p101
    %p103 = scmp.ne.s32.totalorder %s92, %s93
    %p104 = scmp.eq.s32.totalorder %s16, 0
    %p105 = por %p103, %p104
    %p106 = scmp.ne.s32.totalorder %s92, %s93
    %p107 = scmp.eq.s32.totalorder %s17, 1
    %p108 = por %p106, %p107
    %p110 = scmp.ne.s32.totalorder %s93, %s109
    %p111 = scmp.eq.s32.totalorder %s17, 0
    %p112 = por %p110, %p111
    %p113 = scmp.le.s32.totalorder 1, %s11
    %p114 = scmp.lt.s32.totalorder %s11, 3
    %p115 = pnand %p113, %p114
    %p116 = pneg %p115
    // Predicated region
    $region9: #{srnet_forward.7} parent=5 // pred_check
      _
    $region10: #{srnet_forward.7} parent=5 // pred_check_branch
      %118 = sbr.rel (%p115) target = $region12
    $region11: #{srnet_forward.7} parent=5 // pred_region
      %s119 = ssub.s32 %s11, 1
      // Predicated region
      $region13: #{srnet_forward.7} parent=11 // pred_check
        %p120 = pneg %p58
      $region14: #{srnet_forward.7} parent=11 // pred_check_branch
        %122 = sbr.rel (%p120) target = $region16
      $region15: #{srnet_forward.7} parent=11 // pred_region
        _
      $region16: #{srnet_forward.7} parent=11 // pred_fallthru
        _
      // Predicated region
      $region17: #{srnet_forward.7} parent=11 // pred_check
        %p123 = pneg %p79
      $region18: #{srnet_forward.7} parent=11 // pred_check_branch
        %125 = sbr.rel (%p123) target = $region20
      $region19: #{srnet_forward.7} parent=11 // pred_region
        _
      $region20: #{srnet_forward.7} parent=11 // pred_fallthru
        _
    $region12: #{srnet_forward.7} parent=5 // pred_fallthru
      _
    %p126 = scmp.lt.s32.totalorder %s11, 2
    // Predicated region
    $region21: #{srnet_forward.7} parent=5 // pred_check
      %p127 = pneg %p126
    $region22: #{srnet_forward.7} parent=5 // pred_check_branch
      %129 = sbr.rel (%p127) target = $region24
    $region23: #{srnet_forward.7} parent=5 // pred_region
      // Predicated region
      $region25: #{srnet_forward.7} parent=23 // pred_check
        %p130 = pneg %p31
      $region26: #{srnet_forward.7} parent=23 // pred_check_branch
        %132 = sbr.rel (%p130) target = $region28
      $region27: #{srnet_forward.7} parent=23 // pred_region
        %p133 = scmp.lt.s32.totalorder %s11, 1
        %s134 = scalar_select %p133, %s11, 1
        %s135 = smul.addr %s134, 16
        %s136 = smul.addr %s135, 8
        %s137 = scalar_lea.vmem %s1, %s136
      $region28: #{srnet_forward.7} parent=23 // pred_fallthru
        _
    $region24: #{srnet_forward.7} parent=5 // pred_fallthru
      _
    %p138 = scmp.le.s32.totalorder 1, %s11
    %p139 = scmp.lt.s32.totalorder %s11, 3
    %p140 = pnand %p138, %p139
    %p141 = pneg %p140
    // Predicated region
    $region29: #{srnet_forward.7} parent=5 // pred_check
      _
    $region30: #{srnet_forward.7} parent=5 // pred_check_branch
      %143 = sbr.rel (%p140) target = $region32
    $region31: #{srnet_forward.7} parent=5 // pred_region
      %s144 = ssub.s32 %s11, 1
      %p145 = scmp.lt.s32.totalorder %s16, 1
      %s146 = scalar_select %p145, %s16, 1
      %s147 = smul.addr %s146, 16
      %s148 = smul.addr %s147, 8
      %s149 = scalar_lea.vmem %s1, %s148
      %p150 = pneg %p37
      %p151 = pneg %p34
      %p152 = pneg %p58
      %p153 = pneg %p55
      %p154 = pneg %p79
      %p155 = pneg %p76
      %p156 = pneg %p105
      %p157 = pneg %p102
      %s158 = smul.u32 4, %s16
      %p159 = scmp.lt.s32.totalorder %s158, 7
      %s160 = scalar_select %p159, %s158, 7
      %s161 = smul.addr %s160, 8
      %s162 = scalar_lea.vmem %s4, %s161
      %p163 = scmp.lt.s32.totalorder %s16, 1
      %s164 = scalar_select %p163, %s16, 1
      %s165 = smul.addr %s164, 16
      %s166 = smul.addr %s165, 8
      %s167 = scalar_lea.vmem %s1, %s166
      %s168 = smul.u32 4, %s16
      %p169 = scmp.lt.s32.totalorder %s168, 7
      %s170 = scalar_select %p169, %s168, 7
      %s171 = smul.addr %s170, 8
      %s172 = scalar_lea.vmem %s4, %s171
      %s173 = smul.u32 4, %s16
      %v175 = vld [vmem:[%s167] sm:$0xff]
      %v176 = vld [vmem:[%s167 + $0x8] sm:$0xff]
      %v177 = vld [vmem:[%s167 + $0x10] sm:$0xff]
      %v178 = vld [vmem:[%s167 + $0x18] sm:$0xff]
      %v179 = vld [vmem:[%s167 + $0x20] sm:$0xff]
      %v180 = vld [vmem:[%s167 + $0x28] sm:$0xff]
      %v181 = vld [vmem:[%s167 + $0x30] sm:$0xff]
      %v182 = vld [vmem:[%s167 + $0x38] sm:$0xff]
      %v183 = vld [vmem:[%s167 + $0x40] sm:$0xff]
      %v184 = vld [vmem:[%s167 + $0x48] sm:$0xff]
      %v185 = vld [vmem:[%s167 + $0x50] sm:$0xff]
      %v186 = vld [vmem:[%s167 + $0x58] sm:$0xff]
      %v187 = vld [vmem:[%s167 + $0x60] sm:$0xff]
      %v188 = vld [vmem:[%s167 + $0x68] sm:$0xff]
      %v189 = vld [vmem:[%s167 + $0x70] sm:$0xff]
      %v190 = vld [vmem:[%s167 + $0x78] sm:$0xff]
      %vm207 = vcmask 1043456
      %v208 = vrot.slane %v175, 4
      %v209 = vrot.slane %v176, 4
      %v210 = vrot.slane %v177, 4
      %v211 = vrot.slane %v178, 4
      %v212 = vrot.slane %v179, 4
      %v213 = vsel %vm207, %v208, %v212
      %v214 = vrot.slane %v180, 4
      %v215 = vsel %vm207, %v209, %v214
      %v216 = vrot.slane %v181, 4
      %v217 = vsel %vm207, %v210, %v216
      %v218 = vrot.slane %v182, 4
      %v219 = vsel %vm207, %v211, %v218
      %v220 = vrot.slane %v183, 4
      %v221 = vsel %vm207, %v212, %v220
      %v222 = vrot.slane %v184, 4
      %v223 = vsel %vm207, %v214, %v222
      %v224 = vrot.slane %v185, 4
      %v225 = vsel %vm207, %v216, %v224
      %v226 = vrot.slane %v186, 4
      %v227 = vsel %vm207, %v218, %v226
      %v228 = vrot.slane %v187, 4
      %v229 = vsel %vm207, %v220, %v228
      %v230 = vrot.slane %v188, 4
      %v231 = vsel %vm207, %v222, %v230
      %v232 = vrot.slane %v189, 4
      %v233 = vsel %vm207, %v224, %v232
      %v234 = vrot.slane %v190, 4
      %v235 = vsel %vm207, %v226, %v234
      %v256 = vsel %vm207, 0.0, %v208
      %v257 = vsel %vm207, 0.0, %v209
      %v258 = vsel %vm207, 0.0, %v210
      %v259 = vsel %vm207, 0.0, %v211
      %v260 = vsel %vm207, %v228, 0.0
      %v261 = vsel %vm207, %v230, 0.0
      %v262 = vsel %vm207, %v232, 0.0
      %v263 = vsel %vm207, %v234, 0.0
      %v264 = vpack.c.bf16 %v213, %v256
      %v265 = vpack.c.bf16 %v215, %v257
      %v266 = vpack.c.bf16 %v217, %v258
      %v267 = vpack.c.bf16 %v219, %v259
      %v268 = vpack.c.bf16 %v229, %v221
      %v269 = vpack.c.bf16 %v231, %v223
      %v270 = vpack.c.bf16 %v233, %v225
      %v271 = vpack.c.bf16 %v235, %v227
      %v272 = vld [vmem:[%s2] sm:$0xf]
      %v273 = vld [vmem:[%s2 + $0x4] sm:$0xf]
      %v274 = vld [vmem:[%s2 + $0x8] sm:$0xf]
      %v275 = vld [vmem:[%s2 + $0xc] sm:$0xf]
      %v276 = vld [vmem:[%s2 + $0x10] sm:$0xf]
      %v277 = vld [vmem:[%s2 + $0x14] sm:$0xf]
      %v278 = vld [vmem:[%s2 + $0x18] sm:$0xf]
      %v279 = vld [vmem:[%s2 + $0x1c] sm:$0xf]
      %v280 = vld [vmem:[%s2 + $0x20] sm:$0xf]
      %v281 = vld [vmem:[%s2 + $0x24] sm:$0xf]
      %v282 = vld [vmem:[%s2 + $0x28] sm:$0xf]
      %v283 = vld [vmem:[%s2 + $0x2c] sm:$0xf]
      %v284 = vld [vmem:[%s2 + $0x30] sm:$0xf]
      %v285 = vld [vmem:[%s2 + $0x34] sm:$0xf]
      %v286 = vld [vmem:[%s2 + $0x38] sm:$0xf]
      %v287 = vld [vmem:[%s2 + $0x3c] sm:$0xf]
      %v288 = vld [vmem:[%s2 + $0x40] sm:$0xf]
      %v289 = vld [vmem:[%s2 + $0x44] sm:$0xf]
      %v290 = vld [vmem:[%s2 + $0x48] sm:$0xf]
      %v291 = vld [vmem:[%s2 + $0x4c] sm:$0xf]
      %v292 = vld [vmem:[%s2 + $0x50] sm:$0xf]
      %v293 = vld [vmem:[%s2 + $0x54] sm:$0xf]
      %v294 = vld [vmem:[%s2 + $0x58] sm:$0xf]
      %v295 = vld [vmem:[%s2 + $0x5c] sm:$0xf]
      %v296 = vld [vmem:[%s2 + $0x60] sm:$0xf]
      %v297 = vld [vmem:[%s2 + $0x64] sm:$0xf]
      %v298 = vld [vmem:[%s2 + $0x68] sm:$0xf]
      %v299 = vld [vmem:[%s2 + $0x6c] sm:$0xf]
      %v300 = vld [vmem:[%s2 + $0x70] sm:$0xf]
      %v301 = vld [vmem:[%s2 + $0x74] sm:$0xf]
      %v302 = vld [vmem:[%s2 + $0x78] sm:$0xf]
      %v303 = vld [vmem:[%s2 + $0x7c] sm:$0xf]
      %v304 = vld [vmem:[%s2 + $0x80] sm:$0xf]
      %v305 = vld [vmem:[%s2 + $0x84] sm:$0xf]
      %v306 = vld [vmem:[%s2 + $0x88] sm:$0xf]
      %v307 = vld [vmem:[%s2 + $0x8c] sm:$0xf]
      %v308 = vld [vmem:[%s2 + $0x90] sm:$0xf]
      %v309 = vld [vmem:[%s2 + $0x94] sm:$0xf]
      %v310 = vld [vmem:[%s2 + $0x98] sm:$0xf]
      %v311 = vld [vmem:[%s2 + $0x9c] sm:$0xf]
      %v312 = vld [vmem:[%s2 + $0xa0] sm:$0xf]
      %v313 = vld [vmem:[%s2 + $0xa4] sm:$0xf]
      %v314 = vld [vmem:[%s2 + $0xa8] sm:$0xf]
      %v315 = vld [vmem:[%s2 + $0xac] sm:$0xf]
      %v316 = vld [vmem:[%s2 + $0xb0] sm:$0xf]
      %v317 = vld [vmem:[%s2 + $0xb4] sm:$0xf]
      %v318 = vld [vmem:[%s2 + $0xb8] sm:$0xf]
      %v319 = vld [vmem:[%s2 + $0xbc] sm:$0xf]
      %v320 = vld [vmem:[%s2 + $0xc0] sm:$0xf]
      %v321 = vld [vmem:[%s2 + $0xc4] sm:$0xf]
      %v322 = vld [vmem:[%s2 + $0xc8] sm:$0xf]
      %v323 = vld [vmem:[%s2 + $0xcc] sm:$0xf]
      %v324 = vld [vmem:[%s2 + $0xd0] sm:$0xf]
      %v325 = vld [vmem:[%s2 + $0xd4] sm:$0xf]
      %v326 = vld [vmem:[%s2 + $0xd8] sm:$0xf]
      %v327 = vld [vmem:[%s2 + $0xdc] sm:$0xf]
      %v328 = vld [vmem:[%s2 + $0xe0] sm:$0xf]
      %v329 = vld [vmem:[%s2 + $0xe4] sm:$0xf]
      %v330 = vld [vmem:[%s2 + $0xe8] sm:$0xf]
      %v331 = vld [vmem:[%s2 + $0xec] sm:$0xf]
      %v332 = vld [vmem:[%s2 + $0xf0] sm:$0xf]
      %v333 = vld [vmem:[%s2 + $0xf4] sm:$0xf]
      %v334 = vld [vmem:[%s2 + $0xf8] sm:$0xf]
      %v335 = vld [vmem:[%s2 + $0xfc] sm:$0xf]
      %v336 = vpack.c.bf16 %v260, %v260
      %v337 = vpack.c.bf16 %v261, %v261
      %v338 = vpack.c.bf16 %v262, %v262
      %v339 = vpack.c.bf16 %v263, %v263
      %s340 = scalar_lea.vmem %s2, 256
      %v341 = vld [vmem:[%s340] sm:$0xf]
      %v342 = vld [vmem:[%s340 + $0x4] sm:$0xf]
      %v343 = vld [vmem:[%s340 + $0x8] sm:$0xf]
      %v344 = vld [vmem:[%s340 + $0xc] sm:$0xf]
      %v345 = vld [vmem:[%s340 + $0x10] sm:$0xf]
      %v346 = vld [vmem:[%s340 + $0x14] sm:$0xf]
      %v347 = vld [vmem:[%s340 + $0x18] sm:$0xf]
      %v348 = vld [vmem:[%s340 + $0x1c] sm:$0xf]
      %v349 = vld [vmem:[%s340 + $0x20] sm:$0xf]
      %v350 = vld [vmem:[%s340 + $0x24] sm:$0xf]
      %v351 = vld [vmem:[%s340 + $0x28] sm:$0xf]
      %v352 = vld [vmem:[%s340 + $0x2c] sm:$0xf]
      %v353 = vld [vmem:[%s340 + $0x30] sm:$0xf]
      %v354 = vld [vmem:[%s340 + $0x34] sm:$0xf]
      %v355 = vld [vmem:[%s340 + $0x38] sm:$0xf]
      %v356 = vld [vmem:[%s340 + $0x3c] sm:$0xf]
      %v357 = vld [vmem:[%s340 + $0x40] sm:$0xf]
      %v358 = vld [vmem:[%s340 + $0x44] sm:$0xf]
      %v359 = vld [vmem:[%s340 + $0x48] sm:$0xf]
      %v360 = vld [vmem:[%s340 + $0x4c] sm:$0xf]
      %v361 = vld [vmem:[%s340 + $0x50] sm:$0xf]
      %v362 = vld [vmem:[%s340 + $0x54] sm:$0xf]
      %v363 = vld [vmem:[%s340 + $0x58] sm:$0xf]
      %v364 = vld [vmem:[%s340 + $0x5c] sm:$0xf]
      %v365 = vld [vmem:[%s340 + $0x60] sm:$0xf]
      %v366 = vld [vmem:[%s340 + $0x64] sm:$0xf]
      %v367 = vld [vmem:[%s340 + $0x68] sm:$0xf]
      %v368 = vld [vmem:[%s340 + $0x6c] sm:$0xf]
      %v369 = vld [vmem:[%s340 + $0x70] sm:$0xf]
      %v370 = vld [vmem:[%s340 + $0x74] sm:$0xf]
      %v371 = vld [vmem:[%s340 + $0x78] sm:$0xf]
      %v372 = vld [vmem:[%s340 + $0x7c] sm:$0xf]
      %v373 = vld [vmem:[%s340 + $0x80] sm:$0xf]
      %v374 = vld [vmem:[%s340 + $0x84] sm:$0xf]
      %v375 = vld [vmem:[%s340 + $0x88] sm:$0xf]
      %v376 = vld [vmem:[%s340 + $0x8c] sm:$0xf]
      %v377 = vld [vmem:[%s340 + $0x90] sm:$0xf]
      %v378 = vld [vmem:[%s340 + $0x94] sm:$0xf]
      %v379 = vld [vmem:[%s340 + $0x98] sm:$0xf]
      %v380 = vld [vmem:[%s340 + $0x9c] sm:$0xf]
      %v381 = vld [vmem:[%s340 + $0xa0] sm:$0xf]
      %v382 = vld [vmem:[%s340 + $0xa4] sm:$0xf]
      %v383 = vld [vmem:[%s340 + $0xa8] sm:$0xf]
      %v384 = vld [vmem:[%s340 + $0xac] sm:$0xf]
      %v385 = vld [vmem:[%s340 + $0xb0] sm:$0xf]
      %v386 = vld [vmem:[%s340 + $0xb4] sm:$0xf]
      %v387 = vld [vmem:[%s340 + $0xb8] sm:$0xf]
      %v388 = vld [vmem:[%s340 + $0xbc] sm:$0xf]
      %v389 = vld [vmem:[%s340 + $0xc0] sm:$0xf]
      %v390 = vld [vmem:[%s340 + $0xc4] sm:$0xf]
      %v391 = vld [vmem:[%s340 + $0xc8] sm:$0xf]
      %v392 = vld [vmem:[%s340 + $0xcc] sm:$0xf]
      %v393 = vld [vmem:[%s340 + $0xd0] sm:$0xf]
      %v394 = vld [vmem:[%s340 + $0xd4] sm:$0xf]
      %v395 = vld [vmem:[%s340 + $0xd8] sm:$0xf]
      %v396 = vld [vmem:[%s340 + $0xdc] sm:$0xf]
      %v397 = vld [vmem:[%s340 + $0xe0] sm:$0xf]
      %v398 = vld [vmem:[%s340 + $0xe4] sm:$0xf]
      %v399 = vld [vmem:[%s340 + $0xe8] sm:$0xf]
      %v400 = vld [vmem:[%s340 + $0xec] sm:$0xf]
      %v401 = vld [vmem:[%s340 + $0xf0] sm:$0xf]
      %v402 = vld [vmem:[%s340 + $0xf4] sm:$0xf]
      %v403 = vld [vmem:[%s340 + $0xf8] sm:$0xf]
      %v404 = vld [vmem:[%s340 + $0xfc] sm:$0xf]
      %vm405 = vsmask.f32 7424
      %v407 = vshrl.u32 %v264, 16
      %v409 = vshll.u32 %v264, 16
      %v411 = vrot.slane %v409, 1
      %v412 = vor.u32 %v407, %v411
      %v414 = vshll.u32 %v268, 16
      %v416 = vrot.slane %v414, 1
      %v417 = vsel %vm405, %v412, %v416
      %v419 = vshrl.u32 %v265, 16
      %v421 = vshll.u32 %v265, 16
      %v423 = vrot.slane %v421, 1
      %v424 = vor.u32 %v419, %v423
      %v426 = vshll.u32 %v269, 16
      %v428 = vrot.slane %v426, 1
      %v429 = vsel %vm405, %v424, %v428
      %v431 = vshrl.u32 %v266, 16
      %v433 = vshll.u32 %v266, 16
      %v435 = vrot.slane %v433, 1
      %v436 = vor.u32 %v431, %v435
      %v438 = vshll.u32 %v270, 16
      %v440 = vrot.slane %v438, 1
      %v441 = vsel %vm405, %v436, %v440
      %v443 = vshrl.u32 %v267, 16
      %v445 = vshll.u32 %v267, 16
      %v447 = vrot.slane %v445, 1
      %v448 = vor.u32 %v443, %v447
      %v450 = vshll.u32 %v271, 16
      %v452 = vrot.slane %v450, 1
      %v453 = vsel %vm405, %v448, %v452
      %v454 = vshrl.u32 %v268, 16
      %v456 = vor.u32 %v454, %v416
      %v458 = vshll.u32 %v336, 16
      %v460 = vrot.slane %v458, 1
      %v461 = vsel %vm405, %v456, %v460
      %v462 = vshrl.u32 %v269, 16
      %v464 = vor.u32 %v462, %v428
      %v466 = vshll.u32 %v337, 16
      %v468 = vrot.slane %v466, 1
      %v469 = vsel %vm405, %v464, %v468
      %v470 = vshrl.u32 %v270, 16
      %v472 = vor.u32 %v470, %v440
      %v474 = vshll.u32 %v338, 16
      %v476 = vrot.slane %v474, 1
      %v477 = vsel %vm405, %v472, %v476
      %v478 = vshrl.u32 %v271, 16
      %v480 = vor.u32 %v478, %v452
      %v482 = vshll.u32 %v339, 16
      %v484 = vrot.slane %v482, 1
      %v485 = vsel %vm405, %v480, %v484
      %v558 = vunpack.c.l.b16 %v341
      %v559 = vunpack.c.l.b16 %v342
      %v560 = vunpack.c.l.b16 %v343
      %v561 = vunpack.c.l.b16 %v344
      %v562 = vunpack.c.l.b16 %v345
      %v563 = vunpack.c.l.b16 %v346
      %v564 = vunpack.c.l.b16 %v347
      %v565 = vunpack.c.l.b16 %v348
      %v566 = vunpack.c.l.b16 %v349
      %v567 = vunpack.c.l.b16 %v350
      %v568 = vunpack.c.l.b16 %v351
      %v569 = vunpack.c.l.b16 %v352
      %v570 = vunpack.c.l.b16 %v353
      %v571 = vunpack.c.l.b16 %v354
      %v572 = vunpack.c.l.b16 %v355
      %v573 = vunpack.c.l.b16 %v356
      %v574 = vunpack.c.l.b16 %v357
      %v575 = vunpack.c.l.b16 %v358
      %v576 = vunpack.c.l.b16 %v359
      %v577 = vunpack.c.l.b16 %v360
      %v578 = vunpack.c.l.b16 %v361
      %v579 = vunpack.c.l.b16 %v362
      %v580 = vunpack.c.l.b16 %v363
      %v581 = vunpack.c.l.b16 %v364
      %v582 = vunpack.c.l.b16 %v365
      %v583 = vunpack.c.l.b16 %v366
      %v584 = vunpack.c.l.b16 %v367
      %v585 = vunpack.c.l.b16 %v368
      %v586 = vunpack.c.l.b16 %v369
      %v587 = vunpack.c.l.b16 %v370
      %v588 = vunpack.c.l.b16 %v371
      %v589 = vunpack.c.l.b16 %v372
      %v590 = vunpack.c.l.b16 %v373
      %v591 = vunpack.c.l.b16 %v374
      %v592 = vunpack.c.l.b16 %v375
      %v593 = vunpack.c.l.b16 %v376
      %v594 = vunpack.c.l.b16 %v377
      %v595 = vunpack.c.l.b16 %v378
      %v596 = vunpack.c.l.b16 %v379
      %v597 = vunpack.c.l.b16 %v380
      %v598 = vunpack.c.l.b16 %v381
      %v599 = vunpack.c.l.b16 %v382
      %v600 = vunpack.c.l.b16 %v383
      %v601 = vunpack.c.l.b16 %v384
      %v602 = vunpack.c.l.b16 %v385
      %v603 = vunpack.c.l.b16 %v386
      %v604 = vunpack.c.l.b16 %v387
      %v605 = vunpack.c.l.b16 %v388
      %v606 = vunpack.c.l.b16 %v389
      %v607 = vunpack.c.l.b16 %v390
      %v608 = vunpack.c.l.b16 %v391
      %v609 = vunpack.c.l.b16 %v392
      %v610 = vunpack.c.l.b16 %v393
      %v611 = vunpack.c.l.b16 %v394
      %v612 = vunpack.c.l.b16 %v395
      %v613 = vunpack.c.l.b16 %v396
      %v614 = vunpack.c.l.b16 %v397
      %v615 = vunpack.c.l.b16 %v398
      %v616 = vunpack.c.l.b16 %v399
      %v617 = vunpack.c.l.b16 %v400
      %v618 = vunpack.c.l.b16 %v401
      %v619 = vunpack.c.l.b16 %v402
      %v620 = vunpack.c.l.b16 %v403
      %v621 = vunpack.c.l.b16 %v404
      %v622 = vpack.c.b16 %v559, %v558
      %v623 = vpack.c.b16 %v561, %v560
      %v624 = vpack.c.b16 %v563, %v562
      %v625 = vpack.c.b16 %v565, %v564
      %v626 = vpack.c.b16 %v567, %v566
      %v627 = vpack.c.b16 %v569, %v568
      %v628 = vpack.c.b16 %v571, %v570
      %v629 = vpack.c.b16 %v573, %v572
      %v630 = vpack.c.b16 %v575, %v574
      %v631 = vpack.c.b16 %v577, %v576
      %v632 = vpack.c.b16 %v579, %v578
      %v633 = vpack.c.b16 %v581, %v580
      %v634 = vpack.c.b16 %v583, %v582
      %v635 = vpack.c.b16 %v585, %v584
      %v636 = vpack.c.b16 %v587, %v586
      %v637 = vpack.c.b16 %v589, %v588
      %v638 = vpack.c.b16 %v591, %v590
      %v639 = vpack.c.b16 %v593, %v592
      %v640 = vpack.c.b16 %v595, %v594
      %v641 = vpack.c.b16 %v597, %v596
      %v642 = vpack.c.b16 %v599, %v598
      %v643 = vpack.c.b16 %v601, %v600
      %v644 = vpack.c.b16 %v603, %v602
      %v645 = vpack.c.b16 %v605, %v604
      %v646 = vpack.c.b16 %v607, %v606
      %v647 = vpack.c.b16 %v609, %v608
      %v648 = vpack.c.b16 %v611, %v610
      %v649 = vpack.c.b16 %v613, %v612
      %v650 = vpack.c.b16 %v615, %v614
      %v651 = vpack.c.b16 %v617, %v616
      %v652 = vpack.c.b16 %v619, %v618
      %v653 = vpack.c.b16 %v621, %v620
      %686 = vmatprep.subr.bf16.mxu0 0
      %687 = vmatpush1.bf16.msra.mxu0 %v629
      %688 = vmatprep.subr.bf16.mxu0 0
      %689 = vmatpush1.bf16.msra.mxu0 %v628
      %690 = vmatprep.subr.bf16.mxu0 0
      %691 = vmatpush1.bf16.msra.mxu0 %v627
      %692 = vmatprep.subr.bf16.mxu0 0
      %693 = vmatpush1.bf16.msra.mxu0 %v626
      %694 = vmatprep.subr.bf16.mxu0 0
      %695 = vmatpush1.bf16.msra.mxu0 %v625
      %696 = vmatprep.subr.bf16.mxu0 0
      %697 = vmatpush1.bf16.msra.mxu0 %v624
      %698 = vmatprep.subr.bf16.mxu0 0
      %699 = vmatpush1.bf16.msra.mxu0 %v623
      %700 = vmatprep.subr.bf16.mxu0 0
      %701 = vmatpush1.bf16.msra.mxu0 %v622
      %702 = vmatprep.subr.bf16.mxu0 0
      %703 = vmatpush2.bf16.msra.mxu0 %v637
      %704 = vmatprep.subr.bf16.mxu0 0
      %705 = vmatpush2.bf16.msra.mxu0 %v636
      %706 = vmatprep.subr.bf16.mxu0 0
      %707 = vmatpush2.bf16.msra.mxu0 %v635
      %708 = vmatprep.subr.bf16.mxu0 0
      %709 = vmatpush2.bf16.msra.mxu0 %v634
      %710 = vmatprep.subr.bf16.mxu0 0
      %711 = vmatpush2.bf16.msra.mxu0 %v633
      %712 = vmatprep.subr.bf16.mxu0 0
      %713 = vmatpush2.bf16.msra.mxu0 %v632
      %714 = vmatprep.subr.bf16.mxu0 0
      %715 = vmatpush2.bf16.msra.mxu0 %v631
      %716 = vmatprep.subr.bf16.mxu0 0
      %717 = vmatpush2.bf16.msra.mxu0 %v630
      %718 = vmatprep.mubr.bf16.mxu0 %v429
      %719 = vmatmul.mubr.bf16.gmra.mxu0 %v417
      %v720 = vpop.f32.mrf.mxu0
      %v721 = vadd.f32 0.0, %v720
      %v722 = vpop.f32.mrf.mxu0
      %v723 = vpop.f32.mrf.mxu0
      %v724 = vadd.f32 0.0, %v723
      %v725 = vpop.f32.mrf.mxu0
      %726 = vmatprep.mubr.bf16.mxu0 %v469
      %727 = vmatmul.mubr.bf16.gmra.mxu0 %v461
      %v728 = vpop.f32.mrf.mxu0
      %v729 = vadd.f32 0.0, %v728
      %v730 = vpop.f32.mrf.mxu0
      %v731 = vpop.f32.mrf.mxu0
      %v732 = vadd.f32 0.0, %v731
      %v733 = vpop.f32.mrf.mxu0
      %734 = vdwg.mxu0
      %735 = vmatprep.subr.bf16.mxu0 0
      %736 = vmatpush1.bf16.msra.mxu0 %v645
      %737 = vmatprep.subr.bf16.mxu0 0
      %738 = vmatpush1.bf16.msra.mxu0 %v644
      %739 = vmatprep.subr.bf16.mxu0 0
      %740 = vmatpush1.bf16.msra.mxu0 %v643
      %741 = vmatprep.subr.bf16.mxu0 0
      %742 = vmatpush1.bf16.msra.mxu0 %v642
      %743 = vmatprep.subr.bf16.mxu0 0
      %744 = vmatpush1.bf16.msra.mxu0 %v641
      %745 = vmatprep.subr.bf16.mxu0 0
      %746 = vmatpush1.bf16.msra.mxu0 %v640
      %747 = vmatprep.subr.bf16.mxu0 0
      %748 = vmatpush1.bf16.msra.mxu0 %v639
      %749 = vmatprep.subr.bf16.mxu0 0
      %750 = vmatpush1.bf16.msra.mxu0 %v638
      %751 = vmatprep.subr.bf16.mxu0 0
      %752 = vmatpush2.bf16.msra.mxu0 %v653
      %753 = vmatprep.subr.bf16.mxu0 0
      %754 = vmatpush2.bf16.msra.mxu0 %v652
      %755 = vmatprep.subr.bf16.mxu0 0
      %756 = vmatpush2.bf16.msra.mxu0 %v651
      %757 = vmatprep.subr.bf16.mxu0 0
      %758 = vmatpush2.bf16.msra.mxu0 %v650
      %759 = vmatprep.subr.bf16.mxu0 0
      %760 = vmatpush2.bf16.msra.mxu0 %v649
      %761 = vmatprep.subr.bf16.mxu0 0
      %762 = vmatpush2.bf16.msra.mxu0 %v648
      %763 = vmatprep.subr.bf16.mxu0 0
      %764 = vmatpush2.bf16.msra.mxu0 %v647
      %765 = vmatprep.subr.bf16.mxu0 0
      %766 = vmatpush2.bf16.msra.mxu0 %v646
      %767 = vmatprep.mubr.bf16.mxu0 %v453
      %768 = vmatmul.mubr.bf16.gmra.mxu0 %v441
      %v769 = vpop.f32.mrf.mxu0
      %v770 = vadd.f32 %v721, %v769
      %v771 = vpop.f32.mrf.mxu0
      %v772 = vpop.f32.mrf.mxu0
      %v773 = vadd.f32 %v724, %v772
      %v774 = vpop.f32.mrf.mxu0
      %775 = vmatprep.mubr.bf16.mxu0 %v485
      %776 = vmatmul.mubr.bf16.gmra.mxu0 %v477
      %v777 = vpop.f32.mrf.mxu0
      %v778 = vadd.f32 %v729, %v777
      %v779 = vpop.f32.mrf.mxu0
      %v780 = vpop.f32.mrf.mxu0
      %v781 = vadd.f32 %v732, %v780
      %v782 = vpop.f32.mrf.mxu0
      %783 = vdwg.mxu0
      %v848 = vunpack.c.l.b16 %v272
      %v849 = vunpack.c.l.b16 %v273
      %v850 = vunpack.c.l.b16 %v274
      %v851 = vunpack.c.l.b16 %v275
      %v852 = vunpack.c.l.b16 %v276
      %v853 = vunpack.c.l.b16 %v277
      %v854 = vunpack.c.l.b16 %v278
      %v855 = vunpack.c.l.b16 %v279
      %v856 = vunpack.c.l.b16 %v280
      %v857 = vunpack.c.l.b16 %v281
      %v858 = vunpack.c.l.b16 %v282
      %v859 = vunpack.c.l.b16 %v283
      %v860 = vunpack.c.l.b16 %v284
      %v861 = vunpack.c.l.b16 %v285
      %v862 = vunpack.c.l.b16 %v286
      %v863 = vunpack.c.l.b16 %v287
      %v864 = vunpack.c.l.b16 %v288
      %v865 = vunpack.c.l.b16 %v289
      %v866 = vunpack.c.l.b16 %v290
      %v867 = vunpack.c.l.b16 %v291
      %v868 = vunpack.c.l.b16 %v292
      %v869 = vunpack.c.l.b16 %v293
      %v870 = vunpack.c.l.b16 %v294
      %v871 = vunpack.c.l.b16 %v295
      %v872 = vunpack.c.l.b16 %v296
      %v873 = vunpack.c.l.b16 %v297
      %v874 = vunpack.c.l.b16 %v298
      %v875 = vunpack.c.l.b16 %v299
      %v876 = vunpack.c.l.b16 %v300
      %v877 = vunpack.c.l.b16 %v301
      %v878 = vunpack.c.l.b16 %v302
      %v879 = vunpack.c.l.b16 %v303
      %v880 = vunpack.c.l.b16 %v304
      %v881 = vunpack.c.l.b16 %v305
      %v882 = vunpack.c.l.b16 %v306
      %v883 = vunpack.c.l.b16 %v307
      %v884 = vunpack.c.l.b16 %v308
      %v885 = vunpack.c.l.b16 %v309
      %v886 = vunpack.c.l.b16 %v310
      %v887 = vunpack.c.l.b16 %v311
      %v888 = vunpack.c.l.b16 %v312
      %v889 = vunpack.c.l.b16 %v313
      %v890 = vunpack.c.l.b16 %v314
      %v891 = vunpack.c.l.b16 %v315
      %v892 = vunpack.c.l.b16 %v316
      %v893 = vunpack.c.l.b16 %v317
      %v894 = vunpack.c.l.b16 %v318
      %v895 = vunpack.c.l.b16 %v319
      %v896 = vunpack.c.l.b16 %v320
      %v897 = vunpack.c.l.b16 %v321
      %v898 = vunpack.c.l.b16 %v322
      %v899 = vunpack.c.l.b16 %v323
      %v900 = vunpack.c.l.b16 %v324
      %v901 = vunpack.c.l.b16 %v325
      %v902 = vunpack.c.l.b16 %v326
      %v903 = vunpack.c.l.b16 %v327
      %v904 = vunpack.c.l.b16 %v328
      %v905 = vunpack.c.l.b16 %v329
      %v906 = vunpack.c.l.b16 %v330
      %v907 = vunpack.c.l.b16 %v331
      %v908 = vunpack.c.l.b16 %v332
      %v909 = vunpack.c.l.b16 %v333
      %v910 = vunpack.c.l.b16 %v334
      %v911 = vunpack.c.l.b16 %v335
      %v912 = vpack.c.b16 %v849, %v848
      %v913 = vpack.c.b16 %v851, %v850
      %v914 = vpack.c.b16 %v853, %v852
      %v915 = vpack.c.b16 %v855, %v854
      %v916 = vpack.c.b16 %v857, %v856
      %v917 = vpack.c.b16 %v859, %v858
      %v918 = vpack.c.b16 %v861, %v860
      %v919 = vpack.c.b16 %v863, %v862
      %v920 = vpack.c.b16 %v865, %v864
      %v921 = vpack.c.b16 %v867, %v866
      %v922 = vpack.c.b16 %v869, %v868
      %v923 = vpack.c.b16 %v871, %v870
      %v924 = vpack.c.b16 %v873, %v872
      %v925 = vpack.c.b16 %v875, %v874
      %v926 = vpack.c.b16 %v877, %v876
      %v927 = vpack.c.b16 %v879, %v878
      %v928 = vpack.c.b16 %v881, %v880
      %v929 = vpack.c.b16 %v883, %v882
      %v930 = vpack.c.b16 %v885, %v884
      %v931 = vpack.c.b16 %v887, %v886
      %v932 = vpack.c.b16 %v889, %v888
      %v933 = vpack.c.b16 %v891, %v890
      %v934 = vpack.c.b16 %v893, %v892
      %v935 = vpack.c.b16 %v895, %v894
      %v936 = vpack.c.b16 %v897, %v896
      %v937 = vpack.c.b16 %v899, %v898
      %v938 = vpack.c.b16 %v901, %v900
      %v939 = vpack.c.b16 %v903, %v902
      %v940 = vpack.c.b16 %v905, %v904
      %v941 = vpack.c.b16 %v907, %v906
      %v942 = vpack.c.b16 %v909, %v908
      %v943 = vpack.c.b16 %v911, %v910
      %976 = vmatprep.subr.bf16.mxu0 0
      %977 = vmatpush1.bf16.msra.mxu0 %v919
      %978 = vmatprep.subr.bf16.mxu0 0
      %979 = vmatpush1.bf16.msra.mxu0 %v918
      %980 = vmatprep.subr.bf16.mxu0 0
      %981 = vmatpush1.bf16.msra.mxu0 %v917
      %982 = vmatprep.subr.bf16.mxu0 0
      %983 = vmatpush1.bf16.msra.mxu0 %v916
      %984 = vmatprep.subr.bf16.mxu0 0
      %985 = vmatpush1.bf16.msra.mxu0 %v915
      %986 = vmatprep.subr.bf16.mxu0 0
      %987 = vmatpush1.bf16.msra.mxu0 %v914
      %988 = vmatprep.subr.bf16.mxu0 0
      %989 = vmatpush1.bf16.msra.mxu0 %v913
      %990 = vmatprep.subr.bf16.mxu0 0
      %991 = vmatpush1.bf16.msra.mxu0 %v912
      %992 = vmatprep.subr.bf16.mxu0 0
      %993 = vmatpush2.bf16.msra.mxu0 %v927
      %994 = vmatprep.subr.bf16.mxu0 0
      %995 = vmatpush2.bf16.msra.mxu0 %v926
      %996 = vmatprep.subr.bf16.mxu0 0
      %997 = vmatpush2.bf16.msra.mxu0 %v925
      %998 = vmatprep.subr.bf16.mxu0 0
      %999 = vmatpush2.bf16.msra.mxu0 %v924
      %1000 = vmatprep.subr.bf16.mxu0 0
      %1001 = vmatpush2.bf16.msra.mxu0 %v923
      %1002 = vmatprep.subr.bf16.mxu0 0
      %1003 = vmatpush2.bf16.msra.mxu0 %v922
      %1004 = vmatprep.subr.bf16.mxu0 0
      %1005 = vmatpush2.bf16.msra.mxu0 %v921
      %1006 = vmatprep.subr.bf16.mxu0 0
      %1007 = vmatpush2.bf16.msra.mxu0 %v920
      %1008 = vmatprep.mubr.bf16.mxu0 %v265
      %1009 = vmatmul.mubr.bf16.gmra.mxu0 %v264
      %v1010 = vpop.f32.mrf.mxu0
      %v1011 = vadd.f32 %v770, %v1010
      %v1012 = vpop.f32.mrf.mxu0
      %v1013 = vpop.f32.mrf.mxu0
      %v1014 = vadd.f32 %v773, %v1013
      %v1015 = vpop.f32.mrf.mxu0
      %1016 = vmatprep.mubr.bf16.mxu0 %v269
      %1017 = vmatmul.mubr.bf16.gmra.mxu0 %v268
      %v1018 = vpop.f32.mrf.mxu0
      %v1019 = vadd.f32 %v778, %v1018
      %v1020 = vpop.f32.mrf.mxu0
      %v1021 = vpop.f32.mrf.mxu0
      %v1022 = vadd.f32 %v781, %v1021
      %v1023 = vpop.f32.mrf.mxu0
      %1024 = vdwg.mxu0
      %1025 = vmatprep.subr.bf16.mxu0 0
      %1026 = vmatpush1.bf16.msra.mxu0 %v935
      %1027 = vmatprep.subr.bf16.mxu0 0
      %1028 = vmatpush1.bf16.msra.mxu0 %v934
      %1029 = vmatprep.subr.bf16.mxu0 0
      %1030 = vmatpush1.bf16.msra.mxu0 %v933
      %1031 = vmatprep.subr.bf16.mxu0 0
      %1032 = vmatpush1.bf16.msra.mxu0 %v932
      %1033 = vmatprep.subr.bf16.mxu0 0
      %1034 = vmatpush1.bf16.msra.mxu0 %v931
      %1035 = vmatprep.subr.bf16.mxu0 0
      %1036 = vmatpush1.bf16.msra.mxu0 %v930
      %1037 = vmatprep.subr.bf16.mxu0 0
      %1038 = vmatpush1.bf16.msra.mxu0 %v929
      %1039 = vmatprep.subr.bf16.mxu0 0
      %1040 = vmatpush1.bf16.msra.mxu0 %v928
      %1041 = vmatprep.subr.bf16.mxu0 0
      %1042 = vmatpush2.bf16.msra.mxu0 %v943
      %1043 = vmatprep.subr.bf16.mxu0 0
      %1044 = vmatpush2.bf16.msra.mxu0 %v942
      %1045 = vmatprep.subr.bf16.mxu0 0
      %1046 = vmatpush2.bf16.msra.mxu0 %v941
      %1047 = vmatprep.subr.bf16.mxu0 0
      %1048 = vmatpush2.bf16.msra.mxu0 %v940
      %1049 = vmatprep.subr.bf16.mxu0 0
      %1050 = vmatpush2.bf16.msra.mxu0 %v939
      %1051 = vmatprep.subr.bf16.mxu0 0
      %1052 = vmatpush2.bf16.msra.mxu0 %v938
      %1053 = vmatprep.subr.bf16.mxu0 0
      %1054 = vmatpush2.bf16.msra.mxu0 %v937
      %1055 = vmatprep.subr.bf16.mxu0 0
      %1056 = vmatpush2.bf16.msra.mxu0 %v936
      %1057 = vmatprep.mubr.bf16.mxu0 %v267
      %1058 = vmatmul.mubr.bf16.gmra.mxu0 %v266
      %v1059 = vpop.f32.mrf.mxu0
      %v1060 = vadd.f32 %v1011, %v1059
      %v1061 = vpop.f32.mrf.mxu0
      %v1062 = vpop.f32.mrf.mxu0
      %v1063 = vadd.f32 %v1014, %v1062
      %v1064 = vpop.f32.mrf.mxu0
      %1065 = vmatprep.mubr.bf16.mxu0 %v271
      %1066 = vmatmul.mubr.bf16.gmra.mxu0 %v270
      %v1067 = vpop.f32.mrf.mxu0
      %v1068 = vadd.f32 %v1019, %v1067
      %v1069 = vpop.f32.mrf.mxu0
      %v1070 = vpop.f32.mrf.mxu0
      %v1071 = vadd.f32 %v1022, %v1070
      %v1072 = vpop.f32.mrf.mxu0
      %1073 = vdwg.mxu0
      %s1074 = scalar_lea.vmem %s2, 512
      %v1075 = vld [vmem:[%s1074] sm:$0xf]
      %v1076 = vld [vmem:[%s1074 + $0x4] sm:$0xf]
      %v1077 = vld [vmem:[%s1074 + $0x8] sm:$0xf]
      %v1078 = vld [vmem:[%s1074 + $0xc] sm:$0xf]
      %v1079 = vld [vmem:[%s1074 + $0x10] sm:$0xf]
      %v1080 = vld [vmem:[%s1074 + $0x14] sm:$0xf]
      %v1081 = vld [vmem:[%s1074 + $0x18] sm:$0xf]
      %v1082 = vld [vmem:[%s1074 + $0x1c] sm:$0xf]
      %v1083 = vld [vmem:[%s1074 + $0x20] sm:$0xf]
      %v1084 = vld [vmem:[%s1074 + $0x24] sm:$0xf]
      %v1085 = vld [vmem:[%s1074 + $0x28] sm:$0xf]
      %v1086 = vld [vmem:[%s1074 + $0x2c] sm:$0xf]
      %v1087 = vld [vmem:[%s1074 + $0x30] sm:$0xf]
      %v1088 = vld [vmem:[%s1074 + $0x34] sm:$0xf]
      %v1089 = vld [vmem:[%s1074 + $0x38] sm:$0xf]
      %v1090 = vld [vmem:[%s1074 + $0x3c] sm:$0xf]
      %v1091 = vld [vmem:[%s1074 + $0x40] sm:$0xf]
      %v1092 = vld [vmem:[%s1074 + $0x44] sm:$0xf]
      %v1093 = vld [vmem:[%s1074 + $0x48] sm:$0xf]
      %v1094 = vld [vmem:[%s1074 + $0x4c] sm:$0xf]
      %v1095 = vld [vmem:[%s1074 + $0x50] sm:$0xf]
      %v1096 = vld [vmem:[%s1074 + $0x54] sm:$0xf]
      %v1097 = vld [vmem:[%s1074 + $0x58] sm:$0xf]
      %v1098 = vld [vmem:[%s1074 + $0x5c] sm:$0xf]
      %v1099 = vld [vmem:[%s1074 + $0x60] sm:$0xf]
      %v1100 = vld [vmem:[%s1074 + $0x64] sm:$0xf]
      %v1101 = vld [vmem:[%s1074 + $0x68] sm:$0xf]
      %v1102 = vld [vmem:[%s1074 + $0x6c] sm:$0xf]
      %v1103 = vld [vmem:[%s1074 + $0x70] sm:$0xf]
      %v1104 = vld [vmem:[%s1074 + $0x74] sm:$0xf]
      %v1105 = vld [vmem:[%s1074 + $0x78] sm:$0xf]
      %v1106 = vld [vmem:[%s1074 + $0x7c] sm:$0xf]
      %v1107 = vld [vmem:[%s1074 + $0x80] sm:$0xf]
      %v1108 = vld [vmem:[%s1074 + $0x84] sm:$0xf]
      %v1109 = vld [vmem:[%s1074 + $0x88] sm:$0xf]
      %v1110 = vld [vmem:[%s1074 + $0x8c] sm:$0xf]
      %v1111 = vld [vmem:[%s1074 + $0x90] sm:$0xf]
      %v1112 = vld [vmem:[%s1074 + $0x94] sm:$0xf]
      %v1113 = vld [vmem:[%s1074 + $0x98] sm:$0xf]
      %v1114 = vld [vmem:[%s1074 + $0x9c] sm:$0xf]
      %v1115 = vld [vmem:[%s1074 + $0xa0] sm:$0xf]
      %v1116 = vld [vmem:[%s1074 + $0xa4] sm:$0xf]
      %v1117 = vld [vmem:[%s1074 + $0xa8] sm:$0xf]
      %v1118 = vld [vmem:[%s1074 + $0xac] sm:$0xf]
      %v1119 = vld [vmem:[%s1074 + $0xb0] sm:$0xf]
      %v1120 = vld [vmem:[%s1074 + $0xb4] sm:$0xf]
      %v1121 = vld [vmem:[%s1074 + $0xb8] sm:$0xf]
      %v1122 = vld [vmem:[%s1074 + $0xbc] sm:$0xf]
      %v1123 = vld [vmem:[%s1074 + $0xc0] sm:$0xf]
      %v1124 = vld [vmem:[%s1074 + $0xc4] sm:$0xf]
      %v1125 = vld [vmem:[%s1074 + $0xc8] sm:$0xf]
      %v1126 = vld [vmem:[%s1074 + $0xcc] sm:$0xf]
      %v1127 = vld [vmem:[%s1074 + $0xd0] sm:$0xf]
      %v1128 = vld [vmem:[%s1074 + $0xd4] sm:$0xf]
      %v1129 = vld [vmem:[%s1074 + $0xd8] sm:$0xf]
      %v1130 = vld [vmem:[%s1074 + $0xdc] sm:$0xf]
      %v1131 = vld [vmem:[%s1074 + $0xe0] sm:$0xf]
      %v1132 = vld [vmem:[%s1074 + $0xe4] sm:$0xf]
      %v1133 = vld [vmem:[%s1074 + $0xe8] sm:$0xf]
      %v1134 = vld [vmem:[%s1074 + $0xec] sm:$0xf]
      %v1135 = vld [vmem:[%s1074 + $0xf0] sm:$0xf]
      %v1136 = vld [vmem:[%s1074 + $0xf4] sm:$0xf]
      %v1137 = vld [vmem:[%s1074 + $0xf8] sm:$0xf]
      %v1138 = vld [vmem:[%s1074 + $0xfc] sm:$0xf]
      %vm1151 = vcmask 1046528
      %v1152 = vrot.slane %v264, 1
      %v1153 = vrot.slane %v268, 1
      %v1154 = vsel %vm1151, %v1152, %v1153
      %v1155 = vrot.slane %v265, 1
      %v1156 = vrot.slane %v269, 1
      %v1157 = vsel %vm1151, %v1155, %v1156
      %v1158 = vrot.slane %v266, 1
      %v1159 = vrot.slane %v270, 1
      %v1160 = vsel %vm1151, %v1158, %v1159
      %v1161 = vrot.slane %v267, 1
      %v1162 = vrot.slane %v271, 1
      %v1163 = vsel %vm1151, %v1161, %v1162
      %v1164 = vrot.slane %v336, 1
      %v1165 = vsel %vm1151, %v1153, %v1164
      %v1166 = vrot.slane %v337, 1
      %v1167 = vsel %vm1151, %v1156, %v1166
      %v1168 = vrot.slane %v338, 1
      %v1169 = vsel %vm1151, %v1159, %v1168
      %v1170 = vrot.slane %v339, 1
      %v1171 = vsel %vm1151, %v1162, %v1170
      %v1244 = vunpack.c.l.b16 %v1075
      %v1245 = vunpack.c.l.b16 %v1076
      %v1246 = vunpack.c.l.b16 %v1077
      %v1247 = vunpack.c.l.b16 %v1078
      %v1248 = vunpack.c.l.b16 %v1079
      %v1249 = vunpack.c.l.b16 %v1080
      %v1250 = vunpack.c.l.b16 %v1081
      %v1251 = vunpack.c.l.b16 %v1082
      %v1252 = vunpack.c.l.b16 %v1083
      %v1253 = vunpack.c.l.b16 %v1084
      %v1254 = vunpack.c.l.b16 %v1085
      %v1255 = vunpack.c.l.b16 %v1086
      %v1256 = vunpack.c.l.b16 %v1087
      %v1257 = vunpack.c.l.b16 %v1088
      %v1258 = vunpack.c.l.b16 %v1089
      %v1259 = vunpack.c.l.b16 %v1090
      %v1260 = vunpack.c.l.b16 %v1091
      %v1261 = vunpack.c.l.b16 %v1092
      %v1262 = vunpack.c.l.b16 %v1093
      %v1263 = vunpack.c.l.b16 %v1094
      %v1264 = vunpack.c.l.b16 %v1095
      %v1265 = vunpack.c.l.b16 %v1096
      %v1266 = vunpack.c.l.b16 %v1097
      %v1267 = vunpack.c.l.b16 %v1098
      %v1268 = vunpack.c.l.b16 %v1099
      %v1269 = vunpack.c.l.b16 %v1100
      %v1270 = vunpack.c.l.b16 %v1101
      %v1271 = vunpack.c.l.b16 %v1102
      %v1272 = vunpack.c.l.b16 %v1103
      %v1273 = vunpack.c.l.b16 %v1104
      %v1274 = vunpack.c.l.b16 %v1105
      %v1275 = vunpack.c.l.b16 %v1106
      %v1276 = vunpack.c.l.b16 %v1107
      %v1277 = vunpack.c.l.b16 %v1108
      %v1278 = vunpack.c.l.b16 %v1109
      %v1279 = vunpack.c.l.b16 %v1110
      %v1280 = vunpack.c.l.b16 %v1111
      %v1281 = vunpack.c.l.b16 %v1112
      %v1282 = vunpack.c.l.b16 %v1113
      %v1283 = vunpack.c.l.b16 %v1114
      %v1284 = vunpack.c.l.b16 %v1115
      %v1285 = vunpack.c.l.b16 %v1116
      %v1286 = vunpack.c.l.b16 %v1117
      %v1287 = vunpack.c.l.b16 %v1118
      %v1288 = vunpack.c.l.b16 %v1119
      %v1289 = vunpack.c.l.b16 %v1120
      %v1290 = vunpack.c.l.b16 %v1121
      %v1291 = vunpack.c.l.b16 %v1122
      %v1292 = vunpack.c.l.b16 %v1123
      %v1293 = vunpack.c.l.b16 %v1124
      %v1294 = vunpack.c.l.b16 %v1125
      %v1295 = vunpack.c.l.b16 %v1126
      %v1296 = vunpack.c.l.b16 %v1127
      %v1297 = vunpack.c.l.b16 %v1128
      %v1298 = vunpack.c.l.b16 %v1129
      %v1299 = vunpack.c.l.b16 %v1130
      %v1300 = vunpack.c.l.b16 %v1131
      %v1301 = vunpack.c.l.b16 %v1132
      %v1302 = vunpack.c.l.b16 %v1133
      %v1303 = vunpack.c.l.b16 %v1134
      %v1304 = vunpack.c.l.b16 %v1135
      %v1305 = vunpack.c.l.b16 %v1136
      %v1306 = vunpack.c.l.b16 %v1137
      %v1307 = vunpack.c.l.b16 %v1138
      %v1308 = vpack.c.b16 %v1245, %v1244
      %v1309 = vpack.c.b16 %v1247, %v1246
      %v1310 = vpack.c.b16 %v1249, %v1248
      %v1311 = vpack.c.b16 %v1251, %v1250
      %v1312 = vpack.c.b16 %v1253, %v1252
      %v1313 = vpack.c.b16 %v1255, %v1254
      %v1314 = vpack.c.b16 %v1257, %v1256
      %v1315 = vpack.c.b16 %v1259, %v1258
      %v1316 = vpack.c.b16 %v1261, %v1260
      %v1317 = vpack.c.b16 %v1263, %v1262
      %v1318 = vpack.c.b16 %v1265, %v1264
      %v1319 = vpack.c.b16 %v1267, %v1266
      %v1320 = vpack.c.b16 %v1269, %v1268
      %v1321 = vpack.c.b16 %v1271, %v1270
      %v1322 = vpack.c.b16 %v1273, %v1272
      %v1323 = vpack.c.b16 %v1275, %v1274
      %v1324 = vpack.c.b16 %v1277, %v1276
      %v1325 = vpack.c.b16 %v1279, %v1278
      %v1326 = vpack.c.b16 %v1281, %v1280
      %v1327 = vpack.c.b16 %v1283, %v1282
      %v1328 = vpack.c.b16 %v1285, %v1284
      %v1329 = vpack.c.b16 %v1287, %v1286
      %v1330 = vpack.c.b16 %v1289, %v1288
      %v1331 = vpack.c.b16 %v1291, %v1290
      %v1332 = vpack.c.b16 %v1293, %v1292
      %v1333 = vpack.c.b16 %v1295, %v1294
      %v1334 = vpack.c.b16 %v1297, %v1296
      %v1335 = vpack.c.b16 %v1299, %v1298
      %v1336 = vpack.c.b16 %v1301, %v1300
      %v1337 = vpack.c.b16 %v1303, %v1302
      %v1338 = vpack.c.b16 %v1305, %v1304
      %v1339 = vpack.c.b16 %v1307, %v1306
      %1372 = vmatprep.subr.bf16.mxu0 0
      %1373 = vmatpush1.bf16.msra.mxu0 %v1315
      %1374 = vmatprep.subr.bf16.mxu0 0
      %1375 = vmatpush1.bf16.msra.mxu0 %v1314
      %1376 = vmatprep.subr.bf16.mxu0 0
      %1377 = vmatpush1.bf16.msra.mxu0 %v1313
      %1378 = vmatprep.subr.bf16.mxu0 0
      %1379 = vmatpush1.bf16.msra.mxu0 %v1312
      %1380 = vmatprep.subr.bf16.mxu0 0
      %1381 = vmatpush1.bf16.msra.mxu0 %v1311
      %1382 = vmatprep.subr.bf16.mxu0 0
      %1383 = vmatpush1.bf16.msra.mxu0 %v1310
      %1384 = vmatprep.subr.bf16.mxu0 0
      %1385 = vmatpush1.bf16.msra.mxu0 %v1309
      %1386 = vmatprep.subr.bf16.mxu0 0
      %1387 = vmatpush1.bf16.msra.mxu0 %v1308
      %1388 = vmatprep.subr.bf16.mxu0 0
      %1389 = vmatpush2.bf16.msra.mxu0 %v1323
      %1390 = vmatprep.subr.bf16.mxu0 0
      %1391 = vmatpush2.bf16.msra.mxu0 %v1322
      %1392 = vmatprep.subr.bf16.mxu0 0
      %1393 = vmatpush2.bf16.msra.mxu0 %v1321
      %1394 = vmatprep.subr.bf16.mxu0 0
      %1395 = vmatpush2.bf16.msra.mxu0 %v1320
      %1396 = vmatprep.subr.bf16.mxu0 0
      %1397 = vmatpush2.bf16.msra.mxu0 %v1319
      %1398 = vmatprep.subr.bf16.mxu0 0
      %1399 = vmatpush2.bf16.msra.mxu0 %v1318
      %1400 = vmatprep.subr.bf16.mxu0 0
      %1401 = vmatpush2.bf16.msra.mxu0 %v1317
      %1402 = vmatprep.subr.bf16.mxu0 0
      %1403 = vmatpush2.bf16.msra.mxu0 %v1316
      %1404 = vmatprep.mubr.bf16.mxu0 %v1157
      %1405 = vmatmul.mubr.bf16.gmra.mxu0 %v1154
      %v1406 = vpop.f32.mrf.mxu0
      %v1407 = vadd.f32 0.0, %v1406
      %v1408 = vpop.f32.mrf.mxu0
      %v1409 = vpop.f32.mrf.mxu0
      %v1410 = vadd.f32 0.0, %v1409
      %v1411 = vpop.f32.mrf.mxu0
      %1412 = vmatprep.mubr.bf16.mxu0 %v1167
      %1413 = vmatmul.mubr.bf16.gmra.mxu0 %v1165
      %v1414 = vpop.f32.mrf.mxu0
      %v1415 = vadd.f32 0.0, %v1414
      %v1416 = vpop.f32.mrf.mxu0
      %v1417 = vpop.f32.mrf.mxu0
      %v1418 = vadd.f32 0.0, %v1417
      %v1419 = vpop.f32.mrf.mxu0
      %1420 = vdwg.mxu0
      %1421 = vmatprep.subr.bf16.mxu0 0
      %1422 = vmatpush1.bf16.msra.mxu0 %v1331
      %1423 = vmatprep.subr.bf16.mxu0 0
      %1424 = vmatpush1.bf16.msra.mxu0 %v1330
      %1425 = vmatprep.subr.bf16.mxu0 0
      %1426 = vmatpush1.bf16.msra.mxu0 %v1329
      %1427 = vmatprep.subr.bf16.mxu0 0
      %1428 = vmatpush1.bf16.msra.mxu0 %v1328
      %1429 = vmatprep.subr.bf16.mxu0 0
      %1430 = vmatpush1.bf16.msra.mxu0 %v1327
      %1431 = vmatprep.subr.bf16.mxu0 0
      %1432 = vmatpush1.bf16.msra.mxu0 %v1326
      %1433 = vmatprep.subr.bf16.mxu0 0
      %1434 = vmatpush1.bf16.msra.mxu0 %v1325
      %1435 = vmatprep.subr.bf16.mxu0 0
      %1436 = vmatpush1.bf16.msra.mxu0 %v1324
      %1437 = vmatprep.subr.bf16.mxu0 0
      %1438 = vmatpush2.bf16.msra.mxu0 %v1339
      %1439 = vmatprep.subr.bf16.mxu0 0
      %1440 = vmatpush2.bf16.msra.mxu0 %v1338
      %1441 = vmatprep.subr.bf16.mxu0 0
      %1442 = vmatpush2.bf16.msra.mxu0 %v1337
      %1443 = vmatprep.subr.bf16.mxu0 0
      %1444 = vmatpush2.bf16.msra.mxu0 %v1336
      %1445 = vmatprep.subr.bf16.mxu0 0
      %1446 = vmatpush2.bf16.msra.mxu0 %v1335
      %1447 = vmatprep.subr.bf16.mxu0 0
      %1448 = vmatpush2.bf16.msra.mxu0 %v1334
      %1449 = vmatprep.subr.bf16.mxu0 0
      %1450 = vmatpush2.bf16.msra.mxu0 %v1333
      %1451 = vmatprep.subr.bf16.mxu0 0
      %1452 = vmatpush2.bf16.msra.mxu0 %v1332
      %1453 = vmatprep.mubr.bf16.mxu0 %v1163
      %1454 = vmatmul.mubr.bf16.gmra.mxu0 %v1160
      %v1455 = vpop.f32.mrf.mxu0
      %v1456 = vadd.f32 %v1407, %v1455
      %v1457 = vpop.f32.mrf.mxu0
      %v1458 = vpop.f32.mrf.mxu0
      %v1459 = vadd.f32 %v1410, %v1458
      %v1460 = vpop.f32.mrf.mxu0
      %1461 = vmatprep.mubr.bf16.mxu0 %v1171
      %1462 = vmatmul.mubr.bf16.gmra.mxu0 %v1169
      %v1463 = vpop.f32.mrf.mxu0
      %v1464 = vadd.f32 %v1415, %v1463
      %v1465 = vpop.f32.mrf.mxu0
      %v1466 = vpop.f32.mrf.mxu0
      %v1467 = vadd.f32 %v1418, %v1466
      %v1468 = vpop.f32.mrf.mxu0
      %1469 = vdwg.mxu0
      %v1470 = vadd.f32 %v1060, %v1456
      %v1471 = vadd.f32 %v1063, %v1459
      %v1472 = vadd.f32 %v1068, %v1464
      %v1473 = vadd.f32 %v1071, %v1467
      %s1474 = scalar_lea.vmem %s2, 768
      %v1475 = vld [vmem:[%s1474] sm:$0xf]
      %v1476 = vld [vmem:[%s1474 + $0x4] sm:$0xf]
      %v1477 = vld [vmem:[%s1474 + $0x8] sm:$0xf]
      %v1478 = vld [vmem:[%s1474 + $0xc] sm:$0xf]
      %v1479 = vld [vmem:[%s1474 + $0x10] sm:$0xf]
      %v1480 = vld [vmem:[%s1474 + $0x14] sm:$0xf]
      %v1481 = vld [vmem:[%s1474 + $0x18] sm:$0xf]
      %v1482 = vld [vmem:[%s1474 + $0x1c] sm:$0xf]
      %v1483 = vld [vmem:[%s1474 + $0x20] sm:$0xf]
      %v1484 = vld [vmem:[%s1474 + $0x24] sm:$0xf]
      %v1485 = vld [vmem:[%s1474 + $0x28] sm:$0xf]
      %v1486 = vld [vmem:[%s1474 + $0x2c] sm:$0xf]
      %v1487 = vld [vmem:[%s1474 + $0x30] sm:$0xf]
      %v1488 = vld [vmem:[%s1474 + $0x34] sm:$0xf]
      %v1489 = vld [vmem:[%s1474 + $0x38] sm:$0xf]
      %v1490 = vld [vmem:[%s1474 + $0x3c] sm:$0xf]
      %v1491 = vld [vmem:[%s1474 + $0x40] sm:$0xf]
      %v1492 = vld [vmem:[%s1474 + $0x44] sm:$0xf]
      %v1493 = vld [vmem:[%s1474 + $0x48] sm:$0xf]
      %v1494 = vld [vmem:[%s1474 + $0x4c] sm:$0xf]
      %v1495 = vld [vmem:[%s1474 + $0x50] sm:$0xf]
      %v1496 = vld [vmem:[%s1474 + $0x54] sm:$0xf]
      %v1497 = vld [vmem:[%s1474 + $0x58] sm:$0xf]
      %v1498 = vld [vmem:[%s1474 + $0x5c] sm:$0xf]
      %v1499 = vld [vmem:[%s1474 + $0x60] sm:$0xf]
      %v1500 = vld [vmem:[%s1474 + $0x64] sm:$0xf]
      %v1501 = vld [vmem:[%s1474 + $0x68] sm:$0xf]
      %v1502 = vld [vmem:[%s1474 + $0x6c] sm:$0xf]
      %v1503 = vld [vmem:[%s1474 + $0x70] sm:$0xf]
      %v1504 = vld [vmem:[%s1474 + $0x74] sm:$0xf]
      %v1505 = vld [vmem:[%s1474 + $0x78] sm:$0xf]
      %v1506 = vld [vmem:[%s1474 + $0x7c] sm:$0xf]
      %v1507 = vld [vmem:[%s1474 + $0x80] sm:$0xf]
      %v1508 = vld [vmem:[%s1474 + $0x84] sm:$0xf]
      %v1509 = vld [vmem:[%s1474 + $0x88] sm:$0xf]
      %v1510 = vld [vmem:[%s1474 + $0x8c] sm:$0xf]
      %v1511 = vld [vmem:[%s1474 + $0x90] sm:$0xf]
      %v1512 = vld [vmem:[%s1474 + $0x94] sm:$0xf]
      %v1513 = vld [vmem:[%s1474 + $0x98] sm:$0xf]
      %v1514 = vld [vmem:[%s1474 + $0x9c] sm:$0xf]
      %v1515 = vld [vmem:[%s1474 + $0xa0] sm:$0xf]
      %v1516 = vld [vmem:[%s1474 + $0xa4] sm:$0xf]
      %v1517 = vld [vmem:[%s1474 + $0xa8] sm:$0xf]
      %v1518 = vld [vmem:[%s1474 + $0xac] sm:$0xf]
      %v1519 = vld [vmem:[%s1474 + $0xb0] sm:$0xf]
      %v1520 = vld [vmem:[%s1474 + $0xb4] sm:$0xf]
      %v1521 = vld [vmem:[%s1474 + $0xb8] sm:$0xf]
      %v1522 = vld [vmem:[%s1474 + $0xbc] sm:$0xf]
      %v1523 = vld [vmem:[%s1474 + $0xc0] sm:$0xf]
      %v1524 = vld [vmem:[%s1474 + $0xc4] sm:$0xf]
      %v1525 = vld [vmem:[%s1474 + $0xc8] sm:$0xf]
      %v1526 = vld [vmem:[%s1474 + $0xcc] sm:$0xf]
      %v1527 = vld [vmem:[%s1474 + $0xd0] sm:$0xf]
      %v1528 = vld [vmem:[%s1474 + $0xd4] sm:$0xf]
      %v1529 = vld [vmem:[%s1474 + $0xd8] sm:$0xf]
      %v1530 = vld [vmem:[%s1474 + $0xdc] sm:$0xf]
      %v1531 = vld [vmem:[%s1474 + $0xe0] sm:$0xf]
      %v1532 = vld [vmem:[%s1474 + $0xe4] sm:$0xf]
      %v1533 = vld [vmem:[%s1474 + $0xe8] sm:$0xf]
      %v1534 = vld [vmem:[%s1474 + $0xec] sm:$0xf]
      %v1535 = vld [vmem:[%s1474 + $0xf0] sm:$0xf]
      %v1536 = vld [vmem:[%s1474 + $0xf4] sm:$0xf]
      %v1537 = vld [vmem:[%s1474 + $0xf8] sm:$0xf]
      %v1538 = vld [vmem:[%s1474 + $0xfc] sm:$0xf]
      %vm1539 = vsmask.f32 6400
      %v1540 = vrot.slane %v407, 1
      %v1541 = vrot.slane %v409, 2
      %v1542 = vor.u32 %v1540, %v1541
      %v1543 = vrot.slane %v454, 1
      %v1544 = vrot.slane %v414, 2
      %v1545 = vor.u32 %v1543, %v1544
      %v1546 = vsel %vm1539, %v1542, %v1545
      %v1547 = vrot.slane %v419, 1
      %v1548 = vrot.slane %v421, 2
      %v1549 = vor.u32 %v1547, %v1548
      %v1550 = vrot.slane %v462, 1
      %v1551 = vrot.slane %v426, 2
      %v1552 = vor.u32 %v1550, %v1551
      %v1553 = vsel %vm1539, %v1549, %v1552
      %v1554 = vrot.slane %v431, 1
      %v1555 = vrot.slane %v433, 2
      %v1556 = vor.u32 %v1554, %v1555
      %v1557 = vrot.slane %v470, 1
      %v1558 = vrot.slane %v438, 2
      %v1559 = vor.u32 %v1557, %v1558
      %v1560 = vsel %vm1539, %v1556, %v1559
      %v1561 = vrot.slane %v443, 1
      %v1562 = vrot.slane %v445, 2
      %v1563 = vor.u32 %v1561, %v1562
      %v1564 = vrot.slane %v478, 1
      %v1565 = vrot.slane %v450, 2
      %v1566 = vor.u32 %v1564, %v1565
      %v1567 = vsel %vm1539, %v1563, %v1566
      %v1568 = vshrl.u32 %v336, 16
      %v1570 = vrot.slane %v1568, 1
      %v1571 = vrot.slane %v458, 2
      %v1572 = vor.u32 %v1570, %v1571
      %v1573 = vsel %vm1539, %v1545, %v1572
      %v1574 = vshrl.u32 %v337, 16
      %v1576 = vrot.slane %v1574, 1
      %v1577 = vrot.slane %v466, 2
      %v1578 = vor.u32 %v1576, %v1577
      %v1579 = vsel %vm1539, %v1552, %v1578
      %v1580 = vshrl.u32 %v338, 16
      %v1582 = vrot.slane %v1580, 1
      %v1583 = vrot.slane %v474, 2
      %v1584 = vor.u32 %v1582, %v1583
      %v1585 = vsel %vm1539, %v1559, %v1584
      %v1586 = vshrl.u32 %v339, 16
      %v1588 = vrot.slane %v1586, 1
      %v1589 = vrot.slane %v482, 2
      %v1590 = vor.u32 %v1588, %v1589
      %v1591 = vsel %vm1539, %v1566, %v1590
      %v1664 = vunpack.c.l.b16 %v1475
      %v1665 = vunpack.c.l.b16 %v1476
      %v1666 = vunpack.c.l.b16 %v1477
      %v1667 = vunpack.c.l.b16 %v1478
      %v1668 = vunpack.c.l.b16 %v1479
      %v1669 = vunpack.c.l.b16 %v1480
      %v1670 = vunpack.c.l.b16 %v1481
      %v1671 = vunpack.c.l.b16 %v1482
      %v1672 = vunpack.c.l.b16 %v1483
      %v1673 = vunpack.c.l.b16 %v1484
      %v1674 = vunpack.c.l.b16 %v1485
      %v1675 = vunpack.c.l.b16 %v1486
      %v1676 = vunpack.c.l.b16 %v1487
      %v1677 = vunpack.c.l.b16 %v1488
      %v1678 = vunpack.c.l.b16 %v1489
      %v1679 = vunpack.c.l.b16 %v1490
      %v1680 = vunpack.c.l.b16 %v1491
      %v1681 = vunpack.c.l.b16 %v1492
      %v1682 = vunpack.c.l.b16 %v1493
      %v1683 = vunpack.c.l.b16 %v1494
      %v1684 = vunpack.c.l.b16 %v1495
      %v1685 = vunpack.c.l.b16 %v1496
      %v1686 = vunpack.c.l.b16 %v1497
      %v1687 = vunpack.c.l.b16 %v1498
      %v1688 = vunpack.c.l.b16 %v1499
      %v1689 = vunpack.c.l.b16 %v1500
      %v1690 = vunpack.c.l.b16 %v1501
      %v1691 = vunpack.c.l.b16 %v1502
      %v1692 = vunpack.c.l.b16 %v1503
      %v1693 = vunpack.c.l.b16 %v1504
      %v1694 = vunpack.c.l.b16 %v1505
      %v1695 = vunpack.c.l.b16 %v1506
      %v1696 = vunpack.c.l.b16 %v1507
      %v1697 = vunpack.c.l.b16 %v1508
      %v1698 = vunpack.c.l.b16 %v1509
      %v1699 = vunpack.c.l.b16 %v1510
      %v1700 = vunpack.c.l.b16 %v1511
      %v1701 = vunpack.c.l.b16 %v1512
      %v1702 = vunpack.c.l.b16 %v1513
      %v1703 = vunpack.c.l.b16 %v1514
      %v1704 = vunpack.c.l.b16 %v1515
      %v1705 = vunpack.c.l.b16 %v1516
      %v1706 = vunpack.c.l.b16 %v1517
      %v1707 = vunpack.c.l.b16 %v1518
      %v1708 = vunpack.c.l.b16 %v1519
      %v1709 = vunpack.c.l.b16 %v1520
      %v1710 = vunpack.c.l.b16 %v1521
      %v1711 = vunpack.c.l.b16 %v1522
      %v1712 = vunpack.c.l.b16 %v1523
      %v1713 = vunpack.c.l.b16 %v1524
      %v1714 = vunpack.c.l.b16 %v1525
      %v1715 = vunpack.c.l.b16 %v1526
      %v1716 = vunpack.c.l.b16 %v1527
      %v1717 = vunpack.c.l.b16 %v1528
      %v1718 = vunpack.c.l.b16 %v1529
      %v1719 = vunpack.c.l.b16 %v1530
      %v1720 = vunpack.c.l.b16 %v1531
      %v1721 = vunpack.c.l.b16 %v1532
      %v1722 = vunpack.c.l.b16 %v1533
      %v1723 = vunpack.c.l.b16 %v1534
      %v1724 = vunpack.c.l.b16 %v1535
      %v1725 = vunpack.c.l.b16 %v1536
      %v1726 = vunpack.c.l.b16 %v1537
      %v1727 = vunpack.c.l.b16 %v1538
      %v1728 = vpack.c.b16 %v1665, %v1664
      %v1729 = vpack.c.b16 %v1667, %v1666
      %v1730 = vpack.c.b16 %v1669, %v1668
      %v1731 = vpack.c.b16 %v1671, %v1670
      %v1732 = vpack.c.b16 %v1673, %v1672
      %v1733 = vpack.c.b16 %v1675, %v1674
      %v1734 = vpack.c.b16 %v1677, %v1676
      %v1735 = vpack.c.b16 %v1679, %v1678
      %v1736 = vpack.c.b16 %v1681, %v1680
      %v1737 = vpack.c.b16 %v1683, %v1682
      %v1738 = vpack.c.b16 %v1685, %v1684
      %v1739 = vpack.c.b16 %v1687, %v1686
      %v1740 = vpack.c.b16 %v1689, %v1688
      %v1741 = vpack.c.b16 %v1691, %v1690
      %v1742 = vpack.c.b16 %v1693, %v1692
      %v1743 = vpack.c.b16 %v1695, %v1694
      %v1744 = vpack.c.b16 %v1697, %v1696
      %v1745 = vpack.c.b16 %v1699, %v1698
      %v1746 = vpack.c.b16 %v1701, %v1700
      %v1747 = vpack.c.b16 %v1703, %v1702
      %v1748 = vpack.c.b16 %v1705, %v1704
      %v1749 = vpack.c.b16 %v1707, %v1706
      %v1750 = vpack.c.b16 %v1709, %v1708
      %v1751 = vpack.c.b16 %v1711, %v1710
      %v1752 = vpack.c.b16 %v1713, %v1712
      %v1753 = vpack.c.b16 %v1715, %v1714
      %v1754 = vpack.c.b16 %v1717, %v1716
      %v1755 = vpack.c.b16 %v1719, %v1718
      %v1756 = vpack.c.b16 %v1721, %v1720
      %v1757 = vpack.c.b16 %v1723, %v1722
      %v1758 = vpack.c.b16 %v1725, %v1724
      %v1759 = vpack.c.b16 %v1727, %v1726
      %1792 = vmatprep.subr.bf16.mxu0 0
      %1793 = vmatpush1.bf16.msra.mxu0 %v1735
      %1794 = vmatprep.subr.bf16.mxu0 0
      %1795 = vmatpush1.bf16.msra.mxu0 %v1734
      %1796 = vmatprep.subr.bf16.mxu0 0
      %1797 = vmatpush1.bf16.msra.mxu0 %v1733
      %1798 = vmatprep.subr.bf16.mxu0 0
      %1799 = vmatpush1.bf16.msra.mxu0 %v1732
      %1800 = vmatprep.subr.bf16.mxu0 0
      %1801 = vmatpush1.bf16.msra.mxu0 %v1731
      %1802 = vmatprep.subr.bf16.mxu0 0
      %1803 = vmatpush1.bf16.msra.mxu0 %v1730
      %1804 = vmatprep.subr.bf16.mxu0 0
      %1805 = vmatpush1.bf16.msra.mxu0 %v1729
      %1806 = vmatprep.subr.bf16.mxu0 0
      %1807 = vmatpush1.bf16.msra.mxu0 %v1728
      %1808 = vmatprep.subr.bf16.mxu0 0
      %1809 = vmatpush2.bf16.msra.mxu0 %v1743
      %1810 = vmatprep.subr.bf16.mxu0 0
      %1811 = vmatpush2.bf16.msra.mxu0 %v1742
      %1812 = vmatprep.subr.bf16.mxu0 0
      %1813 = vmatpush2.bf16.msra.mxu0 %v1741
      %1814 = vmatprep.subr.bf16.mxu0 0
      %1815 = vmatpush2.bf16.msra.mxu0 %v1740
      %1816 = vmatprep.subr.bf16.mxu0 0
      %1817 = vmatpush2.bf16.msra.mxu0 %v1739
      %1818 = vmatprep.subr.bf16.mxu0 0
      %1819 = vmatpush2.bf16.msra.mxu0 %v1738
      %1820 = vmatprep.subr.bf16.mxu0 0
      %1821 = vmatpush2.bf16.msra.mxu0 %v1737
      %1822 = vmatprep.subr.bf16.mxu0 0
      %1823 = vmatpush2.bf16.msra.mxu0 %v1736
      %1824 = vmatprep.mubr.bf16.mxu0 %v1553
      %1825 = vmatmul.mubr.bf16.gmra.mxu0 %v1546
      %v1826 = vpop.f32.mrf.mxu0
      %v1827 = vadd.f32 0.0, %v1826
      %v1828 = vpop.f32.mrf.mxu0
      %v1829 = vpop.f32.mrf.mxu0
      %v1830 = vadd.f32 0.0, %v1829
      %v1831 = vpop.f32.mrf.mxu0
      %1832 = vmatprep.mubr.bf16.mxu0 %v1579
      %1833 = vmatmul.mubr.bf16.gmra.mxu0 %v1573
      %v1834 = vpop.f32.mrf.mxu0
      %v1835 = vadd.f32 0.0, %v1834
      %v1836 = vpop.f32.mrf.mxu0
      %v1837 = vpop.f32.mrf.mxu0
      %v1838 = vadd.f32 0.0, %v1837
      %v1839 = vpop.f32.mrf.mxu0
      %1840 = vdwg.mxu0
      %1841 = vmatprep.subr.bf16.mxu0 0
      %1842 = vmatpush1.bf16.msra.mxu0 %v1751
      %1843 = vmatprep.subr.bf16.mxu0 0
      %1844 = vmatpush1.bf16.msra.mxu0 %v1750
      %1845 = vmatprep.subr.bf16.mxu0 0
      %1846 = vmatpush1.bf16.msra.mxu0 %v1749
      %1847 = vmatprep.subr.bf16.mxu0 0
      %1848 = vmatpush1.bf16.msra.mxu0 %v1748
      %1849 = vmatprep.subr.bf16.mxu0 0
      %1850 = vmatpush1.bf16.msra.mxu0 %v1747
      %1851 = vmatprep.subr.bf16.mxu0 0
      %1852 = vmatpush1.bf16.msra.mxu0 %v1746
      %1853 = vmatprep.subr.bf16.mxu0 0
      %1854 = vmatpush1.bf16.msra.mxu0 %v1745
      %1855 = vmatprep.subr.bf16.mxu0 0
      %1856 = vmatpush1.bf16.msra.mxu0 %v1744
      %1857 = vmatprep.subr.bf16.mxu0 0
      %1858 = vmatpush2.bf16.msra.mxu0 %v1759
      %1859 = vmatprep.subr.bf16.mxu0 0
      %1860 = vmatpush2.bf16.msra.mxu0 %v1758
      %1861 = vmatprep.subr.bf16.mxu0 0
      %1862 = vmatpush2.bf16.msra.mxu0 %v1757
      %1863 = vmatprep.subr.bf16.mxu0 0
      %1864 = vmatpush2.bf16.msra.mxu0 %v1756
      %1865 = vmatprep.subr.bf16.mxu0 0
      %1866 = vmatpush2.bf16.msra.mxu0 %v1755
      %1867 = vmatprep.subr.bf16.mxu0 0
      %1868 = vmatpush2.bf16.msra.mxu0 %v1754
      %1869 = vmatprep.subr.bf16.mxu0 0
      %1870 = vmatpush2.bf16.msra.mxu0 %v1753
      %1871 = vmatprep.subr.bf16.mxu0 0
      %1872 = vmatpush2.bf16.msra.mxu0 %v1752
      %1873 = vmatprep.mubr.bf16.mxu0 %v1567
      %1874 = vmatmul.mubr.bf16.gmra.mxu0 %v1560
      %v1875 = vpop.f32.mrf.mxu0
      %v1876 = vadd.f32 %v1827, %v1875
      %v1877 = vpop.f32.mrf.mxu0
      %v1878 = vpop.f32.mrf.mxu0
      %v1879 = vadd.f32 %v1830, %v1878
      %v1880 = vpop.f32.mrf.mxu0
      %1881 = vmatprep.mubr.bf16.mxu0 %v1591
      %1882 = vmatmul.mubr.bf16.gmra.mxu0 %v1585
      %v1883 = vpop.f32.mrf.mxu0
      %v1884 = vadd.f32 %v1835, %v1883
      %v1885 = vpop.f32.mrf.mxu0
      %v1886 = vpop.f32.mrf.mxu0
      %v1887 = vadd.f32 %v1838, %v1886
      %v1888 = vpop.f32.mrf.mxu0
      %1889 = vdwg.mxu0
      %v1890 = vadd.f32 %v1470, %v1876
      %v1891 = vadd.f32 %v1471, %v1879
      %v1892 = vadd.f32 %v1472, %v1884
      %v1893 = vadd.f32 %v1473, %v1887
      %s1894 = scalar_lea.vmem %s2, 1024
      %v1895 = vld [vmem:[%s1894] sm:$0xf]
      %v1896 = vld [vmem:[%s1894 + $0x4] sm:$0xf]
      %v1897 = vld [vmem:[%s1894 + $0x8] sm:$0xf]
      %v1898 = vld [vmem:[%s1894 + $0xc] sm:$0xf]
      %v1899 = vld [vmem:[%s1894 + $0x10] sm:$0xf]
      %v1900 = vld [vmem:[%s1894 + $0x14] sm:$0xf]
      %v1901 = vld [vmem:[%s1894 + $0x18] sm:$0xf]
      %v1902 = vld [vmem:[%s1894 + $0x1c] sm:$0xf]
      %v1903 = vld [vmem:[%s1894 + $0x20] sm:$0xf]
      %v1904 = vld [vmem:[%s1894 + $0x24] sm:$0xf]
      %v1905 = vld [vmem:[%s1894 + $0x28] sm:$0xf]
      %v1906 = vld [vmem:[%s1894 + $0x2c] sm:$0xf]
      %v1907 = vld [vmem:[%s1894 + $0x30] sm:$0xf]
      %v1908 = vld [vmem:[%s1894 + $0x34] sm:$0xf]
      %v1909 = vld [vmem:[%s1894 + $0x38] sm:$0xf]
      %v1910 = vld [vmem:[%s1894 + $0x3c] sm:$0xf]
      %v1911 = vld [vmem:[%s1894 + $0x40] sm:$0xf]
      %v1912 = vld [vmem:[%s1894 + $0x44] sm:$0xf]
      %v1913 = vld [vmem:[%s1894 + $0x48] sm:$0xf]
      %v1914 = vld [vmem:[%s1894 + $0x4c] sm:$0xf]
      %v1915 = vld [vmem:[%s1894 + $0x50] sm:$0xf]
      %v1916 = vld [vmem:[%s1894 + $0x54] sm:$0xf]
      %v1917 = vld [vmem:[%s1894 + $0x58] sm:$0xf]
      %v1918 = vld [vmem:[%s1894 + $0x5c] sm:$0xf]
      %v1919 = vld [vmem:[%s1894 + $0x60] sm:$0xf]
      %v1920 = vld [vmem:[%s1894 + $0x64] sm:$0xf]
      %v1921 = vld [vmem:[%s1894 + $0x68] sm:$0xf]
      %v1922 = vld [vmem:[%s1894 + $0x6c] sm:$0xf]
      %v1923 = vld [vmem:[%s1894 + $0x70] sm:$0xf]
      %v1924 = vld [vmem:[%s1894 + $0x74] sm:$0xf]
      %v1925 = vld [vmem:[%s1894 + $0x78] sm:$0xf]
      %v1926 = vld [vmem:[%s1894 + $0x7c] sm:$0xf]
      %v1927 = vld [vmem:[%s1894 + $0x80] sm:$0xf]
      %v1928 = vld [vmem:[%s1894 + $0x84] sm:$0xf]
      %v1929 = vld [vmem:[%s1894 + $0x88] sm:$0xf]
      %v1930 = vld [vmem:[%s1894 + $0x8c] sm:$0xf]
      %v1931 = vld [vmem:[%s1894 + $0x90] sm:$0xf]
      %v1932 = vld [vmem:[%s1894 + $0x94] sm:$0xf]
      %v1933 = vld [vmem:[%s1894 + $0x98] sm:$0xf]
      %v1934 = vld [vmem:[%s1894 + $0x9c] sm:$0xf]
      %v1935 = vld [vmem:[%s1894 + $0xa0] sm:$0xf]
      %v1936 = vld [vmem:[%s1894 + $0xa4] sm:$0xf]
      %v1937 = vld [vmem:[%s1894 + $0xa8] sm:$0xf]
      %v1938 = vld [vmem:[%s1894 + $0xac] sm:$0xf]
      %v1939 = vld [vmem:[%s1894 + $0xb0] sm:$0xf]
      %v1940 = vld [vmem:[%s1894 + $0xb4] sm:$0xf]
      %v1941 = vld [vmem:[%s1894 + $0xb8] sm:$0xf]
      %v1942 = vld [vmem:[%s1894 + $0xbc] sm:$0xf]
      %v1943 = vld [vmem:[%s1894 + $0xc0] sm:$0xf]
      %v1944 = vld [vmem:[%s1894 + $0xc4] sm:$0xf]
      %v1945 = vld [vmem:[%s1894 + $0xc8] sm:$0xf]
      %v1946 = vld [vmem:[%s1894 + $0xcc] sm:$0xf]
      %v1947 = vld [vmem:[%s1894 + $0xd0] sm:$0xf]
      %v1948 = vld [vmem:[%s1894 + $0xd4] sm:$0xf]
      %v1949 = vld [vmem:[%s1894 + $0xd8] sm:$0xf]
      %v1950 = vld [vmem:[%s1894 + $0xdc] sm:$0xf]
      %v1951 = vld [vmem:[%s1894 + $0xe0] sm:$0xf]
      %v1952 = vld [vmem:[%s1894 + $0xe4] sm:$0xf]
      %v1953 = vld [vmem:[%s1894 + $0xe8] sm:$0xf]
      %v1954 = vld [vmem:[%s1894 + $0xec] sm:$0xf]
      %v1955 = vld [vmem:[%s1894 + $0xf0] sm:$0xf]
      %v1956 = vld [vmem:[%s1894 + $0xf4] sm:$0xf]
      %v1957 = vld [vmem:[%s1894 + $0xf8] sm:$0xf]
      %v1958 = vld [vmem:[%s1894 + $0xfc] sm:$0xf]
      %vm1959 = vcmask 1045504
      %v1960 = vrot.slane %v264, 2
      %v1961 = vrot.slane %v268, 2
      %v1962 = vsel %vm1959, %v1960, %v1961
      %v1963 = vrot.slane %v265, 2
      %v1964 = vrot.slane %v269, 2
      %v1965 = vsel %vm1959, %v1963, %v1964
      %v1966 = vrot.slane %v266, 2
      %v1967 = vrot.slane %v270, 2
      %v1968 = vsel %vm1959, %v1966, %v1967
      %v1969 = vrot.slane %v267, 2
      %v1970 = vrot.slane %v271, 2
      %v1971 = vsel %vm1959, %v1969, %v1970
      %v1972 = vrot.slane %v336, 2
      %v1973 = vsel %vm1959, %v1961, %v1972
      %v1974 = vrot.slane %v337, 2
      %v1975 = vsel %vm1959, %v1964, %v1974
      %v1976 = vrot.slane %v338, 2
      %v1977 = vsel %vm1959, %v1967, %v1976
      %v1978 = vrot.slane %v339, 2
      %v1979 = vsel %vm1959, %v1970, %v1978
      %v2052 = vunpack.c.l.b16 %v1895
      %v2053 = vunpack.c.l.b16 %v1896
      %v2054 = vunpack.c.l.b16 %v1897
      %v2055 = vunpack.c.l.b16 %v1898
      %v2056 = vunpack.c.l.b16 %v1899
      %v2057 = vunpack.c.l.b16 %v1900
      %v2058 = vunpack.c.l.b16 %v1901
      %v2059 = vunpack.c.l.b16 %v1902
      %v2060 = vunpack.c.l.b16 %v1903
      %v2061 = vunpack.c.l.b16 %v1904
      %v2062 = vunpack.c.l.b16 %v1905
      %v2063 = vunpack.c.l.b16 %v1906
      %v2064 = vunpack.c.l.b16 %v1907
      %v2065 = vunpack.c.l.b16 %v1908
      %v2066 = vunpack.c.l.b16 %v1909
      %v2067 = vunpack.c.l.b16 %v1910
      %v2068 = vunpack.c.l.b16 %v1911
      %v2069 = vunpack.c.l.b16 %v1912
      %v2070 = vunpack.c.l.b16 %v1913
      %v2071 = vunpack.c.l.b16 %v1914
      %v2072 = vunpack.c.l.b16 %v1915
      %v2073 = vunpack.c.l.b16 %v1916
      %v2074 = vunpack.c.l.b16 %v1917
      %v2075 = vunpack.c.l.b16 %v1918
      %v2076 = vunpack.c.l.b16 %v1919
      %v2077 = vunpack.c.l.b16 %v1920
      %v2078 = vunpack.c.l.b16 %v1921
      %v2079 = vunpack.c.l.b16 %v1922
      %v2080 = vunpack.c.l.b16 %v1923
      %v2081 = vunpack.c.l.b16 %v1924
      %v2082 = vunpack.c.l.b16 %v1925
      %v2083 = vunpack.c.l.b16 %v1926
      %v2084 = vunpack.c.l.b16 %v1927
      %v2085 = vunpack.c.l.b16 %v1928
      %v2086 = vunpack.c.l.b16 %v1929
      %v2087 = vunpack.c.l.b16 %v1930
      %v2088 = vunpack.c.l.b16 %v1931
      %v2089 = vunpack.c.l.b16 %v1932
      %v2090 = vunpack.c.l.b16 %v1933
      %v2091 = vunpack.c.l.b16 %v1934
      %v2092 = vunpack.c.l.b16 %v1935
      %v2093 = vunpack.c.l.b16 %v1936
      %v2094 = vunpack.c.l.b16 %v1937
      %v2095 = vunpack.c.l.b16 %v1938
      %v2096 = vunpack.c.l.b16 %v1939
      %v2097 = vunpack.c.l.b16 %v1940
      %v2098 = vunpack.c.l.b16 %v1941
      %v2099 = vunpack.c.l.b16 %v1942
      %v2100 = vunpack.c.l.b16 %v1943
      %v2101 = vunpack.c.l.b16 %v1944
      %v2102 = vunpack.c.l.b16 %v1945
      %v2103 = vunpack.c.l.b16 %v1946
      %v2104 = vunpack.c.l.b16 %v1947
      %v2105 = vunpack.c.l.b16 %v1948
      %v2106 = vunpack.c.l.b16 %v1949
      %v2107 = vunpack.c.l.b16 %v1950
      %v2108 = vunpack.c.l.b16 %v1951
      %v2109 = vunpack.c.l.b16 %v1952
      %v2110 = vunpack.c.l.b16 %v1953
      %v2111 = vunpack.c.l.b16 %v1954
      %v2112 = vunpack.c.l.b16 %v1955
      %v2113 = vunpack.c.l.b16 %v1956
      %v2114 = vunpack.c.l.b16 %v1957
      %v2115 = vunpack.c.l.b16 %v1958
      %v2116 = vpack.c.b16 %v2053, %v2052
      %v2117 = vpack.c.b16 %v2055, %v2054
      %v2118 = vpack.c.b16 %v2057, %v2056
      %v2119 = vpack.c.b16 %v2059, %v2058
      %v2120 = vpack.c.b16 %v2061, %v2060
      %v2121 = vpack.c.b16 %v2063, %v2062
      %v2122 = vpack.c.b16 %v2065, %v2064
      %v2123 = vpack.c.b16 %v2067, %v2066
      %v2124 = vpack.c.b16 %v2069, %v2068
      %v2125 = vpack.c.b16 %v2071, %v2070
      %v2126 = vpack.c.b16 %v2073, %v2072
      %v2127 = vpack.c.b16 %v2075, %v2074
      %v2128 = vpack.c.b16 %v2077, %v2076
      %v2129 = vpack.c.b16 %v2079, %v2078
      %v2130 = vpack.c.b16 %v2081, %v2080
      %v2131 = vpack.c.b16 %v2083, %v2082
      %v2132 = vpack.c.b16 %v2085, %v2084
      %v2133 = vpack.c.b16 %v2087, %v2086
      %v2134 = vpack.c.b16 %v2089, %v2088
      %v2135 = vpack.c.b16 %v2091, %v2090
      %v2136 = vpack.c.b16 %v2093, %v2092
      %v2137 = vpack.c.b16 %v2095, %v2094
      %v2138 = vpack.c.b16 %v2097, %v2096
      %v2139 = vpack.c.b16 %v2099, %v2098
      %v2140 = vpack.c.b16 %v2101, %v2100
      %v2141 = vpack.c.b16 %v2103, %v2102
      %v2142 = vpack.c.b16 %v2105, %v2104
      %v2143 = vpack.c.b16 %v2107, %v2106
      %v2144 = vpack.c.b16 %v2109, %v2108
      %v2145 = vpack.c.b16 %v2111, %v2110
      %v2146 = vpack.c.b16 %v2113, %v2112
      %v2147 = vpack.c.b16 %v2115, %v2114
      %2180 = vmatprep.subr.bf16.mxu0 0
      %2181 = vmatpush1.bf16.msra.mxu0 %v2123
      %2182 = vmatprep.subr.bf16.mxu0 0
      %2183 = vmatpush1.bf16.msra.mxu0 %v2122
      %2184 = vmatprep.subr.bf16.mxu0 0
      %2185 = vmatpush1.bf16.msra.mxu0 %v2121
      %2186 = vmatprep.subr.bf16.mxu0 0
      %2187 = vmatpush1.bf16.msra.mxu0 %v2120
      %2188 = vmatprep.subr.bf16.mxu0 0
      %2189 = vmatpush1.bf16.msra.mxu0 %v2119
      %2190 = vmatprep.subr.bf16.mxu0 0
      %2191 = vmatpush1.bf16.msra.mxu0 %v2118
      %2192 = vmatprep.subr.bf16.mxu0 0
      %2193 = vmatpush1.bf16.msra.mxu0 %v2117
      %2194 = vmatprep.subr.bf16.mxu0 0
      %2195 = vmatpush1.bf16.msra.mxu0 %v2116
      %2196 = vmatprep.subr.bf16.mxu0 0
      %2197 = vmatpush2.bf16.msra.mxu0 %v2131
      %2198 = vmatprep.subr.bf16.mxu0 0
      %2199 = vmatpush2.bf16.msra.mxu0 %v2130
      %2200 = vmatprep.subr.bf16.mxu0 0
      %2201 = vmatpush2.bf16.msra.mxu0 %v2129
      %2202 = vmatprep.subr.bf16.mxu0 0
      %2203 = vmatpush2.bf16.msra.mxu0 %v2128
      %2204 = vmatprep.subr.bf16.mxu0 0
      %2205 = vmatpush2.bf16.msra.mxu0 %v2127
      %2206 = vmatprep.subr.bf16.mxu0 0
      %2207 = vmatpush2.bf16.msra.mxu0 %v2126
      %2208 = vmatprep.subr.bf16.mxu0 0
      %2209 = vmatpush2.bf16.msra.mxu0 %v2125
      %2210 = vmatprep.subr.bf16.mxu0 0
      %2211 = vmatpush2.bf16.msra.mxu0 %v2124
      %2212 = vmatprep.mubr.bf16.mxu0 %v1965
      %2213 = vmatmul.mubr.bf16.gmra.mxu0 %v1962
      %v2214 = vpop.f32.mrf.mxu0
      %v2215 = vadd.f32 0.0, %v2214
      %v2216 = vpop.f32.mrf.mxu0
      %v2217 = vpop.f32.mrf.mxu0
      %v2218 = vadd.f32 0.0, %v2217
      %v2219 = vpop.f32.mrf.mxu0
      %2220 = vmatprep.mubr.bf16.mxu0 %v1975
      %2221 = vmatmul.mubr.bf16.gmra.mxu0 %v1973
      %v2222 = vpop.f32.mrf.mxu0
      %v2223 = vadd.f32 0.0, %v2222
      %v2224 = vpop.f32.mrf.mxu0
      %v2225 = vpop.f32.mrf.mxu0
      %v2226 = vadd.f32 0.0, %v2225
      %v2227 = vpop.f32.mrf.mxu0
      %2228 = vdwg.mxu0
      %2229 = vmatprep.subr.bf16.mxu0 0
      %2230 = vmatpush1.bf16.msra.mxu0 %v2139
      %2231 = vmatprep.subr.bf16.mxu0 0
      %2232 = vmatpush1.bf16.msra.mxu0 %v2138
      %2233 = vmatprep.subr.bf16.mxu0 0
      %2234 = vmatpush1.bf16.msra.mxu0 %v2137
      %2235 = vmatprep.subr.bf16.mxu0 0
      %2236 = vmatpush1.bf16.msra.mxu0 %v2136
      %2237 = vmatprep.subr.bf16.mxu0 0
      %2238 = vmatpush1.bf16.msra.mxu0 %v2135
      %2239 = vmatprep.subr.bf16.mxu0 0
      %2240 = vmatpush1.bf16.msra.mxu0 %v2134
      %2241 = vmatprep.subr.bf16.mxu0 0
      %2242 = vmatpush1.bf16.msra.mxu0 %v2133
      %2243 = vmatprep.subr.bf16.mxu0 0
      %2244 = vmatpush1.bf16.msra.mxu0 %v2132
      %2245 = vmatprep.subr.bf16.mxu0 0
      %2246 = vmatpush2.bf16.msra.mxu0 %v2147
      %2247 = vmatprep.subr.bf16.mxu0 0
      %2248 = vmatpush2.bf16.msra.mxu0 %v2146
      %2249 = vmatprep.subr.bf16.mxu0 0
      %2250 = vmatpush2.bf16.msra.mxu0 %v2145
      %2251 = vmatprep.subr.bf16.mxu0 0
      %2252 = vmatpush2.bf16.msra.mxu0 %v2144
      %2253 = vmatprep.subr.bf16.mxu0 0
      %2254 = vmatpush2.bf16.msra.mxu0 %v2143
      %2255 = vmatprep.subr.bf16.mxu0 0
      %2256 = vmatpush2.bf16.msra.mxu0 %v2142
      %2257 = vmatprep.subr.bf16.mxu0 0
      %2258 = vmatpush2.bf16.msra.mxu0 %v2141
      %2259 = vmatprep.subr.bf16.mxu0 0
      %2260 = vmatpush2.bf16.msra.mxu0 %v2140
      %2261 = vmatprep.mubr.bf16.mxu0 %v1971
      %2262 = vmatmul.mubr.bf16.gmra.mxu0 %v1968
      %v2263 = vpop.f32.mrf.mxu0
      %v2264 = vadd.f32 %v2215, %v2263
      %v2265 = vpop.f32.mrf.mxu0
      %v2266 = vpop.f32.mrf.mxu0
      %v2267 = vadd.f32 %v2218, %v2266
      %v2268 = vpop.f32.mrf.mxu0
      %2269 = vmatprep.mubr.bf16.mxu0 %v1979
      %2270 = vmatmul.mubr.bf16.gmra.mxu0 %v1977
      %v2271 = vpop.f32.mrf.mxu0
      %v2272 = vadd.f32 %v2223, %v2271
      %v2273 = vpop.f32.mrf.mxu0
      %v2274 = vpop.f32.mrf.mxu0
      %v2275 = vadd.f32 %v2226, %v2274
      %v2276 = vpop.f32.mrf.mxu0
      %2277 = vdwg.mxu0
      %v2278 = vadd.f32 %v1890, %v2264
      %v2279 = vadd.f32 %v1891, %v2267
      %v2280 = vadd.f32 %v1892, %v2272
      %v2281 = vadd.f32 %v1893, %v2275
      %s2282 = scalar_lea.vmem %s2, 1280
      %v2283 = vld [vmem:[%s2282] sm:$0xf]
      %v2284 = vld [vmem:[%s2282 + $0x4] sm:$0xf]
      %v2285 = vld [vmem:[%s2282 + $0x8] sm:$0xf]
      %v2286 = vld [vmem:[%s2282 + $0xc] sm:$0xf]
      %v2287 = vld [vmem:[%s2282 + $0x10] sm:$0xf]
      %v2288 = vld [vmem:[%s2282 + $0x14] sm:$0xf]
      %v2289 = vld [vmem:[%s2282 + $0x18] sm:$0xf]
      %v2290 = vld [vmem:[%s2282 + $0x1c] sm:$0xf]
      %v2291 = vld [vmem:[%s2282 + $0x20] sm:$0xf]
      %v2292 = vld [vmem:[%s2282 + $0x24] sm:$0xf]
      %v2293 = vld [vmem:[%s2282 + $0x28] sm:$0xf]
      %v2294 = vld [vmem:[%s2282 + $0x2c] sm:$0xf]
      %v2295 = vld [vmem:[%s2282 + $0x30] sm:$0xf]
      %v2296 = vld [vmem:[%s2282 + $0x34] sm:$0xf]
      %v2297 = vld [vmem:[%s2282 + $0x38] sm:$0xf]
      %v2298 = vld [vmem:[%s2282 + $0x3c] sm:$0xf]
      %v2299 = vld [vmem:[%s2282 + $0x40] sm:$0xf]
      %v2300 = vld [vmem:[%s2282 + $0x44] sm:$0xf]
      %v2301 = vld [vmem:[%s2282 + $0x48] sm:$0xf]
      %v2302 = vld [vmem:[%s2282 + $0x4c] sm:$0xf]
      %v2303 = vld [vmem:[%s2282 + $0x50] sm:$0xf]
      %v2304 = vld [vmem:[%s2282 + $0x54] sm:$0xf]
      %v2305 = vld [vmem:[%s2282 + $0x58] sm:$0xf]
      %v2306 = vld [vmem:[%s2282 + $0x5c] sm:$0xf]
      %v2307 = vld [vmem:[%s2282 + $0x60] sm:$0xf]
      %v2308 = vld [vmem:[%s2282 + $0x64] sm:$0xf]
      %v2309 = vld [vmem:[%s2282 + $0x68] sm:$0xf]
      %v2310 = vld [vmem:[%s2282 + $0x6c] sm:$0xf]
      %v2311 = vld [vmem:[%s2282 + $0x70] sm:$0xf]
      %v2312 = vld [vmem:[%s2282 + $0x74] sm:$0xf]
      %v2313 = vld [vmem:[%s2282 + $0x78] sm:$0xf]
      %v2314 = vld [vmem:[%s2282 + $0x7c] sm:$0xf]
      %v2315 = vld [vmem:[%s2282 + $0x80] sm:$0xf]
      %v2316 = vld [vmem:[%s2282 + $0x84] sm:$0xf]
      %v2317 = vld [vmem:[%s2282 + $0x88] sm:$0xf]
      %v2318 = vld [vmem:[%s2282 + $0x8c] sm:$0xf]
      %v2319 = vld [vmem:[%s2282 + $0x90] sm:$0xf]
      %v2320 = vld [vmem:[%s2282 + $0x94] sm:$0xf]
      %v2321 = vld [vmem:[%s2282 + $0x98] sm:$0xf]
      %v2322 = vld [vmem:[%s2282 + $0x9c] sm:$0xf]
      %v2323 = vld [vmem:[%s2282 + $0xa0] sm:$0xf]
      %v2324 = vld [vmem:[%s2282 + $0xa4] sm:$0xf]
      %v2325 = vld [vmem:[%s2282 + $0xa8] sm:$0xf]
      %v2326 = vld [vmem:[%s2282 + $0xac] sm:$0xf]
      %v2327 = vld [vmem:[%s2282 + $0xb0] sm:$0xf]
      %v2328 = vld [vmem:[%s2282 + $0xb4] sm:$0xf]
      %v2329 = vld [vmem:[%s2282 + $0xb8] sm:$0xf]
      %v2330 = vld [vmem:[%s2282 + $0xbc] sm:$0xf]
      %v2331 = vld [vmem:[%s2282 + $0xc0] sm:$0xf]
      %v2332 = vld [vmem:[%s2282 + $0xc4] sm:$0xf]
      %v2333 = vld [vmem:[%s2282 + $0xc8] sm:$0xf]
      %v2334 = vld [vmem:[%s2282 + $0xcc] sm:$0xf]
      %v2335 = vld [vmem:[%s2282 + $0xd0] sm:$0xf]
      %v2336 = vld [vmem:[%s2282 + $0xd4] sm:$0xf]
      %v2337 = vld [vmem:[%s2282 + $0xd8] sm:$0xf]
      %v2338 = vld [vmem:[%s2282 + $0xdc] sm:$0xf]
      %v2339 = vld [vmem:[%s2282 + $0xe0] sm:$0xf]
      %v2340 = vld [vmem:[%s2282 + $0xe4] sm:$0xf]
      %v2341 = vld [vmem:[%s2282 + $0xe8] sm:$0xf]
      %v2342 = vld [vmem:[%s2282 + $0xec] sm:$0xf]
      %v2343 = vld [vmem:[%s2282 + $0xf0] sm:$0xf]
      %v2344 = vld [vmem:[%s2282 + $0xf4] sm:$0xf]
      %v2345 = vld [vmem:[%s2282 + $0xf8] sm:$0xf]
      %v2346 = vld [vmem:[%s2282 + $0xfc] sm:$0xf]
      %vm2347 = vsmask.f32 5376
      %v2348 = vrot.slane %v407, 2
      %v2349 = vrot.slane %v409, 3
      %v2350 = vor.u32 %v2348, %v2349
      %v2351 = vrot.slane %v454, 2
      %v2352 = vrot.slane %v414, 3
      %v2353 = vor.u32 %v2351, %v2352
      %v2354 = vsel %vm2347, %v2350, %v2353
      %v2355 = vrot.slane %v419, 2
      %v2356 = vrot.slane %v421, 3
      %v2357 = vor.u32 %v2355, %v2356
      %v2358 = vrot.slane %v462, 2
      %v2359 = vrot.slane %v426, 3
      %v2360 = vor.u32 %v2358, %v2359
      %v2361 = vsel %vm2347, %v2357, %v2360
      %v2362 = vrot.slane %v431, 2
      %v2363 = vrot.slane %v433, 3
      %v2364 = vor.u32 %v2362, %v2363
      %v2365 = vrot.slane %v470, 2
      %v2366 = vrot.slane %v438, 3
      %v2367 = vor.u32 %v2365, %v2366
      %v2368 = vsel %vm2347, %v2364, %v2367
      %v2369 = vrot.slane %v443, 2
      %v2370 = vrot.slane %v445, 3
      %v2371 = vor.u32 %v2369, %v2370
      %v2372 = vrot.slane %v478, 2
      %v2373 = vrot.slane %v450, 3
      %v2374 = vor.u32 %v2372, %v2373
      %v2375 = vsel %vm2347, %v2371, %v2374
      %v2376 = vrot.slane %v1568, 2
      %v2377 = vrot.slane %v458, 3
      %v2378 = vor.u32 %v2376, %v2377
      %v2379 = vsel %vm2347, %v2353, %v2378
      %v2380 = vrot.slane %v1574, 2
      %v2381 = vrot.slane %v466, 3
      %v2382 = vor.u32 %v2380, %v2381
      %v2383 = vsel %vm2347, %v2360, %v2382
      %v2384 = vrot.slane %v1580, 2
      %v2385 = vrot.slane %v474, 3
      %v2386 = vor.u32 %v2384, %v2385
      %v2387 = vsel %vm2347, %v2367, %v2386
      %v2388 = vrot.slane %v1586, 2
      %v2389 = vrot.slane %v482, 3
      %v2390 = vor.u32 %v2388, %v2389
      %v2391 = vsel %vm2347, %v2374, %v2390
      %v2464 = vunpack.c.l.b16 %v2283
      %v2465 = vunpack.c.l.b16 %v2284
      %v2466 = vunpack.c.l.b16 %v2285
      %v2467 = vunpack.c.l.b16 %v2286
      %v2468 = vunpack.c.l.b16 %v2287
      %v2469 = vunpack.c.l.b16 %v2288
      %v2470 = vunpack.c.l.b16 %v2289
      %v2471 = vunpack.c.l.b16 %v2290
      %v2472 = vunpack.c.l.b16 %v2291
      %v2473 = vunpack.c.l.b16 %v2292
      %v2474 = vunpack.c.l.b16 %v2293
      %v2475 = vunpack.c.l.b16 %v2294
      %v2476 = vunpack.c.l.b16 %v2295
      %v2477 = vunpack.c.l.b16 %v2296
      %v2478 = vunpack.c.l.b16 %v2297
      %v2479 = vunpack.c.l.b16 %v2298
      %v2480 = vunpack.c.l.b16 %v2299
      %v2481 = vunpack.c.l.b16 %v2300
      %v2482 = vunpack.c.l.b16 %v2301
      %v2483 = vunpack.c.l.b16 %v2302
      %v2484 = vunpack.c.l.b16 %v2303
      %v2485 = vunpack.c.l.b16 %v2304
      %v2486 = vunpack.c.l.b16 %v2305
      %v2487 = vunpack.c.l.b16 %v2306
      %v2488 = vunpack.c.l.b16 %v2307
      %v2489 = vunpack.c.l.b16 %v2308
      %v2490 = vunpack.c.l.b16 %v2309
      %v2491 = vunpack.c.l.b16 %v2310
      %v2492 = vunpack.c.l.b16 %v2311
      %v2493 = vunpack.c.l.b16 %v2312
      %v2494 = vunpack.c.l.b16 %v2313
      %v2495 = vunpack.c.l.b16 %v2314
      %v2496 = vunpack.c.l.b16 %v2315
      %v2497 = vunpack.c.l.b16 %v2316
      %v2498 = vunpack.c.l.b16 %v2317
      %v2499 = vunpack.c.l.b16 %v2318
      %v2500 = vunpack.c.l.b16 %v2319
      %v2501 = vunpack.c.l.b16 %v2320
      %v2502 = vunpack.c.l.b16 %v2321
      %v2503 = vunpack.c.l.b16 %v2322
      %v2504 = vunpack.c.l.b16 %v2323
      %v2505 = vunpack.c.l.b16 %v2324
      %v2506 = vunpack.c.l.b16 %v2325
      %v2507 = vunpack.c.l.b16 %v2326
      %v2508 = vunpack.c.l.b16 %v2327
      %v2509 = vunpack.c.l.b16 %v2328
      %v2510 = vunpack.c.l.b16 %v2329
      %v2511 = vunpack.c.l.b16 %v2330
      %v2512 = vunpack.c.l.b16 %v2331
      %v2513 = vunpack.c.l.b16 %v2332
      %v2514 = vunpack.c.l.b16 %v2333
      %v2515 = vunpack.c.l.b16 %v2334
      %v2516 = vunpack.c.l.b16 %v2335
      %v2517 = vunpack.c.l.b16 %v2336
      %v2518 = vunpack.c.l.b16 %v2337
      %v2519 = vunpack.c.l.b16 %v2338
      %v2520 = vunpack.c.l.b16 %v2339
      %v2521 = vunpack.c.l.b16 %v2340
      %v2522 = vunpack.c.l.b16 %v2341
      %v2523 = vunpack.c.l.b16 %v2342
      %v2524 = vunpack.c.l.b16 %v2343
      %v2525 = vunpack.c.l.b16 %v2344
      %v2526 = vunpack.c.l.b16 %v2345
      %v2527 = vunpack.c.l.b16 %v2346
      %v2528 = vpack.c.b16 %v2465, %v2464
      %v2529 = vpack.c.b16 %v2467, %v2466
      %v2530 = vpack.c.b16 %v2469, %v2468
      %v2531 = vpack.c.b16 %v2471, %v2470
      %v2532 = vpack.c.b16 %v2473, %v2472
      %v2533 = vpack.c.b16 %v2475, %v2474
      %v2534 = vpack.c.b16 %v2477, %v2476
      %v2535 = vpack.c.b16 %v2479, %v2478
      %v2536 = vpack.c.b16 %v2481, %v2480
      %v2537 = vpack.c.b16 %v2483, %v2482
      %v2538 = vpack.c.b16 %v2485, %v2484
      %v2539 = vpack.c.b16 %v2487, %v2486
      %v2540 = vpack.c.b16 %v2489, %v2488
      %v2541 = vpack.c.b16 %v2491, %v2490
      %v2542 = vpack.c.b16 %v2493, %v2492
      %v2543 = vpack.c.b16 %v2495, %v2494
      %v2544 = vpack.c.b16 %v2497, %v2496
      %v2545 = vpack.c.b16 %v2499, %v2498
      %v2546 = vpack.c.b16 %v2501, %v2500
      %v2547 = vpack.c.b16 %v2503, %v2502
      %v2548 = vpack.c.b16 %v2505, %v2504
      %v2549 = vpack.c.b16 %v2507, %v2506
      %v2550 = vpack.c.b16 %v2509, %v2508
      %v2551 = vpack.c.b16 %v2511, %v2510
      %v2552 = vpack.c.b16 %v2513, %v2512
      %v2553 = vpack.c.b16 %v2515, %v2514
      %v2554 = vpack.c.b16 %v2517, %v2516
      %v2555 = vpack.c.b16 %v2519, %v2518
      %v2556 = vpack.c.b16 %v2521, %v2520
      %v2557 = vpack.c.b16 %v2523, %v2522
      %v2558 = vpack.c.b16 %v2525, %v2524
      %v2559 = vpack.c.b16 %v2527, %v2526
      %2592 = vmatprep.subr.bf16.mxu0 0
      %2593 = vmatpush1.bf16.msra.mxu0 %v2535
      %2594 = vmatprep.subr.bf16.mxu0 0
      %2595 = vmatpush1.bf16.msra.mxu0 %v2534
      %2596 = vmatprep.subr.bf16.mxu0 0
      %2597 = vmatpush1.bf16.msra.mxu0 %v2533
      %2598 = vmatprep.subr.bf16.mxu0 0
      %2599 = vmatpush1.bf16.msra.mxu0 %v2532
      %2600 = vmatprep.subr.bf16.mxu0 0
      %2601 = vmatpush1.bf16.msra.mxu0 %v2531
      %2602 = vmatprep.subr.bf16.mxu0 0
      %2603 = vmatpush1.bf16.msra.mxu0 %v2530
      %2604 = vmatprep.subr.bf16.mxu0 0
      %2605 = vmatpush1.bf16.msra.mxu0 %v2529
      %2606 = vmatprep.subr.bf16.mxu0 0
      %2607 = vmatpush1.bf16.msra.mxu0 %v2528
      %2608 = vmatprep.subr.bf16.mxu0 0
      %2609 = vmatpush2.bf16.msra.mxu0 %v2543
      %2610 = vmatprep.subr.bf16.mxu0 0
      %2611 = vmatpush2.bf16.msra.mxu0 %v2542
      %2612 = vmatprep.subr.bf16.mxu0 0
      %2613 = vmatpush2.bf16.msra.mxu0 %v2541
      %2614 = vmatprep.subr.bf16.mxu0 0
      %2615 = vmatpush2.bf16.msra.mxu0 %v2540
      %2616 = vmatprep.subr.bf16.mxu0 0
      %2617 = vmatpush2.bf16.msra.mxu0 %v2539
      %2618 = vmatprep.subr.bf16.mxu0 0
      %2619 = vmatpush2.bf16.msra.mxu0 %v2538
      %2620 = vmatprep.subr.bf16.mxu0 0
      %2621 = vmatpush2.bf16.msra.mxu0 %v2537
      %2622 = vmatprep.subr.bf16.mxu0 0
      %2623 = vmatpush2.bf16.msra.mxu0 %v2536
      %2624 = vmatprep.mubr.bf16.mxu0 %v2361
      %2625 = vmatmul.mubr.bf16.gmra.mxu0 %v2354
      %v2626 = vpop.f32.mrf.mxu0
      %v2627 = vadd.f32 0.0, %v2626
      %v2628 = vpop.f32.mrf.mxu0
      %v2629 = vpop.f32.mrf.mxu0
      %v2630 = vadd.f32 0.0, %v2629
      %v2631 = vpop.f32.mrf.mxu0
      %2632 = vmatprep.mubr.bf16.mxu0 %v2383
      %2633 = vmatmul.mubr.bf16.gmra.mxu0 %v2379
      %v2634 = vpop.f32.mrf.mxu0
      %v2635 = vadd.f32 0.0, %v2634
      %v2636 = vpop.f32.mrf.mxu0
      %v2637 = vpop.f32.mrf.mxu0
      %v2638 = vadd.f32 0.0, %v2637
      %v2639 = vpop.f32.mrf.mxu0
      %2640 = vdwg.mxu0
      %2641 = vmatprep.subr.bf16.mxu0 0
      %2642 = vmatpush1.bf16.msra.mxu0 %v2551
      %2643 = vmatprep.subr.bf16.mxu0 0
      %2644 = vmatpush1.bf16.msra.mxu0 %v2550
      %2645 = vmatprep.subr.bf16.mxu0 0
      %2646 = vmatpush1.bf16.msra.mxu0 %v2549
      %2647 = vmatprep.subr.bf16.mxu0 0
      %2648 = vmatpush1.bf16.msra.mxu0 %v2548
      %2649 = vmatprep.subr.bf16.mxu0 0
      %2650 = vmatpush1.bf16.msra.mxu0 %v2547
      %2651 = vmatprep.subr.bf16.mxu0 0
      %2652 = vmatpush1.bf16.msra.mxu0 %v2546
      %2653 = vmatprep.subr.bf16.mxu0 0
      %2654 = vmatpush1.bf16.msra.mxu0 %v2545
      %2655 = vmatprep.subr.bf16.mxu0 0
      %2656 = vmatpush1.bf16.msra.mxu0 %v2544
      %2657 = vmatprep.subr.bf16.mxu0 0
      %2658 = vmatpush2.bf16.msra.mxu0 %v2559
      %2659 = vmatprep.subr.bf16.mxu0 0
      %2660 = vmatpush2.bf16.msra.mxu0 %v2558
      %2661 = vmatprep.subr.bf16.mxu0 0
      %2662 = vmatpush2.bf16.msra.mxu0 %v2557
      %2663 = vmatprep.subr.bf16.mxu0 0
      %2664 = vmatpush2.bf16.msra.mxu0 %v2556
      %2665 = vmatprep.subr.bf16.mxu0 0
      %2666 = vmatpush2.bf16.msra.mxu0 %v2555
      %2667 = vmatprep.subr.bf16.mxu0 0
      %2668 = vmatpush2.bf16.msra.mxu0 %v2554
      %2669 = vmatprep.subr.bf16.mxu0 0
      %2670 = vmatpush2.bf16.msra.mxu0 %v2553
      %2671 = vmatprep.subr.bf16.mxu0 0
      %2672 = vmatpush2.bf16.msra.mxu0 %v2552
      %2673 = vmatprep.mubr.bf16.mxu0 %v2375
      %2674 = vmatmul.mubr.bf16.gmra.mxu0 %v2368
      %v2675 = vpop.f32.mrf.mxu0
      %v2676 = vadd.f32 %v2627, %v2675
      %v2677 = vpop.f32.mrf.mxu0
      %v2678 = vpop.f32.mrf.mxu0
      %v2679 = vadd.f32 %v2630, %v2678
      %v2680 = vpop.f32.mrf.mxu0
      %2681 = vmatprep.mubr.bf16.mxu0 %v2391
      %2682 = vmatmul.mubr.bf16.gmra.mxu0 %v2387
      %v2683 = vpop.f32.mrf.mxu0
      %v2684 = vadd.f32 %v2635, %v2683
      %v2685 = vpop.f32.mrf.mxu0
      %v2686 = vpop.f32.mrf.mxu0
      %v2687 = vadd.f32 %v2638, %v2686
      %v2688 = vpop.f32.mrf.mxu0
      %2689 = vdwg.mxu0
      %v2690 = vadd.f32 %v2278, %v2676
      %v2691 = vadd.f32 %v2279, %v2679
      %v2692 = vadd.f32 %v2280, %v2684
      %v2693 = vadd.f32 %v2281, %v2687
      %s2694 = scalar_lea.vmem %s2, 1536
      %v2695 = vld [vmem:[%s2694] sm:$0xf]
      %v2696 = vld [vmem:[%s2694 + $0x4] sm:$0xf]
      %v2697 = vld [vmem:[%s2694 + $0x8] sm:$0xf]
      %v2698 = vld [vmem:[%s2694 + $0xc] sm:$0xf]
      %v2699 = vld [vmem:[%s2694 + $0x10] sm:$0xf]
      %v2700 = vld [vmem:[%s2694 + $0x14] sm:$0xf]
      %v2701 = vld [vmem:[%s2694 + $0x18] sm:$0xf]
      %v2702 = vld [vmem:[%s2694 + $0x1c] sm:$0xf]
      %v2703 = vld [vmem:[%s2694 + $0x20] sm:$0xf]
      %v2704 = vld [vmem:[%s2694 + $0x24] sm:$0xf]
      %v2705 = vld [vmem:[%s2694 + $0x28] sm:$0xf]
      %v2706 = vld [vmem:[%s2694 + $0x2c] sm:$0xf]
      %v2707 = vld [vmem:[%s2694 + $0x30] sm:$0xf]
      %v2708 = vld [vmem:[%s2694 + $0x34] sm:$0xf]
      %v2709 = vld [vmem:[%s2694 + $0x38] sm:$0xf]
      %v2710 = vld [vmem:[%s2694 + $0x3c] sm:$0xf]
      %v2711 = vld [vmem:[%s2694 + $0x40] sm:$0xf]
      %v2712 = vld [vmem:[%s2694 + $0x44] sm:$0xf]
      %v2713 = vld [vmem:[%s2694 + $0x48] sm:$0xf]
      %v2714 = vld [vmem:[%s2694 + $0x4c] sm:$0xf]
      %v2715 = vld [vmem:[%s2694 + $0x50] sm:$0xf]
      %v2716 = vld [vmem:[%s2694 + $0x54] sm:$0xf]
      %v2717 = vld [vmem:[%s2694 + $0x58] sm:$0xf]
      %v2718 = vld [vmem:[%s2694 + $0x5c] sm:$0xf]
      %v2719 = vld [vmem:[%s2694 + $0x60] sm:$0xf]
      %v2720 = vld [vmem:[%s2694 + $0x64] sm:$0xf]
      %v2721 = vld [vmem:[%s2694 + $0x68] sm:$0xf]
      %v2722 = vld [vmem:[%s2694 + $0x6c] sm:$0xf]
      %v2723 = vld [vmem:[%s2694 + $0x70] sm:$0xf]
      %v2724 = vld [vmem:[%s2694 + $0x74] sm:$0xf]
      %v2725 = vld [vmem:[%s2694 + $0x78] sm:$0xf]
      %v2726 = vld [vmem:[%s2694 + $0x7c] sm:$0xf]
      %v2727 = vld [vmem:[%s2694 + $0x80] sm:$0xf]
      %v2728 = vld [vmem:[%s2694 + $0x84] sm:$0xf]
      %v2729 = vld [vmem:[%s2694 + $0x88] sm:$0xf]
      %v2730 = vld [vmem:[%s2694 + $0x8c] sm:$0xf]
      %v2731 = vld [vmem:[%s2694 + $0x90] sm:$0xf]
      %v2732 = vld [vmem:[%s2694 + $0x94] sm:$0xf]
      %v2733 = vld [vmem:[%s2694 + $0x98] sm:$0xf]
      %v2734 = vld [vmem:[%s2694 + $0x9c] sm:$0xf]
      %v2735 = vld [vmem:[%s2694 + $0xa0] sm:$0xf]
      %v2736 = vld [vmem:[%s2694 + $0xa4] sm:$0xf]
      %v2737 = vld [vmem:[%s2694 + $0xa8] sm:$0xf]
      %v2738 = vld [vmem:[%s2694 + $0xac] sm:$0xf]
      %v2739 = vld [vmem:[%s2694 + $0xb0] sm:$0xf]
      %v2740 = vld [vmem:[%s2694 + $0xb4] sm:$0xf]
      %v2741 = vld [vmem:[%s2694 + $0xb8] sm:$0xf]
      %v2742 = vld [vmem:[%s2694 + $0xbc] sm:$0xf]
      %v2743 = vld [vmem:[%s2694 + $0xc0] sm:$0xf]
      %v2744 = vld [vmem:[%s2694 + $0xc4] sm:$0xf]
      %v2745 = vld [vmem:[%s2694 + $0xc8] sm:$0xf]
      %v2746 = vld [vmem:[%s2694 + $0xcc] sm:$0xf]
      %v2747 = vld [vmem:[%s2694 + $0xd0] sm:$0xf]
      %v2748 = vld [vmem:[%s2694 + $0xd4] sm:$0xf]
      %v2749 = vld [vmem:[%s2694 + $0xd8] sm:$0xf]
      %v2750 = vld [vmem:[%s2694 + $0xdc] sm:$0xf]
      %v2751 = vld [vmem:[%s2694 + $0xe0] sm:$0xf]
      %v2752 = vld [vmem:[%s2694 + $0xe4] sm:$0xf]
      %v2753 = vld [vmem:[%s2694 + $0xe8] sm:$0xf]
      %v2754 = vld [vmem:[%s2694 + $0xec] sm:$0xf]
      %v2755 = vld [vmem:[%s2694 + $0xf0] sm:$0xf]
      %v2756 = vld [vmem:[%s2694 + $0xf4] sm:$0xf]
      %v2757 = vld [vmem:[%s2694 + $0xf8] sm:$0xf]
      %v2758 = vld [vmem:[%s2694 + $0xfc] sm:$0xf]
      %vm2759 = vcmask 1044480
      %v2760 = vrot.slane %v264, 3
      %v2761 = vrot.slane %v268, 3
      %v2762 = vsel %vm2759, %v2760, %v2761
      %v2763 = vrot.slane %v265, 3
      %v2764 = vrot.slane %v269, 3
      %v2765 = vsel %vm2759, %v2763, %v2764
      %v2766 = vrot.slane %v266, 3
      %v2767 = vrot.slane %v270, 3
      %v2768 = vsel %vm2759, %v2766, %v2767
      %v2769 = vrot.slane %v267, 3
      %v2770 = vrot.slane %v271, 3
      %v2771 = vsel %vm2759, %v2769, %v2770
      %v2772 = vrot.slane %v336, 3
      %v2773 = vsel %vm2759, %v2761, %v2772
      %v2774 = vrot.slane %v337, 3
      %v2775 = vsel %vm2759, %v2764, %v2774
      %v2776 = vrot.slane %v338, 3
      %v2777 = vsel %vm2759, %v2767, %v2776
      %v2778 = vrot.slane %v339, 3
      %v2779 = vsel %vm2759, %v2770, %v2778
      %v2852 = vunpack.c.l.b16 %v2695
      %v2853 = vunpack.c.l.b16 %v2696
      %v2854 = vunpack.c.l.b16 %v2697
      %v2855 = vunpack.c.l.b16 %v2698
      %v2856 = vunpack.c.l.b16 %v2699
      %v2857 = vunpack.c.l.b16 %v2700
      %v2858 = vunpack.c.l.b16 %v2701
      %v2859 = vunpack.c.l.b16 %v2702
      %v2860 = vunpack.c.l.b16 %v2703
      %v2861 = vunpack.c.l.b16 %v2704
      %v2862 = vunpack.c.l.b16 %v2705
      %v2863 = vunpack.c.l.b16 %v2706
      %v2864 = vunpack.c.l.b16 %v2707
      %v2865 = vunpack.c.l.b16 %v2708
      %v2866 = vunpack.c.l.b16 %v2709
      %v2867 = vunpack.c.l.b16 %v2710
      %v2868 = vunpack.c.l.b16 %v2711
      %v2869 = vunpack.c.l.b16 %v2712
      %v2870 = vunpack.c.l.b16 %v2713
      %v2871 = vunpack.c.l.b16 %v2714
      %v2872 = vunpack.c.l.b16 %v2715
      %v2873 = vunpack.c.l.b16 %v2716
      %v2874 = vunpack.c.l.b16 %v2717
      %v2875 = vunpack.c.l.b16 %v2718
      %v2876 = vunpack.c.l.b16 %v2719
      %v2877 = vunpack.c.l.b16 %v2720
      %v2878 = vunpack.c.l.b16 %v2721
      %v2879 = vunpack.c.l.b16 %v2722
      %v2880 = vunpack.c.l.b16 %v2723
      %v2881 = vunpack.c.l.b16 %v2724
      %v2882 = vunpack.c.l.b16 %v2725
      %v2883 = vunpack.c.l.b16 %v2726
      %v2884 = vunpack.c.l.b16 %v2727
      %v2885 = vunpack.c.l.b16 %v2728
      %v2886 = vunpack.c.l.b16 %v2729
      %v2887 = vunpack.c.l.b16 %v2730
      %v2888 = vunpack.c.l.b16 %v2731
      %v2889 = vunpack.c.l.b16 %v2732
      %v2890 = vunpack.c.l.b16 %v2733
      %v2891 = vunpack.c.l.b16 %v2734
      %v2892 = vunpack.c.l.b16 %v2735
      %v2893 = vunpack.c.l.b16 %v2736
      %v2894 = vunpack.c.l.b16 %v2737
      %v2895 = vunpack.c.l.b16 %v2738
      %v2896 = vunpack.c.l.b16 %v2739
      %v2897 = vunpack.c.l.b16 %v2740
      %v2898 = vunpack.c.l.b16 %v2741
      %v2899 = vunpack.c.l.b16 %v2742
      %v2900 = vunpack.c.l.b16 %v2743
      %v2901 = vunpack.c.l.b16 %v2744
      %v2902 = vunpack.c.l.b16 %v2745
      %v2903 = vunpack.c.l.b16 %v2746
      %v2904 = vunpack.c.l.b16 %v2747
      %v2905 = vunpack.c.l.b16 %v2748
      %v2906 = vunpack.c.l.b16 %v2749
      %v2907 = vunpack.c.l.b16 %v2750
      %v2908 = vunpack.c.l.b16 %v2751
      %v2909 = vunpack.c.l.b16 %v2752
      %v2910 = vunpack.c.l.b16 %v2753
      %v2911 = vunpack.c.l.b16 %v2754
      %v2912 = vunpack.c.l.b16 %v2755
      %v2913 = vunpack.c.l.b16 %v2756
      %v2914 = vunpack.c.l.b16 %v2757
      %v2915 = vunpack.c.l.b16 %v2758
      %v2916 = vpack.c.b16 %v2853, %v2852
      %v2917 = vpack.c.b16 %v2855, %v2854
      %v2918 = vpack.c.b16 %v2857, %v2856
      %v2919 = vpack.c.b16 %v2859, %v2858
      %v2920 = vpack.c.b16 %v2861, %v2860
      %v2921 = vpack.c.b16 %v2863, %v2862
      %v2922 = vpack.c.b16 %v2865, %v2864
      %v2923 = vpack.c.b16 %v2867, %v2866
      %v2924 = vpack.c.b16 %v2869, %v2868
      %v2925 = vpack.c.b16 %v2871, %v2870
      %v2926 = vpack.c.b16 %v2873, %v2872
      %v2927 = vpack.c.b16 %v2875, %v2874
      %v2928 = vpack.c.b16 %v2877, %v2876
      %v2929 = vpack.c.b16 %v2879, %v2878
      %v2930 = vpack.c.b16 %v2881, %v2880
      %v2931 = vpack.c.b16 %v2883, %v2882
      %v2932 = vpack.c.b16 %v2885, %v2884
      %v2933 = vpack.c.b16 %v2887, %v2886
      %v2934 = vpack.c.b16 %v2889, %v2888
      %v2935 = vpack.c.b16 %v2891, %v2890
      %v2936 = vpack.c.b16 %v2893, %v2892
      %v2937 = vpack.c.b16 %v2895, %v2894
      %v2938 = vpack.c.b16 %v2897, %v2896
      %v2939 = vpack.c.b16 %v2899, %v2898
      %v2940 = vpack.c.b16 %v2901, %v2900
      %v2941 = vpack.c.b16 %v2903, %v2902
      %v2942 = vpack.c.b16 %v2905, %v2904
      %v2943 = vpack.c.b16 %v2907, %v2906
      %v2944 = vpack.c.b16 %v2909, %v2908
      %v2945 = vpack.c.b16 %v2911, %v2910
      %v2946 = vpack.c.b16 %v2913, %v2912
      %v2947 = vpack.c.b16 %v2915, %v2914
      %2980 = vmatprep.subr.bf16.mxu0 0
      %2981 = vmatpush1.bf16.msra.mxu0 %v2923
      %2982 = vmatprep.subr.bf16.mxu0 0
      %2983 = vmatpush1.bf16.msra.mxu0 %v2922
      %2984 = vmatprep.subr.bf16.mxu0 0
      %2985 = vmatpush1.bf16.msra.mxu0 %v2921
      %2986 = vmatprep.subr.bf16.mxu0 0
      %2987 = vmatpush1.bf16.msra.mxu0 %v2920
      %2988 = vmatprep.subr.bf16.mxu0 0
      %2989 = vmatpush1.bf16.msra.mxu0 %v2919
      %2990 = vmatprep.subr.bf16.mxu0 0
      %2991 = vmatpush1.bf16.msra.mxu0 %v2918
      %2992 = vmatprep.subr.bf16.mxu0 0
      %2993 = vmatpush1.bf16.msra.mxu0 %v2917
      %2994 = vmatprep.subr.bf16.mxu0 0
      %2995 = vmatpush1.bf16.msra.mxu0 %v2916
      %2996 = vmatprep.subr.bf16.mxu0 0
      %2997 = vmatpush2.bf16.msra.mxu0 %v2931
      %2998 = vmatprep.subr.bf16.mxu0 0
      %2999 = vmatpush2.bf16.msra.mxu0 %v2930
      %3000 = vmatprep.subr.bf16.mxu0 0
      %3001 = vmatpush2.bf16.msra.mxu0 %v2929
      %3002 = vmatprep.subr.bf16.mxu0 0
      %3003 = vmatpush2.bf16.msra.mxu0 %v2928
      %3004 = vmatprep.subr.bf16.mxu0 0
      %3005 = vmatpush2.bf16.msra.mxu0 %v2927
      %3006 = vmatprep.subr.bf16.mxu0 0
      %3007 = vmatpush2.bf16.msra.mxu0 %v2926
      %3008 = vmatprep.subr.bf16.mxu0 0
      %3009 = vmatpush2.bf16.msra.mxu0 %v2925
      %3010 = vmatprep.subr.bf16.mxu0 0
      %3011 = vmatpush2.bf16.msra.mxu0 %v2924
      %3012 = vmatprep.mubr.bf16.mxu0 %v2765
      %3013 = vmatmul.mubr.bf16.gmra.mxu0 %v2762
      %v3014 = vpop.f32.mrf.mxu0
      %v3015 = vadd.f32 0.0, %v3014
      %v3016 = vpop.f32.mrf.mxu0
      %v3017 = vpop.f32.mrf.mxu0
      %v3018 = vadd.f32 0.0, %v3017
      %v3019 = vpop.f32.mrf.mxu0
      %3020 = vmatprep.mubr.bf16.mxu0 %v2775
      %3021 = vmatmul.mubr.bf16.gmra.mxu0 %v2773
      %v3022 = vpop.f32.mrf.mxu0
      %v3023 = vadd.f32 0.0, %v3022
      %v3024 = vpop.f32.mrf.mxu0
      %v3025 = vpop.f32.mrf.mxu0
      %v3026 = vadd.f32 0.0, %v3025
      %v3027 = vpop.f32.mrf.mxu0
      %3028 = vdwg.mxu0
      %3029 = vmatprep.subr.bf16.mxu0 0
      %3030 = vmatpush1.bf16.msra.mxu0 %v2939
      %3031 = vmatprep.subr.bf16.mxu0 0
      %3032 = vmatpush1.bf16.msra.mxu0 %v2938
      %3033 = vmatprep.subr.bf16.mxu0 0
      %3034 = vmatpush1.bf16.msra.mxu0 %v2937
      %3035 = vmatprep.subr.bf16.mxu0 0
      %3036 = vmatpush1.bf16.msra.mxu0 %v2936
      %3037 = vmatprep.subr.bf16.mxu0 0
      %3038 = vmatpush1.bf16.msra.mxu0 %v2935
      %3039 = vmatprep.subr.bf16.mxu0 0
      %3040 = vmatpush1.bf16.msra.mxu0 %v2934
      %3041 = vmatprep.subr.bf16.mxu0 0
      %3042 = vmatpush1.bf16.msra.mxu0 %v2933
      %3043 = vmatprep.subr.bf16.mxu0 0
      %3044 = vmatpush1.bf16.msra.mxu0 %v2932
      %3045 = vmatprep.subr.bf16.mxu0 0
      %3046 = vmatpush2.bf16.msra.mxu0 %v2947
      %3047 = vmatprep.subr.bf16.mxu0 0
      %3048 = vmatpush2.bf16.msra.mxu0 %v2946
      %3049 = vmatprep.subr.bf16.mxu0 0
      %3050 = vmatpush2.bf16.msra.mxu0 %v2945
      %3051 = vmatprep.subr.bf16.mxu0 0
      %3052 = vmatpush2.bf16.msra.mxu0 %v2944
      %3053 = vmatprep.subr.bf16.mxu0 0
      %3054 = vmatpush2.bf16.msra.mxu0 %v2943
      %3055 = vmatprep.subr.bf16.mxu0 0
      %3056 = vmatpush2.bf16.msra.mxu0 %v2942
      %3057 = vmatprep.subr.bf16.mxu0 0
      %3058 = vmatpush2.bf16.msra.mxu0 %v2941
      %3059 = vmatprep.subr.bf16.mxu0 0
      %3060 = vmatpush2.bf16.msra.mxu0 %v2940
      %3061 = vmatprep.mubr.bf16.mxu0 %v2771
      %3062 = vmatmul.mubr.bf16.gmra.mxu0 %v2768
      %v3063 = vpop.f32.mrf.mxu0
      %v3064 = vadd.f32 %v3015, %v3063
      %v3065 = vpop.f32.mrf.mxu0
      %v3066 = vpop.f32.mrf.mxu0
      %v3067 = vadd.f32 %v3018, %v3066
      %v3068 = vpop.f32.mrf.mxu0
      %3069 = vmatprep.mubr.bf16.mxu0 %v2779
      %3070 = vmatmul.mubr.bf16.gmra.mxu0 %v2777
      %v3071 = vpop.f32.mrf.mxu0
      %v3072 = vadd.f32 %v3023, %v3071
      %v3073 = vpop.f32.mrf.mxu0
      %v3074 = vpop.f32.mrf.mxu0
      %v3075 = vadd.f32 %v3026, %v3074
      %v3076 = vpop.f32.mrf.mxu0
      %3077 = vdwg.mxu0
      %v3078 = vadd.f32 %v2690, %v3064
      %v3079 = vadd.f32 %v2691, %v3067
      %v3080 = vadd.f32 %v2692, %v3072
      %v3081 = vadd.f32 %v2693, %v3075
      %s3082 = scalar_lea.vmem %s2, 1792
      %v3083 = vld [vmem:[%s3082] sm:$0xf]
      %v3084 = vld [vmem:[%s3082 + $0x4] sm:$0xf]
      %v3085 = vld [vmem:[%s3082 + $0x8] sm:$0xf]
      %v3086 = vld [vmem:[%s3082 + $0xc] sm:$0xf]
      %v3087 = vld [vmem:[%s3082 + $0x10] sm:$0xf]
      %v3088 = vld [vmem:[%s3082 + $0x14] sm:$0xf]
      %v3089 = vld [vmem:[%s3082 + $0x18] sm:$0xf]
      %v3090 = vld [vmem:[%s3082 + $0x1c] sm:$0xf]
      %v3091 = vld [vmem:[%s3082 + $0x20] sm:$0xf]
      %v3092 = vld [vmem:[%s3082 + $0x24] sm:$0xf]
      %v3093 = vld [vmem:[%s3082 + $0x28] sm:$0xf]
      %v3094 = vld [vmem:[%s3082 + $0x2c] sm:$0xf]
      %v3095 = vld [vmem:[%s3082 + $0x30] sm:$0xf]
      %v3096 = vld [vmem:[%s3082 + $0x34] sm:$0xf]
      %v3097 = vld [vmem:[%s3082 + $0x38] sm:$0xf]
      %v3098 = vld [vmem:[%s3082 + $0x3c] sm:$0xf]
      %v3099 = vld [vmem:[%s3082 + $0x40] sm:$0xf]
      %v3100 = vld [vmem:[%s3082 + $0x44] sm:$0xf]
      %v3101 = vld [vmem:[%s3082 + $0x48] sm:$0xf]
      %v3102 = vld [vmem:[%s3082 + $0x4c] sm:$0xf]
      %v3103 = vld [vmem:[%s3082 + $0x50] sm:$0xf]
      %v3104 = vld [vmem:[%s3082 + $0x54] sm:$0xf]
      %v3105 = vld [vmem:[%s3082 + $0x58] sm:$0xf]
      %v3106 = vld [vmem:[%s3082 + $0x5c] sm:$0xf]
      %v3107 = vld [vmem:[%s3082 + $0x60] sm:$0xf]
      %v3108 = vld [vmem:[%s3082 + $0x64] sm:$0xf]
      %v3109 = vld [vmem:[%s3082 + $0x68] sm:$0xf]
      %v3110 = vld [vmem:[%s3082 + $0x6c] sm:$0xf]
      %v3111 = vld [vmem:[%s3082 + $0x70] sm:$0xf]
      %v3112 = vld [vmem:[%s3082 + $0x74] sm:$0xf]
      %v3113 = vld [vmem:[%s3082 + $0x78] sm:$0xf]
      %v3114 = vld [vmem:[%s3082 + $0x7c] sm:$0xf]
      %v3115 = vld [vmem:[%s3082 + $0x80] sm:$0xf]
      %v3116 = vld [vmem:[%s3082 + $0x84] sm:$0xf]
      %v3117 = vld [vmem:[%s3082 + $0x88] sm:$0xf]
      %v3118 = vld [vmem:[%s3082 + $0x8c] sm:$0xf]
      %v3119 = vld [vmem:[%s3082 + $0x90] sm:$0xf]
      %v3120 = vld [vmem:[%s3082 + $0x94] sm:$0xf]
      %v3121 = vld [vmem:[%s3082 + $0x98] sm:$0xf]
      %v3122 = vld [vmem:[%s3082 + $0x9c] sm:$0xf]
      %v3123 = vld [vmem:[%s3082 + $0xa0] sm:$0xf]
      %v3124 = vld [vmem:[%s3082 + $0xa4] sm:$0xf]
      %v3125 = vld [vmem:[%s3082 + $0xa8] sm:$0xf]
      %v3126 = vld [vmem:[%s3082 + $0xac] sm:$0xf]
      %v3127 = vld [vmem:[%s3082 + $0xb0] sm:$0xf]
      %v3128 = vld [vmem:[%s3082 + $0xb4] sm:$0xf]
      %v3129 = vld [vmem:[%s3082 + $0xb8] sm:$0xf]
      %v3130 = vld [vmem:[%s3082 + $0xbc] sm:$0xf]
      %v3131 = vld [vmem:[%s3082 + $0xc0] sm:$0xf]
      %v3132 = vld [vmem:[%s3082 + $0xc4] sm:$0xf]
      %v3133 = vld [vmem:[%s3082 + $0xc8] sm:$0xf]
      %v3134 = vld [vmem:[%s3082 + $0xcc] sm:$0xf]
      %v3135 = vld [vmem:[%s3082 + $0xd0] sm:$0xf]
      %v3136 = vld [vmem:[%s3082 + $0xd4] sm:$0xf]
      %v3137 = vld [vmem:[%s3082 + $0xd8] sm:$0xf]
      %v3138 = vld [vmem:[%s3082 + $0xdc] sm:$0xf]
      %v3139 = vld [vmem:[%s3082 + $0xe0] sm:$0xf]
      %v3140 = vld [vmem:[%s3082 + $0xe4] sm:$0xf]
      %v3141 = vld [vmem:[%s3082 + $0xe8] sm:$0xf]
      %v3142 = vld [vmem:[%s3082 + $0xec] sm:$0xf]
      %v3143 = vld [vmem:[%s3082 + $0xf0] sm:$0xf]
      %v3144 = vld [vmem:[%s3082 + $0xf4] sm:$0xf]
      %v3145 = vld [vmem:[%s3082 + $0xf8] sm:$0xf]
      %v3146 = vld [vmem:[%s3082 + $0xfc] sm:$0xf]
      %vm3147 = vsmask.f32 4352
      %v3148 = vrot.slane %v407, 3
      %v3149 = vrot.slane %v409, 4
      %v3150 = vor.u32 %v3148, %v3149
      %v3151 = vrot.slane %v454, 3
      %v3152 = vrot.slane %v414, 4
      %v3153 = vor.u32 %v3151, %v3152
      %v3154 = vsel %vm3147, %v3150, %v3153
      %v3155 = vrot.slane %v419, 3
      %v3156 = vrot.slane %v421, 4
      %v3157 = vor.u32 %v3155, %v3156
      %v3158 = vrot.slane %v462, 3
      %v3159 = vrot.slane %v426, 4
      %v3160 = vor.u32 %v3158, %v3159
      %v3161 = vsel %vm3147, %v3157, %v3160
      %v3162 = vrot.slane %v431, 3
      %v3163 = vrot.slane %v433, 4
      %v3164 = vor.u32 %v3162, %v3163
      %v3165 = vrot.slane %v470, 3
      %v3166 = vrot.slane %v438, 4
      %v3167 = vor.u32 %v3165, %v3166
      %v3168 = vsel %vm3147, %v3164, %v3167
      %v3169 = vrot.slane %v443, 3
      %v3170 = vrot.slane %v445, 4
      %v3171 = vor.u32 %v3169, %v3170
      %v3172 = vrot.slane %v478, 3
      %v3173 = vrot.slane %v450, 4
      %v3174 = vor.u32 %v3172, %v3173
      %v3175 = vsel %vm3147, %v3171, %v3174
      %v3176 = vrot.slane %v1568, 3
      %v3177 = vrot.slane %v458, 4
      %v3178 = vor.u32 %v3176, %v3177
      %v3179 = vsel %vm3147, %v3153, %v3178
      %v3180 = vrot.slane %v1574, 3
      %v3181 = vrot.slane %v466, 4
      %v3182 = vor.u32 %v3180, %v3181
      %v3183 = vsel %vm3147, %v3160, %v3182
      %v3184 = vrot.slane %v1580, 3
      %v3185 = vrot.slane %v474, 4
      %v3186 = vor.u32 %v3184, %v3185
      %v3187 = vsel %vm3147, %v3167, %v3186
      %v3188 = vrot.slane %v1586, 3
      %v3189 = vrot.slane %v482, 4
      %v3190 = vor.u32 %v3188, %v3189
      %v3191 = vsel %vm3147, %v3174, %v3190
      %v3264 = vunpack.c.l.b16 %v3083
      %v3265 = vunpack.c.l.b16 %v3084
      %v3266 = vunpack.c.l.b16 %v3085
      %v3267 = vunpack.c.l.b16 %v3086
      %v3268 = vunpack.c.l.b16 %v3087
      %v3269 = vunpack.c.l.b16 %v3088
      %v3270 = vunpack.c.l.b16 %v3089
      %v3271 = vunpack.c.l.b16 %v3090
      %v3272 = vunpack.c.l.b16 %v3091
      %v3273 = vunpack.c.l.b16 %v3092
      %v3274 = vunpack.c.l.b16 %v3093
      %v3275 = vunpack.c.l.b16 %v3094
      %v3276 = vunpack.c.l.b16 %v3095
      %v3277 = vunpack.c.l.b16 %v3096
      %v3278 = vunpack.c.l.b16 %v3097
      %v3279 = vunpack.c.l.b16 %v3098
      %v3280 = vunpack.c.l.b16 %v3099
      %v3281 = vunpack.c.l.b16 %v3100
      %v3282 = vunpack.c.l.b16 %v3101
      %v3283 = vunpack.c.l.b16 %v3102
      %v3284 = vunpack.c.l.b16 %v3103
      %v3285 = vunpack.c.l.b16 %v3104
      %v3286 = vunpack.c.l.b16 %v3105
      %v3287 = vunpack.c.l.b16 %v3106
      %v3288 = vunpack.c.l.b16 %v3107
      %v3289 = vunpack.c.l.b16 %v3108
      %v3290 = vunpack.c.l.b16 %v3109
      %v3291 = vunpack.c.l.b16 %v3110
      %v3292 = vunpack.c.l.b16 %v3111
      %v3293 = vunpack.c.l.b16 %v3112
      %v3294 = vunpack.c.l.b16 %v3113
      %v3295 = vunpack.c.l.b16 %v3114
      %v3296 = vunpack.c.l.b16 %v3115
      %v3297 = vunpack.c.l.b16 %v3116
      %v3298 = vunpack.c.l.b16 %v3117
      %v3299 = vunpack.c.l.b16 %v3118
      %v3300 = vunpack.c.l.b16 %v3119
      %v3301 = vunpack.c.l.b16 %v3120
      %v3302 = vunpack.c.l.b16 %v3121
      %v3303 = vunpack.c.l.b16 %v3122
      %v3304 = vunpack.c.l.b16 %v3123
      %v3305 = vunpack.c.l.b16 %v3124
      %v3306 = vunpack.c.l.b16 %v3125
      %v3307 = vunpack.c.l.b16 %v3126
      %v3308 = vunpack.c.l.b16 %v3127
      %v3309 = vunpack.c.l.b16 %v3128
      %v3310 = vunpack.c.l.b16 %v3129
      %v3311 = vunpack.c.l.b16 %v3130
      %v3312 = vunpack.c.l.b16 %v3131
      %v3313 = vunpack.c.l.b16 %v3132
      %v3314 = vunpack.c.l.b16 %v3133
      %v3315 = vunpack.c.l.b16 %v3134
      %v3316 = vunpack.c.l.b16 %v3135
      %v3317 = vunpack.c.l.b16 %v3136
      %v3318 = vunpack.c.l.b16 %v3137
      %v3319 = vunpack.c.l.b16 %v3138
      %v3320 = vunpack.c.l.b16 %v3139
      %v3321 = vunpack.c.l.b16 %v3140
      %v3322 = vunpack.c.l.b16 %v3141
      %v3323 = vunpack.c.l.b16 %v3142
      %v3324 = vunpack.c.l.b16 %v3143
      %v3325 = vunpack.c.l.b16 %v3144
      %v3326 = vunpack.c.l.b16 %v3145
      %v3327 = vunpack.c.l.b16 %v3146
      %v3328 = vpack.c.b16 %v3265, %v3264
      %v3329 = vpack.c.b16 %v3267, %v3266
      %v3330 = vpack.c.b16 %v3269, %v3268
      %v3331 = vpack.c.b16 %v3271, %v3270
      %v3332 = vpack.c.b16 %v3273, %v3272
      %v3333 = vpack.c.b16 %v3275, %v3274
      %v3334 = vpack.c.b16 %v3277, %v3276
      %v3335 = vpack.c.b16 %v3279, %v3278
      %v3336 = vpack.c.b16 %v3281, %v3280
      %v3337 = vpack.c.b16 %v3283, %v3282
      %v3338 = vpack.c.b16 %v3285, %v3284
      %v3339 = vpack.c.b16 %v3287, %v3286
      %v3340 = vpack.c.b16 %v3289, %v3288
      %v3341 = vpack.c.b16 %v3291, %v3290
      %v3342 = vpack.c.b16 %v3293, %v3292
      %v3343 = vpack.c.b16 %v3295, %v3294
      %v3344 = vpack.c.b16 %v3297, %v3296
      %v3345 = vpack.c.b16 %v3299, %v3298
      %v3346 = vpack.c.b16 %v3301, %v3300
      %v3347 = vpack.c.b16 %v3303, %v3302
      %v3348 = vpack.c.b16 %v3305, %v3304
      %v3349 = vpack.c.b16 %v3307, %v3306
      %v3350 = vpack.c.b16 %v3309, %v3308
      %v3351 = vpack.c.b16 %v3311, %v3310
      %v3352 = vpack.c.b16 %v3313, %v3312
      %v3353 = vpack.c.b16 %v3315, %v3314
      %v3354 = vpack.c.b16 %v3317, %v3316
      %v3355 = vpack.c.b16 %v3319, %v3318
      %v3356 = vpack.c.b16 %v3321, %v3320
      %v3357 = vpack.c.b16 %v3323, %v3322
      %v3358 = vpack.c.b16 %v3325, %v3324
      %v3359 = vpack.c.b16 %v3327, %v3326
      %3392 = vmatprep.subr.bf16.mxu0 0
      %3393 = vmatpush1.bf16.msra.mxu0 %v3335
      %3394 = vmatprep.subr.bf16.mxu0 0
      %3395 = vmatpush1.bf16.msra.mxu0 %v3334
      %3396 = vmatprep.subr.bf16.mxu0 0
      %3397 = vmatpush1.bf16.msra.mxu0 %v3333
      %3398 = vmatprep.subr.bf16.mxu0 0
      %3399 = vmatpush1.bf16.msra.mxu0 %v3332
      %3400 = vmatprep.subr.bf16.mxu0 0
      %3401 = vmatpush1.bf16.msra.mxu0 %v3331
      %3402 = vmatprep.subr.bf16.mxu0 0
      %3403 = vmatpush1.bf16.msra.mxu0 %v3330
      %3404 = vmatprep.subr.bf16.mxu0 0
      %3405 = vmatpush1.bf16.msra.mxu0 %v3329
      %3406 = vmatprep.subr.bf16.mxu0 0
      %3407 = vmatpush1.bf16.msra.mxu0 %v3328
      %3408 = vmatprep.subr.bf16.mxu0 0
      %3409 = vmatpush2.bf16.msra.mxu0 %v3343
      %3410 = vmatprep.subr.bf16.mxu0 0
      %3411 = vmatpush2.bf16.msra.mxu0 %v3342
      %3412 = vmatprep.subr.bf16.mxu0 0
      %3413 = vmatpush2.bf16.msra.mxu0 %v3341
      %3414 = vmatprep.subr.bf16.mxu0 0
      %3415 = vmatpush2.bf16.msra.mxu0 %v3340
      %3416 = vmatprep.subr.bf16.mxu0 0
      %3417 = vmatpush2.bf16.msra.mxu0 %v3339
      %3418 = vmatprep.subr.bf16.mxu0 0
      %3419 = vmatpush2.bf16.msra.mxu0 %v3338
      %3420 = vmatprep.subr.bf16.mxu0 0
      %3421 = vmatpush2.bf16.msra.mxu0 %v3337
      %3422 = vmatprep.subr.bf16.mxu0 0
      %3423 = vmatpush2.bf16.msra.mxu0 %v3336
      %3424 = vmatprep.mubr.bf16.mxu0 %v3161
      %3425 = vmatmul.mubr.bf16.gmra.mxu0 %v3154
      %v3426 = vpop.f32.mrf.mxu0
      %v3427 = vadd.f32 0.0, %v3426
      %v3428 = vpop.f32.mrf.mxu0
      %v3429 = vpop.f32.mrf.mxu0
      %v3430 = vadd.f32 0.0, %v3429
      %v3431 = vpop.f32.mrf.mxu0
      %3432 = vmatprep.mubr.bf16.mxu0 %v3183
      %3433 = vmatmul.mubr.bf16.gmra.mxu0 %v3179
      %v3434 = vpop.f32.mrf.mxu0
      %v3435 = vadd.f32 0.0, %v3434
      %v3436 = vpop.f32.mrf.mxu0
      %v3437 = vpop.f32.mrf.mxu0
      %v3438 = vadd.f32 0.0, %v3437
      %v3439 = vpop.f32.mrf.mxu0
      %3440 = vdwg.mxu0
      %3441 = vmatprep.subr.bf16.mxu0 0
      %3442 = vmatpush1.bf16.msra.mxu0 %v3351
      %3443 = vmatprep.subr.bf16.mxu0 0
      %3444 = vmatpush1.bf16.msra.mxu0 %v3350
      %3445 = vmatprep.subr.bf16.mxu0 0
      %3446 = vmatpush1.bf16.msra.mxu0 %v3349
      %3447 = vmatprep.subr.bf16.mxu0 0
      %3448 = vmatpush1.bf16.msra.mxu0 %v3348
      %3449 = vmatprep.subr.bf16.mxu0 0
      %3450 = vmatpush1.bf16.msra.mxu0 %v3347
      %3451 = vmatprep.subr.bf16.mxu0 0
      %3452 = vmatpush1.bf16.msra.mxu0 %v3346
      %3453 = vmatprep.subr.bf16.mxu0 0
      %3454 = vmatpush1.bf16.msra.mxu0 %v3345
      %3455 = vmatprep.subr.bf16.mxu0 0
      %3456 = vmatpush1.bf16.msra.mxu0 %v3344
      %3457 = vmatprep.subr.bf16.mxu0 0
      %3458 = vmatpush2.bf16.msra.mxu0 %v3359
      %3459 = vmatprep.subr.bf16.mxu0 0
      %3460 = vmatpush2.bf16.msra.mxu0 %v3358
      %3461 = vmatprep.subr.bf16.mxu0 0
      %3462 = vmatpush2.bf16.msra.mxu0 %v3357
      %3463 = vmatprep.subr.bf16.mxu0 0
      %3464 = vmatpush2.bf16.msra.mxu0 %v3356
      %3465 = vmatprep.subr.bf16.mxu0 0
      %3466 = vmatpush2.bf16.msra.mxu0 %v3355
      %3467 = vmatprep.subr.bf16.mxu0 0
      %3468 = vmatpush2.bf16.msra.mxu0 %v3354
      %3469 = vmatprep.subr.bf16.mxu0 0
      %3470 = vmatpush2.bf16.msra.mxu0 %v3353
      %3471 = vmatprep.subr.bf16.mxu0 0
      %3472 = vmatpush2.bf16.msra.mxu0 %v3352
      %3473 = vmatprep.mubr.bf16.mxu0 %v3175
      %3474 = vmatmul.mubr.bf16.gmra.mxu0 %v3168
      %v3475 = vpop.f32.mrf.mxu0
      %v3476 = vadd.f32 %v3427, %v3475
      %v3477 = vpop.f32.mrf.mxu0
      %v3478 = vpop.f32.mrf.mxu0
      %v3479 = vadd.f32 %v3430, %v3478
      %v3480 = vpop.f32.mrf.mxu0
      %3481 = vmatprep.mubr.bf16.mxu0 %v3191
      %3482 = vmatmul.mubr.bf16.gmra.mxu0 %v3187
      %v3483 = vpop.f32.mrf.mxu0
      %v3484 = vadd.f32 %v3435, %v3483
      %v3485 = vpop.f32.mrf.mxu0
      %v3486 = vpop.f32.mrf.mxu0
      %v3487 = vadd.f32 %v3438, %v3486
      %v3488 = vpop.f32.mrf.mxu0
      %3489 = vdwg.mxu0
      %v3490 = vadd.f32 %v3078, %v3476
      %v3491 = vadd.f32 %v3079, %v3479
      %v3492 = vadd.f32 %v3080, %v3484
      %v3493 = vadd.f32 %v3081, %v3487
      %v3494 = vpack.c.bf16 %v221, %v213
      %v3495 = vpack.c.bf16 %v223, %v215
      %v3496 = vpack.c.bf16 %v225, %v217
      %v3497 = vpack.c.bf16 %v227, %v219
      %v3498 = vpack.c.bf16 %v260, %v229
      %v3499 = vpack.c.bf16 %v261, %v231
      %v3500 = vpack.c.bf16 %v262, %v233
      %v3501 = vpack.c.bf16 %v263, %v235
      %s3502 = scalar_lea.vmem %s2, 2048
      %v3503 = vld [vmem:[%s3502] sm:$0xf]
      %v3504 = vld [vmem:[%s3502 + $0x4] sm:$0xf]
      %v3505 = vld [vmem:[%s3502 + $0x8] sm:$0xf]
      %v3506 = vld [vmem:[%s3502 + $0xc] sm:$0xf]
      %v3507 = vld [vmem:[%s3502 + $0x10] sm:$0xf]
      %v3508 = vld [vmem:[%s3502 + $0x14] sm:$0xf]
      %v3509 = vld [vmem:[%s3502 + $0x18] sm:$0xf]
      %v3510 = vld [vmem:[%s3502 + $0x1c] sm:$0xf]
      %v3511 = vld [vmem:[%s3502 + $0x20] sm:$0xf]
      %v3512 = vld [vmem:[%s3502 + $0x24] sm:$0xf]
      %v3513 = vld [vmem:[%s3502 + $0x28] sm:$0xf]
      %v3514 = vld [vmem:[%s3502 + $0x2c] sm:$0xf]
      %v3515 = vld [vmem:[%s3502 + $0x30] sm:$0xf]
      %v3516 = vld [vmem:[%s3502 + $0x34] sm:$0xf]
      %v3517 = vld [vmem:[%s3502 + $0x38] sm:$0xf]
      %v3518 = vld [vmem:[%s3502 + $0x3c] sm:$0xf]
      %v3519 = vld [vmem:[%s3502 + $0x40] sm:$0xf]
      %v3520 = vld [vmem:[%s3502 + $0x44] sm:$0xf]
      %v3521 = vld [vmem:[%s3502 + $0x48] sm:$0xf]
      %v3522 = vld [vmem:[%s3502 + $0x4c] sm:$0xf]
      %v3523 = vld [vmem:[%s3502 + $0x50] sm:$0xf]
      %v3524 = vld [vmem:[%s3502 + $0x54] sm:$0xf]
      %v3525 = vld [vmem:[%s3502 + $0x58] sm:$0xf]
      %v3526 = vld [vmem:[%s3502 + $0x5c] sm:$0xf]
      %v3527 = vld [vmem:[%s3502 + $0x60] sm:$0xf]
      %v3528 = vld [vmem:[%s3502 + $0x64] sm:$0xf]
      %v3529 = vld [vmem:[%s3502 + $0x68] sm:$0xf]
      %v3530 = vld [vmem:[%s3502 + $0x6c] sm:$0xf]
      %v3531 = vld [vmem:[%s3502 + $0x70] sm:$0xf]
      %v3532 = vld [vmem:[%s3502 + $0x74] sm:$0xf]
      %v3533 = vld [vmem:[%s3502 + $0x78] sm:$0xf]
      %v3534 = vld [vmem:[%s3502 + $0x7c] sm:$0xf]
      %v3535 = vld [vmem:[%s3502 + $0x80] sm:$0xf]
      %v3536 = vld [vmem:[%s3502 + $0x84] sm:$0xf]
      %v3537 = vld [vmem:[%s3502 + $0x88] sm:$0xf]
      %v3538 = vld [vmem:[%s3502 + $0x8c] sm:$0xf]
      %v3539 = vld [vmem:[%s3502 + $0x90] sm:$0xf]
      %v3540 = vld [vmem:[%s3502 + $0x94] sm:$0xf]
      %v3541 = vld [vmem:[%s3502 + $0x98] sm:$0xf]
      %v3542 = vld [vmem:[%s3502 + $0x9c] sm:$0xf]
      %v3543 = vld [vmem:[%s3502 + $0xa0] sm:$0xf]
      %v3544 = vld [vmem:[%s3502 + $0xa4] sm:$0xf]
      %v3545 = vld [vmem:[%s3502 + $0xa8] sm:$0xf]
      %v3546 = vld [vmem:[%s3502 + $0xac] sm:$0xf]
      %v3547 = vld [vmem:[%s3502 + $0xb0] sm:$0xf]
      %v3548 = vld [vmem:[%s3502 + $0xb4] sm:$0xf]
      %v3549 = vld [vmem:[%s3502 + $0xb8] sm:$0xf]
      %v3550 = vld [vmem:[%s3502 + $0xbc] sm:$0xf]
      %v3551 = vld [vmem:[%s3502 + $0xc0] sm:$0xf]
      %v3552 = vld [vmem:[%s3502 + $0xc4] sm:$0xf]
      %v3553 = vld [vmem:[%s3502 + $0xc8] sm:$0xf]
      %v3554 = vld [vmem:[%s3502 + $0xcc] sm:$0xf]
      %v3555 = vld [vmem:[%s3502 + $0xd0] sm:$0xf]
      %v3556 = vld [vmem:[%s3502 + $0xd4] sm:$0xf]
      %v3557 = vld [vmem:[%s3502 + $0xd8] sm:$0xf]
      %v3558 = vld [vmem:[%s3502 + $0xdc] sm:$0xf]
      %v3559 = vld [vmem:[%s3502 + $0xe0] sm:$0xf]
      %v3560 = vld [vmem:[%s3502 + $0xe4] sm:$0xf]
      %v3561 = vld [vmem:[%s3502 + $0xe8] sm:$0xf]
      %v3562 = vld [vmem:[%s3502 + $0xec] sm:$0xf]
      %v3563 = vld [vmem:[%s3502 + $0xf0] sm:$0xf]
      %v3564 = vld [vmem:[%s3502 + $0xf4] sm:$0xf]
      %v3565 = vld [vmem:[%s3502 + $0xf8] sm:$0xf]
      %v3566 = vld [vmem:[%s3502 + $0xfc] sm:$0xf]
      %v3631 = vunpack.c.l.b16 %v3503
      %v3632 = vunpack.c.l.b16 %v3504
      %v3633 = vunpack.c.l.b16 %v3505
      %v3634 = vunpack.c.l.b16 %v3506
      %v3635 = vunpack.c.l.b16 %v3507
      %v3636 = vunpack.c.l.b16 %v3508
      %v3637 = vunpack.c.l.b16 %v3509
      %v3638 = vunpack.c.l.b16 %v3510
      %v3639 = vunpack.c.l.b16 %v3511
      %v3640 = vunpack.c.l.b16 %v3512
      %v3641 = vunpack.c.l.b16 %v3513
      %v3642 = vunpack.c.l.b16 %v3514
      %v3643 = vunpack.c.l.b16 %v3515
      %v3644 = vunpack.c.l.b16 %v3516
      %v3645 = vunpack.c.l.b16 %v3517
      %v3646 = vunpack.c.l.b16 %v3518
      %v3647 = vunpack.c.l.b16 %v3519
      %v3648 = vunpack.c.l.b16 %v3520
      %v3649 = vunpack.c.l.b16 %v3521
      %v3650 = vunpack.c.l.b16 %v3522
      %v3651 = vunpack.c.l.b16 %v3523
      %v3652 = vunpack.c.l.b16 %v3524
      %v3653 = vunpack.c.l.b16 %v3525
      %v3654 = vunpack.c.l.b16 %v3526
      %v3655 = vunpack.c.l.b16 %v3527
      %v3656 = vunpack.c.l.b16 %v3528
      %v3657 = vunpack.c.l.b16 %v3529
      %v3658 = vunpack.c.l.b16 %v3530
      %v3659 = vunpack.c.l.b16 %v3531
      %v3660 = vunpack.c.l.b16 %v3532
      %v3661 = vunpack.c.l.b16 %v3533
      %v3662 = vunpack.c.l.b16 %v3534
      %v3663 = vunpack.c.l.b16 %v3535
      %v3664 = vunpack.c.l.b16 %v3536
      %v3665 = vunpack.c.l.b16 %v3537
      %v3666 = vunpack.c.l.b16 %v3538
      %v3667 = vunpack.c.l.b16 %v3539
      %v3668 = vunpack.c.l.b16 %v3540
      %v3669 = vunpack.c.l.b16 %v3541
      %v3670 = vunpack.c.l.b16 %v3542
      %v3671 = vunpack.c.l.b16 %v3543
      %v3672 = vunpack.c.l.b16 %v3544
      %v3673 = vunpack.c.l.b16 %v3545
      %v3674 = vunpack.c.l.b16 %v3546
      %v3675 = vunpack.c.l.b16 %v3547
      %v3676 = vunpack.c.l.b16 %v3548
      %v3677 = vunpack.c.l.b16 %v3549
      %v3678 = vunpack.c.l.b16 %v3550
      %v3679 = vunpack.c.l.b16 %v3551
      %v3680 = vunpack.c.l.b16 %v3552
      %v3681 = vunpack.c.l.b16 %v3553
      %v3682 = vunpack.c.l.b16 %v3554
      %v3683 = vunpack.c.l.b16 %v3555
      %v3684 = vunpack.c.l.b16 %v3556
      %v3685 = vunpack.c.l.b16 %v3557
      %v3686 = vunpack.c.l.b16 %v3558
      %v3687 = vunpack.c.l.b16 %v3559
      %v3688 = vunpack.c.l.b16 %v3560
      %v3689 = vunpack.c.l.b16 %v3561
      %v3690 = vunpack.c.l.b16 %v3562
      %v3691 = vunpack.c.l.b16 %v3563
      %v3692 = vunpack.c.l.b16 %v3564
      %v3693 = vunpack.c.l.b16 %v3565
      %v3694 = vunpack.c.l.b16 %v3566
      %v3695 = vpack.c.b16 %v3632, %v3631
      %v3696 = vpack.c.b16 %v3634, %v3633
      %v3697 = vpack.c.b16 %v3636, %v3635
      %v3698 = vpack.c.b16 %v3638, %v3637
      %v3699 = vpack.c.b16 %v3640, %v3639
      %v3700 = vpack.c.b16 %v3642, %v3641
      %v3701 = vpack.c.b16 %v3644, %v3643
      %v3702 = vpack.c.b16 %v3646, %v3645
      %v3703 = vpack.c.b16 %v3648, %v3647
      %v3704 = vpack.c.b16 %v3650, %v3649
      %v3705 = vpack.c.b16 %v3652, %v3651
      %v3706 = vpack.c.b16 %v3654, %v3653
      %v3707 = vpack.c.b16 %v3656, %v3655
      %v3708 = vpack.c.b16 %v3658, %v3657
      %v3709 = vpack.c.b16 %v3660, %v3659
      %v3710 = vpack.c.b16 %v3662, %v3661
      %v3711 = vpack.c.b16 %v3664, %v3663
      %v3712 = vpack.c.b16 %v3666, %v3665
      %v3713 = vpack.c.b16 %v3668, %v3667
      %v3714 = vpack.c.b16 %v3670, %v3669
      %v3715 = vpack.c.b16 %v3672, %v3671
      %v3716 = vpack.c.b16 %v3674, %v3673
      %v3717 = vpack.c.b16 %v3676, %v3675
      %v3718 = vpack.c.b16 %v3678, %v3677
      %v3719 = vpack.c.b16 %v3680, %v3679
      %v3720 = vpack.c.b16 %v3682, %v3681
      %v3721 = vpack.c.b16 %v3684, %v3683
      %v3722 = vpack.c.b16 %v3686, %v3685
      %v3723 = vpack.c.b16 %v3688, %v3687
      %v3724 = vpack.c.b16 %v3690, %v3689
      %v3725 = vpack.c.b16 %v3692, %v3691
      %v3726 = vpack.c.b16 %v3694, %v3693
      %3759 = vmatprep.subr.bf16.mxu0 0
      %3760 = vmatpush1.bf16.msra.mxu0 %v3702
      %3761 = vmatprep.subr.bf16.mxu0 0
      %3762 = vmatpush1.bf16.msra.mxu0 %v3701
      %3763 = vmatprep.subr.bf16.mxu0 0
      %3764 = vmatpush1.bf16.msra.mxu0 %v3700
      %3765 = vmatprep.subr.bf16.mxu0 0
      %3766 = vmatpush1.bf16.msra.mxu0 %v3699
      %3767 = vmatprep.subr.bf16.mxu0 0
      %3768 = vmatpush1.bf16.msra.mxu0 %v3698
      %3769 = vmatprep.subr.bf16.mxu0 0
      %3770 = vmatpush1.bf16.msra.mxu0 %v3697
      %3771 = vmatprep.subr.bf16.mxu0 0
      %3772 = vmatpush1.bf16.msra.mxu0 %v3696
      %3773 = vmatprep.subr.bf16.mxu0 0
      %3774 = vmatpush1.bf16.msra.mxu0 %v3695
      %3775 = vmatprep.subr.bf16.mxu0 0
      %3776 = vmatpush2.bf16.msra.mxu0 %v3710
      %3777 = vmatprep.subr.bf16.mxu0 0
      %3778 = vmatpush2.bf16.msra.mxu0 %v3709
      %3779 = vmatprep.subr.bf16.mxu0 0
      %3780 = vmatpush2.bf16.msra.mxu0 %v3708
      %3781 = vmatprep.subr.bf16.mxu0 0
      %3782 = vmatpush2.bf16.msra.mxu0 %v3707
      %3783 = vmatprep.subr.bf16.mxu0 0
      %3784 = vmatpush2.bf16.msra.mxu0 %v3706
      %3785 = vmatprep.subr.bf16.mxu0 0
      %3786 = vmatpush2.bf16.msra.mxu0 %v3705
      %3787 = vmatprep.subr.bf16.mxu0 0
      %3788 = vmatpush2.bf16.msra.mxu0 %v3704
      %3789 = vmatprep.subr.bf16.mxu0 0
      %3790 = vmatpush2.bf16.msra.mxu0 %v3703
      %3791 = vmatprep.mubr.bf16.mxu0 %v3495
      %3792 = vmatmul.mubr.bf16.gmra.mxu0 %v3494
      %v3793 = vpop.f32.mrf.mxu0
      %v3794 = vadd.f32 0.0, %v3793
      %v3795 = vpop.f32.mrf.mxu0
      %v3796 = vpop.f32.mrf.mxu0
      %v3797 = vadd.f32 0.0, %v3796
      %v3798 = vpop.f32.mrf.mxu0
      %3799 = vmatprep.mubr.bf16.mxu0 %v3499
      %3800 = vmatmul.mubr.bf16.gmra.mxu0 %v3498
      %v3801 = vpop.f32.mrf.mxu0
      %v3802 = vadd.f32 0.0, %v3801
      %v3803 = vpop.f32.mrf.mxu0
      %v3804 = vpop.f32.mrf.mxu0
      %v3805 = vadd.f32 0.0, %v3804
      %v3806 = vpop.f32.mrf.mxu0
      %3807 = vdwg.mxu0
      %3808 = vmatprep.subr.bf16.mxu0 0
      %3809 = vmatpush1.bf16.msra.mxu0 %v3718
      %3810 = vmatprep.subr.bf16.mxu0 0
      %3811 = vmatpush1.bf16.msra.mxu0 %v3717
      %3812 = vmatprep.subr.bf16.mxu0 0
      %3813 = vmatpush1.bf16.msra.mxu0 %v3716
      %3814 = vmatprep.subr.bf16.mxu0 0
      %3815 = vmatpush1.bf16.msra.mxu0 %v3715
      %3816 = vmatprep.subr.bf16.mxu0 0
      %3817 = vmatpush1.bf16.msra.mxu0 %v3714
      %3818 = vmatprep.subr.bf16.mxu0 0
      %3819 = vmatpush1.bf16.msra.mxu0 %v3713
      %3820 = vmatprep.subr.bf16.mxu0 0
      %3821 = vmatpush1.bf16.msra.mxu0 %v3712
      %3822 = vmatprep.subr.bf16.mxu0 0
      %3823 = vmatpush1.bf16.msra.mxu0 %v3711
      %3824 = vmatprep.subr.bf16.mxu0 0
      %3825 = vmatpush2.bf16.msra.mxu0 %v3726
      %3826 = vmatprep.subr.bf16.mxu0 0
      %3827 = vmatpush2.bf16.msra.mxu0 %v3725
      %3828 = vmatprep.subr.bf16.mxu0 0
      %3829 = vmatpush2.bf16.msra.mxu0 %v3724
      %3830 = vmatprep.subr.bf16.mxu0 0
      %3831 = vmatpush2.bf16.msra.mxu0 %v3723
      %3832 = vmatprep.subr.bf16.mxu0 0
      %3833 = vmatpush2.bf16.msra.mxu0 %v3722
      %3834 = vmatprep.subr.bf16.mxu0 0
      %3835 = vmatpush2.bf16.msra.mxu0 %v3721
      %3836 = vmatprep.subr.bf16.mxu0 0
      %3837 = vmatpush2.bf16.msra.mxu0 %v3720
      %3838 = vmatprep.subr.bf16.mxu0 0
      %3839 = vmatpush2.bf16.msra.mxu0 %v3719
      %3840 = vmatprep.mubr.bf16.mxu0 %v3497
      %3841 = vmatmul.mubr.bf16.gmra.mxu0 %v3496
      %v3842 = vpop.f32.mrf.mxu0
      %v3843 = vadd.f32 %v3794, %v3842
      %v3844 = vpop.f32.mrf.mxu0
      %v3845 = vpop.f32.mrf.mxu0
      %v3846 = vadd.f32 %v3797, %v3845
      %v3847 = vpop.f32.mrf.mxu0
      %3848 = vmatprep.mubr.bf16.mxu0 %v3501
      %3849 = vmatmul.mubr.bf16.gmra.mxu0 %v3500
      %v3850 = vpop.f32.mrf.mxu0
      %v3851 = vadd.f32 %v3802, %v3850
      %v3852 = vpop.f32.mrf.mxu0
      %v3853 = vpop.f32.mrf.mxu0
      %v3854 = vadd.f32 %v3805, %v3853
      %v3855 = vpop.f32.mrf.mxu0
      %3856 = vdwg.mxu0
      %v3857 = vadd.f32 %v3490, %v3843
      %v3858 = vadd.f32 %v3491, %v3846
      %v3859 = vadd.f32 %v3492, %v3851
      %v3860 = vadd.f32 %v3493, %v3854
      %v3861 = vld [vmem:[%s3] sm:$0x1]
      %v3863 = vlaneseq
      %v3864 = vshrl.u32 %v3863, 7
      %v3865 = vsub.s32 0, %v3864
      %v3866 = vrot.slane %v3861, %v3865
      %v3868 = vadd.f32 %v3857, %v3866
      %v3869 = vadd.f32 %v3858, %v3866
      %v3870 = vadd.f32 %v3859, %v3866
      %v3871 = vadd.f32 %v3860, %v3866
      %v3872 = vtanh.pop %v3868
      %v3873 = vtanh.pop %v3869
      %v3874 = vtanh.pop %v3870
      %v3875 = vtanh.pop %v3871
      %vm3876 = vcmask 785408
      %3877 = vst.msk [vmem:[%s172] sm:$0xff] %vm3876, %v3872
      %3878 = vst.msk [vmem:[%s172 + $0x8] sm:$0xff] %vm3876, %v3873
      %3879 = vst.msk [vmem:[%s172 + $0x10] sm:$0xff] %vm3876, %v3874
      %3880 = vst.msk [vmem:[%s172 + $0x18] sm:$0xff] %vm3876, %v3875
      %s3881 = smul.u32 4, %s16
      %p3882 = scmp.lt.s32.totalorder %s3881, 7
      %s3883 = scalar_select %p3882, %s3881, 7
      %s3884 = smul.addr %s3883, 8
      %s3885 = scalar_lea.vmem %s4, %s3884
      // Predicated region
      $region33: #{srnet_forward.7} parent=31 // pred_check
        %p3886 = pneg %p102
      $region34: #{srnet_forward.7} parent=31 // pred_check_branch
        %3888 = sbr.rel (%p3886) target = $region36
      $region35: #{srnet_forward.7} parent=31 // pred_region
        %s3889 = smul.u32 4, %s16
      $region36: #{srnet_forward.7} parent=31 // pred_fallthru
        _
    $region32: #{srnet_forward.7} parent=5 // pred_fallthru
      _
    %p3890 = scmp.le.s32.totalorder 2, %s11
    // Predicated region
    $region37: #{srnet_forward.7} parent=5 // pred_check
      %p3891 = pneg %p3890
    $region38: #{srnet_forward.7} parent=5 // pred_check_branch
      %3893 = sbr.rel (%p3891) target = $region40
    $region39: #{srnet_forward.7} parent=5 // pred_region
      %s3894 = ssub.s32 %s11, 2
      // Predicated region
      $region41: #{srnet_forward.7} parent=39 // pred_check
        %p3895 = pneg %p108
      $region42: #{srnet_forward.7} parent=39 // pred_check_branch
        %3897 = sbr.rel (%p3895) target = $region44
      $region43: #{srnet_forward.7} parent=39 // pred_region
        %s3898 = smul.u32 4, %s17
        %p3899 = scmp.lt.s32.totalorder %s3898, 7
        %s3900 = scalar_select %p3899, %s3898, 7
        %s3901 = smul.addr %s3900, 8
        %s3902 = scalar_lea.vmem %s4, %s3901
      $region44: #{srnet_forward.7} parent=39 // pred_fallthru
        _
    $region40: #{srnet_forward.7} parent=5 // pred_fallthru
      _
  $region6: #{srnet_forward.7} parent=0 // loop_footer
    %s15 = sadd.s32 1, %s11
  $region7: #{srnet_forward.7} parent=0 // loop_footer_branch
    %10 = sbr.rel target = $region3
  $region8: #{srnet_forward.7} parent=0 // loop_exit
    _

</llo_original>
